<compile_context>
chip_gen: v7x
topology: tpu7x:2x2x1
jax: 0.10.0
libtpu: 0.0.40
codegen_flags: <defaults>
</compile_context>

<pallas_src>
import functools

import jax
import jax.numpy as jnp
from jax.experimental import pallas as pl
from jax.experimental.pallas import tpu as pltpu


def _round_up(x, m):
    return ((x + m - 1) // m) * m


_VMEM_FALLBACK = 32 * 1024 * 1024


@functools.lru_cache(maxsize=None)
def _vmem_limit():
    """~3/4 of physical VMEM (96 MiB on 128 MiB parts, 48 MiB on v7x)."""
    try:
        info = pltpu.get_tpu_info()
        for attr in ("vmem_capacity_bytes", "vmem_size_bytes", "vmem_bytes"):
            cap = getattr(info, attr, None)
            if cap:
                return int(min(int(cap) * 3 // 4, 100 * 1024 * 1024))
    except Exception:
        pass
    return _VMEM_FALLBACK


# ----------------------------------------------------------------------------
# Tiled fused matmul kernels (bf16 MXU operands, f32 accumulate + epilogue)
# ----------------------------------------------------------------------------
def _matmul_affine_kernel(a_ref, b_ref, s_ref, c_ref, o_ref, acc_ref, *, relu):
    @pl.when(pl.program_id(2) == 0)
    def _():
        acc_ref[...] = jnp.zeros_like(acc_ref)

    acc_ref[...] += jnp.dot(a_ref[...], b_ref[...],
                            preferred_element_type=jnp.float32)

    @pl.when(pl.program_id(2) == pl.num_programs(2) - 1)
    def _():
        acc = acc_ref[...] * s_ref[...] + c_ref[...]     # per-out-channel affine
        if relu:
            acc = jnp.maximum(acc, 0.0)
        o_ref[...] = acc.astype(o_ref.dtype)


def _matmul_plain_kernel(a_ref, b_ref, o_ref, acc_ref):
    @pl.when(pl.program_id(2) == 0)
    def _():
        acc_ref[...] = jnp.zeros_like(acc_ref)

    acc_ref[...] += jnp.dot(a_ref[...], b_ref[...],
                            preferred_element_type=jnp.float32)

    @pl.when(pl.program_id(2) == pl.num_programs(2) - 1)
    def _():
        o_ref[...] = acc_ref[...].astype(o_ref.dtype)


def fused_matmul(a, b, scale=None, bias=None, *, relu=False,
                 operand_dtype=jnp.bfloat16, out_dtype=jnp.float32):
    """(M,K) @ (K,N) [* scale + bias] [ReLU], tiled over (M, N, K)."""
    M, K = a.shape
    K2, N = b.shape
    assert K == K2

    tm = 512 if M >= 512 else _round_up(M, 8)
    Mp = _round_up(M, tm)

    if N > 256:                       # big out-channel dims -> lane-dense 256 tile
        tn = 256
        Np = _round_up(N, tn)
    else:                             # small N: full dim, no pad/slice copies
        tn = N
        Np = N

    if K > 1024:
        tk = 128
        for t in (1024, 512, 256):
            if K % t == 0:
                tk = t
                break
        Kp = _round_up(K, tk)
    else:                             # small K: single full-width chunk
        Kp = _round_up(K, 8)
        tk = Kp

    a = a.astype(operand_dtype)
    b = b.astype(operand_dtype)
    if (Mp, Kp) != (M, K):
        a = jnp.pad(a, ((0, Mp - M), (0, Kp - K)))
    if (Kp, Np) != (K, N):
        b = jnp.pad(b, ((0, Kp - K), (0, Np - N)))

    grid = (Mp // tm, Np // tn, Kp // tk)
    affine = scale is not None
    itemsize_out = jnp.dtype(out_dtype).itemsize
    cost = pl.CostEstimate(
        flops=int(2 * M * K * N),
        transcendentals=0,
        bytes_accessed=int(Mp * Kp * 2 + Kp * Np * 2 + Mp * Np * itemsize_out))

    if affine:
        s = scale.astype(jnp.float32).reshape(1, N)
        c = bias.astype(jnp.float32).reshape(1, N)
        if Np != N:
            s = jnp.pad(s, ((0, 0), (0, Np - N)))
            c = jnp.pad(c, ((0, 0), (0, Np - N)))
        kernel = functools.partial(_matmul_affine_kernel, relu=relu)
        in_specs = [
            pl.BlockSpec((tm, tk), lambda i, j, k: (i, k)),
            pl.BlockSpec((tk, tn), lambda i, j, k: (k, j)),
            pl.BlockSpec((1, tn), lambda i, j, k: (0, j)),
            pl.BlockSpec((1, tn), lambda i, j, k: (0, j)),
        ]
        operands = (a, b, s, c)
    else:
        kernel = _matmul_plain_kernel
        in_specs = [
            pl.BlockSpec((tm, tk), lambda i, j, k: (i, k)),
            pl.BlockSpec((tk, tn), lambda i, j, k: (k, j)),
        ]
        operands = (a, b)

    out = pl.pallas_call(
        kernel,
        out_shape=jax.ShapeDtypeStruct((Mp, Np), out_dtype),
        grid=grid,
        in_specs=in_specs,
        out_specs=pl.BlockSpec((tm, tn), lambda i, j, k: (i, j)),
        scratch_shapes=[pltpu.VMEM((tm, tn), jnp.float32)],
        compiler_params=pltpu.CompilerParams(
            dimension_semantics=("parallel", "parallel", "arbitrary"),
            vmem_limit_bytes=_vmem_limit(),
        ),
        cost_estimate=cost,
    )(*operands)

    if (Mp, Np) != (M, N):
        out = out[:M, :N]
    return out


# ----------------------------------------------------------------------------
# 1x1 conv (NHWC) = fused matmul over flattened spatial positions
# ----------------------------------------------------------------------------
def conv1x1(x_nhwc, w, scale, bias, *, relu, out_dtype=jnp.bfloat16):
    """1x1 conv + per-channel affine + optional ReLU.  w: (Cout, Cin, 1, 1)."""
    n, h, wd, cin = x_nhwc.shape
    cout = w.shape[0]
    flat = x_nhwc.reshape(n * h * wd, cin)
    wm = w.reshape(cout, cin).T          # (Cin, Cout)
    y = fused_matmul(flat, wm, scale, bias, relu=relu, out_dtype=out_dtype)
    return y.reshape(n, h, wd, cout)


# ----------------------------------------------------------------------------
# Dilated 3x3 conv: shared max-dilation padding, 3 column strips / 9 matmuls
# accumulated inside one pallas_call (no host im2col, no per-tap reshape).
# ----------------------------------------------------------------------------
def pad_for_dilated(feat_bf16, d_max, tk):
    """Pad NHWC feature once: d_max border, width to a multiple of 8, channels
    to a multiple of the K tile.  Shared by all three dilated branches."""
    n, h, w, cin = feat_bf16.shape
    wr = _round_up(w, 8)
    kp = _round_up(cin, tk)
    xp = jnp.pad(feat_bf16,
                 ((0, 0), (d_max, d_max), (d_max, d_max + (wr - w)),
                  (0, kp - cin)))
    meta = dict(h=h, w=w, wr=wr, cin=cin, kp=kp, tk=tk, d_max=d_max)
    return xp, meta


def _pick_conv3x3_tn(cout, h, wr, hp, wp, tk, limit):
    cands = [cout] + [t for t in (256, 128) if t < cout and cout % t == 0]
    for tn in cands:
        est = (4 * h * wr * tn          # f32 accumulator scratch
               + 4 * hp * wp * tk       # double-buffered bf16 input block
               + 4 * h * wr * tn        # double-buffered bf16 output block
               + 4 * 9 * tk * tn)       # double-buffered bf16 weights
        if est <= limit // 2:
            return tn
    return cands[-1]


def _conv3x3_kernel(x_ref, w_ref, s_ref, c_ref, o_ref, acc_ref, *,
                    relu, d, off, H, Wr, Hp):
    # x_ref: (1, Hp, Wp, tk)  w_ref: (9, tk, tn)  o_ref: (1, H, Wr, tn)
    k = pl.program_id(2)

    @pl.when(k == 0)
    def _():
        acc_ref[...] = jnp.zeros_like(acc_ref)

    tk = x_ref.shape[3]
    acc = acc_ref[...]                                   # (H*Wr, tn)
    for kx in range(3):                                  # 3 column strips only
        xs = off + kx * d
        strip = x_ref[0, :, xs:xs + Wr, :]               # (Hp, Wr, tk)
        flat = strip.reshape(Hp * Wr, tk)                # free: Wr % 8 == 0
        for ky in range(3):
            ys = off + ky * d
            rows = flat[ys * Wr:(ys + H) * Wr, :]        # aligned row range
            acc = acc + jnp.dot(rows, w_ref[ky * 3 + kx],
                                preferred_element_type=jnp.float32)
    acc_ref[...] = acc

    @pl.when(k == pl.num_programs(2) - 1)
    def _():
        res = acc_ref[...] * s_ref[...] + c_ref[...]
        if relu:
            res = jnp.maximum(res, 0.0)
        # (H*Wr, tn) -> (1, H, Wr, tn) is layout-free since Wr % 8 == 0.
        o_ref[...] = res.reshape(1, H, Wr, res.shape[-1]).astype(o_ref.dtype)


def conv3x3_dilated(xp, meta, w, dilation, scale, bias, *, relu=True,
                    out_dtype=jnp.bfloat16):
    """3x3 dilated conv, padding=dilation ('same'), fused affine + ReLU.
    xp: shared d_max-padded NHWC bf16 input; w: (Cout,Cin,3,3) torch layout."""
    n = xp.shape[0]
    h, wd, wr = meta["h"], meta["w"], meta["wr"]
    cin, kp, tk, dmax = meta["cin"], meta["kp"], meta["tk"], meta["d_max"]
    hp, wp = xp.shape[1], xp.shape[2]
    cout = w.shape[0]
    d = int(dilation)
    off = dmax - d                         # extra border from the shared pad

    w9 = w.transpose(2, 3, 1, 0).reshape(9, cin, cout).astype(jnp.bfloat16)
    if kp != cin:
        w9 = jnp.pad(w9, ((0, 0), (0, kp - cin), (0, 0)))
    s = scale.astype(jnp.float32).reshape(1, cout)
    c = bias.astype(jnp.float32).reshape(1, cout)

    tn = _pick_conv3x3_tn(cout, h, wr, hp, wp, tk, _vmem_limit())
    grid = (n, cout // tn, kp // tk)

    out = pl.pallas_call(
        functools.partial(_conv3x3_kernel, relu=relu, d=d, off=off,
                          H=h, Wr=wr, Hp=hp),
        out_shape=jax.ShapeDtypeStruct((n, h, wr, cout), out_dtype),
        grid=grid,
        in_specs=[
            pl.BlockSpec((1, hp, wp, tk), lambda b, j, k: (b, 0, 0, k)),
            pl.BlockSpec((9, tk, tn), lambda b, j, k: (0, k, j)),
            pl.BlockSpec((1, tn), lambda b, j, k: (0, j)),
            pl.BlockSpec((1, tn), lambda b, j, k: (0, j)),
        ],
        out_specs=pl.BlockSpec((1, h, wr, tn), lambda b, j, k: (b, 0, 0, j)),
        scratch_shapes=[pltpu.VMEM((h * wr, tn), jnp.float32)],
        compiler_params=pltpu.CompilerParams(
            dimension_semantics=("parallel", "parallel", "arbitrary"),
            vmem_limit_bytes=_vmem_limit(),
        ),
        cost_estimate=pl.CostEstimate(
            flops=int(2 * 9 * n * h * wd * cin * cout),
            transcendentals=0,
            bytes_accessed=int(xp.size * 2 + w9.size * 2
                               + n * h * wr * cout * 2)),
    )(xp, w9, s, c)

    if wr != wd:
        out = out[:, :, :wd, :]            # drop junk columns from W rounding
    return out


# ----------------------------------------------------------------------------
# Global average pooling: bf16 read, f32 tiled accumulating reduction, no pad
# ----------------------------------------------------------------------------
def _gap_kernel(x_ref, o_ref, acc_ref, *, inv_hw, hw, thw, need_mask):
    j = pl.program_id(1)

    @pl.when(j == 0)
    def _():
        acc_ref[...] = jnp.zeros_like(acc_ref)

    x = x_ref[0].astype(jnp.float32)                     # (thw, C)
    if need_mask:                                        # ragged last tile
        row = jax.lax.broadcasted_iota(jnp.int32, x.shape, 0) + j * thw
        x = jnp.where(row < hw, x, 0.0)
    acc_ref[...] += jnp.sum(x, axis=0, keepdims=True)

    @pl.when(j == pl.num_programs(1) - 1)
    def _():
        o_ref[...] = (acc_ref[...] * inv_hw)[None].astype(o_ref.dtype)


def global_avg_pool(x_nhwc):
    """AdaptiveAvgPool2d(1): (N,H,W,C) -> (N,C) in f32 (input read in bf16)."""
    n, h, w, c = x_nhwc.shape
    hw = h * w
    thw = hw if hw <= 512 else 512
    need_mask = (hw % thw) != 0
    x = x_nhwc.reshape(n, hw, c)
    out = pl.pallas_call(
        functools.partial(_gap_kernel, inv_hw=1.0 / hw, hw=hw, thw=thw,
                          need_mask=need_mask),
        out_shape=jax.ShapeDtypeStruct((n, 1, c), jnp.float32),
        grid=(n, pl.cdiv(hw, thw)),
        in_specs=[pl.BlockSpec((1, thw, c), lambda b, j: (b, j, 0))],
        out_specs=pl.BlockSpec((1, 1, c), lambda b, j: (b, 0, 0)),
        scratch_shapes=[pltpu.VMEM((1, c), jnp.float32)],
        compiler_params=pltpu.CompilerParams(
            dimension_semantics=("parallel", "arbitrary"),
            vmem_limit_bytes=_vmem_limit(),
        ),
    )(x)
    return out.reshape(n, c)


# ----------------------------------------------------------------------------
# conv2 over the (virtual) 5-way concat: reads x1..x4 directly, pooled branch
# contributes a constant-per-batch row added in the epilogue.  No concat copy.
# ----------------------------------------------------------------------------
def _aspp_combine_kernel(x1_ref, x2_ref, x3_ref, x4_ref, r5_ref, w_ref,
                         s_ref, c_ref, o_ref):
    acc = jnp.dot(x1_ref[0], w_ref[0], preferred_element_type=jnp.float32)
    acc += jnp.dot(x2_ref[0], w_ref[1], preferred_element_type=jnp.float32)
    acc += jnp.dot(x3_ref[0], w_ref[2], preferred_element_type=jnp.float32)
    acc += jnp.dot(x4_ref[0], w_ref[3], preferred_element_type=jnp.float32)
    res = (acc + r5_ref[0]) * s_ref[...] + c_ref[...]
    res = jnp.maximum(res, 0.0)
    o_ref[...] = res[None].astype(o_ref.dtype)


def aspp_combine(x1, x2, x3, x4, r5, w_chunks, scale, bias,
                 *, out_dtype=jnp.bfloat16):
    """bn2(relu( sum_i x_i @ W_i + r5 )): the conv2 of ASPP without the concat.
    x1..x4: (N,H,W,C) bf16, r5: (N,Cout) f32 (pooled-branch contribution),
    w_chunks: (4, C, Cout)."""
    n, h, w, c = x1.shape
    cout = w_chunks.shape[-1]
    hw = h * w
    # Rows of a block only feed the same output row, so a ragged last tile
    # (hw % tm != 0) cannot contaminate valid rows; OOB rows are dropped.
    tm = hw if hw <= 1024 else 512
    mt = pl.cdiv(hw, tm)

    xs = [a.reshape(n, hw, c) for a in (x1, x2, x3, x4)]
    wk = w_chunks.astype(jnp.bfloat16)
    s = scale.astype(jnp.float32).reshape(1, cout)
    b = bias.astype(jnp.float32).reshape(1, cout)
    r5 = r5.astype(jnp.float32).reshape(n, 1, cout)

    x_spec = pl.BlockSpec((1, tm, c), lambda bi, m: (bi, m, 0))
    out = pl.pallas_call(
        _aspp_combine_kernel,
        out_shape=jax.ShapeDtypeStruct((n, hw, cout), out_dtype),
        grid=(n, mt),
        in_specs=[x_spec, x_spec, x_spec, x_spec,
                  pl.BlockSpec((1, 1, cout), lambda bi, m: (bi, 0, 0)),
                  pl.BlockSpec((4, c, cout), lambda bi, m: (0, 0, 0)),
                  pl.BlockSpec((1, cout), lambda bi, m: (0, 0)),
                  pl.BlockSpec((1, cout), lambda bi, m: (0, 0))],
        out_specs=pl.BlockSpec((1, tm, cout), lambda bi, m: (bi, m, 0)),
        compiler_params=pltpu.CompilerParams(
            dimension_semantics=("parallel", "parallel"),
            vmem_limit_bytes=_vmem_limit(),
        ),
        cost_estimate=pl.CostEstimate(
            flops=int(2 * 4 * n * hw * c * cout),
            transcendentals=0,
            bytes_accessed=int(4 * n * hw * c * 2 + n * hw * cout * 2)),
    )(*xs, r5, wk, s, b)
    return out.reshape(n, h, w, cout)


# ----------------------------------------------------------------------------
# Bilinear resize (align_corners=True) as two row-tiled interpolation matmuls
# ----------------------------------------------------------------------------
def _bilinear_matrix(out_size, in_size):
    if in_size == 1:
        return jnp.ones((out_size, 1), jnp.float32)
    scale = (in_size - 1) / max(out_size - 1, 1)
    src = jnp.arange(out_size, dtype=jnp.float32) * scale
    i0 = jnp.floor(src).astype(jnp.int32)
    i1 = jnp.minimum(i0 + 1, in_size - 1)
    w1 = src - i0.astype(jnp.float32)
    w0 = 1.0 - w1
    return (jax.nn.one_hot(i0, in_size, dtype=jnp.float32) * w0[:, None]
            + jax.nn.one_hot(i1, in_size, dtype=jnp.float32) * w1[:, None])


def bilinear_resize_nchw(x, out_h, out_w):
    """F.interpolate(mode='bilinear', align_corners=True) on small NCHW logits."""
    n, c, h, w = x.shape
    A_h = _bilinear_matrix(out_h, h)      # (out_h, h)
    A_w = _bilinear_matrix(out_w, w)      # (out_w, w)
    # height pass: big dim (n*c*w) stays on the tiled row axis (bf16 operands,
    # K = h is used unpadded)
    t = x.transpose(0, 1, 3, 2).reshape(n * c * w, h)
    t = fused_matmul(t, A_h.T)                                       # (n*c*w, out_h)
    t = t.reshape(n, c, w, out_h).transpose(0, 1, 3, 2)              # (n, c, out_h, w)
    # width pass
    u = t.reshape(n * c * out_h, w)
    u = fused_matmul(u, A_w.T)                                       # (n*c*out_h, out_w)
    return u.reshape(n, c, out_h, out_w)


# ----------------------------------------------------------------------------
# Parameters (deterministic synthetic init) and forward passes
# ----------------------------------------------------------------------------
def bn_affine(p, eps=3e-4):
    scale = p["gamma"] / jnp.sqrt(p["var"] + eps)
    return scale, p["beta"] - p["mean"] * scale


def init_params(key, c_in_img, c_backbone, c_aspp, num_classes):
    keys = jax.random.split(key, 40)
    k = iter(keys)

    def conv_w(cout, cin, kh, kw):
        return 0.1 * jax.random.normal(next(k), (cout, cin, kh, kw), jnp.float32)

    def bn(c):
        return dict(
            gamma=1.0 + 0.1 * jax.random.normal(next(k), (c,), jnp.float32),
            beta=0.1 * jax.random.normal(next(k), (c,), jnp.float32),
            mean=0.1 * jax.random.normal(next(k), (c,), jnp.float32),
            var=jnp.abs(jax.random.normal(next(k), (c,), jnp.float32)) + 0.5,
        )

    return dict(
        backbone_w=conv_w(c_backbone, c_in_img, 1, 1),
        aspp1_w=conv_w(c_aspp, c_backbone, 1, 1), aspp1_bn=bn(c_aspp),
        aspp2_w=conv_w(c_aspp, c_backbone, 3, 3), aspp2_bn=bn(c_aspp),
        aspp3_w=conv_w(c_aspp, c_backbone, 3, 3), aspp3_bn=bn(c_aspp),
        aspp4_w=conv_w(c_aspp, c_backbone, 3, 3), aspp4_bn=bn(c_aspp),
        aspp5_w=conv_w(c_aspp, c_backbone, 1, 1), aspp5_bn=bn(c_aspp),
        conv2_w=conv_w(c_aspp, c_aspp * 5, 1, 1), bn2=bn(c_aspp),
        conv_out_w=conv_w(num_classes, c_aspp, 1, 1),
        conv_out_b=0.1 * jax.random.normal(next(k), (num_classes,), jnp.float32),
    )


def aspp_forward(feat_nhwc, p, mult=1):
    n, h, w, cin = feat_nhwc.shape
    c_aspp = p["aspp1_w"].shape[0]
    dils = (int(6 * mult), int(12 * mult), int(18 * mult))
    dmax = max(dils)

    s1, b1 = bn_affine(p["aspp1_bn"])
    x1 = conv1x1(feat_nhwc, p["aspp1_w"], s1, b1, relu=True,
                 out_dtype=jnp.bfloat16)

    # shared (single) padded copy of the feature map for all dilated branches
    tk = cin if cin <= 256 else 128
    xp, meta = pad_for_dilated(feat_nhwc.astype(jnp.bfloat16), dmax, tk)
    s2, b2 = bn_affine(p["aspp2_bn"])
    x2 = conv3x3_dilated(xp, meta, p["aspp2_w"], dils[0], s2, b2, relu=True)
    s3, b3 = bn_affine(p["aspp3_bn"])
    x3 = conv3x3_dilated(xp, meta, p["aspp3_w"], dils[1], s3, b3, relu=True)
    s4, b4 = bn_affine(p["aspp4_bn"])
    x4 = conv3x3_dilated(xp, meta, p["aspp4_w"], dils[2], s4, b4, relu=True)

    # global pooling branch (1x1 map -> bilinear upsample == broadcast)
    pooled = global_avg_pool(feat_nhwc)                            # (N, Cin) f32
    s5, b5 = bn_affine(p["aspp5_bn"])
    w5 = p["aspp5_w"].reshape(c_aspp, cin).T
    x5 = fused_matmul(pooled, w5, s5, b5, relu=True)               # (N, c_aspp)

    # conv2 without materializing the 5*c_aspp concat
    w2 = p["conv2_w"].reshape(c_aspp, 5 * c_aspp).T                # (5*c_aspp, c_aspp)
    w2 = w2.reshape(5, c_aspp, c_aspp)
    r5 = fused_matmul(x5, w2[4], out_dtype=jnp.float32)            # (N, c_aspp)
    s6, b6 = bn_affine(p["bn2"])
    return aspp_combine(x1, x2, x3, x4, r5, w2[:4], s6, b6)


def deeplabv3_forward(x_nchw, params, backbone_stride=4):
    n, c, H, W = x_nchw.shape
    x = x_nchw.transpose(0, 2, 3, 1)                 # NHWC internally

    # TODO(synk): the torchvision ResNet-50/101 backbone (IntermediateLayerGetter,
    # pretrained) is an external dependency and is not translated; stand-in below =
    # strided average pooling + 1x1 conv + ReLU producing the backbone feature map.
    s = backbone_stride
    h, w = H // s, W // s
    pooled = x.reshape(n, h, s, w, s, c).mean(axis=(2, 4))
    c_bb = params["backbone_w"].shape[0]
    feat = conv1x1(pooled, params["backbone_w"],
                   jnp.ones((c_bb,), jnp.float32), jnp.zeros((c_bb,), jnp.float32),
                   relu=True, out_dtype=jnp.bfloat16)

    aspp_out = aspp_forward(feat, params, mult=1)    # (N,h,w,c_aspp) bf16

    nc = params["conv_out_w"].shape[0]
    logits = conv1x1(aspp_out, params["conv_out_w"],
                     jnp.ones((nc,), jnp.float32), params["conv_out_b"],
                     relu=False, out_dtype=jnp.float32)

    logits = logits.transpose(0, 3, 1, 2)            # small logits -> NCHW
    return bilinear_resize_nchw(logits, H, W)


# ----------------------------------------------------------------------------
if __name__ == "__main__":
    key = jax.random.PRNGKey(0)
    kx, kp = jax.random.split(key)

    N, C_IN, H, W = 2, 3, 32, 32
    C_BACKBONE, C_ASPP, NUM_CLASSES = 32, 16, 8   # small stand-ins for 2048 / 256 / |classes|

    x = jax.random.normal(kx, (N, C_IN, H, W), jnp.float32)
    params = init_params(kp, C_IN, C_BACKBONE, C_ASPP, NUM_CLASSES)

    fwd = jax.jit(functools.partial(deeplabv3_forward, backbone_stride=4))
    out = jax.block_until_ready(fwd(x, params))
    assert out.shape == (N, NUM_CLASSES, H, W), out.shape
    assert bool(jnp.all(jnp.isfinite(out)))
    print("KERNEL_OK")
</pallas_src>

<mosaic_0001>
module attributes {stable_mosaic.version = 11 : i64} {
  func.func @_matmul_affine_kernel(%arg0: i32, %arg1: i32, %arg2: i32, %arg3: memref<128x8xbf16, #tpu.memory_space<vmem>>, %arg4: memref<8x32xbf16, #tpu.memory_space<vmem>>, %arg5: memref<1x32xf32, #tpu.memory_space<vmem>>, %arg6: memref<1x32xf32, #tpu.memory_space<vmem>>, %arg7: memref<128x32xbf16, #tpu.memory_space<vmem>>, %arg8: memref<128x32xf32, #tpu.memory_space<vmem>>) attributes {dimension_semantics = [#tpu.dimension_semantics<parallel>, #tpu.dimension_semantics<parallel>, #tpu.dimension_semantics<arbitrary>], iteration_bounds = array<i64: 1, 1, 1>, scalar_prefetch = 0 : i64, scratch_operands = 1 : i64, tpu.core_type = #tpu.core_type<tc>, window_params = [{transform_indices = @transform_0, window_bounds = array<i64: 128, 8>}, {transform_indices = @transform_1, window_bounds = array<i64: 8, 32>}, {transform_indices = @transform_2, window_bounds = array<i64: 1, 32>}, {transform_indices = @transform_3, window_bounds = array<i64: 1, 32>}, {transform_indices = @transform_4, window_bounds = array<i64: 128, 32>}]} {
    %c0_i32 = arith.constant 0 : i32
    %0 = arith.cmpi eq, %arg2, %c0_i32 : i32
    %1 = arith.extui %0 : i1 to i32
    %c0_i32_0 = arith.constant 0 : i32
    %2 = arith.cmpi ne, %1, %c0_i32_0 : i32
    scf.if %2 {
      %cst_10 = arith.constant 0.000000e+00 : f32
      %12 = vector.broadcast %cst_10 : f32 to vector<128x32xf32>
      %c0_11 = arith.constant 0 : index
      %c0_12 = arith.constant 0 : index
      %13 = vector.load %arg8[%c0_11, %c0_12] : memref<128x32xf32, #tpu.memory_space<vmem>>, vector<128x32xf32>
      tpu.vector_store %arg8[%c0_11, %c0_12], %12 {strides = array<i32>} : memref<128x32xf32, #tpu.memory_space<vmem>>, vector<128x32xf32>,
    } else {
    }
    %c0 = arith.constant 0 : index
    %c0_1 = arith.constant 0 : index
    %3 = vector.load %arg8[%c0, %c0_1] : memref<128x32xf32, #tpu.memory_space<vmem>>, vector<128x32xf32>
    %c0_2 = arith.constant 0 : index
    %c0_3 = arith.constant 0 : index
    %4 = vector.load %arg3[%c0_2, %c0_3] : memref<128x8xbf16, #tpu.memory_space<vmem>>, vector<128x8xbf16>
    %c0_4 = arith.constant 0 : index
    %c0_5 = arith.constant 0 : index
    %5 = vector.load %arg4[%c0_4, %c0_5] : memref<8x32xbf16, #tpu.memory_space<vmem>>, vector<8x32xbf16>
    %cst = arith.constant dense<0.000000e+00> : vector<128x32xf32>
    %6 = tpu.matmul %4, %5, %cst {dimension_numbers = #tpu.dot_dimension_numbers<[1], [0], [0], [1], [0, 0, 1, 1], [], []>} : vector<128x8xbf16>, vector<8x32xbf16>, vector<128x32xf32> -> vector<128x32xf32>
    %7 = arith.addf %3, %6 : vector<128x32xf32>
    %c0_6 = arith.constant 0 : index
    %c0_7 = arith.constant 0 : index
    %8 = vector.load %arg8[%c0_6, %c0_7] : memref<128x32xf32, #tpu.memory_space<vmem>>, vector<128x32xf32>
    tpu.vector_store %arg8[%c0_6, %c0_7], %7 {strides = array<i32>} : memref<128x32xf32, #tpu.memory_space<vmem>>, vector<128x32xf32>,
    %c0_i32_8 = arith.constant 0 : i32
    %9 = arith.cmpi eq, %arg2, %c0_i32_8 : i32
    %10 = arith.extui %9 : i1 to i32
    %c0_i32_9 = arith.constant 0 : i32
    %11 = arith.cmpi ne, %10, %c0_i32_9 : i32
    scf.if %11 {
      %c0_10 = arith.constant 0 : index
      %c0_11 = arith.constant 0 : index
      %12 = vector.load %arg8[%c0_10, %c0_11] : memref<128x32xf32, #tpu.memory_space<vmem>>, vector<128x32xf32>
      %c0_12 = arith.constant 0 : index
      %c0_13 = arith.constant 0 : index
      %13 = vector.load %arg5[%c0_12, %c0_13] : memref<1x32xf32, #tpu.memory_space<vmem>>, vector<1x32xf32>
      %14 = vector.broadcast %13 : vector<1x32xf32> to vector<128x32xf32>
      %15 = arith.mulf %12, %14 : vector<128x32xf32>
      %c0_14 = arith.constant 0 : index
      %c0_15 = arith.constant 0 : index
      %16 = vector.load %arg6[%c0_14, %c0_15] : memref<1x32xf32, #tpu.memory_space<vmem>>, vector<1x32xf32>
      %17 = vector.broadcast %16 : vector<1x32xf32> to vector<128x32xf32>
      %18 = arith.addf %15, %17 : vector<128x32xf32>
      %cst_16 = arith.constant 0.000000e+00 : f32
      %19 = vector.broadcast %cst_16 : f32 to vector<128x32xf32>
      %20 = arith.maximumf %18, %19 : vector<128x32xf32>
      %21 = arith.truncf %20 : vector<128x32xf32> to vector<128x32xbf16>
      %c0_17 = arith.constant 0 : index
      %c0_18 = arith.constant 0 : index
      %22 = vector.load %arg7[%c0_17, %c0_18] : memref<128x32xbf16, #tpu.memory_space<vmem>>, vector<128x32xbf16>
      tpu.vector_store %arg7[%c0_17, %c0_18], %21 {strides = array<i32>} : memref<128x32xbf16, #tpu.memory_space<vmem>>, vector<128x32xbf16>,
    } else {
    }
    return
  }
  func.func @transform_0(%arg0: i32, %arg1: i32, %arg2: i32) -> (i32, i32) {
    %c0_i32 = arith.constant 0 : i32
    return %arg0, %arg2 : i32, i32
  }
  func.func @transform_1(%arg0: i32, %arg1: i32, %arg2: i32) -> (i32, i32) {
    %c0_i32 = arith.constant 0 : i32
    return %arg2, %arg1 : i32, i32
  }
  func.func @transform_2(%arg0: i32, %arg1: i32, %arg2: i32) -> (i32, i32) {
    %c0_i32 = arith.constant 0 : i32
    %c0_i32_0 = arith.constant 0 : i32
    return %c0_i32, %arg1 : i32, i32
  }
  func.func @transform_3(%arg0: i32, %arg1: i32, %arg2: i32) -> (i32, i32) {
    %c0_i32 = arith.constant 0 : i32
    %c0_i32_0 = arith.constant 0 : i32
    return %c0_i32, %arg1 : i32, i32
  }
  func.func @transform_4(%arg0: i32, %arg1: i32, %arg2: i32) -> (i32, i32) {
    %c0_i32 = arith.constant 0 : i32
    return %arg0, %arg1 : i32, i32
  }
}

module attributes {stable_mosaic.version = 11 : i64} {
  func.func @_conv3x3_kernel(%arg0: i32, %arg1: i32, %arg2: i32, %arg3: memref<1x44x44x32xbf16, #tpu.memory_space<vmem>>, %arg4: memref<9x32x16xbf16, #tpu.memory_space<vmem>>, %arg5: memref<1x16xf32, #tpu.memory_space<vmem>>, %arg6: memref<1x16xf32, #tpu.memory_space<vmem>>, %arg7: memref<1x8x8x16xbf16, #tpu.memory_space<vmem>>, %arg8: memref<64x16xf32, #tpu.memory_space<vmem>>) attributes {dimension_semantics = [#tpu.dimension_semantics<parallel>, #tpu.dimension_semantics<parallel>, #tpu.dimension_semantics<arbitrary>], iteration_bounds = array<i64: 2, 1, 1>, scalar_prefetch = 0 : i64, scratch_operands = 1 : i64, tpu.core_type = #tpu.core_type<tc>, window_params = [{transform_indices = @transform_0, window_bounds = array<i64: 1, 44, 44, 32>}, {transform_indices = @transform_1, window_bounds = array<i64: 9, 32, 16>}, {transform_indices = @transform_2, window_bounds = array<i64: 1, 16>}, {transform_indices = @transform_3, window_bounds = array<i64: 1, 16>}, {transform_indices = @transform_4, window_bounds = array<i64: 1, 8, 8, 16>}]} {
    %c0_i32 = arith.constant 0 : i32
    %0 = arith.cmpi eq, %arg2, %c0_i32 : i32
    %1 = arith.extui %0 : i1 to i32
    %c0_i32_0 = arith.constant 0 : i32
    %2 = arith.cmpi ne, %1, %c0_i32_0 : i32
    scf.if %2 {
      %cst_42 = arith.constant 0.000000e+00 : f32
      %62 = vector.broadcast %cst_42 : f32 to vector<64x16xf32>
      %c0_43 = arith.constant 0 : index
      %c0_44 = arith.constant 0 : index
      %63 = vector.load %arg8[%c0_43, %c0_44] : memref<64x16xf32, #tpu.memory_space<vmem>>, vector<64x16xf32>
      tpu.vector_store %arg8[%c0_43, %c0_44], %62 {strides = array<i32>} : memref<64x16xf32, #tpu.memory_space<vmem>>, vector<64x16xf32>,
    } else {
    }
    %c0 = arith.constant 0 : index
    %c0_1 = arith.constant 0 : index
    %3 = vector.load %arg8[%c0, %c0_1] : memref<64x16xf32, #tpu.memory_space<vmem>>, vector<64x16xf32>
    %c0_2 = arith.constant 0 : index
    %c0_3 = arith.constant 0 : index
    %c12 = arith.constant 12 : index
    %c0_4 = arith.constant 0 : index
    %4 = vector.load %arg3[%c0_2, %c0_3, %c12, %c0_4] : memref<1x44x44x32xbf16, #tpu.memory_space<vmem>>, vector<1x44x8x32xbf16>
    %5 = vector.shape_cast %4 : vector<1x44x8x32xbf16> to vector<44x8x32xbf16>
    %6 = vector.shape_cast %5 : vector<44x8x32xbf16> to vector<352x32xbf16>
    %7 = vector.extract_strided_slice %6 {offsets = [96, 0], sizes = [64, 32], strides = [1, 1]} : vector<352x32xbf16> to vector<64x32xbf16>
    %c0_5 = arith.constant 0 : index
    %c0_6 = arith.constant 0 : index
    %c0_7 = arith.constant 0 : index
    %8 = vector.load %arg4[%c0_5, %c0_6, %c0_7] : memref<9x32x16xbf16, #tpu.memory_space<vmem>>, vector<1x32x16xbf16>
    %9 = vector.shape_cast %8 : vector<1x32x16xbf16> to vector<32x16xbf16>
    %cst = arith.constant dense<0.000000e+00> : vector<64x16xf32>
    %10 = tpu.matmul %7, %9, %cst {dimension_numbers = #tpu.dot_dimension_numbers<[1], [0], [0], [1], [0, 0, 1, 1], [], []>} : vector<64x32xbf16>, vector<32x16xbf16>, vector<64x16xf32> -> vector<64x16xf32>
    %11 = arith.addf %3, %10 : vector<64x16xf32>
    %12 = vector.extract_strided_slice %6 {offsets = [144, 0], sizes = [64, 32], strides = [1, 1]} : vector<352x32xbf16> to vector<64x32xbf16>
    %c3 = arith.constant 3 : index
    %c0_8 = arith.constant 0 : index
    %c0_9 = arith.constant 0 : index
    %13 = vector.load %arg4[%c3, %c0_8, %c0_9] : memref<9x32x16xbf16, #tpu.memory_space<vmem>>, vector<1x32x16xbf16>
    %14 = vector.shape_cast %13 : vector<1x32x16xbf16> to vector<32x16xbf16>
    %cst_10 = arith.constant dense<0.000000e+00> : vector<64x16xf32>
    %15 = tpu.matmul %12, %14, %cst_10 {dimension_numbers = #tpu.dot_dimension_numbers<[1], [0], [0], [1], [0, 0, 1, 1], [], []>} : vector<64x32xbf16>, vector<32x16xbf16>, vector<64x16xf32> -> vector<64x16xf32>
    %16 = arith.addf %11, %15 : vector<64x16xf32>
    %17 = vector.extract_strided_slice %6 {offsets = [192, 0], sizes = [64, 32], strides = [1, 1]} : vector<352x32xbf16> to vector<64x32xbf16>
    %c6 = arith.constant 6 : index
    %c0_11 = arith.constant 0 : index
    %c0_12 = arith.constant 0 : index
    %18 = vector.load %arg4[%c6, %c0_11, %c0_12] : memref<9x32x16xbf16, #tpu.memory_space<vmem>>, vector<1x32x16xbf16>
    %19 = vector.shape_cast %18 : vector<1x32x16xbf16> to vector<32x16xbf16>
    %cst_13 = arith.constant dense<0.000000e+00> : vector<64x16xf32>
    %20 = tpu.matmul %17, %19, %cst_13 {dimension_numbers = #tpu.dot_dimension_numbers<[1], [0], [0], [1], [0, 0, 1, 1], [], []>} : vector<64x32xbf16>, vector<32x16xbf16>, vector<64x16xf32> -> vector<64x16xf32>
    %21 = arith.addf %16, %20 : vector<64x16xf32>
    %c0_14 = arith.constant 0 : index
    %c0_15 = arith.constant 0 : index
    %c18 = arith.constant 18 : index
    %c0_16 = arith.constant 0 : index
    %22 = vector.load %arg3[%c0_14, %c0_15, %c18, %c0_16] : memref<1x44x44x32xbf16, #tpu.memory_space<vmem>>, vector<1x44x8x32xbf16>
    %23 = vector.shape_cast %22 : vector<1x44x8x32xbf16> to vector<44x8x32xbf16>
    %24 = vector.shape_cast %23 : vector<44x8x32xbf16> to vector<352x32xbf16>
    %25 = vector.extract_strided_slice %24 {offsets = [96, 0], sizes = [64, 32], strides = [1, 1]} : vector<352x32xbf16> to vector<64x32xbf16>
    %c1 = arith.constant 1 : index
    %c0_17 = arith.constant 0 : index
    %c0_18 = arith.constant 0 : index
    %26 = vector.load %arg4[%c1, %c0_17, %c0_18] : memref<9x32x16xbf16, #tpu.memory_space<vmem>>, vector<1x32x16xbf16>
    %27 = vector.shape_cast %26 : vector<1x32x16xbf16> to vector<32x16xbf16>
    %cst_19 = arith.constant dense<0.000000e+00> : vector<64x16xf32>
    %28 = tpu.matmul %25, %27, %cst_19 {dimension_numbers = #tpu.dot_dimension_numbers<[1], [0], [0], [1], [0, 0, 1, 1], [], []>} : vector<64x32xbf16>, vector<32x16xbf16>, vector<64x16xf32> -> vector<64x16xf32>
    %29 = arith.addf %21, %28 : vector<64x16xf32>
    %30 = vector.extract_strided_slice %24 {offsets = [144, 0], sizes = [64, 32], strides = [1, 1]} : vector<352x32xbf16> to vector<64x32xbf16>
    %c4 = arith.constant 4 : index
    %c0_20 = arith.constant 0 : index
    %c0_21 = arith.constant 0 : index
    %31 = vector.load %arg4[%c4, %c0_20, %c0_21] : memref<9x32x16xbf16, #tpu.memory_space<vmem>>, vector<1x32x16xbf16>
    %32 = vector.shape_cast %31 : vector<1x32x16xbf16> to vector<32x16xbf16>
    %cst_22 = arith.constant dense<0.000000e+00> : vector<64x16xf32>
    %33 = tpu.matmul %30, %32, %cst_22 {dimension_numbers = #tpu.dot_dimension_numbers<[1], [0], [0], [1], [0, 0, 1, 1], [], []>} : vector<64x32xbf16>, vector<32x16xbf16>, vector<64x16xf32> -> vector<64x16xf32>
    %34 = arith.addf %29, %33 : vector<64x16xf32>
    %35 = vector.extract_strided_slice %24 {offsets = [192, 0], sizes = [64, 32], strides = [1, 1]} : vector<352x32xbf16> to vector<64x32xbf16>
    %c7 = arith.constant 7 : index
    %c0_23 = arith.constant 0 : index
    %c0_24 = arith.constant 0 : index
    %36 = vector.load %arg4[%c7, %c0_23, %c0_24] : memref<9x32x16xbf16, #tpu.memory_space<vmem>>, vector<1x32x16xbf16>
    %37 = vector.shape_cast %36 : vector<1x32x16xbf16> to vector<32x16xbf16>
    %cst_25 = arith.constant dense<0.000000e+00> : vector<64x16xf32>
    %38 = tpu.matmul %35, %37, %cst_25 {dimension_numbers = #tpu.dot_dimension_numbers<[1], [0], [0], [1], [0, 0, 1, 1], [], []>} : vector<64x32xbf16>, vector<32x16xbf16>, vector<64x16xf32> -> vector<64x16xf32>
    %39 = arith.addf %34, %38 : vector<64x16xf32>
    %c0_26 = arith.constant 0 : index
    %c0_27 = arith.constant 0 : index
    %c24 = arith.constant 24 : index
    %c0_28 = arith.constant 0 : index
    %40 = vector.load %arg3[%c0_26, %c0_27, %c24, %c0_28] : memref<1x44x44x32xbf16, #tpu.memory_space<vmem>>, vector<1x44x8x32xbf16>
    %41 = vector.shape_cast %40 : vector<1x44x8x32xbf16> to vector<44x8x32xbf16>
    %42 = vector.shape_cast %41 : vector<44x8x32xbf16> to vector<352x32xbf16>
    %43 = vector.extract_strided_slice %42 {offsets = [96, 0], sizes = [64, 32], strides = [1, 1]} : vector<352x32xbf16> to vector<64x32xbf16>
    %c2 = arith.constant 2 : index
    %c0_29 = arith.constant 0 : index
    %c0_30 = arith.constant 0 : index
    %44 = vector.load %arg4[%c2, %c0_29, %c0_30] : memref<9x32x16xbf16, #tpu.memory_space<vmem>>, vector<1x32x16xbf16>
    %45 = vector.shape_cast %44 : vector<1x32x16xbf16> to vector<32x16xbf16>
    %cst_31 = arith.constant dense<0.000000e+00> : vector<64x16xf32>
    %46 = tpu.matmul %43, %45, %cst_31 {dimension_numbers = #tpu.dot_dimension_numbers<[1], [0], [0], [1], [0, 0, 1, 1], [], []>} : vector<64x32xbf16>, vector<32x16xbf16>, vector<64x16xf32> -> vector<64x16xf32>
    %47 = arith.addf %39, %46 : vector<64x16xf32>
    %48 = vector.extract_strided_slice %42 {offsets = [144, 0], sizes = [64, 32], strides = [1, 1]} : vector<352x32xbf16> to vector<64x32xbf16>
    %c5 = arith.constant 5 : index
    %c0_32 = arith.constant 0 : index
    %c0_33 = arith.constant 0 : index
    %49 = vector.load %arg4[%c5, %c0_32, %c0_33] : memref<9x32x16xbf16, #tpu.memory_space<vmem>>, vector<1x32x16xbf16>
    %50 = vector.shape_cast %49 : vector<1x32x16xbf16> to vector<32x16xbf16>
    %cst_34 = arith.constant dense<0.000000e+00> : vector<64x16xf32>
    %51 = tpu.matmul %48, %50, %cst_34 {dimension_numbers = #tpu.dot_dimension_numbers<[1], [0], [0], [1], [0, 0, 1, 1], [], []>} : vector<64x32xbf16>, vector<32x16xbf16>, vector<64x16xf32> -> vector<64x16xf32>
    %52 = arith.addf %47, %51 : vector<64x16xf32>
    %53 = vector.extract_strided_slice %42 {offsets = [192, 0], sizes = [64, 32], strides = [1, 1]} : vector<352x32xbf16> to vector<64x32xbf16>
    %c8 = arith.constant 8 : index
    %c0_35 = arith.constant 0 : index
    %c0_36 = arith.constant 0 : index
    %54 = vector.load %arg4[%c8, %c0_35, %c0_36] : memref<9x32x16xbf16, #tpu.memory_space<vmem>>, vector<1x32x16xbf16>
    %55 = vector.shape_cast %54 : vector<1x32x16xbf16> to vector<32x16xbf16>
    %cst_37 = arith.constant dense<0.000000e+00> : vector<64x16xf32>
    %56 = tpu.matmul %53, %55, %cst_37 {dimension_numbers = #tpu.dot_dimension_numbers<[1], [0], [0], [1], [0, 0, 1, 1], [], []>} : vector<64x32xbf16>, vector<32x16xbf16>, vector<64x16xf32> -> vector<64x16xf32>
    %57 = arith.addf %52, %56 : vector<64x16xf32>
    %c0_38 = arith.constant 0 : index
    %c0_39 = arith.constant 0 : index
    %58 = vector.load %arg8[%c0_38, %c0_39] : memref<64x16xf32, #tpu.memory_space<vmem>>, vector<64x16xf32>
    tpu.vector_store %arg8[%c0_38, %c0_39], %57 {strides = array<i32>} : memref<64x16xf32, #tpu.memory_space<vmem>>, vector<64x16xf32>,
    %c0_i32_40 = arith.constant 0 : i32
    %59 = arith.cmpi eq, %arg2, %c0_i32_40 : i32
    %60 = arith.extui %59 : i1 to i32
    %c0_i32_41 = arith.constant 0 : i32
    %61 = arith.cmpi ne, %60, %c0_i32_41 : i32
    scf.if %61 {
      %c0_42 = arith.constant 0 : index
      %c0_43 = arith.constant 0 : index
      %62 = vector.load %arg8[%c0_42, %c0_43] : memref<64x16xf32, #tpu.memory_space<vmem>>, vector<64x16xf32>
      %c0_44 = arith.constant 0 : index
      %c0_45 = arith.constant 0 : index
      %63 = vector.load %arg5[%c0_44, %c0_45] : memref<1x16xf32, #tpu.memory_space<vmem>>, vector<1x16xf32>
      %64 = vector.broadcast %63 : vector<1x16xf32> to vector<64x16xf32>
      %65 = arith.mulf %62, %64 : vector<64x16xf32>
      %c0_46 = arith.constant 0 : index
      %c0_47 = arith.constant 0 : index
      %66 = vector.load %arg6[%c0_46, %c0_47] : memref<1x16xf32, #tpu.memory_space<vmem>>, vector<1x16xf32>
      %67 = vector.broadcast %66 : vector<1x16xf32> to vector<64x16xf32>
      %68 = arith.addf %65, %67 : vector<64x16xf32>
      %cst_48 = arith.constant 0.000000e+00 : f32
      %69 = vector.broadcast %cst_48 : f32 to vector<64x16xf32>
      %70 = arith.maximumf %68, %69 : vector<64x16xf32>
      %71 = vector.shape_cast %70 : vector<64x16xf32> to vector<1x8x8x16xf32>
      %72 = arith.truncf %71 : vector<1x8x8x16xf32> to vector<1x8x8x16xbf16>
      %c0_49 = arith.constant 0 : index
      %c0_50 = arith.constant 0 : index
      %c0_51 = arith.constant 0 : index
      %c0_52 = arith.constant 0 : index
      %73 = vector.load %arg7[%c0_49, %c0_50, %c0_51, %c0_52] : memref<1x8x8x16xbf16, #tpu.memory_space<vmem>>, vector<1x8x8x16xbf16>
      tpu.vector_store %arg7[%c0_49, %c0_50, %c0_51, %c0_52], %72 {strides = array<i32>} : memref<1x8x8x16xbf16, #tpu.memory_space<vmem>>, vector<1x8x8x16xbf16>,
    } else {
    }
    return
  }
  func.func @transform_0(%arg0: i32, %arg1: i32, %arg2: i32) -> (i32, i32, i32, i32) {
    %c0_i32 = arith.constant 0 : i32
    %c0_i32_0 = arith.constant 0 : i32
    %c0_i32_1 = arith.constant 0 : i32
    return %arg0, %c0_i32, %c0_i32_0, %arg2 : i32, i32, i32, i32
  }
  func.func @transform_1(%arg0: i32, %arg1: i32, %arg2: i32) -> (i32, i32, i32) {
    %c0_i32 = arith.constant 0 : i32
    %c0_i32_0 = arith.constant 0 : i32
    return %c0_i32, %arg2, %arg1 : i32, i32, i32
  }
  func.func @transform_2(%arg0: i32, %arg1: i32, %arg2: i32) -> (i32, i32) {
    %c0_i32 = arith.constant 0 : i32
    %c0_i32_0 = arith.constant 0 : i32
    return %c0_i32, %arg1 : i32, i32
  }
  func.func @transform_3(%arg0: i32, %arg1: i32, %arg2: i32) -> (i32, i32) {
    %c0_i32 = arith.constant 0 : i32
    %c0_i32_0 = arith.constant 0 : i32
    return %c0_i32, %arg1 : i32, i32
  }
  func.func @transform_4(%arg0: i32, %arg1: i32, %arg2: i32) -> (i32, i32, i32, i32) {
    %c0_i32 = arith.constant 0 : i32
    %c0_i32_0 = arith.constant 0 : i32
    %c0_i32_1 = arith.constant 0 : i32
    return %arg0, %c0_i32, %c0_i32_0, %arg1 : i32, i32, i32, i32
  }
}

module attributes {stable_mosaic.version = 11 : i64} {
  func.func @_conv3x3_kernel(%arg0: i32, %arg1: i32, %arg2: i32, %arg3: memref<1x44x44x32xbf16, #tpu.memory_space<vmem>>, %arg4: memref<9x32x16xbf16, #tpu.memory_space<vmem>>, %arg5: memref<1x16xf32, #tpu.memory_space<vmem>>, %arg6: memref<1x16xf32, #tpu.memory_space<vmem>>, %arg7: memref<1x8x8x16xbf16, #tpu.memory_space<vmem>>, %arg8: memref<64x16xf32, #tpu.memory_space<vmem>>) attributes {dimension_semantics = [#tpu.dimension_semantics<parallel>, #tpu.dimension_semantics<parallel>, #tpu.dimension_semantics<arbitrary>], iteration_bounds = array<i64: 2, 1, 1>, scalar_prefetch = 0 : i64, scratch_operands = 1 : i64, tpu.core_type = #tpu.core_type<tc>, window_params = [{transform_indices = @transform_0, window_bounds = array<i64: 1, 44, 44, 32>}, {transform_indices = @transform_1, window_bounds = array<i64: 9, 32, 16>}, {transform_indices = @transform_2, window_bounds = array<i64: 1, 16>}, {transform_indices = @transform_3, window_bounds = array<i64: 1, 16>}, {transform_indices = @transform_4, window_bounds = array<i64: 1, 8, 8, 16>}]} {
    %c0_i32 = arith.constant 0 : i32
    %0 = arith.cmpi eq, %arg2, %c0_i32 : i32
    %1 = arith.extui %0 : i1 to i32
    %c0_i32_0 = arith.constant 0 : i32
    %2 = arith.cmpi ne, %1, %c0_i32_0 : i32
    scf.if %2 {
      %cst_43 = arith.constant 0.000000e+00 : f32
      %62 = vector.broadcast %cst_43 : f32 to vector<64x16xf32>
      %c0_44 = arith.constant 0 : index
      %c0_45 = arith.constant 0 : index
      %63 = vector.load %arg8[%c0_44, %c0_45] : memref<64x16xf32, #tpu.memory_space<vmem>>, vector<64x16xf32>
      tpu.vector_store %arg8[%c0_44, %c0_45], %62 {strides = array<i32>} : memref<64x16xf32, #tpu.memory_space<vmem>>, vector<64x16xf32>,
    } else {
    }
    %c0 = arith.constant 0 : index
    %c0_1 = arith.constant 0 : index
    %3 = vector.load %arg8[%c0, %c0_1] : memref<64x16xf32, #tpu.memory_space<vmem>>, vector<64x16xf32>
    %c0_2 = arith.constant 0 : index
    %c0_3 = arith.constant 0 : index
    %c6 = arith.constant 6 : index
    %c0_4 = arith.constant 0 : index
    %4 = vector.load %arg3[%c0_2, %c0_3, %c6, %c0_4] : memref<1x44x44x32xbf16, #tpu.memory_space<vmem>>, vector<1x44x8x32xbf16>
    %5 = vector.shape_cast %4 : vector<1x44x8x32xbf16> to vector<44x8x32xbf16>
    %6 = vector.shape_cast %5 : vector<44x8x32xbf16> to vector<352x32xbf16>
    %7 = vector.extract_strided_slice %6 {offsets = [48, 0], sizes = [64, 32], strides = [1, 1]} : vector<352x32xbf16> to vector<64x32xbf16>
    %c0_5 = arith.constant 0 : index
    %c0_6 = arith.constant 0 : index
    %c0_7 = arith.constant 0 : index
    %8 = vector.load %arg4[%c0_5, %c0_6, %c0_7] : memref<9x32x16xbf16, #tpu.memory_space<vmem>>, vector<1x32x16xbf16>
    %9 = vector.shape_cast %8 : vector<1x32x16xbf16> to vector<32x16xbf16>
    %cst = arith.constant dense<0.000000e+00> : vector<64x16xf32>
    %10 = tpu.matmul %7, %9, %cst {dimension_numbers = #tpu.dot_dimension_numbers<[1], [0], [0], [1], [0, 0, 1, 1], [], []>} : vector<64x32xbf16>, vector<32x16xbf16>, vector<64x16xf32> -> vector<64x16xf32>
    %11 = arith.addf %3, %10 : vector<64x16xf32>
    %12 = vector.extract_strided_slice %6 {offsets = [144, 0], sizes = [64, 32], strides = [1, 1]} : vector<352x32xbf16> to vector<64x32xbf16>
    %c3 = arith.constant 3 : index
    %c0_8 = arith.constant 0 : index
    %c0_9 = arith.constant 0 : index
    %13 = vector.load %arg4[%c3, %c0_8, %c0_9] : memref<9x32x16xbf16, #tpu.memory_space<vmem>>, vector<1x32x16xbf16>
    %14 = vector.shape_cast %13 : vector<1x32x16xbf16> to vector<32x16xbf16>
    %cst_10 = arith.constant dense<0.000000e+00> : vector<64x16xf32>
    %15 = tpu.matmul %12, %14, %cst_10 {dimension_numbers = #tpu.dot_dimension_numbers<[1], [0], [0], [1], [0, 0, 1, 1], [], []>} : vector<64x32xbf16>, vector<32x16xbf16>, vector<64x16xf32> -> vector<64x16xf32>
    %16 = arith.addf %11, %15 : vector<64x16xf32>
    %17 = vector.extract_strided_slice %6 {offsets = [240, 0], sizes = [64, 32], strides = [1, 1]} : vector<352x32xbf16> to vector<64x32xbf16>
    %c6_11 = arith.constant 6 : index
    %c0_12 = arith.constant 0 : index
    %c0_13 = arith.constant 0 : index
    %18 = vector.load %arg4[%c6_11, %c0_12, %c0_13] : memref<9x32x16xbf16, #tpu.memory_space<vmem>>, vector<1x32x16xbf16>
    %19 = vector.shape_cast %18 : vector<1x32x16xbf16> to vector<32x16xbf16>
    %cst_14 = arith.constant dense<0.000000e+00> : vector<64x16xf32>
    %20 = tpu.matmul %17, %19, %cst_14 {dimension_numbers = #tpu.dot_dimension_numbers<[1], [0], [0], [1], [0, 0, 1, 1], [], []>} : vector<64x32xbf16>, vector<32x16xbf16>, vector<64x16xf32> -> vector<64x16xf32>
    %21 = arith.addf %16, %20 : vector<64x16xf32>
    %c0_15 = arith.constant 0 : index
    %c0_16 = arith.constant 0 : index
    %c18 = arith.constant 18 : index
    %c0_17 = arith.constant 0 : index
    %22 = vector.load %arg3[%c0_15, %c0_16, %c18, %c0_17] : memref<1x44x44x32xbf16, #tpu.memory_space<vmem>>, vector<1x44x8x32xbf16>
    %23 = vector.shape_cast %22 : vector<1x44x8x32xbf16> to vector<44x8x32xbf16>
    %24 = vector.shape_cast %23 : vector<44x8x32xbf16> to vector<352x32xbf16>
    %25 = vector.extract_strided_slice %24 {offsets = [48, 0], sizes = [64, 32], strides = [1, 1]} : vector<352x32xbf16> to vector<64x32xbf16>
    %c1 = arith.constant 1 : index
    %c0_18 = arith.constant 0 : index
    %c0_19 = arith.constant 0 : index
    %26 = vector.load %arg4[%c1, %c0_18, %c0_19] : memref<9x32x16xbf16, #tpu.memory_space<vmem>>, vector<1x32x16xbf16>
    %27 = vector.shape_cast %26 : vector<1x32x16xbf16> to vector<32x16xbf16>
    %cst_20 = arith.constant dense<0.000000e+00> : vector<64x16xf32>
    %28 = tpu.matmul %25, %27, %cst_20 {dimension_numbers = #tpu.dot_dimension_numbers<[1], [0], [0], [1], [0, 0, 1, 1], [], []>} : vector<64x32xbf16>, vector<32x16xbf16>, vector<64x16xf32> -> vector<64x16xf32>
    %29 = arith.addf %21, %28 : vector<64x16xf32>
    %30 = vector.extract_strided_slice %24 {offsets = [144, 0], sizes = [64, 32], strides = [1, 1]} : vector<352x32xbf16> to vector<64x32xbf16>
    %c4 = arith.constant 4 : index
    %c0_21 = arith.constant 0 : index
    %c0_22 = arith.constant 0 : index
    %31 = vector.load %arg4[%c4, %c0_21, %c0_22] : memref<9x32x16xbf16, #tpu.memory_space<vmem>>, vector<1x32x16xbf16>
    %32 = vector.shape_cast %31 : vector<1x32x16xbf16> to vector<32x16xbf16>
    %cst_23 = arith.constant dense<0.000000e+00> : vector<64x16xf32>
    %33 = tpu.matmul %30, %32, %cst_23 {dimension_numbers = #tpu.dot_dimension_numbers<[1], [0], [0], [1], [0, 0, 1, 1], [], []>} : vector<64x32xbf16>, vector<32x16xbf16>, vector<64x16xf32> -> vector<64x16xf32>
    %34 = arith.addf %29, %33 : vector<64x16xf32>
    %35 = vector.extract_strided_slice %24 {offsets = [240, 0], sizes = [64, 32], strides = [1, 1]} : vector<352x32xbf16> to vector<64x32xbf16>
    %c7 = arith.constant 7 : index
    %c0_24 = arith.constant 0 : index
    %c0_25 = arith.constant 0 : index
    %36 = vector.load %arg4[%c7, %c0_24, %c0_25] : memref<9x32x16xbf16, #tpu.memory_space<vmem>>, vector<1x32x16xbf16>
    %37 = vector.shape_cast %36 : vector<1x32x16xbf16> to vector<32x16xbf16>
    %cst_26 = arith.constant dense<0.000000e+00> : vector<64x16xf32>
    %38 = tpu.matmul %35, %37, %cst_26 {dimension_numbers = #tpu.dot_dimension_numbers<[1], [0], [0], [1], [0, 0, 1, 1], [], []>} : vector<64x32xbf16>, vector<32x16xbf16>, vector<64x16xf32> -> vector<64x16xf32>
    %39 = arith.addf %34, %38 : vector<64x16xf32>
    %c0_27 = arith.constant 0 : index
    %c0_28 = arith.constant 0 : index
    %c30 = arith.constant 30 : index
    %c0_29 = arith.constant 0 : index
    %40 = vector.load %arg3[%c0_27, %c0_28, %c30, %c0_29] : memref<1x44x44x32xbf16, #tpu.memory_space<vmem>>, vector<1x44x8x32xbf16>
    %41 = vector.shape_cast %40 : vector<1x44x8x32xbf16> to vector<44x8x32xbf16>
    %42 = vector.shape_cast %41 : vector<44x8x32xbf16> to vector<352x32xbf16>
    %43 = vector.extract_strided_slice %42 {offsets = [48, 0], sizes = [64, 32], strides = [1, 1]} : vector<352x32xbf16> to vector<64x32xbf16>
    %c2 = arith.constant 2 : index
    %c0_30 = arith.constant 0 : index
    %c0_31 = arith.constant 0 : index
    %44 = vector.load %arg4[%c2, %c0_30, %c0_31] : memref<9x32x16xbf16, #tpu.memory_space<vmem>>, vector<1x32x16xbf16>
    %45 = vector.shape_cast %44 : vector<1x32x16xbf16> to vector<32x16xbf16>
    %cst_32 = arith.constant dense<0.000000e+00> : vector<64x16xf32>
    %46 = tpu.matmul %43, %45, %cst_32 {dimension_numbers = #tpu.dot_dimension_numbers<[1], [0], [0], [1], [0, 0, 1, 1], [], []>} : vector<64x32xbf16>, vector<32x16xbf16>, vector<64x16xf32> -> vector<64x16xf32>
    %47 = arith.addf %39, %46 : vector<64x16xf32>
    %48 = vector.extract_strided_slice %42 {offsets = [144, 0], sizes = [64, 32], strides = [1, 1]} : vector<352x32xbf16> to vector<64x32xbf16>
    %c5 = arith.constant 5 : index
    %c0_33 = arith.constant 0 : index
    %c0_34 = arith.constant 0 : index
    %49 = vector.load %arg4[%c5, %c0_33, %c0_34] : memref<9x32x16xbf16, #tpu.memory_space<vmem>>, vector<1x32x16xbf16>
    %50 = vector.shape_cast %49 : vector<1x32x16xbf16> to vector<32x16xbf16>
    %cst_35 = arith.constant dense<0.000000e+00> : vector<64x16xf32>
    %51 = tpu.matmul %48, %50, %cst_35 {dimension_numbers = #tpu.dot_dimension_numbers<[1], [0], [0], [1], [0, 0, 1, 1], [], []>} : vector<64x32xbf16>, vector<32x16xbf16>, vector<64x16xf32> -> vector<64x16xf32>
    %52 = arith.addf %47, %51 : vector<64x16xf32>
    %53 = vector.extract_strided_slice %42 {offsets = [240, 0], sizes = [64, 32], strides = [1, 1]} : vector<352x32xbf16> to vector<64x32xbf16>
    %c8 = arith.constant 8 : index
    %c0_36 = arith.constant 0 : index
    %c0_37 = arith.constant 0 : index
    %54 = vector.load %arg4[%c8, %c0_36, %c0_37] : memref<9x32x16xbf16, #tpu.memory_space<vmem>>, vector<1x32x16xbf16>
    %55 = vector.shape_cast %54 : vector<1x32x16xbf16> to vector<32x16xbf16>
    %cst_38 = arith.constant dense<0.000000e+00> : vector<64x16xf32>
    %56 = tpu.matmul %53, %55, %cst_38 {dimension_numbers = #tpu.dot_dimension_numbers<[1], [0], [0], [1], [0, 0, 1, 1], [], []>} : vector<64x32xbf16>, vector<32x16xbf16>, vector<64x16xf32> -> vector<64x16xf32>
    %57 = arith.addf %52, %56 : vector<64x16xf32>
    %c0_39 = arith.constant 0 : index
    %c0_40 = arith.constant 0 : index
    %58 = vector.load %arg8[%c0_39, %c0_40] : memref<64x16xf32, #tpu.memory_space<vmem>>, vector<64x16xf32>
    tpu.vector_store %arg8[%c0_39, %c0_40], %57 {strides = array<i32>} : memref<64x16xf32, #tpu.memory_space<vmem>>, vector<64x16xf32>,
    %c0_i32_41 = arith.constant 0 : i32
    %59 = arith.cmpi eq, %arg2, %c0_i32_41 : i32
    %60 = arith.extui %59 : i1 to i32
    %c0_i32_42 = arith.constant 0 : i32
    %61 = arith.cmpi ne, %60, %c0_i32_42 : i32
    scf.if %61 {
      %c0_43 = arith.constant 0 : index
      %c0_44 = arith.constant 0 : index
      %62 = vector.load %arg8[%c0_43, %c0_44] : memref<64x16xf32, #tpu.memory_space<vmem>>, vector<64x16xf32>
      %c0_45 = arith.constant 0 : index
      %c0_46 = arith.constant 0 : index
      %63 = vector.load %arg5[%c0_45, %c0_46] : memref<1x16xf32, #tpu.memory_space<vmem>>, vector<1x16xf32>
      %64 = vector.broadcast %63 : vector<1x16xf32> to vector<64x16xf32>
      %65 = arith.mulf %62, %64 : vector<64x16xf32>
      %c0_47 = arith.constant 0 : index
      %c0_48 = arith.constant 0 : index
      %66 = vector.load %arg6[%c0_47, %c0_48] : memref<1x16xf32, #tpu.memory_space<vmem>>, vector<1x16xf32>
      %67 = vector.broadcast %66 : vector<1x16xf32> to vector<64x16xf32>
      %68 = arith.addf %65, %67 : vector<64x16xf32>
      %cst_49 = arith.constant 0.000000e+00 : f32
      %69 = vector.broadcast %cst_49 : f32 to vector<64x16xf32>
      %70 = arith.maximumf %68, %69 : vector<64x16xf32>
      %71 = vector.shape_cast %70 : vector<64x16xf32> to vector<1x8x8x16xf32>
      %72 = arith.truncf %71 : vector<1x8x8x16xf32> to vector<1x8x8x16xbf16>
      %c0_50 = arith.constant 0 : index
      %c0_51 = arith.constant 0 : index
      %c0_52 = arith.constant 0 : index
      %c0_53 = arith.constant 0 : index
      %73 = vector.load %arg7[%c0_50, %c0_51, %c0_52, %c0_53] : memref<1x8x8x16xbf16, #tpu.memory_space<vmem>>, vector<1x8x8x16xbf16>
      tpu.vector_store %arg7[%c0_50, %c0_51, %c0_52, %c0_53], %72 {strides = array<i32>} : memref<1x8x8x16xbf16, #tpu.memory_space<vmem>>, vector<1x8x8x16xbf16>,
    } else {
    }
    return
  }
  func.func @transform_0(%arg0: i32, %arg1: i32, %arg2: i32) -> (i32, i32, i32, i32) {
    %c0_i32 = arith.constant 0 : i32
    %c0_i32_0 = arith.constant 0 : i32
    %c0_i32_1 = arith.constant 0 : i32
    return %arg0, %c0_i32, %c0_i32_0, %arg2 : i32, i32, i32, i32
  }
  func.func @transform_1(%arg0: i32, %arg1: i32, %arg2: i32) -> (i32, i32, i32) {
    %c0_i32 = arith.constant 0 : i32
    %c0_i32_0 = arith.constant 0 : i32
    return %c0_i32, %arg2, %arg1 : i32, i32, i32
  }
  func.func @transform_2(%arg0: i32, %arg1: i32, %arg2: i32) -> (i32, i32) {
    %c0_i32 = arith.constant 0 : i32
    %c0_i32_0 = arith.constant 0 : i32
    return %c0_i32, %arg1 : i32, i32
  }
  func.func @transform_3(%arg0: i32, %arg1: i32, %arg2: i32) -> (i32, i32) {
    %c0_i32 = arith.constant 0 : i32
    %c0_i32_0 = arith.constant 0 : i32
    return %c0_i32, %arg1 : i32, i32
  }
  func.func @transform_4(%arg0: i32, %arg1: i32, %arg2: i32) -> (i32, i32, i32, i32) {
    %c0_i32 = arith.constant 0 : i32
    %c0_i32_0 = arith.constant 0 : i32
    %c0_i32_1 = arith.constant 0 : i32
    return %arg0, %c0_i32, %c0_i32_0, %arg1 : i32, i32, i32, i32
  }
}

module attributes {stable_mosaic.version = 11 : i64} {
  func.func @_conv3x3_kernel(%arg0: i32, %arg1: i32, %arg2: i32, %arg3: memref<1x44x44x32xbf16, #tpu.memory_space<vmem>>, %arg4: memref<9x32x16xbf16, #tpu.memory_space<vmem>>, %arg5: memref<1x16xf32, #tpu.memory_space<vmem>>, %arg6: memref<1x16xf32, #tpu.memory_space<vmem>>, %arg7: memref<1x8x8x16xbf16, #tpu.memory_space<vmem>>, %arg8: memref<64x16xf32, #tpu.memory_space<vmem>>) attributes {dimension_semantics = [#tpu.dimension_semantics<parallel>, #tpu.dimension_semantics<parallel>, #tpu.dimension_semantics<arbitrary>], iteration_bounds = array<i64: 2, 1, 1>, scalar_prefetch = 0 : i64, scratch_operands = 1 : i64, tpu.core_type = #tpu.core_type<tc>, window_params = [{transform_indices = @transform_0, window_bounds = array<i64: 1, 44, 44, 32>}, {transform_indices = @transform_1, window_bounds = array<i64: 9, 32, 16>}, {transform_indices = @transform_2, window_bounds = array<i64: 1, 16>}, {transform_indices = @transform_3, window_bounds = array<i64: 1, 16>}, {transform_indices = @transform_4, window_bounds = array<i64: 1, 8, 8, 16>}]} {
    %c0_i32 = arith.constant 0 : i32
    %0 = arith.cmpi eq, %arg2, %c0_i32 : i32
    %1 = arith.extui %0 : i1 to i32
    %c0_i32_0 = arith.constant 0 : i32
    %2 = arith.cmpi ne, %1, %c0_i32_0 : i32
    scf.if %2 {
      %cst_43 = arith.constant 0.000000e+00 : f32
      %62 = vector.broadcast %cst_43 : f32 to vector<64x16xf32>
      %c0_44 = arith.constant 0 : index
      %c0_45 = arith.constant 0 : index
      %63 = vector.load %arg8[%c0_44, %c0_45] : memref<64x16xf32, #tpu.memory_space<vmem>>, vector<64x16xf32>
      tpu.vector_store %arg8[%c0_44, %c0_45], %62 {strides = array<i32>} : memref<64x16xf32, #tpu.memory_space<vmem>>, vector<64x16xf32>,
    } else {
    }
    %c0 = arith.constant 0 : index
    %c0_1 = arith.constant 0 : index
    %3 = vector.load %arg8[%c0, %c0_1] : memref<64x16xf32, #tpu.memory_space<vmem>>, vector<64x16xf32>
    %c0_2 = arith.constant 0 : index
    %c0_3 = arith.constant 0 : index
    %c0_4 = arith.constant 0 : index
    %c0_5 = arith.constant 0 : index
    %4 = vector.load %arg3[%c0_2, %c0_3, %c0_4, %c0_5] : memref<1x44x44x32xbf16, #tpu.memory_space<vmem>>, vector<1x44x8x32xbf16>
    %5 = vector.shape_cast %4 : vector<1x44x8x32xbf16> to vector<44x8x32xbf16>
    %6 = vector.shape_cast %5 : vector<44x8x32xbf16> to vector<352x32xbf16>
    %7 = vector.extract_strided_slice %6 {offsets = [0, 0], sizes = [64, 32], strides = [1, 1]} : vector<352x32xbf16> to vector<64x32xbf16>
    %c0_6 = arith.constant 0 : index
    %c0_7 = arith.constant 0 : index
    %c0_8 = arith.constant 0 : index
    %8 = vector.load %arg4[%c0_6, %c0_7, %c0_8] : memref<9x32x16xbf16, #tpu.memory_space<vmem>>, vector<1x32x16xbf16>
    %9 = vector.shape_cast %8 : vector<1x32x16xbf16> to vector<32x16xbf16>
    %cst = arith.constant dense<0.000000e+00> : vector<64x16xf32>
    %10 = tpu.matmul %7, %9, %cst {dimension_numbers = #tpu.dot_dimension_numbers<[1], [0], [0], [1], [0, 0, 1, 1], [], []>} : vector<64x32xbf16>, vector<32x16xbf16>, vector<64x16xf32> -> vector<64x16xf32>
    %11 = arith.addf %3, %10 : vector<64x16xf32>
    %12 = vector.extract_strided_slice %6 {offsets = [144, 0], sizes = [64, 32], strides = [1, 1]} : vector<352x32xbf16> to vector<64x32xbf16>
    %c3 = arith.constant 3 : index
    %c0_9 = arith.constant 0 : index
    %c0_10 = arith.constant 0 : index
    %13 = vector.load %arg4[%c3, %c0_9, %c0_10] : memref<9x32x16xbf16, #tpu.memory_space<vmem>>, vector<1x32x16xbf16>
    %14 = vector.shape_cast %13 : vector<1x32x16xbf16> to vector<32x16xbf16>
    %cst_11 = arith.constant dense<0.000000e+00> : vector<64x16xf32>
    %15 = tpu.matmul %12, %14, %cst_11 {dimension_numbers = #tpu.dot_dimension_numbers<[1], [0], [0], [1], [0, 0, 1, 1], [], []>} : vector<64x32xbf16>, vector<32x16xbf16>, vector<64x16xf32> -> vector<64x16xf32>
    %16 = arith.addf %11, %15 : vector<64x16xf32>
    %17 = vector.extract_strided_slice %6 {offsets = [288, 0], sizes = [64, 32], strides = [1, 1]} : vector<352x32xbf16> to vector<64x32xbf16>
    %c6 = arith.constant 6 : index
    %c0_12 = arith.constant 0 : index
    %c0_13 = arith.constant 0 : index
    %18 = vector.load %arg4[%c6, %c0_12, %c0_13] : memref<9x32x16xbf16, #tpu.memory_space<vmem>>, vector<1x32x16xbf16>
    %19 = vector.shape_cast %18 : vector<1x32x16xbf16> to vector<32x16xbf16>
    %cst_14 = arith.constant dense<0.000000e+00> : vector<64x16xf32>
    %20 = tpu.matmul %17, %19, %cst_14 {dimension_numbers = #tpu.dot_dimension_numbers<[1], [0], [0], [1], [0, 0, 1, 1], [], []>} : vector<64x32xbf16>, vector<32x16xbf16>, vector<64x16xf32> -> vector<64x16xf32>
    %21 = arith.addf %16, %20 : vector<64x16xf32>
    %c0_15 = arith.constant 0 : index
    %c0_16 = arith.constant 0 : index
    %c18 = arith.constant 18 : index
    %c0_17 = arith.constant 0 : index
    %22 = vector.load %arg3[%c0_15, %c0_16, %c18, %c0_17] : memref<1x44x44x32xbf16, #tpu.memory_space<vmem>>, vector<1x44x8x32xbf16>
    %23 = vector.shape_cast %22 : vector<1x44x8x32xbf16> to vector<44x8x32xbf16>
    %24 = vector.shape_cast %23 : vector<44x8x32xbf16> to vector<352x32xbf16>
    %25 = vector.extract_strided_slice %24 {offsets = [0, 0], sizes = [64, 32], strides = [1, 1]} : vector<352x32xbf16> to vector<64x32xbf16>
    %c1 = arith.constant 1 : index
    %c0_18 = arith.constant 0 : index
    %c0_19 = arith.constant 0 : index
    %26 = vector.load %arg4[%c1, %c0_18, %c0_19] : memref<9x32x16xbf16, #tpu.memory_space<vmem>>, vector<1x32x16xbf16>
    %27 = vector.shape_cast %26 : vector<1x32x16xbf16> to vector<32x16xbf16>
    %cst_20 = arith.constant dense<0.000000e+00> : vector<64x16xf32>
    %28 = tpu.matmul %25, %27, %cst_20 {dimension_numbers = #tpu.dot_dimension_numbers<[1], [0], [0], [1], [0, 0, 1, 1], [], []>} : vector<64x32xbf16>, vector<32x16xbf16>, vector<64x16xf32> -> vector<64x16xf32>
    %29 = arith.addf %21, %28 : vector<64x16xf32>
    %30 = vector.extract_strided_slice %24 {offsets = [144, 0], sizes = [64, 32], strides = [1, 1]} : vector<352x32xbf16> to vector<64x32xbf16>
    %c4 = arith.constant 4 : index
    %c0_21 = arith.constant 0 : index
    %c0_22 = arith.constant 0 : index
    %31 = vector.load %arg4[%c4, %c0_21, %c0_22] : memref<9x32x16xbf16, #tpu.memory_space<vmem>>, vector<1x32x16xbf16>
    %32 = vector.shape_cast %31 : vector<1x32x16xbf16> to vector<32x16xbf16>
    %cst_23 = arith.constant dense<0.000000e+00> : vector<64x16xf32>
    %33 = tpu.matmul %30, %32, %cst_23 {dimension_numbers = #tpu.dot_dimension_numbers<[1], [0], [0], [1], [0, 0, 1, 1], [], []>} : vector<64x32xbf16>, vector<32x16xbf16>, vector<64x16xf32> -> vector<64x16xf32>
    %34 = arith.addf %29, %33 : vector<64x16xf32>
    %35 = vector.extract_strided_slice %24 {offsets = [288, 0], sizes = [64, 32], strides = [1, 1]} : vector<352x32xbf16> to vector<64x32xbf16>
    %c7 = arith.constant 7 : index
    %c0_24 = arith.constant 0 : index
    %c0_25 = arith.constant 0 : index
    %36 = vector.load %arg4[%c7, %c0_24, %c0_25] : memref<9x32x16xbf16, #tpu.memory_space<vmem>>, vector<1x32x16xbf16>
    %37 = vector.shape_cast %36 : vector<1x32x16xbf16> to vector<32x16xbf16>
    %cst_26 = arith.constant dense<0.000000e+00> : vector<64x16xf32>
    %38 = tpu.matmul %35, %37, %cst_26 {dimension_numbers = #tpu.dot_dimension_numbers<[1], [0], [0], [1], [0, 0, 1, 1], [], []>} : vector<64x32xbf16>, vector<32x16xbf16>, vector<64x16xf32> -> vector<64x16xf32>
    %39 = arith.addf %34, %38 : vector<64x16xf32>
    %c0_27 = arith.constant 0 : index
    %c0_28 = arith.constant 0 : index
    %c36 = arith.constant 36 : index
    %c0_29 = arith.constant 0 : index
    %40 = vector.load %arg3[%c0_27, %c0_28, %c36, %c0_29] : memref<1x44x44x32xbf16, #tpu.memory_space<vmem>>, vector<1x44x8x32xbf16>
    %41 = vector.shape_cast %40 : vector<1x44x8x32xbf16> to vector<44x8x32xbf16>
    %42 = vector.shape_cast %41 : vector<44x8x32xbf16> to vector<352x32xbf16>
    %43 = vector.extract_strided_slice %42 {offsets = [0, 0], sizes = [64, 32], strides = [1, 1]} : vector<352x32xbf16> to vector<64x32xbf16>
    %c2 = arith.constant 2 : index
    %c0_30 = arith.constant 0 : index
    %c0_31 = arith.constant 0 : index
    %44 = vector.load %arg4[%c2, %c0_30, %c0_31] : memref<9x32x16xbf16, #tpu.memory_space<vmem>>, vector<1x32x16xbf16>
    %45 = vector.shape_cast %44 : vector<1x32x16xbf16> to vector<32x16xbf16>
    %cst_32 = arith.constant dense<0.000000e+00> : vector<64x16xf32>
    %46 = tpu.matmul %43, %45, %cst_32 {dimension_numbers = #tpu.dot_dimension_numbers<[1], [0], [0], [1], [0, 0, 1, 1], [], []>} : vector<64x32xbf16>, vector<32x16xbf16>, vector<64x16xf32> -> vector<64x16xf32>
    %47 = arith.addf %39, %46 : vector<64x16xf32>
    %48 = vector.extract_strided_slice %42 {offsets = [144, 0], sizes = [64, 32], strides = [1, 1]} : vector<352x32xbf16> to vector<64x32xbf16>
    %c5 = arith.constant 5 : index
    %c0_33 = arith.constant 0 : index
    %c0_34 = arith.constant 0 : index
    %49 = vector.load %arg4[%c5, %c0_33, %c0_34] : memref<9x32x16xbf16, #tpu.memory_space<vmem>>, vector<1x32x16xbf16>
    %50 = vector.shape_cast %49 : vector<1x32x16xbf16> to vector<32x16xbf16>
    %cst_35 = arith.constant dense<0.000000e+00> : vector<64x16xf32>
    %51 = tpu.matmul %48, %50, %cst_35 {dimension_numbers = #tpu.dot_dimension_numbers<[1], [0], [0], [1], [0, 0, 1, 1], [], []>} : vector<64x32xbf16>, vector<32x16xbf16>, vector<64x16xf32> -> vector<64x16xf32>
    %52 = arith.addf %47, %51 : vector<64x16xf32>
    %53 = vector.extract_strided_slice %42 {offsets = [288, 0], sizes = [64, 32], strides = [1, 1]} : vector<352x32xbf16> to vector<64x32xbf16>
    %c8 = arith.constant 8 : index
    %c0_36 = arith.constant 0 : index
    %c0_37 = arith.constant 0 : index
    %54 = vector.load %arg4[%c8, %c0_36, %c0_37] : memref<9x32x16xbf16, #tpu.memory_space<vmem>>, vector<1x32x16xbf16>
    %55 = vector.shape_cast %54 : vector<1x32x16xbf16> to vector<32x16xbf16>
    %cst_38 = arith.constant dense<0.000000e+00> : vector<64x16xf32>
    %56 = tpu.matmul %53, %55, %cst_38 {dimension_numbers = #tpu.dot_dimension_numbers<[1], [0], [0], [1], [0, 0, 1, 1], [], []>} : vector<64x32xbf16>, vector<32x16xbf16>, vector<64x16xf32> -> vector<64x16xf32>
    %57 = arith.addf %52, %56 : vector<64x16xf32>
    %c0_39 = arith.constant 0 : index
    %c0_40 = arith.constant 0 : index
    %58 = vector.load %arg8[%c0_39, %c0_40] : memref<64x16xf32, #tpu.memory_space<vmem>>, vector<64x16xf32>
    tpu.vector_store %arg8[%c0_39, %c0_40], %57 {strides = array<i32>} : memref<64x16xf32, #tpu.memory_space<vmem>>, vector<64x16xf32>,
    %c0_i32_41 = arith.constant 0 : i32
    %59 = arith.cmpi eq, %arg2, %c0_i32_41 : i32
    %60 = arith.extui %59 : i1 to i32
    %c0_i32_42 = arith.constant 0 : i32
    %61 = arith.cmpi ne, %60, %c0_i32_42 : i32
    scf.if %61 {
      %c0_43 = arith.constant 0 : index
      %c0_44 = arith.constant 0 : index
      %62 = vector.load %arg8[%c0_43, %c0_44] : memref<64x16xf32, #tpu.memory_space<vmem>>, vector<64x16xf32>
      %c0_45 = arith.constant 0 : index
      %c0_46 = arith.constant 0 : index
      %63 = vector.load %arg5[%c0_45, %c0_46] : memref<1x16xf32, #tpu.memory_space<vmem>>, vector<1x16xf32>
      %64 = vector.broadcast %63 : vector<1x16xf32> to vector<64x16xf32>
      %65 = arith.mulf %62, %64 : vector<64x16xf32>
      %c0_47 = arith.constant 0 : index
      %c0_48 = arith.constant 0 : index
      %66 = vector.load %arg6[%c0_47, %c0_48] : memref<1x16xf32, #tpu.memory_space<vmem>>, vector<1x16xf32>
      %67 = vector.broadcast %66 : vector<1x16xf32> to vector<64x16xf32>
      %68 = arith.addf %65, %67 : vector<64x16xf32>
      %cst_49 = arith.constant 0.000000e+00 : f32
      %69 = vector.broadcast %cst_49 : f32 to vector<64x16xf32>
      %70 = arith.maximumf %68, %69 : vector<64x16xf32>
      %71 = vector.shape_cast %70 : vector<64x16xf32> to vector<1x8x8x16xf32>
      %72 = arith.truncf %71 : vector<1x8x8x16xf32> to vector<1x8x8x16xbf16>
      %c0_50 = arith.constant 0 : index
      %c0_51 = arith.constant 0 : index
      %c0_52 = arith.constant 0 : index
      %c0_53 = arith.constant 0 : index
      %73 = vector.load %arg7[%c0_50, %c0_51, %c0_52, %c0_53] : memref<1x8x8x16xbf16, #tpu.memory_space<vmem>>, vector<1x8x8x16xbf16>
      tpu.vector_store %arg7[%c0_50, %c0_51, %c0_52, %c0_53], %72 {strides = array<i32>} : memref<1x8x8x16xbf16, #tpu.memory_space<vmem>>, vector<1x8x8x16xbf16>,
    } else {
    }
    return
  }
  func.func @transform_0(%arg0: i32, %arg1: i32, %arg2: i32) -> (i32, i32, i32, i32) {
    %c0_i32 = arith.constant 0 : i32
    %c0_i32_0 = arith.constant 0 : i32
    %c0_i32_1 = arith.constant 0 : i32
    return %arg0, %c0_i32, %c0_i32_0, %arg2 : i32, i32, i32, i32
  }
  func.func @transform_1(%arg0: i32, %arg1: i32, %arg2: i32) -> (i32, i32, i32) {
    %c0_i32 = arith.constant 0 : i32
    %c0_i32_0 = arith.constant 0 : i32
    return %c0_i32, %arg2, %arg1 : i32, i32, i32
  }
  func.func @transform_2(%arg0: i32, %arg1: i32, %arg2: i32) -> (i32, i32) {
    %c0_i32 = arith.constant 0 : i32
    %c0_i32_0 = arith.constant 0 : i32
    return %c0_i32, %arg1 : i32, i32
  }
  func.func @transform_3(%arg0: i32, %arg1: i32, %arg2: i32) -> (i32, i32) {
    %c0_i32 = arith.constant 0 : i32
    %c0_i32_0 = arith.constant 0 : i32
    return %c0_i32, %arg1 : i32, i32
  }
  func.func @transform_4(%arg0: i32, %arg1: i32, %arg2: i32) -> (i32, i32, i32, i32) {
    %c0_i32 = arith.constant 0 : i32
    %c0_i32_0 = arith.constant 0 : i32
    %c0_i32_1 = arith.constant 0 : i32
    return %arg0, %c0_i32, %c0_i32_0, %arg1 : i32, i32, i32, i32
  }
}

module attributes {stable_mosaic.version = 11 : i64} {
  func.func @_gap_kernel(%arg0: i32, %arg1: i32, %arg2: memref<1x64x32xbf16, #tpu.memory_space<vmem>>, %arg3: memref<1x1x32xf32, #tpu.memory_space<vmem>>, %arg4: memref<1x32xf32, #tpu.memory_space<vmem>>) attributes {dimension_semantics = [#tpu.dimension_semantics<parallel>, #tpu.dimension_semantics<arbitrary>], iteration_bounds = array<i64: 2, 1>, scalar_prefetch = 0 : i64, scratch_operands = 1 : i64, tpu.core_type = #tpu.core_type<tc>, window_params = [{transform_indices = @transform_0, window_bounds = array<i64: 1, 64, 32>}, {transform_indices = @transform_1, window_bounds = array<i64: 1, 1, 32>}]} {
    %c0_i32 = arith.constant 0 : i32
    %0 = arith.cmpi eq, %arg1, %c0_i32 : i32
    %1 = arith.extui %0 : i1 to i32
    %c0_i32_0 = arith.constant 0 : i32
    %2 = arith.cmpi ne, %1, %c0_i32_0 : i32
    scf.if %2 {
      %cst_9 = arith.constant 0.000000e+00 : f32
      %14 = vector.broadcast %cst_9 : f32 to vector<1x32xf32>
      %c0_10 = arith.constant 0 : index
      %c0_11 = arith.constant 0 : index
      %15 = vector.load %arg4[%c0_10, %c0_11] : memref<1x32xf32, #tpu.memory_space<vmem>>, vector<1x32xf32>
      tpu.vector_store %arg4[%c0_10, %c0_11], %14 {strides = array<i32>} : memref<1x32xf32, #tpu.memory_space<vmem>>, vector<1x32xf32>,
    } else {
    }
    %c0 = arith.constant 0 : index
    %c0_1 = arith.constant 0 : index
    %c0_2 = arith.constant 0 : index
    %3 = vector.load %arg2[%c0, %c0_1, %c0_2] : memref<1x64x32xbf16, #tpu.memory_space<vmem>>, vector<1x64x32xbf16>
    %4 = vector.shape_cast %3 : vector<1x64x32xbf16> to vector<64x32xbf16>
    %5 = arith.extf %4 : vector<64x32xbf16> to vector<64x32xf32>
    %c0_3 = arith.constant 0 : index
    %c0_4 = arith.constant 0 : index
    %6 = vector.load %arg4[%c0_3, %c0_4] : memref<1x32xf32, #tpu.memory_space<vmem>>, vector<1x32xf32>
    %cst = arith.constant dense<0.000000e+00> : vector<32xf32>
    %7 = vector.multi_reduction <add>, %5, %cst [0] : vector<64x32xf32> to vector<32xf32>
    %8 = vector.shape_cast %7 : vector<32xf32> to vector<1x32xf32>
    %9 = arith.addf %6, %8 : vector<1x32xf32>
    %c0_5 = arith.constant 0 : index
    %c0_6 = arith.constant 0 : index
    %10 = vector.load %arg4[%c0_5, %c0_6] : memref<1x32xf32, #tpu.memory_space<vmem>>, vector<1x32xf32>
    tpu.vector_store %arg4[%c0_5, %c0_6], %9 {strides = array<i32>} : memref<1x32xf32, #tpu.memory_space<vmem>>, vector<1x32xf32>,
    %c0_i32_7 = arith.constant 0 : i32
    %11 = arith.cmpi eq, %arg1, %c0_i32_7 : i32
    %12 = arith.extui %11 : i1 to i32
    %c0_i32_8 = arith.constant 0 : i32
    %13 = arith.cmpi ne, %12, %c0_i32_8 : i32
    scf.if %13 {
      %c0_9 = arith.constant 0 : index
      %c0_10 = arith.constant 0 : index
      %14 = vector.load %arg4[%c0_9, %c0_10] : memref<1x32xf32, #tpu.memory_space<vmem>>, vector<1x32xf32>
      %cst_11 = arith.constant 1.562500e-02 : f32
      %15 = vector.broadcast %cst_11 : f32 to vector<1x32xf32>
      %16 = arith.mulf %14, %15 : vector<1x32xf32>
      %17 = vector.shape_cast %16 : vector<1x32xf32> to vector<1x1x32xf32>
      %c0_12 = arith.constant 0 : index
      %c0_13 = arith.constant 0 : index
      %c0_14 = arith.constant 0 : index
      %18 = vector.load %arg3[%c0_12, %c0_13, %c0_14] : memref<1x1x32xf32, #tpu.memory_space<vmem>>, vector<1x1x32xf32>
      tpu.vector_store %arg3[%c0_12, %c0_13, %c0_14], %17 {strides = array<i32>} : memref<1x1x32xf32, #tpu.memory_space<vmem>>, vector<1x1x32xf32>,
    } else {
    }
    return
  }
  func.func @transform_0(%arg0: i32, %arg1: i32) -> (i32, i32, i32) {
    %c0_i32 = arith.constant 0 : i32
    %c0_i32_0 = arith.constant 0 : i32
    return %arg0, %arg1, %c0_i32 : i32, i32, i32
  }
  func.func @transform_1(%arg0: i32, %arg1: i32) -> (i32, i32, i32) {
    %c0_i32 = arith.constant 0 : i32
    %c0_i32_0 = arith.constant 0 : i32
    %c0_i32_1 = arith.constant 0 : i32
    return %arg0, %c0_i32, %c0_i32_0 : i32, i32, i32
  }
}

module attributes {stable_mosaic.version = 11 : i64} {
  func.func @_matmul_affine_kernel(%arg0: i32, %arg1: i32, %arg2: i32, %arg3: memref<8x32xbf16, #tpu.memory_space<vmem>>, %arg4: memref<32x16xbf16, #tpu.memory_space<vmem>>, %arg5: memref<1x16xf32, #tpu.memory_space<vmem>>, %arg6: memref<1x16xf32, #tpu.memory_space<vmem>>, %arg7: memref<8x16xf32, #tpu.memory_space<vmem>>, %arg8: memref<8x16xf32, #tpu.memory_space<vmem>>) attributes {dimension_semantics = [#tpu.dimension_semantics<parallel>, #tpu.dimension_semantics<parallel>, #tpu.dimension_semantics<arbitrary>], iteration_bounds = array<i64: 1, 1, 1>, scalar_prefetch = 0 : i64, scratch_operands = 1 : i64, tpu.core_type = #tpu.core_type<tc>, window_params = [{transform_indices = @transform_0, window_bounds = array<i64: 8, 32>}, {transform_indices = @transform_1, window_bounds = array<i64: 32, 16>}, {transform_indices = @transform_2, window_bounds = array<i64: 1, 16>}, {transform_indices = @transform_3, window_bounds = array<i64: 1, 16>}, {transform_indices = @transform_4, window_bounds = array<i64: 8, 16>}]} {
    %c0_i32 = arith.constant 0 : i32
    %0 = arith.cmpi eq, %arg2, %c0_i32 : i32
    %1 = arith.extui %0 : i1 to i32
    %c0_i32_0 = arith.constant 0 : i32
    %2 = arith.cmpi ne, %1, %c0_i32_0 : i32
    scf.if %2 {
      %cst_10 = arith.constant 0.000000e+00 : f32
      %12 = vector.broadcast %cst_10 : f32 to vector<8x16xf32>
      %c0_11 = arith.constant 0 : index
      %c0_12 = arith.constant 0 : index
      %13 = vector.load %arg8[%c0_11, %c0_12] : memref<8x16xf32, #tpu.memory_space<vmem>>, vector<8x16xf32>
      tpu.vector_store %arg8[%c0_11, %c0_12], %12 {strides = array<i32>} : memref<8x16xf32, #tpu.memory_space<vmem>>, vector<8x16xf32>,
    } else {
    }
    %c0 = arith.constant 0 : index
    %c0_1 = arith.constant 0 : index
    %3 = vector.load %arg8[%c0, %c0_1] : memref<8x16xf32, #tpu.memory_space<vmem>>, vector<8x16xf32>
    %c0_2 = arith.constant 0 : index
    %c0_3 = arith.constant 0 : index
    %4 = vector.load %arg3[%c0_2, %c0_3] : memref<8x32xbf16, #tpu.memory_space<vmem>>, vector<8x32xbf16>
    %c0_4 = arith.constant 0 : index
    %c0_5 = arith.constant 0 : index
    %5 = vector.load %arg4[%c0_4, %c0_5] : memref<32x16xbf16, #tpu.memory_space<vmem>>, vector<32x16xbf16>
    %cst = arith.constant dense<0.000000e+00> : vector<8x16xf32>
    %6 = tpu.matmul %4, %5, %cst {dimension_numbers = #tpu.dot_dimension_numbers<[1], [0], [0], [1], [0, 0, 1, 1], [], []>} : vector<8x32xbf16>, vector<32x16xbf16>, vector<8x16xf32> -> vector<8x16xf32>
    %7 = arith.addf %3, %6 : vector<8x16xf32>
    %c0_6 = arith.constant 0 : index
    %c0_7 = arith.constant 0 : index
    %8 = vector.load %arg8[%c0_6, %c0_7] : memref<8x16xf32, #tpu.memory_space<vmem>>, vector<8x16xf32>
    tpu.vector_store %arg8[%c0_6, %c0_7], %7 {strides = array<i32>} : memref<8x16xf32, #tpu.memory_space<vmem>>, vector<8x16xf32>,
    %c0_i32_8 = arith.constant 0 : i32
    %9 = arith.cmpi eq, %arg2, %c0_i32_8 : i32
    %10 = arith.extui %9 : i1 to i32
    %c0_i32_9 = arith.constant 0 : i32
    %11 = arith.cmpi ne, %10, %c0_i32_9 : i32
    scf.if %11 {
      %c0_10 = arith.constant 0 : index
      %c0_11 = arith.constant 0 : index
      %12 = vector.load %arg8[%c0_10, %c0_11] : memref<8x16xf32, #tpu.memory_space<vmem>>, vector<8x16xf32>
      %c0_12 = arith.constant 0 : index
      %c0_13 = arith.constant 0 : index
      %13 = vector.load %arg5[%c0_12, %c0_13] : memref<1x16xf32, #tpu.memory_space<vmem>>, vector<1x16xf32>
      %14 = vector.broadcast %13 : vector<1x16xf32> to vector<8x16xf32>
      %15 = arith.mulf %12, %14 : vector<8x16xf32>
      %c0_14 = arith.constant 0 : index
      %c0_15 = arith.constant 0 : index
      %16 = vector.load %arg6[%c0_14, %c0_15] : memref<1x16xf32, #tpu.memory_space<vmem>>, vector<1x16xf32>
      %17 = vector.broadcast %16 : vector<1x16xf32> to vector<8x16xf32>
      %18 = arith.addf %15, %17 : vector<8x16xf32>
      %cst_16 = arith.constant 0.000000e+00 : f32
      %19 = vector.broadcast %cst_16 : f32 to vector<8x16xf32>
      %20 = arith.maximumf %18, %19 : vector<8x16xf32>
      %c0_17 = arith.constant 0 : index
      %c0_18 = arith.constant 0 : index
      %21 = vector.load %arg7[%c0_17, %c0_18] : memref<8x16xf32, #tpu.memory_space<vmem>>, vector<8x16xf32>
      tpu.vector_store %arg7[%c0_17, %c0_18], %20 {strides = array<i32>} : memref<8x16xf32, #tpu.memory_space<vmem>>, vector<8x16xf32>,
    } else {
    }
    return
  }
  func.func @transform_0(%arg0: i32, %arg1: i32, %arg2: i32) -> (i32, i32) {
    %c0_i32 = arith.constant 0 : i32
    return %arg0, %arg2 : i32, i32
  }
  func.func @transform_1(%arg0: i32, %arg1: i32, %arg2: i32) -> (i32, i32) {
    %c0_i32 = arith.constant 0 : i32
    return %arg2, %arg1 : i32, i32
  }
  func.func @transform_2(%arg0: i32, %arg1: i32, %arg2: i32) -> (i32, i32) {
    %c0_i32 = arith.constant 0 : i32
    %c0_i32_0 = arith.constant 0 : i32
    return %c0_i32, %arg1 : i32, i32
  }
  func.func @transform_3(%arg0: i32, %arg1: i32, %arg2: i32) -> (i32, i32) {
    %c0_i32 = arith.constant 0 : i32
    %c0_i32_0 = arith.constant 0 : i32
    return %c0_i32, %arg1 : i32, i32
  }
  func.func @transform_4(%arg0: i32, %arg1: i32, %arg2: i32) -> (i32, i32) {
    %c0_i32 = arith.constant 0 : i32
    return %arg0, %arg1 : i32, i32
  }
}

module attributes {stable_mosaic.version = 11 : i64} {
  func.func @_matmul_affine_kernel(%arg0: i32, %arg1: i32, %arg2: i32, %arg3: memref<128x32xbf16, #tpu.memory_space<vmem>>, %arg4: memref<32x16xbf16, #tpu.memory_space<vmem>>, %arg5: memref<1x16xf32, #tpu.memory_space<vmem>>, %arg6: memref<1x16xf32, #tpu.memory_space<vmem>>, %arg7: memref<128x16xbf16, #tpu.memory_space<vmem>>, %arg8: memref<128x16xf32, #tpu.memory_space<vmem>>) attributes {dimension_semantics = [#tpu.dimension_semantics<parallel>, #tpu.dimension_semantics<parallel>, #tpu.dimension_semantics<arbitrary>], iteration_bounds = array<i64: 1, 1, 1>, scalar_prefetch = 0 : i64, scratch_operands = 1 : i64, tpu.core_type = #tpu.core_type<tc>, window_params = [{transform_indices = @transform_0, window_bounds = array<i64: 128, 32>}, {transform_indices = @transform_1, window_bounds = array<i64: 32, 16>}, {transform_indices = @transform_2, window_bounds = array<i64: 1, 16>}, {transform_indices = @transform_3, window_bounds = array<i64: 1, 16>}, {transform_indices = @transform_4, window_bounds = array<i64: 128, 16>}]} {
    %c0_i32 = arith.constant 0 : i32
    %0 = arith.cmpi eq, %arg2, %c0_i32 : i32
    %1 = arith.extui %0 : i1 to i32
    %c0_i32_0 = arith.constant 0 : i32
    %2 = arith.cmpi ne, %1, %c0_i32_0 : i32
    scf.if %2 {
      %cst_10 = arith.constant 0.000000e+00 : f32
      %12 = vector.broadcast %cst_10 : f32 to vector<128x16xf32>
      %c0_11 = arith.constant 0 : index
      %c0_12 = arith.constant 0 : index
      %13 = vector.load %arg8[%c0_11, %c0_12] : memref<128x16xf32, #tpu.memory_space<vmem>>, vector<128x16xf32>
      tpu.vector_store %arg8[%c0_11, %c0_12], %12 {strides = array<i32>} : memref<128x16xf32, #tpu.memory_space<vmem>>, vector<128x16xf32>,
    } else {
    }
    %c0 = arith.constant 0 : index
    %c0_1 = arith.constant 0 : index
    %3 = vector.load %arg8[%c0, %c0_1] : memref<128x16xf32, #tpu.memory_space<vmem>>, vector<128x16xf32>
    %c0_2 = arith.constant 0 : index
    %c0_3 = arith.constant 0 : index
    %4 = vector.load %arg3[%c0_2, %c0_3] : memref<128x32xbf16, #tpu.memory_space<vmem>>, vector<128x32xbf16>
    %c0_4 = arith.constant 0 : index
    %c0_5 = arith.constant 0 : index
    %5 = vector.load %arg4[%c0_4, %c0_5] : memref<32x16xbf16, #tpu.memory_space<vmem>>, vector<32x16xbf16>
    %cst = arith.constant dense<0.000000e+00> : vector<128x16xf32>
    %6 = tpu.matmul %4, %5, %cst {dimension_numbers = #tpu.dot_dimension_numbers<[1], [0], [0], [1], [0, 0, 1, 1], [], []>} : vector<128x32xbf16>, vector<32x16xbf16>, vector<128x16xf32> -> vector<128x16xf32>
    %7 = arith.addf %3, %6 : vector<128x16xf32>
    %c0_6 = arith.constant 0 : index
    %c0_7 = arith.constant 0 : index
    %8 = vector.load %arg8[%c0_6, %c0_7] : memref<128x16xf32, #tpu.memory_space<vmem>>, vector<128x16xf32>
    tpu.vector_store %arg8[%c0_6, %c0_7], %7 {strides = array<i32>} : memref<128x16xf32, #tpu.memory_space<vmem>>, vector<128x16xf32>,
    %c0_i32_8 = arith.constant 0 : i32
    %9 = arith.cmpi eq, %arg2, %c0_i32_8 : i32
    %10 = arith.extui %9 : i1 to i32
    %c0_i32_9 = arith.constant 0 : i32
    %11 = arith.cmpi ne, %10, %c0_i32_9 : i32
    scf.if %11 {
      %c0_10 = arith.constant 0 : index
      %c0_11 = arith.constant 0 : index
      %12 = vector.load %arg8[%c0_10, %c0_11] : memref<128x16xf32, #tpu.memory_space<vmem>>, vector<128x16xf32>
      %c0_12 = arith.constant 0 : index
      %c0_13 = arith.constant 0 : index
      %13 = vector.load %arg5[%c0_12, %c0_13] : memref<1x16xf32, #tpu.memory_space<vmem>>, vector<1x16xf32>
      %14 = vector.broadcast %13 : vector<1x16xf32> to vector<128x16xf32>
      %15 = arith.mulf %12, %14 : vector<128x16xf32>
      %c0_14 = arith.constant 0 : index
      %c0_15 = arith.constant 0 : index
      %16 = vector.load %arg6[%c0_14, %c0_15] : memref<1x16xf32, #tpu.memory_space<vmem>>, vector<1x16xf32>
      %17 = vector.broadcast %16 : vector<1x16xf32> to vector<128x16xf32>
      %18 = arith.addf %15, %17 : vector<128x16xf32>
      %cst_16 = arith.constant 0.000000e+00 : f32
      %19 = vector.broadcast %cst_16 : f32 to vector<128x16xf32>
      %20 = arith.maximumf %18, %19 : vector<128x16xf32>
      %21 = arith.truncf %20 : vector<128x16xf32> to vector<128x16xbf16>
      %c0_17 = arith.constant 0 : index
      %c0_18 = arith.constant 0 : index
      %22 = vector.load %arg7[%c0_17, %c0_18] : memref<128x16xbf16, #tpu.memory_space<vmem>>, vector<128x16xbf16>
      tpu.vector_store %arg7[%c0_17, %c0_18], %21 {strides = array<i32>} : memref<128x16xbf16, #tpu.memory_space<vmem>>, vector<128x16xbf16>,
    } else {
    }
    return
  }
  func.func @transform_0(%arg0: i32, %arg1: i32, %arg2: i32) -> (i32, i32) {
    %c0_i32 = arith.constant 0 : i32
    return %arg0, %arg2 : i32, i32
  }
  func.func @transform_1(%arg0: i32, %arg1: i32, %arg2: i32) -> (i32, i32) {
    %c0_i32 = arith.constant 0 : i32
    return %arg2, %arg1 : i32, i32
  }
  func.func @transform_2(%arg0: i32, %arg1: i32, %arg2: i32) -> (i32, i32) {
    %c0_i32 = arith.constant 0 : i32
    %c0_i32_0 = arith.constant 0 : i32
    return %c0_i32, %arg1 : i32, i32
  }
  func.func @transform_3(%arg0: i32, %arg1: i32, %arg2: i32) -> (i32, i32) {
    %c0_i32 = arith.constant 0 : i32
    %c0_i32_0 = arith.constant 0 : i32
    return %c0_i32, %arg1 : i32, i32
  }
  func.func @transform_4(%arg0: i32, %arg1: i32, %arg2: i32) -> (i32, i32) {
    %c0_i32 = arith.constant 0 : i32
    return %arg0, %arg1 : i32, i32
  }
}

module attributes {stable_mosaic.version = 11 : i64} {
  func.func @_matmul_plain_kernel(%arg0: i32, %arg1: i32, %arg2: i32, %arg3: memref<8x16xbf16, #tpu.memory_space<vmem>>, %arg4: memref<16x16xbf16, #tpu.memory_space<vmem>>, %arg5: memref<8x16xf32, #tpu.memory_space<vmem>>, %arg6: memref<8x16xf32, #tpu.memory_space<vmem>>) attributes {dimension_semantics = [#tpu.dimension_semantics<parallel>, #tpu.dimension_semantics<parallel>, #tpu.dimension_semantics<arbitrary>], iteration_bounds = array<i64: 1, 1, 1>, scalar_prefetch = 0 : i64, scratch_operands = 1 : i64, tpu.core_type = #tpu.core_type<tc>, window_params = [{transform_indices = @transform_0, window_bounds = array<i64: 8, 16>}, {transform_indices = @transform_1, window_bounds = array<i64: 16, 16>}, {transform_indices = @transform_2, window_bounds = array<i64: 8, 16>}]} {
    %c0_i32 = arith.constant 0 : i32
    %0 = arith.cmpi eq, %arg2, %c0_i32 : i32
    %1 = arith.extui %0 : i1 to i32
    %c0_i32_0 = arith.constant 0 : i32
    %2 = arith.cmpi ne, %1, %c0_i32_0 : i32
    scf.if %2 {
      %cst_10 = arith.constant 0.000000e+00 : f32
      %12 = vector.broadcast %cst_10 : f32 to vector<8x16xf32>
      %c0_11 = arith.constant 0 : index
      %c0_12 = arith.constant 0 : index
      %13 = vector.load %arg6[%c0_11, %c0_12] : memref<8x16xf32, #tpu.memory_space<vmem>>, vector<8x16xf32>
      tpu.vector_store %arg6[%c0_11, %c0_12], %12 {strides = array<i32>} : memref<8x16xf32, #tpu.memory_space<vmem>>, vector<8x16xf32>,
    } else {
    }
    %c0 = arith.constant 0 : index
    %c0_1 = arith.constant 0 : index
    %3 = vector.load %arg6[%c0, %c0_1] : memref<8x16xf32, #tpu.memory_space<vmem>>, vector<8x16xf32>
    %c0_2 = arith.constant 0 : index
    %c0_3 = arith.constant 0 : index
    %4 = vector.load %arg3[%c0_2, %c0_3] : memref<8x16xbf16, #tpu.memory_space<vmem>>, vector<8x16xbf16>
    %c0_4 = arith.constant 0 : index
    %c0_5 = arith.constant 0 : index
    %5 = vector.load %arg4[%c0_4, %c0_5] : memref<16x16xbf16, #tpu.memory_space<vmem>>, vector<16x16xbf16>
    %cst = arith.constant dense<0.000000e+00> : vector<8x16xf32>
    %6 = tpu.matmul %4, %5, %cst {dimension_numbers = #tpu.dot_dimension_numbers<[1], [0], [0], [1], [0, 0, 1, 1], [], []>} : vector<8x16xbf16>, vector<16x16xbf16>, vector<8x16xf32> -> vector<8x16xf32>
    %7 = arith.addf %3, %6 : vector<8x16xf32>
    %c0_6 = arith.constant 0 : index
    %c0_7 = arith.constant 0 : index
    %8 = vector.load %arg6[%c0_6, %c0_7] : memref<8x16xf32, #tpu.memory_space<vmem>>, vector<8x16xf32>
    tpu.vector_store %arg6[%c0_6, %c0_7], %7 {strides = array<i32>} : memref<8x16xf32, #tpu.memory_space<vmem>>, vector<8x16xf32>,
    %c0_i32_8 = arith.constant 0 : i32
    %9 = arith.cmpi eq, %arg2, %c0_i32_8 : i32
    %10 = arith.extui %9 : i1 to i32
    %c0_i32_9 = arith.constant 0 : i32
    %11 = arith.cmpi ne, %10, %c0_i32_9 : i32
    scf.if %11 {
      %c0_10 = arith.constant 0 : index
      %c0_11 = arith.constant 0 : index
      %12 = vector.load %arg6[%c0_10, %c0_11] : memref<8x16xf32, #tpu.memory_space<vmem>>, vector<8x16xf32>
      %c0_12 = arith.constant 0 : index
      %c0_13 = arith.constant 0 : index
      %13 = vector.load %arg5[%c0_12, %c0_13] : memref<8x16xf32, #tpu.memory_space<vmem>>, vector<8x16xf32>
      tpu.vector_store %arg5[%c0_12, %c0_13], %12 {strides = array<i32>} : memref<8x16xf32, #tpu.memory_space<vmem>>, vector<8x16xf32>,
    } else {
    }
    return
  }
  func.func @transform_0(%arg0: i32, %arg1: i32, %arg2: i32) -> (i32, i32) {
    %c0_i32 = arith.constant 0 : i32
    return %arg0, %arg2 : i32, i32
  }
  func.func @transform_1(%arg0: i32, %arg1: i32, %arg2: i32) -> (i32, i32) {
    %c0_i32 = arith.constant 0 : i32
    return %arg2, %arg1 : i32, i32
  }
  func.func @transform_2(%arg0: i32, %arg1: i32, %arg2: i32) -> (i32, i32) {
    %c0_i32 = arith.constant 0 : i32
    return %arg0, %arg1 : i32, i32
  }
}

module attributes {stable_mosaic.version = 11 : i64} {
  func.func @_aspp_combine_kernel(%arg0: i32, %arg1: i32, %arg2: memref<1x64x16xbf16, #tpu.memory_space<vmem>>, %arg3: memref<1x64x16xbf16, #tpu.memory_space<vmem>>, %arg4: memref<1x64x16xbf16, #tpu.memory_space<vmem>>, %arg5: memref<1x64x16xbf16, #tpu.memory_space<vmem>>, %arg6: memref<1x1x16xf32, #tpu.memory_space<vmem>>, %arg7: memref<4x16x16xbf16, #tpu.memory_space<vmem>>, %arg8: memref<1x16xf32, #tpu.memory_space<vmem>>, %arg9: memref<1x16xf32, #tpu.memory_space<vmem>>, %arg10: memref<1x64x16xbf16, #tpu.memory_space<vmem>>) attributes {dimension_semantics = [#tpu.dimension_semantics<parallel>, #tpu.dimension_semantics<parallel>], iteration_bounds = array<i64: 2, 1>, scalar_prefetch = 0 : i64, scratch_operands = 0 : i64, tpu.core_type = #tpu.core_type<tc>, window_params = [{transform_indices = @transform_0, window_bounds = array<i64: 1, 64, 16>}, {transform_indices = @transform_1, window_bounds = array<i64: 1, 64, 16>}, {transform_indices = @transform_2, window_bounds = array<i64: 1, 64, 16>}, {transform_indices = @transform_3, window_bounds = array<i64: 1, 64, 16>}, {transform_indices = @transform_4, window_bounds = array<i64: 1, 1, 16>}, {pipeline_mode = #tpu.pipeline_mode<synchronous>, transform_indices = @transform_5, window_bounds = array<i64: 4, 16, 16>}, {pipeline_mode = #tpu.pipeline_mode<synchronous>, transform_indices = @transform_6, window_bounds = array<i64: 1, 16>}, {pipeline_mode = #tpu.pipeline_mode<synchronous>, transform_indices = @transform_7, window_bounds = array<i64: 1, 16>}, {transform_indices = @transform_8, window_bounds = array<i64: 1, 64, 16>}]} {
    %c0 = arith.constant 0 : index
    %c0_0 = arith.constant 0 : index
    %c0_1 = arith.constant 0 : index
    %0 = vector.load %arg2[%c0, %c0_0, %c0_1] : memref<1x64x16xbf16, #tpu.memory_space<vmem>>, vector<1x64x16xbf16>
    %1 = vector.shape_cast %0 : vector<1x64x16xbf16> to vector<64x16xbf16>
    %c0_2 = arith.constant 0 : index
    %c0_3 = arith.constant 0 : index
    %c0_4 = arith.constant 0 : index
    %2 = vector.load %arg7[%c0_2, %c0_3, %c0_4] : memref<4x16x16xbf16, #tpu.memory_space<vmem>>, vector<1x16x16xbf16>
    %3 = vector.shape_cast %2 : vector<1x16x16xbf16> to vector<16x16xbf16>
    %cst = arith.constant dense<0.000000e+00> : vector<64x16xf32>
    %4 = tpu.matmul %1, %3, %cst {dimension_numbers = #tpu.dot_dimension_numbers<[1], [0], [0], [1], [0, 0, 1, 1], [], []>} : vector<64x16xbf16>, vector<16x16xbf16>, vector<64x16xf32> -> vector<64x16xf32>
    %c0_5 = arith.constant 0 : index
    %c0_6 = arith.constant 0 : index
    %c0_7 = arith.constant 0 : index
    %5 = vector.load %arg3[%c0_5, %c0_6, %c0_7] : memref<1x64x16xbf16, #tpu.memory_space<vmem>>, vector<1x64x16xbf16>
    %6 = vector.shape_cast %5 : vector<1x64x16xbf16> to vector<64x16xbf16>
    %c1 = arith.constant 1 : index
    %c0_8 = arith.constant 0 : index
    %c0_9 = arith.constant 0 : index
    %7 = vector.load %arg7[%c1, %c0_8, %c0_9] : memref<4x16x16xbf16, #tpu.memory_space<vmem>>, vector<1x16x16xbf16>
    %8 = vector.shape_cast %7 : vector<1x16x16xbf16> to vector<16x16xbf16>
    %cst_10 = arith.constant dense<0.000000e+00> : vector<64x16xf32>
    %9 = tpu.matmul %6, %8, %cst_10 {dimension_numbers = #tpu.dot_dimension_numbers<[1], [0], [0], [1], [0, 0, 1, 1], [], []>} : vector<64x16xbf16>, vector<16x16xbf16>, vector<64x16xf32> -> vector<64x16xf32>
    %10 = arith.addf %4, %9 : vector<64x16xf32>
    %c0_11 = arith.constant 0 : index
    %c0_12 = arith.constant 0 : index
    %c0_13 = arith.constant 0 : index
    %11 = vector.load %arg4[%c0_11, %c0_12, %c0_13] : memref<1x64x16xbf16, #tpu.memory_space<vmem>>, vector<1x64x16xbf16>
    %12 = vector.shape_cast %11 : vector<1x64x16xbf16> to vector<64x16xbf16>
    %c2 = arith.constant 2 : index
    %c0_14 = arith.constant 0 : index
    %c0_15 = arith.constant 0 : index
    %13 = vector.load %arg7[%c2, %c0_14, %c0_15] : memref<4x16x16xbf16, #tpu.memory_space<vmem>>, vector<1x16x16xbf16>
    %14 = vector.shape_cast %13 : vector<1x16x16xbf16> to vector<16x16xbf16>
    %cst_16 = arith.constant dense<0.000000e+00> : vector<64x16xf32>
    %15 = tpu.matmul %12, %14, %cst_16 {dimension_numbers = #tpu.dot_dimension_numbers<[1], [0], [0], [1], [0, 0, 1, 1], [], []>} : vector<64x16xbf16>, vector<16x16xbf16>, vector<64x16xf32> -> vector<64x16xf32>
    %16 = arith.addf %10, %15 : vector<64x16xf32>
    %c0_17 = arith.constant 0 : index
    %c0_18 = arith.constant 0 : index
    %c0_19 = arith.constant 0 : index
    %17 = vector.load %arg5[%c0_17, %c0_18, %c0_19] : memref<1x64x16xbf16, #tpu.memory_space<vmem>>, vector<1x64x16xbf16>
    %18 = vector.shape_cast %17 : vector<1x64x16xbf16> to vector<64x16xbf16>
    %c3 = arith.constant 3 : index
    %c0_20 = arith.constant 0 : index
    %c0_21 = arith.constant 0 : index
    %19 = vector.load %arg7[%c3, %c0_20, %c0_21] : memref<4x16x16xbf16, #tpu.memory_space<vmem>>, vector<1x16x16xbf16>
    %20 = vector.shape_cast %19 : vector<1x16x16xbf16> to vector<16x16xbf16>
    %cst_22 = arith.constant dense<0.000000e+00> : vector<64x16xf32>
    %21 = tpu.matmul %18, %20, %cst_22 {dimension_numbers = #tpu.dot_dimension_numbers<[1], [0], [0], [1], [0, 0, 1, 1], [], []>} : vector<64x16xbf16>, vector<16x16xbf16>, vector<64x16xf32> -> vector<64x16xf32>
    %22 = arith.addf %16, %21 : vector<64x16xf32>
    %c0_23 = arith.constant 0 : index
    %c0_24 = arith.constant 0 : index
    %c0_25 = arith.constant 0 : index
    %23 = vector.load %arg6[%c0_23, %c0_24, %c0_25] : memref<1x1x16xf32, #tpu.memory_space<vmem>>, vector<1x1x16xf32>
    %24 = vector.shape_cast %23 : vector<1x1x16xf32> to vector<1x16xf32>
    %25 = vector.broadcast %24 : vector<1x16xf32> to vector<64x16xf32>
    %26 = arith.addf %22, %25 : vector<64x16xf32>
    %c0_26 = arith.constant 0 : index
    %c0_27 = arith.constant 0 : index
    %27 = vector.load %arg8[%c0_26, %c0_27] : memref<1x16xf32, #tpu.memory_space<vmem>>, vector<1x16xf32>
    %28 = vector.broadcast %27 : vector<1x16xf32> to vector<64x16xf32>
    %29 = arith.mulf %26, %28 : vector<64x16xf32>
    %c0_28 = arith.constant 0 : index
    %c0_29 = arith.constant 0 : index
    %30 = vector.load %arg9[%c0_28, %c0_29] : memref<1x16xf32, #tpu.memory_space<vmem>>, vector<1x16xf32>
    %31 = vector.broadcast %30 : vector<1x16xf32> to vector<64x16xf32>
    %32 = arith.addf %29, %31 : vector<64x16xf32>
    %cst_30 = arith.constant 0.000000e+00 : f32
    %33 = vector.broadcast %cst_30 : f32 to vector<64x16xf32>
    %34 = arith.maximumf %32, %33 : vector<64x16xf32>
    %35 = vector.shape_cast %34 : vector<64x16xf32> to vector<1x64x16xf32>
    %36 = arith.truncf %35 : vector<1x64x16xf32> to vector<1x64x16xbf16>
    %c0_31 = arith.constant 0 : index
    %c0_32 = arith.constant 0 : index
    %c0_33 = arith.constant 0 : index
    %37 = vector.load %arg10[%c0_31, %c0_32, %c0_33] : memref<1x64x16xbf16, #tpu.memory_space<vmem>>, vector<1x64x16xbf16>
    tpu.vector_store %arg10[%c0_31, %c0_32, %c0_33], %36 {strides = array<i32>} : memref<1x64x16xbf16, #tpu.memory_space<vmem>>, vector<1x64x16xbf16>,
    return
  }
  func.func @transform_0(%arg0: i32, %arg1: i32) -> (i32, i32, i32) {
    %c0_i32 = arith.constant 0 : i32
    %c0_i32_0 = arith.constant 0 : i32
    return %arg0, %arg1, %c0_i32 : i32, i32, i32
  }
  func.func @transform_1(%arg0: i32, %arg1: i32) -> (i32, i32, i32) {
    %c0_i32 = arith.constant 0 : i32
    %c0_i32_0 = arith.constant 0 : i32
    return %arg0, %arg1, %c0_i32 : i32, i32, i32
  }
  func.func @transform_2(%arg0: i32, %arg1: i32) -> (i32, i32, i32) {
    %c0_i32 = arith.constant 0 : i32
    %c0_i32_0 = arith.constant 0 : i32
    return %arg0, %arg1, %c0_i32 : i32, i32, i32
  }
  func.func @transform_3(%arg0: i32, %arg1: i32) -> (i32, i32, i32) {
    %c0_i32 = arith.constant 0 : i32
    %c0_i32_0 = arith.constant 0 : i32
    return %arg0, %arg1, %c0_i32 : i32, i32, i32
  }
  func.func @transform_4(%arg0: i32, %arg1: i32) -> (i32, i32, i32) {
    %c0_i32 = arith.constant 0 : i32
    %c0_i32_0 = arith.constant 0 : i32
    %c0_i32_1 = arith.constant 0 : i32
    return %arg0, %c0_i32, %c0_i32_0 : i32, i32, i32
  }
  func.func @transform_5(%arg0: i32, %arg1: i32) -> (i32, i32, i32) {
    %c0_i32 = arith.constant 0 : i32
    %c0_i32_0 = arith.constant 0 : i32
    %c0_i32_1 = arith.constant 0 : i32
    %c0_i32_2 = arith.constant 0 : i32
    return %c0_i32, %c0_i32_0, %c0_i32_1 : i32, i32, i32
  }
  func.func @transform_6(%arg0: i32, %arg1: i32) -> (i32, i32) {
    %c0_i32 = arith.constant 0 : i32
    %c0_i32_0 = arith.constant 0 : i32
    %c0_i32_1 = arith.constant 0 : i32
    return %c0_i32, %c0_i32_0 : i32, i32
  }
  func.func @transform_7(%arg0: i32, %arg1: i32) -> (i32, i32) {
    %c0_i32 = arith.constant 0 : i32
    %c0_i32_0 = arith.constant 0 : i32
    %c0_i32_1 = arith.constant 0 : i32
    return %c0_i32, %c0_i32_0 : i32, i32
  }
  func.func @transform_8(%arg0: i32, %arg1: i32) -> (i32, i32, i32) {
    %c0_i32 = arith.constant 0 : i32
    %c0_i32_0 = arith.constant 0 : i32
    return %arg0, %arg1, %c0_i32 : i32, i32, i32
  }
}

module attributes {stable_mosaic.version = 11 : i64} {
  func.func @_matmul_affine_kernel(%arg0: i32, %arg1: i32, %arg2: i32, %arg3: memref<128x16xbf16, #tpu.memory_space<vmem>>, %arg4: memref<16x8xbf16, #tpu.memory_space<vmem>>, %arg5: memref<1x8xf32, #tpu.memory_space<vmem>>, %arg6: memref<1x8xf32, #tpu.memory_space<vmem>>, %arg7: memref<128x8xf32, #tpu.memory_space<vmem>>, %arg8: memref<128x8xf32, #tpu.memory_space<vmem>>) attributes {dimension_semantics = [#tpu.dimension_semantics<parallel>, #tpu.dimension_semantics<parallel>, #tpu.dimension_semantics<arbitrary>], iteration_bounds = array<i64: 1, 1, 1>, scalar_prefetch = 0 : i64, scratch_operands = 1 : i64, tpu.core_type = #tpu.core_type<tc>, window_params = [{transform_indices = @transform_0, window_bounds = array<i64: 128, 16>}, {transform_indices = @transform_1, window_bounds = array<i64: 16, 8>}, {transform_indices = @transform_2, window_bounds = array<i64: 1, 8>}, {transform_indices = @transform_3, window_bounds = array<i64: 1, 8>}, {transform_indices = @transform_4, window_bounds = array<i64: 128, 8>}]} {
    %c0_i32 = arith.constant 0 : i32
    %0 = arith.cmpi eq, %arg2, %c0_i32 : i32
    %1 = arith.extui %0 : i1 to i32
    %c0_i32_0 = arith.constant 0 : i32
    %2 = arith.cmpi ne, %1, %c0_i32_0 : i32
    scf.if %2 {
      %cst_10 = arith.constant 0.000000e+00 : f32
      %12 = vector.broadcast %cst_10 : f32 to vector<128x8xf32>
      %c0_11 = arith.constant 0 : index
      %c0_12 = arith.constant 0 : index
      %13 = vector.load %arg8[%c0_11, %c0_12] : memref<128x8xf32, #tpu.memory_space<vmem>>, vector<128x8xf32>
      tpu.vector_store %arg8[%c0_11, %c0_12], %12 {strides = array<i32>} : memref<128x8xf32, #tpu.memory_space<vmem>>, vector<128x8xf32>,
    } else {
    }
    %c0 = arith.constant 0 : index
    %c0_1 = arith.constant 0 : index
    %3 = vector.load %arg8[%c0, %c0_1] : memref<128x8xf32, #tpu.memory_space<vmem>>, vector<128x8xf32>
    %c0_2 = arith.constant 0 : index
    %c0_3 = arith.constant 0 : index
    %4 = vector.load %arg3[%c0_2, %c0_3] : memref<128x16xbf16, #tpu.memory_space<vmem>>, vector<128x16xbf16>
    %c0_4 = arith.constant 0 : index
    %c0_5 = arith.constant 0 : index
    %5 = vector.load %arg4[%c0_4, %c0_5] : memref<16x8xbf16, #tpu.memory_space<vmem>>, vector<16x8xbf16>
    %cst = arith.constant dense<0.000000e+00> : vector<128x8xf32>
    %6 = tpu.matmul %4, %5, %cst {dimension_numbers = #tpu.dot_dimension_numbers<[1], [0], [0], [1], [0, 0, 1, 1], [], []>} : vector<128x16xbf16>, vector<16x8xbf16>, vector<128x8xf32> -> vector<128x8xf32>
    %7 = arith.addf %3, %6 : vector<128x8xf32>
    %c0_6 = arith.constant 0 : index
    %c0_7 = arith.constant 0 : index
    %8 = vector.load %arg8[%c0_6, %c0_7] : memref<128x8xf32, #tpu.memory_space<vmem>>, vector<128x8xf32>
    tpu.vector_store %arg8[%c0_6, %c0_7], %7 {strides = array<i32>} : memref<128x8xf32, #tpu.memory_space<vmem>>, vector<128x8xf32>,
    %c0_i32_8 = arith.constant 0 : i32
    %9 = arith.cmpi eq, %arg2, %c0_i32_8 : i32
    %10 = arith.extui %9 : i1 to i32
    %c0_i32_9 = arith.constant 0 : i32
    %11 = arith.cmpi ne, %10, %c0_i32_9 : i32
    scf.if %11 {
      %c0_10 = arith.constant 0 : index
      %c0_11 = arith.constant 0 : index
      %12 = vector.load %arg8[%c0_10, %c0_11] : memref<128x8xf32, #tpu.memory_space<vmem>>, vector<128x8xf32>
      %c0_12 = arith.constant 0 : index
      %c0_13 = arith.constant 0 : index
      %13 = vector.load %arg5[%c0_12, %c0_13] : memref<1x8xf32, #tpu.memory_space<vmem>>, vector<1x8xf32>
      %14 = vector.broadcast %13 : vector<1x8xf32> to vector<128x8xf32>
      %15 = arith.mulf %12, %14 : vector<128x8xf32>
      %c0_14 = arith.constant 0 : index
      %c0_15 = arith.constant 0 : index
      %16 = vector.load %arg6[%c0_14, %c0_15] : memref<1x8xf32, #tpu.memory_space<vmem>>, vector<1x8xf32>
      %17 = vector.broadcast %16 : vector<1x8xf32> to vector<128x8xf32>
      %18 = arith.addf %15, %17 : vector<128x8xf32>
      %c0_16 = arith.constant 0 : index
      %c0_17 = arith.constant 0 : index
      %19 = vector.load %arg7[%c0_16, %c0_17] : memref<128x8xf32, #tpu.memory_space<vmem>>, vector<128x8xf32>
      tpu.vector_store %arg7[%c0_16, %c0_17], %18 {strides = array<i32>} : memref<128x8xf32, #tpu.memory_space<vmem>>, vector<128x8xf32>,
    } else {
    }
    return
  }
  func.func @transform_0(%arg0: i32, %arg1: i32, %arg2: i32) -> (i32, i32) {
    %c0_i32 = arith.constant 0 : i32
    return %arg0, %arg2 : i32, i32
  }
  func.func @transform_1(%arg0: i32, %arg1: i32, %arg2: i32) -> (i32, i32) {
    %c0_i32 = arith.constant 0 : i32
    return %arg2, %arg1 : i32, i32
  }
  func.func @transform_2(%arg0: i32, %arg1: i32, %arg2: i32) -> (i32, i32) {
    %c0_i32 = arith.constant 0 : i32
    %c0_i32_0 = arith.constant 0 : i32
    return %c0_i32, %arg1 : i32, i32
  }
  func.func @transform_3(%arg0: i32, %arg1: i32, %arg2: i32) -> (i32, i32) {
    %c0_i32 = arith.constant 0 : i32
    %c0_i32_0 = arith.constant 0 : i32
    return %c0_i32, %arg1 : i32, i32
  }
  func.func @transform_4(%arg0: i32, %arg1: i32, %arg2: i32) -> (i32, i32) {
    %c0_i32 = arith.constant 0 : i32
    return %arg0, %arg1 : i32, i32
  }
}

module attributes {stable_mosaic.version = 11 : i64} {
  func.func @_matmul_plain_kernel(%arg0: i32, %arg1: i32, %arg2: i32, %arg3: memref<512x8xbf16, #tpu.memory_space<vmem>>, %arg4: memref<8x32xbf16, #tpu.memory_space<vmem>>, %arg5: memref<512x32xf32, #tpu.memory_space<vmem>>, %arg6: memref<512x32xf32, #tpu.memory_space<vmem>>) attributes {dimension_semantics = [#tpu.dimension_semantics<parallel>, #tpu.dimension_semantics<parallel>, #tpu.dimension_semantics<arbitrary>], iteration_bounds = array<i64: 1, 1, 1>, scalar_prefetch = 0 : i64, scratch_operands = 1 : i64, tpu.core_type = #tpu.core_type<tc>, window_params = [{transform_indices = @transform_0, window_bounds = array<i64: 512, 8>}, {transform_indices = @transform_1, window_bounds = array<i64: 8, 32>}, {transform_indices = @transform_2, window_bounds = array<i64: 512, 32>}]} {
    %c0_i32 = arith.constant 0 : i32
    %0 = arith.cmpi eq, %arg2, %c0_i32 : i32
    %1 = arith.extui %0 : i1 to i32
    %c0_i32_0 = arith.constant 0 : i32
    %2 = arith.cmpi ne, %1, %c0_i32_0 : i32
    scf.if %2 {
      %cst_10 = arith.constant 0.000000e+00 : f32
      %12 = vector.broadcast %cst_10 : f32 to vector<512x32xf32>
      %c0_11 = arith.constant 0 : index
      %c0_12 = arith.constant 0 : index
      %13 = vector.load %arg6[%c0_11, %c0_12] : memref<512x32xf32, #tpu.memory_space<vmem>>, vector<512x32xf32>
      tpu.vector_store %arg6[%c0_11, %c0_12], %12 {strides = array<i32>} : memref<512x32xf32, #tpu.memory_space<vmem>>, vector<512x32xf32>,
    } else {
    }
    %c0 = arith.constant 0 : index
    %c0_1 = arith.constant 0 : index
    %3 = vector.load %arg6[%c0, %c0_1] : memref<512x32xf32, #tpu.memory_space<vmem>>, vector<512x32xf32>
    %c0_2 = arith.constant 0 : index
    %c0_3 = arith.constant 0 : index
    %4 = vector.load %arg3[%c0_2, %c0_3] : memref<512x8xbf16, #tpu.memory_space<vmem>>, vector<512x8xbf16>
    %c0_4 = arith.constant 0 : index
    %c0_5 = arith.constant 0 : index
    %5 = vector.load %arg4[%c0_4, %c0_5] : memref<8x32xbf16, #tpu.memory_space<vmem>>, vector<8x32xbf16>
    %cst = arith.constant dense<0.000000e+00> : vector<512x32xf32>
    %6 = tpu.matmul %4, %5, %cst {dimension_numbers = #tpu.dot_dimension_numbers<[1], [0], [0], [1], [0, 0, 1, 1], [], []>} : vector<512x8xbf16>, vector<8x32xbf16>, vector<512x32xf32> -> vector<512x32xf32>
    %7 = arith.addf %3, %6 : vector<512x32xf32>
    %c0_6 = arith.constant 0 : index
    %c0_7 = arith.constant 0 : index
    %8 = vector.load %arg6[%c0_6, %c0_7] : memref<512x32xf32, #tpu.memory_space<vmem>>, vector<512x32xf32>
    tpu.vector_store %arg6[%c0_6, %c0_7], %7 {strides = array<i32>} : memref<512x32xf32, #tpu.memory_space<vmem>>, vector<512x32xf32>,
    %c0_i32_8 = arith.constant 0 : i32
    %9 = arith.cmpi eq, %arg2, %c0_i32_8 : i32
    %10 = arith.extui %9 : i1 to i32
    %c0_i32_9 = arith.constant 0 : i32
    %11 = arith.cmpi ne, %10, %c0_i32_9 : i32
    scf.if %11 {
      %c0_10 = arith.constant 0 : index
      %c0_11 = arith.constant 0 : index
      %12 = vector.load %arg6[%c0_10, %c0_11] : memref<512x32xf32, #tpu.memory_space<vmem>>, vector<512x32xf32>
      %c0_12 = arith.constant 0 : index
      %c0_13 = arith.constant 0 : index
      %13 = vector.load %arg5[%c0_12, %c0_13] : memref<512x32xf32, #tpu.memory_space<vmem>>, vector<512x32xf32>
      tpu.vector_store %arg5[%c0_12, %c0_13], %12 {strides = array<i32>} : memref<512x32xf32, #tpu.memory_space<vmem>>, vector<512x32xf32>,
    } else {
    }
    return
  }
  func.func @transform_0(%arg0: i32, %arg1: i32, %arg2: i32) -> (i32, i32) {
    %c0_i32 = arith.constant 0 : i32
    return %arg0, %arg2 : i32, i32
  }
  func.func @transform_1(%arg0: i32, %arg1: i32, %arg2: i32) -> (i32, i32) {
    %c0_i32 = arith.constant 0 : i32
    return %arg2, %arg1 : i32, i32
  }
  func.func @transform_2(%arg0: i32, %arg1: i32, %arg2: i32) -> (i32, i32) {
    %c0_i32 = arith.constant 0 : i32
    return %arg0, %arg1 : i32, i32
  }
}

module attributes {stable_mosaic.version = 11 : i64} {
  func.func @_matmul_plain_kernel(%arg0: i32, %arg1: i32, %arg2: i32, %arg3: memref<128x8xbf16, #tpu.memory_space<vmem>>, %arg4: memref<8x32xbf16, #tpu.memory_space<vmem>>, %arg5: memref<128x32xf32, #tpu.memory_space<vmem>>, %arg6: memref<128x32xf32, #tpu.memory_space<vmem>>) attributes {dimension_semantics = [#tpu.dimension_semantics<parallel>, #tpu.dimension_semantics<parallel>, #tpu.dimension_semantics<arbitrary>], iteration_bounds = array<i64: 1, 1, 1>, scalar_prefetch = 0 : i64, scratch_operands = 1 : i64, tpu.core_type = #tpu.core_type<tc>, window_params = [{transform_indices = @transform_0, window_bounds = array<i64: 128, 8>}, {transform_indices = @transform_1, window_bounds = array<i64: 8, 32>}, {transform_indices = @transform_2, window_bounds = array<i64: 128, 32>}]} {
    %c0_i32 = arith.constant 0 : i32
    %0 = arith.cmpi eq, %arg2, %c0_i32 : i32
    %1 = arith.extui %0 : i1 to i32
    %c0_i32_0 = arith.constant 0 : i32
    %2 = arith.cmpi ne, %1, %c0_i32_0 : i32
    scf.if %2 {
      %cst_10 = arith.constant 0.000000e+00 : f32
      %12 = vector.broadcast %cst_10 : f32 to vector<128x32xf32>
      %c0_11 = arith.constant 0 : index
      %c0_12 = arith.constant 0 : index
      %13 = vector.load %arg6[%c0_11, %c0_12] : memref<128x32xf32, #tpu.memory_space<vmem>>, vector<128x32xf32>
      tpu.vector_store %arg6[%c0_11, %c0_12], %12 {strides = array<i32>} : memref<128x32xf32, #tpu.memory_space<vmem>>, vector<128x32xf32>,
    } else {
    }
    %c0 = arith.constant 0 : index
    %c0_1 = arith.constant 0 : index
    %3 = vector.load %arg6[%c0, %c0_1] : memref<128x32xf32, #tpu.memory_space<vmem>>, vector<128x32xf32>
    %c0_2 = arith.constant 0 : index
    %c0_3 = arith.constant 0 : index
    %4 = vector.load %arg3[%c0_2, %c0_3] : memref<128x8xbf16, #tpu.memory_space<vmem>>, vector<128x8xbf16>
    %c0_4 = arith.constant 0 : index
    %c0_5 = arith.constant 0 : index
    %5 = vector.load %arg4[%c0_4, %c0_5] : memref<8x32xbf16, #tpu.memory_space<vmem>>, vector<8x32xbf16>
    %cst = arith.constant dense<0.000000e+00> : vector<128x32xf32>
    %6 = tpu.matmul %4, %5, %cst {dimension_numbers = #tpu.dot_dimension_numbers<[1], [0], [0], [1], [0, 0, 1, 1], [], []>} : vector<128x8xbf16>, vector<8x32xbf16>, vector<128x32xf32> -> vector<128x32xf32>
    %7 = arith.addf %3, %6 : vector<128x32xf32>
    %c0_6 = arith.constant 0 : index
    %c0_7 = arith.constant 0 : index
    %8 = vector.load %arg6[%c0_6, %c0_7] : memref<128x32xf32, #tpu.memory_space<vmem>>, vector<128x32xf32>
    tpu.vector_store %arg6[%c0_6, %c0_7], %7 {strides = array<i32>} : memref<128x32xf32, #tpu.memory_space<vmem>>, vector<128x32xf32>,
    %c0_i32_8 = arith.constant 0 : i32
    %9 = arith.cmpi eq, %arg2, %c0_i32_8 : i32
    %10 = arith.extui %9 : i1 to i32
    %c0_i32_9 = arith.constant 0 : i32
    %11 = arith.cmpi ne, %10, %c0_i32_9 : i32
    scf.if %11 {
      %c0_10 = arith.constant 0 : index
      %c0_11 = arith.constant 0 : index
      %12 = vector.load %arg6[%c0_10, %c0_11] : memref<128x32xf32, #tpu.memory_space<vmem>>, vector<128x32xf32>
      %c0_12 = arith.constant 0 : index
      %c0_13 = arith.constant 0 : index
      %13 = vector.load %arg5[%c0_12, %c0_13] : memref<128x32xf32, #tpu.memory_space<vmem>>, vector<128x32xf32>
      tpu.vector_store %arg5[%c0_12, %c0_13], %12 {strides = array<i32>} : memref<128x32xf32, #tpu.memory_space<vmem>>, vector<128x32xf32>,
    } else {
    }
    return
  }
  func.func @transform_0(%arg0: i32, %arg1: i32, %arg2: i32) -> (i32, i32) {
    %c0_i32 = arith.constant 0 : i32
    return %arg0, %arg2 : i32, i32
  }
  func.func @transform_1(%arg0: i32, %arg1: i32, %arg2: i32) -> (i32, i32) {
    %c0_i32 = arith.constant 0 : i32
    return %arg2, %arg1 : i32, i32
  }
  func.func @transform_2(%arg0: i32, %arg1: i32, %arg2: i32) -> (i32, i32) {
    %c0_i32 = arith.constant 0 : i32
    return %arg0, %arg1 : i32, i32
  }
}

</mosaic_0001>

<llo_original>
// kernel: deeplabv3_forward.12
$region0: #{deeplabv3_forward.12}
  #allocation0 [shape = 'u32[]', space=smem, size = 0x4, offset = 0x4, fixed_abs, tag = 'smem constant byte address 0x4 - core index']
  #allocation1 [shape = 'u32[144,128]{1,0:T(1,128)}', space=vmem, size = 0x12000, scoped, tag = 'internal scratch']
  #allocation2 [shape = 'f32[128,32]{1,0:T(8,128)}', space=vmem, size = 0x10000, scoped, tag = 'scratch operand']
  %s0 = inlined_call_operand.vmem [shape: bf16[128,8], index: 0, kind: input, shape index: {}]
  %s1 = inlined_call_operand.vmem [shape: bf16[8,32], index: 1, kind: input, shape index: {}]
  %s2 = inlined_call_operand.vmem [shape: f32[1,32], index: 2, kind: input, shape index: {}]
  %s3 = inlined_call_operand.vmem [shape: f32[1,32], index: 3, kind: input, shape index: {}]
  %s4 = inlined_call_operand.vmem [shape: bf16[128,32], index: 4, kind: output, shape index: {}]
  %s5 = sld [smem:[#allocation0]]
  $region34: #{deeplabv3_forward.12} parent=0
    _
  %s7 = ssub.s32 1, %s5
  %s8 = scalar_select 0, %s7, %s5
  // Predicated region
  $region2: #{deeplabv3_forward.12} parent=0 // pred_check
    _
  $region3: #{deeplabv3_forward.12} parent=0 // pred_check_branch
    %10 = sbr.rel (0) target = $region5
  $region4: #{deeplabv3_forward.12} parent=0 // pred_region
    _
  $region5: #{deeplabv3_forward.12} parent=0 // pred_fallthru
    _
  // Predicated region
  $region6: #{deeplabv3_forward.12} parent=0 // pred_check
    _
  $region7: #{deeplabv3_forward.12} parent=0 // pred_check_branch
    %12 = sbr.rel (0) target = $region9
  $region8: #{deeplabv3_forward.12} parent=0 // pred_region
    _
  $region9: #{deeplabv3_forward.12} parent=0 // pred_fallthru
    _
  // Predicated region
  $region10: #{deeplabv3_forward.12} parent=0 // pred_check
    _
  $region11: #{deeplabv3_forward.12} parent=0 // pred_check_branch
    %14 = sbr.rel (0) target = $region13
  $region12: #{deeplabv3_forward.12} parent=0 // pred_region
    _
  $region13: #{deeplabv3_forward.12} parent=0 // pred_fallthru
    _
  // Predicated region
  $region14: #{deeplabv3_forward.12} parent=0 // pred_check
    _
  $region15: #{deeplabv3_forward.12} parent=0 // pred_check_branch
    %16 = sbr.rel (0) target = $region17
  $region16: #{deeplabv3_forward.12} parent=0 // pred_region
    _
  $region17: #{deeplabv3_forward.12} parent=0 // pred_fallthru
    _
  %p18 = scmp.eq.s32.totalorder 0, 0
  // Predicated region
  $region18: #{deeplabv3_forward.12} parent=0 // pred_check
    %p19 = pneg %p18
  $region19: #{deeplabv3_forward.12} parent=0 // pred_check_branch
    %21 = sbr.rel (%p19) target = $region21
  $region20: #{deeplabv3_forward.12} parent=0 // pred_region
    %vm22 = vcmask 261120
    %23 = vst.msk [vmem:[#allocation2] sm:$0xff] %vm22, 0.0
    %24 = vst.msk [vmem:[#allocation2 + $0x8] sm:$0xff] %vm22, 0.0
    %25 = vst.msk [vmem:[#allocation2 + $0x10] sm:$0xff] %vm22, 0.0
    %26 = vst.msk [vmem:[#allocation2 + $0x18] sm:$0xff] %vm22, 0.0
    %27 = vst.msk [vmem:[#allocation2 + $0x20] sm:$0xff] %vm22, 0.0
    %28 = vst.msk [vmem:[#allocation2 + $0x28] sm:$0xff] %vm22, 0.0
    %29 = vst.msk [vmem:[#allocation2 + $0x30] sm:$0xff] %vm22, 0.0
    %30 = vst.msk [vmem:[#allocation2 + $0x38] sm:$0xff] %vm22, 0.0
    %31 = vst.msk [vmem:[#allocation2 + $0x40] sm:$0xff] %vm22, 0.0
    %32 = vst.msk [vmem:[#allocation2 + $0x48] sm:$0xff] %vm22, 0.0
    %33 = vst.msk [vmem:[#allocation2 + $0x50] sm:$0xff] %vm22, 0.0
    %34 = vst.msk [vmem:[#allocation2 + $0x58] sm:$0xff] %vm22, 0.0
    %35 = vst.msk [vmem:[#allocation2 + $0x60] sm:$0xff] %vm22, 0.0
    %36 = vst.msk [vmem:[#allocation2 + $0x68] sm:$0xff] %vm22, 0.0
    %37 = vst.msk [vmem:[#allocation2 + $0x70] sm:$0xff] %vm22, 0.0
    %38 = vst.msk [vmem:[#allocation2 + $0x78] sm:$0xff] %vm22, 0.0
  $region21: #{deeplabv3_forward.12} parent=0 // pred_fallthru
    _
  %v39 = vld [vmem:[#allocation2] sm:$0xff]
  %v40 = vld [vmem:[#allocation2 + $0x8] sm:$0xff]
  %v41 = vld [vmem:[#allocation2 + $0x10] sm:$0xff]
  %v42 = vld [vmem:[#allocation2 + $0x18] sm:$0xff]
  %v43 = vld [vmem:[#allocation2 + $0x20] sm:$0xff]
  %v44 = vld [vmem:[#allocation2 + $0x28] sm:$0xff]
  %v45 = vld [vmem:[#allocation2 + $0x30] sm:$0xff]
  %v46 = vld [vmem:[#allocation2 + $0x38] sm:$0xff]
  %v47 = vld [vmem:[#allocation2 + $0x40] sm:$0xff]
  %v48 = vld [vmem:[#allocation2 + $0x48] sm:$0xff]
  %v49 = vld [vmem:[#allocation2 + $0x50] sm:$0xff]
  %v50 = vld [vmem:[#allocation2 + $0x58] sm:$0xff]
  %v51 = vld [vmem:[#allocation2 + $0x60] sm:$0xff]
  %v52 = vld [vmem:[#allocation2 + $0x68] sm:$0xff]
  %v53 = vld [vmem:[#allocation2 + $0x70] sm:$0xff]
  %v54 = vld [vmem:[#allocation2 + $0x78] sm:$0xff]
  %v55 = vld [vmem:[%s0] sm:$0xf]
  %v56 = vld [vmem:[%s0 + $0x4] sm:$0xf]
  %v57 = vld [vmem:[%s0 + $0x8] sm:$0xf]
  %v58 = vld [vmem:[%s0 + $0xc] sm:$0xf]
  %v59 = vld [vmem:[%s0 + $0x10] sm:$0xf]
  %v60 = vld [vmem:[%s0 + $0x14] sm:$0xf]
  %v61 = vld [vmem:[%s0 + $0x18] sm:$0xf]
  %v62 = vld [vmem:[%s0 + $0x1c] sm:$0xf]
  %v63 = vld [vmem:[%s0 + $0x20] sm:$0xf]
  %v64 = vld [vmem:[%s0 + $0x24] sm:$0xf]
  %v65 = vld [vmem:[%s0 + $0x28] sm:$0xf]
  %v66 = vld [vmem:[%s0 + $0x2c] sm:$0xf]
  %v67 = vld [vmem:[%s0 + $0x30] sm:$0xf]
  %v68 = vld [vmem:[%s0 + $0x34] sm:$0xf]
  %v69 = vld [vmem:[%s0 + $0x38] sm:$0xf]
  %v70 = vld [vmem:[%s0 + $0x3c] sm:$0xf]
  %v71 = vld [vmem:[%s1] sm:$0xf]
  %v88 = vunpack.c.l.b16 %v55
  %v89 = vunpack.c.l.b16 %v56
  %v90 = vunpack.c.l.b16 %v57
  %v91 = vunpack.c.l.b16 %v58
  %v92 = vunpack.c.l.b16 %v59
  %v93 = vunpack.c.l.b16 %v60
  %v94 = vunpack.c.l.b16 %v61
  %v95 = vunpack.c.l.b16 %v62
  %v96 = vunpack.c.l.b16 %v63
  %v97 = vunpack.c.l.b16 %v64
  %v98 = vunpack.c.l.b16 %v65
  %v99 = vunpack.c.l.b16 %v66
  %v100 = vunpack.c.l.b16 %v67
  %v101 = vunpack.c.l.b16 %v68
  %v102 = vunpack.c.l.b16 %v69
  %v103 = vunpack.c.l.b16 %v70
  %v104 = vpack.c.b16 %v89, %v88
  %v105 = vpack.c.b16 %v91, %v90
  %v106 = vpack.c.b16 %v93, %v92
  %v107 = vpack.c.b16 %v95, %v94
  %v108 = vpack.c.b16 %v97, %v96
  %v109 = vpack.c.b16 %v99, %v98
  %v110 = vpack.c.b16 %v101, %v100
  %v111 = vpack.c.b16 %v103, %v102
  %vm112 = vcmask 64512
  %v114 = vsel %vm112, %v104, 0
  %v117 = vsel %vm112, %v105, 0
  %v120 = vsel %vm112, %v106, 0
  %v123 = vsel %vm112, %v107, 0
  %v126 = vsel %vm112, %v108, 0
  %v129 = vsel %vm112, %v109, 0
  %v132 = vsel %vm112, %v110, 0
  %v135 = vsel %vm112, %v111, 0
  %vm137 = vcmask 1043456
  %v139 = vsel %vm137, %v71, 0
  %141 = vmatprep.subr.bf16.mxu0 0
  %142 = vmatpush1.bf16.msra.mxu0 %v139
  %143 = vmatprep.subr.bf16.mxu0 0
  %144 = vmatpush1.bf16.msra.mxu0 0
  %145 = vmatprep.subr.bf16.mxu0 0
  %146 = vmatpush1.bf16.msra.mxu0 0
  %147 = vmatprep.subr.bf16.mxu0 0
  %148 = vmatpush1.bf16.msra.mxu0 0
  %149 = vmatprep.subr.bf16.mxu0 0
  %150 = vmatpush1.bf16.msra.mxu0 0
  %151 = vmatprep.subr.bf16.mxu0 0
  %152 = vmatpush1.bf16.msra.mxu0 0
  %153 = vmatprep.subr.bf16.mxu0 0
  %154 = vmatpush1.bf16.msra.mxu0 0
  %155 = vmatprep.subr.bf16.mxu0 0
  %156 = vmatpush1.bf16.msra.mxu0 0
  %157 = vmatprep.subr.bf16.mxu0 0
  %158 = vmatpush1.bf16.msra.mxu0 0
  %159 = vmatprep.subr.bf16.mxu0 0
  %160 = vmatpush1.bf16.msra.mxu0 0
  %161 = vmatprep.subr.bf16.mxu0 0
  %162 = vmatpush1.bf16.msra.mxu0 0
  %163 = vmatprep.subr.bf16.mxu0 0
  %164 = vmatpush1.bf16.msra.mxu0 0
  %165 = vmatprep.subr.bf16.mxu0 0
  %166 = vmatpush1.bf16.msra.mxu0 0
  %167 = vmatprep.subr.bf16.mxu0 0
  %168 = vmatpush1.bf16.msra.mxu0 0
  %169 = vmatprep.subr.bf16.mxu0 0
  %170 = vmatpush1.bf16.msra.mxu0 0
  %171 = vmatprep.subr.bf16.mxu0 0
  %172 = vmatpush1.bf16.msra.mxu0 0
  %173 = vmatprep.mubr.bf16.mxu0 0
  %174 = vmatmul.mubr.bf16.gmra.mrb[0].mxu0 %v114
  %v175 = vpop.f32.mrb[0].mxu0
  %v176 = vadd.f32 0.0, %v175
  %v177 = vpop.f32.mrb[0].mxu0
  %v178 = vpop.f32.mrb[0].mxu0
  %v179 = vadd.f32 0.0, %v178
  %v180 = vpop.f32.mrb[0].mxu0
  %181 = vmatprep.mubr.bf16.mxu0 0
  %182 = vmatmul.mubr.bf16.gmra.mrb[0].mxu0 %v117
  %v183 = vpop.f32.mrb[0].mxu0
  %v184 = vadd.f32 0.0, %v183
  %v185 = vpop.f32.mrb[0].mxu0
  %v186 = vpop.f32.mrb[0].mxu0
  %v187 = vadd.f32 0.0, %v186
  %v188 = vpop.f32.mrb[0].mxu0
  %189 = vmatprep.mubr.bf16.mxu0 0
  %190 = vmatmul.mubr.bf16.gmra.mrb[0].mxu0 %v120
  %v191 = vpop.f32.mrb[0].mxu0
  %v192 = vadd.f32 0.0, %v191
  %v193 = vpop.f32.mrb[0].mxu0
  %v194 = vpop.f32.mrb[0].mxu0
  %v195 = vadd.f32 0.0, %v194
  %v196 = vpop.f32.mrb[0].mxu0
  %197 = vmatprep.mubr.bf16.mxu0 0
  %198 = vmatmul.mubr.bf16.gmra.mrb[0].mxu0 %v123
  %v199 = vpop.f32.mrb[0].mxu0
  %v200 = vadd.f32 0.0, %v199
  %v201 = vpop.f32.mrb[0].mxu0
  %v202 = vpop.f32.mrb[0].mxu0
  %v203 = vadd.f32 0.0, %v202
  %v204 = vpop.f32.mrb[0].mxu0
  %205 = vmatprep.mubr.bf16.mxu0 0
  %206 = vmatmul.mubr.bf16.gmra.mrb[0].mxu0 %v126
  %v207 = vpop.f32.mrb[0].mxu0
  %v208 = vadd.f32 0.0, %v207
  %v209 = vpop.f32.mrb[0].mxu0
  %v210 = vpop.f32.mrb[0].mxu0
  %v211 = vadd.f32 0.0, %v210
  %v212 = vpop.f32.mrb[0].mxu0
  %213 = vmatprep.mubr.bf16.mxu0 0
  %214 = vmatmul.mubr.bf16.gmra.mrb[0].mxu0 %v129
  %v215 = vpop.f32.mrb[0].mxu0
  %v216 = vadd.f32 0.0, %v215
  %v217 = vpop.f32.mrb[0].mxu0
  %v218 = vpop.f32.mrb[0].mxu0
  %v219 = vadd.f32 0.0, %v218
  %v220 = vpop.f32.mrb[0].mxu0
  %221 = vmatprep.mubr.bf16.mxu0 0
  %222 = vmatmul.mubr.bf16.gmra.mrb[0].mxu0 %v132
  %v223 = vpop.f32.mrb[0].mxu0
  %v224 = vadd.f32 0.0, %v223
  %v225 = vpop.f32.mrb[0].mxu0
  %v226 = vpop.f32.mrb[0].mxu0
  %v227 = vadd.f32 0.0, %v226
  %v228 = vpop.f32.mrb[0].mxu0
  %229 = vmatprep.mubr.bf16.mxu0 0
  %230 = vmatmul.mubr.bf16.gmra.mrb[0].mxu0 %v135
  %v231 = vpop.f32.mrb[0].mxu0
  %v232 = vadd.f32 0.0, %v231
  %v233 = vpop.f32.mrb[0].mxu0
  %v234 = vpop.f32.mrb[0].mxu0
  %v235 = vadd.f32 0.0, %v234
  %v236 = vpop.f32.mrb[0].mxu0
  %237 = vdwg.mxu0
  %v238 = vadd.f32 %v39, %v176
  %v239 = vadd.f32 %v40, %v179
  %v240 = vadd.f32 %v41, %v184
  %v241 = vadd.f32 %v42, %v187
  %v242 = vadd.f32 %v43, %v192
  %v243 = vadd.f32 %v44, %v195
  %v244 = vadd.f32 %v45, %v200
  %v245 = vadd.f32 %v46, %v203
  %v246 = vadd.f32 %v47, %v208
  %v247 = vadd.f32 %v48, %v211
  %v248 = vadd.f32 %v49, %v216
  %v249 = vadd.f32 %v50, %v219
  %v250 = vadd.f32 %v51, %v224
  %v251 = vadd.f32 %v52, %v227
  %v252 = vadd.f32 %v53, %v232
  %v253 = vadd.f32 %v54, %v235
  %vm254 = vcmask 261120
  %255 = vst.msk [vmem:[#allocation2] sm:$0xff] %vm254, %v238
  %256 = vst.msk [vmem:[#allocation2 + $0x8] sm:$0xff] %vm254, %v239
  %257 = vst.msk [vmem:[#allocation2 + $0x10] sm:$0xff] %vm254, %v240
  %258 = vst.msk [vmem:[#allocation2 + $0x18] sm:$0xff] %vm254, %v241
  %259 = vst.msk [vmem:[#allocation2 + $0x20] sm:$0xff] %vm254, %v242
  %260 = vst.msk [vmem:[#allocation2 + $0x28] sm:$0xff] %vm254, %v243
  %261 = vst.msk [vmem:[#allocation2 + $0x30] sm:$0xff] %vm254, %v244
  %262 = vst.msk [vmem:[#allocation2 + $0x38] sm:$0xff] %vm254, %v245
  %263 = vst.msk [vmem:[#allocation2 + $0x40] sm:$0xff] %vm254, %v246
  %264 = vst.msk [vmem:[#allocation2 + $0x48] sm:$0xff] %vm254, %v247
  %265 = vst.msk [vmem:[#allocation2 + $0x50] sm:$0xff] %vm254, %v248
  %266 = vst.msk [vmem:[#allocation2 + $0x58] sm:$0xff] %vm254, %v249
  %267 = vst.msk [vmem:[#allocation2 + $0x60] sm:$0xff] %vm254, %v250
  %268 = vst.msk [vmem:[#allocation2 + $0x68] sm:$0xff] %vm254, %v251
  %269 = vst.msk [vmem:[#allocation2 + $0x70] sm:$0xff] %vm254, %v252
  %270 = vst.msk [vmem:[#allocation2 + $0x78] sm:$0xff] %vm254, %v253
  // Predicated region
  $region22: #{deeplabv3_forward.12} parent=0 // pred_check
    %p271 = pneg %p18
  $region23: #{deeplabv3_forward.12} parent=0 // pred_check_branch
    %273 = sbr.rel (%p271) target = $region25
  $region24: #{deeplabv3_forward.12} parent=0 // pred_region
    %v274 = vld [vmem:[#allocation2] sm:$0xff]
    %v275 = vld [vmem:[#allocation2 + $0x8] sm:$0xff]
    %v276 = vld [vmem:[#allocation2 + $0x10] sm:$0xff]
    %v277 = vld [vmem:[#allocation2 + $0x18] sm:$0xff]
    %v278 = vld [vmem:[#allocation2 + $0x20] sm:$0xff]
    %v279 = vld [vmem:[#allocation2 + $0x28] sm:$0xff]
    %v280 = vld [vmem:[#allocation2 + $0x30] sm:$0xff]
    %v281 = vld [vmem:[#allocation2 + $0x38] sm:$0xff]
    %v282 = vld [vmem:[#allocation2 + $0x40] sm:$0xff]
    %v283 = vld [vmem:[#allocation2 + $0x48] sm:$0xff]
    %v284 = vld [vmem:[#allocation2 + $0x50] sm:$0xff]
    %v285 = vld [vmem:[#allocation2 + $0x58] sm:$0xff]
    %v286 = vld [vmem:[#allocation2 + $0x60] sm:$0xff]
    %v287 = vld [vmem:[#allocation2 + $0x68] sm:$0xff]
    %v288 = vld [vmem:[#allocation2 + $0x70] sm:$0xff]
    %v289 = vld [vmem:[#allocation2 + $0x78] sm:$0xff]
    %v290 = vld [vmem:[%s2] sm:$0x1]
    %v292 = vlaneseq
    %v293 = vshrl.u32 %v292, 7
    %v294 = vsub.s32 0, %v293
    %v295 = vrot.slane %v290, %v294
    %v297 = vmul.f32 %v274, %v295
    %v298 = vmul.f32 %v275, %v295
    %v299 = vmul.f32 %v276, %v295
    %v300 = vmul.f32 %v277, %v295
    %v301 = vmul.f32 %v278, %v295
    %v302 = vmul.f32 %v279, %v295
    %v303 = vmul.f32 %v280, %v295
    %v304 = vmul.f32 %v281, %v295
    %v305 = vmul.f32 %v282, %v295
    %v306 = vmul.f32 %v283, %v295
    %v307 = vmul.f32 %v284, %v295
    %v308 = vmul.f32 %v285, %v295
    %v309 = vmul.f32 %v286, %v295
    %v310 = vmul.f32 %v287, %v295
    %v311 = vmul.f32 %v288, %v295
    %v312 = vmul.f32 %v289, %v295
    %v313 = vld [vmem:[%s3] sm:$0x1]
    %v315 = vlaneseq
    %v316 = vshrl.u32 %v315, 7
    %v317 = vsub.s32 0, %v316
    %v318 = vrot.slane %v313, %v317
    %v320 = vadd.f32 %v297, %v318
    %v321 = vadd.f32 %v298, %v318
    %v322 = vadd.f32 %v299, %v318
    %v323 = vadd.f32 %v300, %v318
    %v324 = vadd.f32 %v301, %v318
    %v325 = vadd.f32 %v302, %v318
    %v326 = vadd.f32 %v303, %v318
    %v327 = vadd.f32 %v304, %v318
    %v328 = vadd.f32 %v305, %v318
    %v329 = vadd.f32 %v306, %v318
    %v330 = vadd.f32 %v307, %v318
    %v331 = vadd.f32 %v308, %v318
    %v332 = vadd.f32 %v309, %v318
    %v333 = vadd.f32 %v310, %v318
    %v334 = vadd.f32 %v311, %v318
    %v335 = vadd.f32 %v312, %v318
    %v336 = vmax.f32 %v320, 0.0
    %v337 = vmax.f32 %v321, 0.0
    %v338 = vmax.f32 %v322, 0.0
    %v339 = vmax.f32 %v323, 0.0
    %v340 = vmax.f32 %v324, 0.0
    %v341 = vmax.f32 %v325, 0.0
    %v342 = vmax.f32 %v326, 0.0
    %v343 = vmax.f32 %v327, 0.0
    %v344 = vmax.f32 %v328, 0.0
    %v345 = vmax.f32 %v329, 0.0
    %v346 = vmax.f32 %v330, 0.0
    %v347 = vmax.f32 %v331, 0.0
    %v348 = vmax.f32 %v332, 0.0
    %v349 = vmax.f32 %v333, 0.0
    %v350 = vmax.f32 %v334, 0.0
    %v351 = vmax.f32 %v335, 0.0
    %v352 = vpack.c.bf16 %v337, %v336
    %v353 = vpack.c.bf16 %v339, %v338
    %v354 = vpack.c.bf16 %v341, %v340
    %v355 = vpack.c.bf16 %v343, %v342
    %v356 = vpack.c.bf16 %v345, %v344
    %v357 = vpack.c.bf16 %v347, %v346
    %v358 = vpack.c.bf16 %v349, %v348
    %v359 = vpack.c.bf16 %v351, %v350
    %v368 = vunpack.c.l.b16 %v352
    %v369 = vunpack.c.h.b16 %v352
    %v370 = vunpack.c.l.b16 %v353
    %v371 = vunpack.c.h.b16 %v353
    %v372 = vunpack.c.l.b16 %v354
    %v373 = vunpack.c.h.b16 %v354
    %v374 = vunpack.c.l.b16 %v355
    %v375 = vunpack.c.h.b16 %v355
    %v376 = vunpack.c.l.b16 %v356
    %v377 = vunpack.c.h.b16 %v356
    %v378 = vunpack.c.l.b16 %v357
    %v379 = vunpack.c.h.b16 %v357
    %v380 = vunpack.c.l.b16 %v358
    %v381 = vunpack.c.h.b16 %v358
    %v382 = vunpack.c.l.b16 %v359
    %v383 = vunpack.c.h.b16 %v359
    %v384 = vpack.c.b16 %v368, %v368
    %v385 = vpack.c.b16 %v369, %v369
    %v386 = vpack.c.b16 %v370, %v370
    %v387 = vpack.c.b16 %v371, %v371
    %v388 = vpack.c.b16 %v372, %v372
    %v389 = vpack.c.b16 %v373, %v373
    %v390 = vpack.c.b16 %v374, %v374
    %v391 = vpack.c.b16 %v375, %v375
    %v392 = vpack.c.b16 %v376, %v376
    %v393 = vpack.c.b16 %v377, %v377
    %v394 = vpack.c.b16 %v378, %v378
    %v395 = vpack.c.b16 %v379, %v379
    %v396 = vpack.c.b16 %v380, %v380
    %v397 = vpack.c.b16 %v381, %v381
    %v398 = vpack.c.b16 %v382, %v382
    %v399 = vpack.c.b16 %v383, %v383
    %vm416 = vcmask 257024
    %417 = vst.msk [vmem:[%s4] sm:$0xf] %vm416, %v384
    %418 = vst.msk [vmem:[%s4 + $0x4] sm:$0xf] %vm416, %v385
    %419 = vst.msk [vmem:[%s4 + $0x8] sm:$0xf] %vm416, %v386
    %420 = vst.msk [vmem:[%s4 + $0xc] sm:$0xf] %vm416, %v387
    %421 = vst.msk [vmem:[%s4 + $0x10] sm:$0xf] %vm416, %v388
    %422 = vst.msk [vmem:[%s4 + $0x14] sm:$0xf] %vm416, %v389
    %423 = vst.msk [vmem:[%s4 + $0x18] sm:$0xf] %vm416, %v390
    %424 = vst.msk [vmem:[%s4 + $0x1c] sm:$0xf] %vm416, %v391
    %425 = vst.msk [vmem:[%s4 + $0x20] sm:$0xf] %vm416, %v392
    %426 = vst.msk [vmem:[%s4 + $0x24] sm:$0xf] %vm416, %v393
    %427 = vst.msk [vmem:[%s4 + $0x28] sm:$0xf] %vm416, %v394
    %428 = vst.msk [vmem:[%s4 + $0x2c] sm:$0xf] %vm416, %v395
    %429 = vst.msk [vmem:[%s4 + $0x30] sm:$0xf] %vm416, %v396
    %430 = vst.msk [vmem:[%s4 + $0x34] sm:$0xf] %vm416, %v397
    %431 = vst.msk [vmem:[%s4 + $0x38] sm:$0xf] %vm416, %v398
    %432 = vst.msk [vmem:[%s4 + $0x3c] sm:$0xf] %vm416, %v399
  $region25: #{deeplabv3_forward.12} parent=0 // pred_fallthru
    _
  // Predicated region
  $region26: #{deeplabv3_forward.12} parent=0 // pred_check
    _
  $region27: #{deeplabv3_forward.12} parent=0 // pred_check_branch
    %434 = sbr.rel (0) target = $region29
  $region28: #{deeplabv3_forward.12} parent=0 // pred_region
    _
  $region29: #{deeplabv3_forward.12} parent=0 // pred_fallthru
    _
  // Predicated region
  $region30: #{deeplabv3_forward.12} parent=0 // pred_check
    _
  $region31: #{deeplabv3_forward.12} parent=0 // pred_check_branch
    %436 = sbr.rel (0) target = $region33
  $region32: #{deeplabv3_forward.12} parent=0 // pred_region
    _
  $region33: #{deeplabv3_forward.12} parent=0 // pred_fallthru
    _

// kernel: deeplabv3_forward.14
$region0: #{deeplabv3_forward.14}
  #allocation0 [shape = 'u32[]', space=smem, size = 0x4, offset = 0x4, fixed_abs, tag = 'smem constant byte address 0x4 - core index']
  #allocation1 [shape = 'u32[144,128]{1,0:T(1,128)}', space=vmem, size = 0x12000, scoped, tag = 'internal scratch']
  #allocation2 [shape = 'f32[64,16]{1,0:T(8,128)}', space=vmem, size = 0x8000, scoped, tag = 'scratch operand']
  %s0 = inlined_call_operand.vmem [shape: bf16[2,44,44,32], index: 0, kind: input, shape index: {}]
  %s1 = inlined_call_operand.vmem [shape: bf16[9,32,16], index: 1, kind: input, shape index: {}]
  %s2 = inlined_call_operand.vmem [shape: f32[1,16], index: 2, kind: input, shape index: {}]
  %s3 = inlined_call_operand.vmem [shape: f32[1,16], index: 3, kind: input, shape index: {}]
  %s4 = inlined_call_operand.vmem [shape: bf16[2,8,8,16], index: 4, kind: output, shape index: {}]
  %s5 = sld [smem:[#allocation0]]
  $region57: #{deeplabv3_forward.14} parent=0
    _
  %s7 = ssub.s32 1, %s5
  %s8 = scalar_select 0, %s7, %s5
  loop: start=0, step=1, limit=4
  $region2: #{deeplabv3_forward.14} parent=0 // loop_pre_header
    _
  $region3: #{deeplabv3_forward.14} parent=0 // loop_header
    %s10 = sphi 0, %s14
    %p11 = scmp.ge.s32.totalorder %s10, 4
    %s17 = sphi 0, %s36
    %s18 = sphi 0, %s32
    %s19 = sphi 0, %s28
    %s20 = sphi 0, %s17
    %s21 = sphi 0, %s18
    %s22 = sphi 0, %s19
    %s23 = sphi 0, %s20
    %s24 = sphi 0, %s21
    %s25 = sphi 0, %s22
    %s41 = sphi 0, %s43
    %s44 = sphi 0, %s41
    %s45 = sphi 0, %s44
    %s61 = sphi 0, %s45
    %s69 = sphi 0, %s71
    %s72 = sphi 0, %s69
    %s73 = sphi 0, %s72
    %s89 = sphi 0, %s73
    %s95 = sphi 0, %s97
    %s98 = sphi 0, %s95
    %s99 = sphi 0, %s98
    %s115 = sphi 0, %s99
    %s121 = sphi 0, %s123
    %s124 = sphi 0, %s121
    %s125 = sphi 0, %s124
    %s141 = sphi 0, %s125
    %s149 = sphi 0, %s151
    %s152 = sphi 0, %s149
    %s153 = sphi 0, %s152
    %s169 = sphi 0, %s153
  $region4: #{deeplabv3_forward.14} parent=0 // loop_header_branch
    %13 = sbr.rel (%p11) target = $region8
  $region5: #{deeplabv3_forward.14} parent=0 // loop_body
    %s15 = ssub.s32 %s10, 1
    %s16 = ssub.s32 %s10, 2
    %s26 = sadd.s32 1, %s19
    %p27 = scmp.ge.s32.totalorder %s26, 1
    %s28 = scalar_select %p27, 0, %s26
    %s29 = sadd.s32 1, %s18
    %s30 = scalar_select %p27, %s29, %s18
    %p31 = scmp.ge.s32.totalorder %s30, 1
    %s32 = scalar_select %p31, 0, %s30
    %s33 = sadd.s32 1, %s17
    %s34 = scalar_select %p31, %s33, %s17
    %p35 = scmp.ge.s32.totalorder %s34, 2
    %s36 = scalar_select %p35, 0, %s34
    %s37 = ssub.s32 %s17, %s36
    %s38 = ssub.s32 %s19, %s28
    %s39 = sor.u32 %s37, %s38
    %p40 = scmp.eq.s32.totalorder %s39, 0
    %s42 = sadd.s32 %s41, 1
    %s43 = scalar_select %p40, %s41, %s42
    %p46 = pneg %p40
    %p47 = scmp.eq.s32.totalorder %s10, 1
    %p48 = por %p46, %p47
    %p49 = scmp.ne.s32.totalorder %s41, %s44
    %p50 = scmp.eq.s32.totalorder %s10, 0
    %p51 = por %p49, %p50
    %p52 = scmp.ne.s32.totalorder %s41, %s44
    %p53 = scmp.eq.s32.totalorder %s15, 1
    %p54 = por %p52, %p53
    %p55 = scmp.ne.s32.totalorder %s44, %s45
    %p56 = scmp.eq.s32.totalorder %s15, 0
    %p57 = por %p55, %p56
    %p58 = scmp.ne.s32.totalorder %s44, %s45
    %p59 = scmp.eq.s32.totalorder %s16, 1
    %p60 = por %p58, %p59
    %p62 = scmp.ne.s32.totalorder %s45, %s61
    %p63 = scmp.eq.s32.totalorder %s16, 0
    %p64 = por %p62, %p63
    %s65 = ssub.s32 %s19, %s28
    %s66 = ssub.s32 %s18, %s32
    %s67 = sor.u32 %s65, %s66
    %p68 = scmp.eq.s32.totalorder %s67, 0
    %s70 = sadd.s32 %s69, 1
    %s71 = scalar_select %p68, %s69, %s70
    %p74 = pneg %p68
    %p75 = scmp.eq.s32.totalorder %s10, 1
    %p76 = por %p74, %p75
    %p77 = scmp.ne.s32.totalorder %s69, %s72
    %p78 = scmp.eq.s32.totalorder %s10, 0
    %p79 = por %p77, %p78
    %p80 = scmp.ne.s32.totalorder %s69, %s72
    %p81 = scmp.eq.s32.totalorder %s15, 1
    %p82 = por %p80, %p81
    %p83 = scmp.ne.s32.totalorder %s72, %s73
    %p84 = scmp.eq.s32.totalorder %s15, 0
    %p85 = por %p83, %p84
    %p86 = scmp.ne.s32.totalorder %s72, %s73
    %p87 = scmp.eq.s32.totalorder %s16, 1
    %p88 = por %p86, %p87
    %p90 = scmp.ne.s32.totalorder %s73, %s89
    %p91 = scmp.eq.s32.totalorder %s16, 0
    %p92 = por %p90, %p91
    %s93 = ssub.s32 %s18, %s32
    %p94 = scmp.eq.s32.totalorder %s93, 0
    %s96 = sadd.s32 %s95, 1
    %s97 = scalar_select %p94, %s95, %s96
    %p100 = pneg %p94
    %p101 = scmp.eq.s32.totalorder %s10, 1
    %p102 = por %p100, %p101
    %p103 = scmp.ne.s32.totalorder %s95, %s98
    %p104 = scmp.eq.s32.totalorder %s10, 0
    %p105 = por %p103, %p104
    %p106 = scmp.ne.s32.totalorder %s95, %s98
    %p107 = scmp.eq.s32.totalorder %s15, 1
    %p108 = por %p106, %p107
    %p109 = scmp.ne.s32.totalorder %s98, %s99
    %p110 = scmp.eq.s32.totalorder %s15, 0
    %p111 = por %p109, %p110
    %p112 = scmp.ne.s32.totalorder %s98, %s99
    %p113 = scmp.eq.s32.totalorder %s16, 1
    %p114 = por %p112, %p113
    %p116 = scmp.ne.s32.totalorder %s99, %s115
    %p117 = scmp.eq.s32.totalorder %s16, 0
    %p118 = por %p116, %p117
    %s119 = ssub.s32 %s18, %s32
    %p120 = scmp.eq.s32.totalorder %s119, 0
    %s122 = sadd.s32 %s121, 1
    %s123 = scalar_select %p120, %s121, %s122
    %p126 = pneg %p120
    %p127 = scmp.eq.s32.totalorder %s10, 1
    %p128 = por %p126, %p127
    %p129 = scmp.ne.s32.totalorder %s121, %s124
    %p130 = scmp.eq.s32.totalorder %s10, 0
    %p131 = por %p129, %p130
    %p132 = scmp.ne.s32.totalorder %s121, %s124
    %p133 = scmp.eq.s32.totalorder %s15, 1
    %p134 = por %p132, %p133
    %p135 = scmp.ne.s32.totalorder %s124, %s125
    %p136 = scmp.eq.s32.totalorder %s15, 0
    %p137 = por %p135, %p136
    %p138 = scmp.ne.s32.totalorder %s124, %s125
    %p139 = scmp.eq.s32.totalorder %s16, 1
    %p140 = por %p138, %p139
    %p142 = scmp.ne.s32.totalorder %s125, %s141
    %p143 = scmp.eq.s32.totalorder %s16, 0
    %p144 = por %p142, %p143
    %s145 = ssub.s32 %s17, %s36
    %s146 = ssub.s32 %s18, %s32
    %s147 = sor.u32 %s145, %s146
    %p148 = scmp.eq.s32.totalorder %s147, 0
    %s150 = sadd.s32 %s149, 1
    %s151 = scalar_select %p148, %s149, %s150
    %p154 = pneg %p148
    %p155 = scmp.eq.s32.totalorder %s10, 1
    %p156 = por %p154, %p155
    %p157 = scmp.ne.s32.totalorder %s149, %s152
    %p158 = scmp.eq.s32.totalorder %s10, 0
    %p159 = por %p157, %p158
    %p160 = scmp.ne.s32.totalorder %s149, %s152
    %p161 = scmp.eq.s32.totalorder %s15, 1
    %p162 = por %p160, %p161
    %p163 = scmp.ne.s32.totalorder %s152, %s153
    %p164 = scmp.eq.s32.totalorder %s15, 0
    %p165 = por %p163, %p164
    %p166 = scmp.ne.s32.totalorder %s152, %s153
    %p167 = scmp.eq.s32.totalorder %s16, 1
    %p168 = por %p166, %p167
    %p170 = scmp.ne.s32.totalorder %s153, %s169
    %p171 = scmp.eq.s32.totalorder %s16, 0
    %p172 = por %p170, %p171
    %p173 = scmp.le.s32.totalorder 1, %s10
    %p174 = scmp.lt.s32.totalorder %s10, 3
    %p175 = pnand %p173, %p174
    %p176 = pneg %p175
    // Predicated region
    $region9: #{deeplabv3_forward.14} parent=5 // pred_check
      _
    $region10: #{deeplabv3_forward.14} parent=5 // pred_check_branch
      %178 = sbr.rel (%p175) target = $region12
    $region11: #{deeplabv3_forward.14} parent=5 // pred_region
      %s179 = ssub.s32 %s10, 1
      // Predicated region
      $region13: #{deeplabv3_forward.14} parent=11 // pred_check
        %p180 = pneg %p85
      $region14: #{deeplabv3_forward.14} parent=11 // pred_check_branch
        %182 = sbr.rel (%p180) target = $region16
      $region15: #{deeplabv3_forward.14} parent=11 // pred_region
        %s183 = smul.u32 4, %s22
        %p184 = scmp.lt.s32.totalorder %s183, 3
        %s185 = scalar_select %p184, %s183, 3
        %p186 = scmp.lt.s32.totalorder %s21, 0
        %s187 = scalar_select %p186, %s21, 0
        %s188 = sadd.s32 %s187, %s185
        %s189 = smul.addr %s188, 4
        %s190 = scalar_lea.vmem %s1, %s189
        %s191 = smul.u32 4, %s22
      $region16: #{deeplabv3_forward.14} parent=11 // pred_fallthru
        _
      // Predicated region
      $region17: #{deeplabv3_forward.14} parent=11 // pred_check
        %p192 = pneg %p111
      $region18: #{deeplabv3_forward.14} parent=11 // pred_check_branch
        %194 = sbr.rel (%p192) target = $region20
      $region19: #{deeplabv3_forward.14} parent=11 // pred_region
        %p195 = scmp.lt.s32.totalorder %s21, 0
        %s196 = scalar_select %p195, %s21, 0
        %s197 = scalar_lea.vmem %s2, %s196
      $region20: #{deeplabv3_forward.14} parent=11 // pred_fallthru
        _
      // Predicated region
      $region21: #{deeplabv3_forward.14} parent=11 // pred_check
        %p198 = pneg %p137
      $region22: #{deeplabv3_forward.14} parent=11 // pred_check_branch
        %200 = sbr.rel (%p198) target = $region24
      $region23: #{deeplabv3_forward.14} parent=11 // pred_region
        %p201 = scmp.lt.s32.totalorder %s21, 0
        %s202 = scalar_select %p201, %s21, 0
        %s203 = scalar_lea.vmem %s3, %s202
      $region24: #{deeplabv3_forward.14} parent=11 // pred_fallthru
        _
    $region12: #{deeplabv3_forward.14} parent=5 // pred_fallthru
      _
    %p204 = scmp.lt.s32.totalorder %s10, 2
    // Predicated region
    $region25: #{deeplabv3_forward.14} parent=5 // pred_check
      %p205 = pneg %p204
    $region26: #{deeplabv3_forward.14} parent=5 // pred_check_branch
      %207 = sbr.rel (%p205) target = $region28
    $region27: #{deeplabv3_forward.14} parent=5 // pred_region
      // Predicated region
      $region29: #{deeplabv3_forward.14} parent=27 // pred_check
        %p208 = pneg %p51
      $region30: #{deeplabv3_forward.14} parent=27 // pred_check_branch
        %210 = sbr.rel (%p208) target = $region32
      $region31: #{deeplabv3_forward.14} parent=27 // pred_region
        %p211 = scmp.lt.s32.totalorder %s17, 1
        %s212 = scalar_select %p211, %s17, 1
        %p213 = scmp.lt.s32.totalorder %s19, 0
        %s214 = scalar_select %p213, %s19, 0
        %s215 = smul.addr %s212, 264
        %s216 = sadd.s32 %s214, %s215
        %s217 = smul.addr %s216, 4
        %s218 = scalar_lea.vmem %s0, %s217
      $region32: #{deeplabv3_forward.14} parent=27 // pred_fallthru
        _
    $region28: #{deeplabv3_forward.14} parent=5 // pred_fallthru
      _
    %p219 = scmp.le.s32.totalorder 1, %s10
    %p220 = scmp.lt.s32.totalorder %s10, 3
    %p221 = pnand %p219, %p220
    %p222 = pneg %p221
    // Predicated region
    $region33: #{deeplabv3_forward.14} parent=5 // pred_check
      _
    $region34: #{deeplabv3_forward.14} parent=5 // pred_check_branch
      %224 = sbr.rel (%p221) target = $region36
    $region35: #{deeplabv3_forward.14} parent=5 // pred_region
      %s225 = ssub.s32 %s10, 1
      %p226 = scmp.lt.s32.totalorder %s20, 1
      %s227 = scalar_select %p226, %s20, 1
      %p228 = scmp.lt.s32.totalorder %s22, 0
      %s229 = scalar_select %p228, %s22, 0
      %s230 = smul.addr %s227, 264
      %s231 = sadd.s32 %s229, %s230
      %s232 = smul.addr %s231, 4
      %s233 = scalar_lea.vmem %s0, %s232
      %p234 = pneg %p57
      %p235 = pneg %p54
      %s236 = smul.u32 4, %s22
      %p237 = scmp.lt.s32.totalorder %s236, 3
      %s238 = scalar_select %p237, %s236, 3
      %p239 = scmp.lt.s32.totalorder %s21, 0
      %s240 = scalar_select %p239, %s21, 0
      %s241 = sadd.s32 %s240, %s238
      %s242 = smul.addr %s241, 4
      %s243 = scalar_lea.vmem %s1, %s242
      %p244 = pneg %p85
      %p245 = pneg %p82
      %p246 = scmp.lt.s32.totalorder %s21, 0
      %s247 = scalar_select %p246, %s21, 0
      %s248 = scalar_lea.vmem %s2, %s247
      %p249 = pneg %p111
      %p250 = pneg %p108
      %p251 = scmp.lt.s32.totalorder %s21, 0
      %s252 = scalar_select %p251, %s21, 0
      %s253 = scalar_lea.vmem %s3, %s252
      %p254 = pneg %p137
      %p255 = pneg %p134
      %p256 = pneg %p165
      %p257 = pneg %p162
      %p258 = scmp.lt.s32.totalorder %s20, 1
      %s259 = scalar_select %p258, %s20, 1
      %p260 = scmp.lt.s32.totalorder %s21, 0
      %s261 = scalar_select %p260, %s21, 0
      %s262 = smul.addr %s259, 8
      %s263 = sadd.s32 %s261, %s262
      %s264 = smul.addr %s263, 4
      %s265 = scalar_lea.vmem %s4, %s264
      %p266 = scmp.lt.s32.totalorder %s20, 1
      %s267 = scalar_select %p266, %s20, 1
      %p268 = scmp.lt.s32.totalorder %s22, 0
      %s269 = scalar_select %p268, %s22, 0
      %s270 = smul.addr %s267, 264
      %s271 = sadd.s32 %s269, %s270
      %s272 = smul.addr %s271, 4
      %s273 = scalar_lea.vmem %s0, %s272
      %s274 = smul.u32 4, %s22
      %p275 = scmp.lt.s32.totalorder %s274, 3
      %s276 = scalar_select %p275, %s274, 3
      %p277 = scmp.lt.s32.totalorder %s21, 0
      %s278 = scalar_select %p277, %s21, 0
      %s279 = sadd.s32 %s278, %s276
      %s280 = smul.addr %s279, 4
      %s281 = scalar_lea.vmem %s1, %s280
      %s282 = smul.u32 4, %s22
      %p283 = scmp.lt.s32.totalorder %s21, 0
      %s284 = scalar_select %p283, %s21, 0
      %s285 = scalar_lea.vmem %s2, %s284
      %p286 = scmp.lt.s32.totalorder %s21, 0
      %s287 = scalar_select %p286, %s21, 0
      %s288 = scalar_lea.vmem %s3, %s287
      %p289 = scmp.lt.s32.totalorder %s20, 1
      %s290 = scalar_select %p289, %s20, 1
      %p291 = scmp.lt.s32.totalorder %s21, 0
      %s292 = scalar_select %p291, %s21, 0
      %s293 = smul.addr %s290, 8
      %s294 = sadd.s32 %s292, %s293
      %s295 = smul.addr %s294, 4
      %s296 = scalar_lea.vmem %s4, %s295
      %p298 = scmp.eq.s32.totalorder %s22, 0
      // Predicated region
      $region37: #{deeplabv3_forward.14} parent=35 // pred_check
        %p299 = pneg %p298
      $region38: #{deeplabv3_forward.14} parent=35 // pred_check_branch
        %301 = sbr.rel (%p299) target = $region40
      $region39: #{deeplabv3_forward.14} parent=35 // pred_region
        %vm302 = vcmask 130048
        %303 = vst.msk [vmem:[#allocation2] sm:$0xff] %vm302, 0.0
        %304 = vst.msk [vmem:[#allocation2 + $0x8] sm:$0xff] %vm302, 0.0
        %305 = vst.msk [vmem:[#allocation2 + $0x10] sm:$0xff] %vm302, 0.0
        %306 = vst.msk [vmem:[#allocation2 + $0x18] sm:$0xff] %vm302, 0.0
        %307 = vst.msk [vmem:[#allocation2 + $0x20] sm:$0xff] %vm302, 0.0
        %308 = vst.msk [vmem:[#allocation2 + $0x28] sm:$0xff] %vm302, 0.0
        %309 = vst.msk [vmem:[#allocation2 + $0x30] sm:$0xff] %vm302, 0.0
        %310 = vst.msk [vmem:[#allocation2 + $0x38] sm:$0xff] %vm302, 0.0
      $region40: #{deeplabv3_forward.14} parent=35 // pred_fallthru
        _
      %v311 = vld [vmem:[#allocation2] sm:$0xff]
      %v312 = vld [vmem:[#allocation2 + $0x8] sm:$0xff]
      %v313 = vld [vmem:[#allocation2 + $0x10] sm:$0xff]
      %v314 = vld [vmem:[#allocation2 + $0x18] sm:$0xff]
      %v315 = vld [vmem:[#allocation2 + $0x20] sm:$0xff]
      %v316 = vld [vmem:[#allocation2 + $0x28] sm:$0xff]
      %v317 = vld [vmem:[#allocation2 + $0x30] sm:$0xff]
      %v318 = vld [vmem:[#allocation2 + $0x38] sm:$0xff]
      %v319 = vld [vmem:[%s273 + $0x124] sm:$0xc]
      %v320 = vld [vmem:[%s273 + $0x128] sm:$0x3]
      %v321 = vld [vmem:[%s273 + $0x13c] sm:$0xc]
      %v322 = vld [vmem:[%s273 + $0x140] sm:$0x3]
      %v323 = vld [vmem:[%s273 + $0x154] sm:$0xc]
      %v324 = vld [vmem:[%s273 + $0x158] sm:$0x3]
      %v325 = vld [vmem:[%s273 + $0x16c] sm:$0xc]
      %v326 = vld [vmem:[%s273 + $0x170] sm:$0x3]
      %v327 = vld [vmem:[%s273 + $0x184] sm:$0xc]
      %v328 = vld [vmem:[%s273 + $0x188] sm:$0x3]
      %v329 = vld [vmem:[%s273 + $0x19c] sm:$0xc]
      %v330 = vld [vmem:[%s273 + $0x1a0] sm:$0x3]
      %v331 = vld [vmem:[%s273 + $0x1b4] sm:$0xc]
      %v332 = vld [vmem:[%s273 + $0x1b8] sm:$0x3]
      %v333 = vld [vmem:[%s273 + $0x1cc] sm:$0xc]
      %v334 = vld [vmem:[%s273 + $0x1d0] sm:$0x3]
      %v335 = vld [vmem:[%s273 + $0x1e4] sm:$0xc]
      %v336 = vld [vmem:[%s273 + $0x1e8] sm:$0x3]
      %v337 = vld [vmem:[%s273 + $0x1fc] sm:$0xc]
      %v338 = vld [vmem:[%s273 + $0x200] sm:$0x3]
      %v339 = vld [vmem:[%s273 + $0x214] sm:$0xc]
      %v340 = vld [vmem:[%s273 + $0x218] sm:$0x3]
      %v341 = vld [vmem:[%s273 + $0x22c] sm:$0xc]
      %v342 = vld [vmem:[%s273 + $0x230] sm:$0x3]
      %v343 = vld [vmem:[%s273 + $0x244] sm:$0xc]
      %v344 = vld [vmem:[%s273 + $0x248] sm:$0x3]
      %v345 = vld [vmem:[%s273 + $0x25c] sm:$0xc]
      %v346 = vld [vmem:[%s273 + $0x260] sm:$0x3]
      %v347 = vld [vmem:[%s273 + $0x274] sm:$0xc]
      %v348 = vld [vmem:[%s273 + $0x278] sm:$0x3]
      %v349 = vld [vmem:[%s273 + $0x28c] sm:$0xc]
      %v350 = vld [vmem:[%s273 + $0x290] sm:$0x3]
      %v351 = vld [vmem:[%s273 + $0x2a4] sm:$0xc]
      %v352 = vld [vmem:[%s273 + $0x2a8] sm:$0x3]
      %v353 = vld [vmem:[%s273 + $0x2bc] sm:$0xc]
      %v354 = vld [vmem:[%s273 + $0x2c0] sm:$0x3]
      %v355 = vld [vmem:[%s273 + $0x2d4] sm:$0xc]
      %v356 = vld [vmem:[%s273 + $0x2d8] sm:$0x3]
      %v357 = vld [vmem:[%s273 + $0x2ec] sm:$0xc]
      %v358 = vld [vmem:[%s273 + $0x2f0] sm:$0x3]
      %vm399 = vcmask 1041408
      %vm400 = vcmask 1045508
      %vm401 = vmor %vm399, %vm400
      %v402 = vrot.slane %v319, 6
      %v403 = vrot.slane %v402, 4
      %v404 = vrot.slane %v320, 6
      %v405 = vsel %vm401, %v403, %v404
      %v406 = vrot.slane %v321, 6
      %v407 = vrot.slane %v406, 4
      %v408 = vrot.slane %v322, 6
      %v409 = vsel %vm401, %v407, %v408
      %v410 = vrot.slane %v323, 6
      %v411 = vrot.slane %v410, 4
      %v412 = vrot.slane %v324, 6
      %v413 = vsel %vm401, %v411, %v412
      %v414 = vrot.slane %v325, 6
      %v415 = vrot.slane %v414, 4
      %v416 = vrot.slane %v326, 6
      %v417 = vsel %vm401, %v415, %v416
      %v418 = vrot.slane %v327, 6
      %v419 = vrot.slane %v418, 4
      %v420 = vrot.slane %v328, 6
      %v421 = vsel %vm401, %v419, %v420
      %v422 = vrot.slane %v329, 6
      %v423 = vrot.slane %v422, 4
      %v424 = vrot.slane %v330, 6
      %v425 = vsel %vm401, %v423, %v424
      %v426 = vrot.slane %v331, 6
      %v427 = vrot.slane %v426, 4
      %v428 = vrot.slane %v332, 6
      %v429 = vsel %vm401, %v427, %v428
      %v430 = vrot.slane %v333, 6
      %v431 = vrot.slane %v430, 4
      %v432 = vrot.slane %v334, 6
      %v433 = vsel %vm401, %v431, %v432
      %v434 = vrot.slane %v335, 6
      %v435 = vrot.slane %v434, 4
      %v436 = vrot.slane %v336, 6
      %v437 = vsel %vm401, %v435, %v436
      %v438 = vrot.slane %v337, 6
      %v439 = vrot.slane %v438, 4
      %v440 = vrot.slane %v338, 6
      %v441 = vsel %vm401, %v439, %v440
      %v442 = vrot.slane %v339, 6
      %v443 = vrot.slane %v442, 4
      %v444 = vrot.slane %v340, 6
      %v445 = vsel %vm401, %v443, %v444
      %v446 = vrot.slane %v341, 6
      %v447 = vrot.slane %v446, 4
      %v448 = vrot.slane %v342, 6
      %v449 = vsel %vm401, %v447, %v448
      %v450 = vrot.slane %v343, 6
      %v451 = vrot.slane %v450, 4
      %v452 = vrot.slane %v344, 6
      %v453 = vsel %vm401, %v451, %v452
      %v454 = vrot.slane %v345, 6
      %v455 = vrot.slane %v454, 4
      %v456 = vrot.slane %v346, 6
      %v457 = vsel %vm401, %v455, %v456
      %v458 = vrot.slane %v347, 6
      %v459 = vrot.slane %v458, 4
      %v460 = vrot.slane %v348, 6
      %v461 = vsel %vm401, %v459, %v460
      %v462 = vrot.slane %v349, 6
      %v463 = vrot.slane %v462, 4
      %v464 = vrot.slane %v350, 6
      %v465 = vsel %vm401, %v463, %v464
      %v466 = vrot.slane %v351, 6
      %v467 = vrot.slane %v466, 4
      %v468 = vrot.slane %v352, 6
      %v469 = vsel %vm401, %v467, %v468
      %v470 = vrot.slane %v353, 6
      %v471 = vrot.slane %v470, 4
      %v472 = vrot.slane %v354, 6
      %v473 = vsel %vm401, %v471, %v472
      %v474 = vrot.slane %v355, 6
      %v475 = vrot.slane %v474, 4
      %v476 = vrot.slane %v356, 6
      %v477 = vsel %vm401, %v475, %v476
      %v478 = vrot.slane %v357, 6
      %v479 = vrot.slane %v478, 4
      %v480 = vrot.slane %v358, 6
      %v481 = vsel %vm401, %v479, %v480
      %v482 = vld [vmem:[%s281] sm:$0xf]
      %v483 = vld [vmem:[%s281 + $0x4] sm:$0xf]
      %v484 = vld [vmem:[%s281 + $0x8] sm:$0xf]
      %v485 = vld [vmem:[%s281 + $0xc] sm:$0xf]
      %v486 = vunpack.c.l.b16 %v405
      %v487 = vunpack.c.l.b16 %v409
      %v488 = vunpack.c.l.b16 %v413
      %v489 = vunpack.c.l.b16 %v417
      %v490 = vunpack.c.l.b16 %v421
      %v491 = vunpack.c.l.b16 %v425
      %v492 = vunpack.c.l.b16 %v429
      %v493 = vunpack.c.l.b16 %v433
      %v494 = vpack.c.b16 %v487, %v486
      %v495 = vpack.c.b16 %v489, %v488
      %v496 = vpack.c.b16 %v491, %v490
      %v497 = vpack.c.b16 %v493, %v492
      %v502 = vunpack.c.l.b16 %v482
      %v503 = vunpack.c.l.b16 %v483
      %v504 = vunpack.c.l.b16 %v484
      %v505 = vunpack.c.l.b16 %v485
      %v506 = vpack.c.b16 %v503, %v502
      %v507 = vpack.c.b16 %v505, %v504
      %vm510 = vcmask 261120
      %v512 = vsel %vm510, %v494, 0
      %v515 = vsel %vm510, %v495, 0
      %v518 = vsel %vm510, %v496, 0
      %v521 = vsel %vm510, %v497, 0
      %523 = vmatprep.subr.bf16.mxu0 0
      %524 = vmatpush1.bf16.msra.mxu0 %v506
      %525 = vmatprep.subr.bf16.mxu0 0
      %526 = vmatpush1.bf16.msra.mxu0 %v507
      %527 = vmatprep.subr.bf16.mxu0 0
      %528 = vmatpush1.bf16.msra.mxu0 0
      %529 = vmatprep.subr.bf16.mxu0 0
      %530 = vmatpush1.bf16.msra.mxu0 0
      %531 = vmatprep.subr.bf16.mxu0 0
      %532 = vmatpush1.bf16.msra.mxu0 0
      %533 = vmatprep.subr.bf16.mxu0 0
      %534 = vmatpush1.bf16.msra.mxu0 0
      %535 = vmatprep.subr.bf16.mxu0 0
      %536 = vmatpush1.bf16.msra.mxu0 0
      %537 = vmatprep.subr.bf16.mxu0 0
      %538 = vmatpush1.bf16.msra.mxu0 0
      %539 = vmatprep.subr.bf16.mxu0 0
      %540 = vmatpush1.bf16.msra.mxu0 0
      %541 = vmatprep.subr.bf16.mxu0 0
      %542 = vmatpush1.bf16.msra.mxu0 0
      %543 = vmatprep.subr.bf16.mxu0 0
      %544 = vmatpush1.bf16.msra.mxu0 0
      %545 = vmatprep.subr.bf16.mxu0 0
      %546 = vmatpush1.bf16.msra.mxu0 0
      %547 = vmatprep.subr.bf16.mxu0 0
      %548 = vmatpush1.bf16.msra.mxu0 0
      %549 = vmatprep.subr.bf16.mxu0 0
      %550 = vmatpush1.bf16.msra.mxu0 0
      %551 = vmatprep.subr.bf16.mxu0 0
      %552 = vmatpush1.bf16.msra.mxu0 0
      %553 = vmatprep.subr.bf16.mxu0 0
      %554 = vmatpush1.bf16.msra.mxu0 0
      %555 = vmatprep.mubr.bf16.mxu0 0
      %556 = vmatmul.mubr.bf16.gmra.mrb[0].mxu0 %v512
      %v557 = vpop.f32.mrb[0].mxu0
      %v558 = vadd.f32 0.0, %v557
      %v559 = vpop.f32.mrb[0].mxu0
      %v560 = vpop.f32.mrb[0].mxu0
      %v561 = vadd.f32 0.0, %v560
      %v562 = vpop.f32.mrb[0].mxu0
      %563 = vmatprep.mubr.bf16.mxu0 0
      %564 = vmatmul.mubr.bf16.gmra.mrb[0].mxu0 %v515
      %v565 = vpop.f32.mrb[0].mxu0
      %v566 = vadd.f32 0.0, %v565
      %v567 = vpop.f32.mrb[0].mxu0
      %v568 = vpop.f32.mrb[0].mxu0
      %v569 = vadd.f32 0.0, %v568
      %v570 = vpop.f32.mrb[0].mxu0
      %571 = vmatprep.mubr.bf16.mxu0 0
      %572 = vmatmul.mubr.bf16.gmra.mrb[0].mxu0 %v518
      %v573 = vpop.f32.mrb[0].mxu0
      %v574 = vadd.f32 0.0, %v573
      %v575 = vpop.f32.mrb[0].mxu0
      %v576 = vpop.f32.mrb[0].mxu0
      %v577 = vadd.f32 0.0, %v576
      %v578 = vpop.f32.mrb[0].mxu0
      %579 = vmatprep.mubr.bf16.mxu0 0
      %580 = vmatmul.mubr.bf16.gmra.mrb[0].mxu0 %v521
      %v581 = vpop.f32.mrb[0].mxu0
      %v582 = vadd.f32 0.0, %v581
      %v583 = vpop.f32.mrb[0].mxu0
      %v584 = vpop.f32.mrb[0].mxu0
      %v585 = vadd.f32 0.0, %v584
      %v586 = vpop.f32.mrb[0].mxu0
      %587 = vdwg.mxu0
      %v588 = vadd.f32 %v311, %v558
      %v589 = vadd.f32 %v312, %v561
      %v590 = vadd.f32 %v313, %v566
      %v591 = vadd.f32 %v314, %v569
      %v592 = vadd.f32 %v315, %v574
      %v593 = vadd.f32 %v316, %v577
      %v594 = vadd.f32 %v317, %v582
      %v595 = vadd.f32 %v318, %v585
      %s596 = scalar_lea.vmem %s281, 48
      %v597 = vld [vmem:[%s596] sm:$0xf]
      %v598 = vld [vmem:[%s596 + $0x4] sm:$0xf]
      %v599 = vld [vmem:[%s596 + $0x8] sm:$0xf]
      %v600 = vld [vmem:[%s596 + $0xc] sm:$0xf]
      %v601 = vunpack.c.l.b16 %v437
      %v602 = vunpack.c.l.b16 %v441
      %v603 = vunpack.c.l.b16 %v445
      %v604 = vunpack.c.l.b16 %v449
      %v605 = vunpack.c.l.b16 %v453
      %v606 = vunpack.c.l.b16 %v457
      %v607 = vpack.c.b16 %v602, %v601
      %v608 = vpack.c.b16 %v604, %v603
      %v609 = vpack.c.b16 %v606, %v605
      %v614 = vunpack.c.l.b16 %v597
      %v615 = vunpack.c.l.b16 %v598
      %v616 = vunpack.c.l.b16 %v599
      %v617 = vunpack.c.l.b16 %v600
      %v618 = vpack.c.b16 %v615, %v614
      %v619 = vpack.c.b16 %v617, %v616
      %v623 = vsel %vm510, %v607, 0
      %v626 = vsel %vm510, %v608, 0
      %v629 = vsel %vm510, %v609, 0
      %631 = vmatprep.subr.bf16.mxu0 0
      %632 = vmatpush1.bf16.msra.mxu0 %v618
      %633 = vmatprep.subr.bf16.mxu0 0
      %634 = vmatpush1.bf16.msra.mxu0 %v619
      %635 = vmatprep.subr.bf16.mxu0 0
      %636 = vmatpush1.bf16.msra.mxu0 0
      %637 = vmatprep.subr.bf16.mxu0 0
      %638 = vmatpush1.bf16.msra.mxu0 0
      %639 = vmatprep.subr.bf16.mxu0 0
      %640 = vmatpush1.bf16.msra.mxu0 0
      %641 = vmatprep.subr.bf16.mxu0 0
      %642 = vmatpush1.bf16.msra.mxu0 0
      %643 = vmatprep.subr.bf16.mxu0 0
      %644 = vmatpush1.bf16.msra.mxu0 0
      %645 = vmatprep.subr.bf16.mxu0 0
      %646 = vmatpush1.bf16.msra.mxu0 0
      %647 = vmatprep.subr.bf16.mxu0 0
      %648 = vmatpush1.bf16.msra.mxu0 0
      %649 = vmatprep.subr.bf16.mxu0 0
      %650 = vmatpush1.bf16.msra.mxu0 0
      %651 = vmatprep.subr.bf16.mxu0 0
      %652 = vmatpush1.bf16.msra.mxu0 0
      %653 = vmatprep.subr.bf16.mxu0 0
      %654 = vmatpush1.bf16.msra.mxu0 0
      %655 = vmatprep.subr.bf16.mxu0 0
      %656 = vmatpush1.bf16.msra.mxu0 0
      %657 = vmatprep.subr.bf16.mxu0 0
      %658 = vmatpush1.bf16.msra.mxu0 0
      %659 = vmatprep.subr.bf16.mxu0 0
      %660 = vmatpush1.bf16.msra.mxu0 0
      %661 = vmatprep.subr.bf16.mxu0 0
      %662 = vmatpush1.bf16.msra.mxu0 0
      %663 = vmatprep.mubr.bf16.mxu0 0
      %664 = vmatmul.mubr.bf16.gmra.mrb[0].mxu0 %v521
      %v665 = vpop.f32.mrb[0].mxu0
      %v666 = vadd.f32 0.0, %v665
      %v667 = vpop.f32.mrb[0].mxu0
      %v668 = vpop.f32.mrb[0].mxu0
      %v669 = vadd.f32 0.0, %v668
      %v670 = vpop.f32.mrb[0].mxu0
      %671 = vmatprep.mubr.bf16.mxu0 0
      %672 = vmatmul.mubr.bf16.gmra.mrb[0].mxu0 %v623
      %v673 = vpop.f32.mrb[0].mxu0
      %v674 = vadd.f32 0.0, %v673
      %v675 = vpop.f32.mrb[0].mxu0
      %v676 = vpop.f32.mrb[0].mxu0
      %v677 = vadd.f32 0.0, %v676
      %v678 = vpop.f32.mrb[0].mxu0
      %679 = vmatprep.mubr.bf16.mxu0 0
      %680 = vmatmul.mubr.bf16.gmra.mrb[0].mxu0 %v626
      %v681 = vpop.f32.mrb[0].mxu0
      %v682 = vadd.f32 0.0, %v681
      %v683 = vpop.f32.mrb[0].mxu0
      %v684 = vpop.f32.mrb[0].mxu0
      %v685 = vadd.f32 0.0, %v684
      %v686 = vpop.f32.mrb[0].mxu0
      %687 = vmatprep.mubr.bf16.mxu0 0
      %688 = vmatmul.mubr.bf16.gmra.mrb[0].mxu0 %v629
      %v689 = vpop.f32.mrb[0].mxu0
      %v690 = vadd.f32 0.0, %v689
      %v691 = vpop.f32.mrb[0].mxu0
      %v692 = vpop.f32.mrb[0].mxu0
      %v693 = vadd.f32 0.0, %v692
      %v694 = vpop.f32.mrb[0].mxu0
      %695 = vdwg.mxu0
      %v696 = vadd.f32 %v588, %v666
      %v697 = vadd.f32 %v589, %v669
      %v698 = vadd.f32 %v590, %v674
      %v699 = vadd.f32 %v591, %v677
      %v700 = vadd.f32 %v592, %v682
      %v701 = vadd.f32 %v593, %v685
      %v702 = vadd.f32 %v594, %v690
      %v703 = vadd.f32 %v595, %v693
      %s704 = scalar_lea.vmem %s281, 96
      %v705 = vld [vmem:[%s704] sm:$0xf]
      %v706 = vld [vmem:[%s704 + $0x4] sm:$0xf]
      %v707 = vld [vmem:[%s704 + $0x8] sm:$0xf]
      %v708 = vld [vmem:[%s704 + $0xc] sm:$0xf]
      %v709 = vunpack.c.l.b16 %v461
      %v710 = vunpack.c.l.b16 %v465
      %v711 = vunpack.c.l.b16 %v469
      %v712 = vunpack.c.l.b16 %v473
      %v713 = vunpack.c.l.b16 %v477
      %v714 = vunpack.c.l.b16 %v481
      %v715 = vpack.c.b16 %v710, %v709
      %v716 = vpack.c.b16 %v712, %v711
      %v717 = vpack.c.b16 %v714, %v713
      %v722 = vunpack.c.l.b16 %v705
      %v723 = vunpack.c.l.b16 %v706
      %v724 = vunpack.c.l.b16 %v707
      %v725 = vunpack.c.l.b16 %v708
      %v726 = vpack.c.b16 %v723, %v722
      %v727 = vpack.c.b16 %v725, %v724
      %v731 = vsel %vm510, %v715, 0
      %v734 = vsel %vm510, %v716, 0
      %v737 = vsel %vm510, %v717, 0
      %739 = vmatprep.subr.bf16.mxu0 0
      %740 = vmatpush1.bf16.msra.mxu0 %v726
      %741 = vmatprep.subr.bf16.mxu0 0
      %742 = vmatpush1.bf16.msra.mxu0 %v727
      %743 = vmatprep.subr.bf16.mxu0 0
      %744 = vmatpush1.bf16.msra.mxu0 0
      %745 = vmatprep.subr.bf16.mxu0 0
      %746 = vmatpush1.bf16.msra.mxu0 0
      %747 = vmatprep.subr.bf16.mxu0 0
      %748 = vmatpush1.bf16.msra.mxu0 0
      %749 = vmatprep.subr.bf16.mxu0 0
      %750 = vmatpush1.bf16.msra.mxu0 0
      %751 = vmatprep.subr.bf16.mxu0 0
      %752 = vmatpush1.bf16.msra.mxu0 0
      %753 = vmatprep.subr.bf16.mxu0 0
      %754 = vmatpush1.bf16.msra.mxu0 0
      %755 = vmatprep.subr.bf16.mxu0 0
      %756 = vmatpush1.bf16.msra.mxu0 0
      %757 = vmatprep.subr.bf16.mxu0 0
      %758 = vmatpush1.bf16.msra.mxu0 0
      %759 = vmatprep.subr.bf16.mxu0 0
      %760 = vmatpush1.bf16.msra.mxu0 0
      %761 = vmatprep.subr.bf16.mxu0 0
      %762 = vmatpush1.bf16.msra.mxu0 0
      %763 = vmatprep.subr.bf16.mxu0 0
      %764 = vmatpush1.bf16.msra.mxu0 0
      %765 = vmatprep.subr.bf16.mxu0 0
      %766 = vmatpush1.bf16.msra.mxu0 0
      %767 = vmatprep.subr.bf16.mxu0 0
      %768 = vmatpush1.bf16.msra.mxu0 0
      %769 = vmatprep.subr.bf16.mxu0 0
      %770 = vmatpush1.bf16.msra.mxu0 0
      %771 = vmatprep.mubr.bf16.mxu0 0
      %772 = vmatmul.mubr.bf16.gmra.mrb[0].mxu0 %v629
      %v773 = vpop.f32.mrb[0].mxu0
      %v774 = vadd.f32 0.0, %v773
      %v775 = vpop.f32.mrb[0].mxu0
      %v776 = vpop.f32.mrb[0].mxu0
      %v777 = vadd.f32 0.0, %v776
      %v778 = vpop.f32.mrb[0].mxu0
      %779 = vmatprep.mubr.bf16.mxu0 0
      %780 = vmatmul.mubr.bf16.gmra.mrb[0].mxu0 %v731
      %v781 = vpop.f32.mrb[0].mxu0
      %v782 = vadd.f32 0.0, %v781
      %v783 = vpop.f32.mrb[0].mxu0
      %v784 = vpop.f32.mrb[0].mxu0
      %v785 = vadd.f32 0.0, %v784
      %v786 = vpop.f32.mrb[0].mxu0
      %787 = vmatprep.mubr.bf16.mxu0 0
      %788 = vmatmul.mubr.bf16.gmra.mrb[0].mxu0 %v734
      %v789 = vpop.f32.mrb[0].mxu0
      %v790 = vadd.f32 0.0, %v789
      %v791 = vpop.f32.mrb[0].mxu0
      %v792 = vpop.f32.mrb[0].mxu0
      %v793 = vadd.f32 0.0, %v792
      %v794 = vpop.f32.mrb[0].mxu0
      %795 = vmatprep.mubr.bf16.mxu0 0
      %796 = vmatmul.mubr.bf16.gmra.mrb[0].mxu0 %v737
      %v797 = vpop.f32.mrb[0].mxu0
      %v798 = vadd.f32 0.0, %v797
      %v799 = vpop.f32.mrb[0].mxu0
      %v800 = vpop.f32.mrb[0].mxu0
      %v801 = vadd.f32 0.0, %v800
      %v802 = vpop.f32.mrb[0].mxu0
      %803 = vdwg.mxu0
      %v804 = vadd.f32 %v696, %v774
      %v805 = vadd.f32 %v697, %v777
      %v806 = vadd.f32 %v698, %v782
      %v807 = vadd.f32 %v699, %v785
      %v808 = vadd.f32 %v700, %v790
      %v809 = vadd.f32 %v701, %v793
      %v810 = vadd.f32 %v702, %v798
      %v811 = vadd.f32 %v703, %v801
      %v812 = vld [vmem:[%s273 + $0x128] sm:$0xe]
      %v813 = vld [vmem:[%s273 + $0x12c] sm:$0x1]
      %v814 = vld [vmem:[%s273 + $0x140] sm:$0xe]
      %v815 = vld [vmem:[%s273 + $0x144] sm:$0x1]
      %v816 = vld [vmem:[%s273 + $0x158] sm:$0xe]
      %v817 = vld [vmem:[%s273 + $0x15c] sm:$0x1]
      %v818 = vld [vmem:[%s273 + $0x170] sm:$0xe]
      %v819 = vld [vmem:[%s273 + $0x174] sm:$0x1]
      %v820 = vld [vmem:[%s273 + $0x188] sm:$0xe]
      %v821 = vld [vmem:[%s273 + $0x18c] sm:$0x1]
      %v822 = vld [vmem:[%s273 + $0x1a0] sm:$0xe]
      %v823 = vld [vmem:[%s273 + $0x1a4] sm:$0x1]
      %v824 = vld [vmem:[%s273 + $0x1b8] sm:$0xe]
      %v825 = vld [vmem:[%s273 + $0x1bc] sm:$0x1]
      %v826 = vld [vmem:[%s273 + $0x1d0] sm:$0xe]
      %v827 = vld [vmem:[%s273 + $0x1d4] sm:$0x1]
      %v828 = vld [vmem:[%s273 + $0x1e8] sm:$0xe]
      %v829 = vld [vmem:[%s273 + $0x1ec] sm:$0x1]
      %v830 = vld [vmem:[%s273 + $0x200] sm:$0xe]
      %v831 = vld [vmem:[%s273 + $0x204] sm:$0x1]
      %v832 = vld [vmem:[%s273 + $0x218] sm:$0xe]
      %v833 = vld [vmem:[%s273 + $0x21c] sm:$0x1]
      %v834 = vld [vmem:[%s273 + $0x230] sm:$0xe]
      %v835 = vld [vmem:[%s273 + $0x234] sm:$0x1]
      %v836 = vld [vmem:[%s273 + $0x248] sm:$0xe]
      %v837 = vld [vmem:[%s273 + $0x24c] sm:$0x1]
      %v838 = vld [vmem:[%s273 + $0x260] sm:$0xe]
      %v839 = vld [vmem:[%s273 + $0x264] sm:$0x1]
      %v840 = vld [vmem:[%s273 + $0x278] sm:$0xe]
      %v841 = vld [vmem:[%s273 + $0x27c] sm:$0x1]
      %v842 = vld [vmem:[%s273 + $0x290] sm:$0xe]
      %v843 = vld [vmem:[%s273 + $0x294] sm:$0x1]
      %v844 = vld [vmem:[%s273 + $0x2a8] sm:$0xe]
      %v845 = vld [vmem:[%s273 + $0x2ac] sm:$0x1]
      %v846 = vld [vmem:[%s273 + $0x2c0] sm:$0xe]
      %v847 = vld [vmem:[%s273 + $0x2c4] sm:$0x1]
      %v848 = vld [vmem:[%s273 + $0x2d8] sm:$0xe]
      %v849 = vld [vmem:[%s273 + $0x2dc] sm:$0x1]
      %v850 = vld [vmem:[%s273 + $0x2f0] sm:$0xe]
      %v851 = vld [vmem:[%s273 + $0x2f4] sm:$0x1]
      %vm892 = vcmask 1042432
      %vm893 = vcmask 1046532
      %vm894 = vmor %vm892, %vm893
      %v895 = vrot.slane %v812, 5
      %v896 = vrot.slane %v895, 4
      %v897 = vrot.slane %v813, 5
      %v898 = vsel %vm894, %v896, %v897
      %v899 = vrot.slane %v814, 5
      %v900 = vrot.slane %v899, 4
      %v901 = vrot.slane %v815, 5
      %v902 = vsel %vm894, %v900, %v901
      %v903 = vrot.slane %v816, 5
      %v904 = vrot.slane %v903, 4
      %v905 = vrot.slane %v817, 5
      %v906 = vsel %vm894, %v904, %v905
      %v907 = vrot.slane %v818, 5
      %v908 = vrot.slane %v907, 4
      %v909 = vrot.slane %v819, 5
      %v910 = vsel %vm894, %v908, %v909
      %v911 = vrot.slane %v820, 5
      %v912 = vrot.slane %v911, 4
      %v913 = vrot.slane %v821, 5
      %v914 = vsel %vm894, %v912, %v913
      %v915 = vrot.slane %v822, 5
      %v916 = vrot.slane %v915, 4
      %v917 = vrot.slane %v823, 5
      %v918 = vsel %vm894, %v916, %v917
      %v919 = vrot.slane %v824, 5
      %v920 = vrot.slane %v919, 4
      %v921 = vrot.slane %v825, 5
      %v922 = vsel %vm894, %v920, %v921
      %v923 = vrot.slane %v826, 5
      %v924 = vrot.slane %v923, 4
      %v925 = vrot.slane %v827, 5
      %v926 = vsel %vm894, %v924, %v925
      %v927 = vrot.slane %v828, 5
      %v928 = vrot.slane %v927, 4
      %v929 = vrot.slane %v829, 5
      %v930 = vsel %vm894, %v928, %v929
      %v931 = vrot.slane %v830, 5
      %v932 = vrot.slane %v931, 4
      %v933 = vrot.slane %v831, 5
      %v934 = vsel %vm894, %v932, %v933
      %v935 = vrot.slane %v832, 5
      %v936 = vrot.slane %v935, 4
      %v937 = vrot.slane %v833, 5
      %v938 = vsel %vm894, %v936, %v937
      %v939 = vrot.slane %v834, 5
      %v940 = vrot.slane %v939, 4
      %v941 = vrot.slane %v835, 5
      %v942 = vsel %vm894, %v940, %v941
      %v943 = vrot.slane %v836, 5
      %v944 = vrot.slane %v943, 4
      %v945 = vrot.slane %v837, 5
      %v946 = vsel %vm894, %v944, %v945
      %v947 = vrot.slane %v838, 5
      %v948 = vrot.slane %v947, 4
      %v949 = vrot.slane %v839, 5
      %v950 = vsel %vm894, %v948, %v949
      %v951 = vrot.slane %v840, 5
      %v952 = vrot.slane %v951, 4
      %v953 = vrot.slane %v841, 5
      %v954 = vsel %vm894, %v952, %v953
      %v955 = vrot.slane %v842, 5
      %v956 = vrot.slane %v955, 4
      %v957 = vrot.slane %v843, 5
      %v958 = vsel %vm894, %v956, %v957
      %v959 = vrot.slane %v844, 5
      %v960 = vrot.slane %v959, 4
      %v961 = vrot.slane %v845, 5
      %v962 = vsel %vm894, %v960, %v961
      %v963 = vrot.slane %v846, 5
      %v964 = vrot.slane %v963, 4
      %v965 = vrot.slane %v847, 5
      %v966 = vsel %vm894, %v964, %v965
      %v967 = vrot.slane %v848, 5
      %v968 = vrot.slane %v967, 4
      %v969 = vrot.slane %v849, 5
      %v970 = vsel %vm894, %v968, %v969
      %v971 = vrot.slane %v850, 5
      %v972 = vrot.slane %v971, 4
      %v973 = vrot.slane %v851, 5
      %v974 = vsel %vm894, %v972, %v973
      %s975 = scalar_lea.vmem %s281, 16
      %v976 = vld [vmem:[%s975] sm:$0xf]
      %v977 = vld [vmem:[%s975 + $0x4] sm:$0xf]
      %v978 = vld [vmem:[%s975 + $0x8] sm:$0xf]
      %v979 = vld [vmem:[%s975 + $0xc] sm:$0xf]
      %v980 = vunpack.c.l.b16 %v898
      %v981 = vunpack.c.l.b16 %v902
      %v982 = vunpack.c.l.b16 %v906
      %v983 = vunpack.c.l.b16 %v910
      %v984 = vunpack.c.l.b16 %v914
      %v985 = vunpack.c.l.b16 %v918
      %v986 = vunpack.c.l.b16 %v922
      %v987 = vunpack.c.l.b16 %v926
      %v988 = vpack.c.b16 %v981, %v980
      %v989 = vpack.c.b16 %v983, %v982
      %v990 = vpack.c.b16 %v985, %v984
      %v991 = vpack.c.b16 %v987, %v986
      %v996 = vunpack.c.l.b16 %v976
      %v997 = vunpack.c.l.b16 %v977
      %v998 = vunpack.c.l.b16 %v978
      %v999 = vunpack.c.l.b16 %v979
      %v1000 = vpack.c.b16 %v997, %v996
      %v1001 = vpack.c.b16 %v999, %v998
      %v1005 = vsel %vm510, %v988, 0
      %v1008 = vsel %vm510, %v989, 0
      %v1011 = vsel %vm510, %v990, 0
      %v1014 = vsel %vm510, %v991, 0
      %1016 = vmatprep.subr.bf16.mxu0 0
      %1017 = vmatpush1.bf16.msra.mxu0 %v1000
      %1018 = vmatprep.subr.bf16.mxu0 0
      %1019 = vmatpush1.bf16.msra.mxu0 %v1001
      %1020 = vmatprep.subr.bf16.mxu0 0
      %1021 = vmatpush1.bf16.msra.mxu0 0
      %1022 = vmatprep.subr.bf16.mxu0 0
      %1023 = vmatpush1.bf16.msra.mxu0 0
      %1024 = vmatprep.subr.bf16.mxu0 0
      %1025 = vmatpush1.bf16.msra.mxu0 0
      %1026 = vmatprep.subr.bf16.mxu0 0
      %1027 = vmatpush1.bf16.msra.mxu0 0
      %1028 = vmatprep.subr.bf16.mxu0 0
      %1029 = vmatpush1.bf16.msra.mxu0 0
      %1030 = vmatprep.subr.bf16.mxu0 0
      %1031 = vmatpush1.bf16.msra.mxu0 0
      %1032 = vmatprep.subr.bf16.mxu0 0
      %1033 = vmatpush1.bf16.msra.mxu0 0
      %1034 = vmatprep.subr.bf16.mxu0 0
      %1035 = vmatpush1.bf16.msra.mxu0 0
      %1036 = vmatprep.subr.bf16.mxu0 0
      %1037 = vmatpush1.bf16.msra.mxu0 0
      %1038 = vmatprep.subr.bf16.mxu0 0
      %1039 = vmatpush1.bf16.msra.mxu0 0
      %1040 = vmatprep.subr.bf16.mxu0 0
      %1041 = vmatpush1.bf16.msra.mxu0 0
      %1042 = vmatprep.subr.bf16.mxu0 0
      %1043 = vmatpush1.bf16.msra.mxu0 0
      %1044 = vmatprep.subr.bf16.mxu0 0
      %1045 = vmatpush1.bf16.msra.mxu0 0
      %1046 = vmatprep.subr.bf16.mxu0 0
      %1047 = vmatpush1.bf16.msra.mxu0 0
      %1048 = vmatprep.mubr.bf16.mxu0 0
      %1049 = vmatmul.mubr.bf16.gmra.mrb[0].mxu0 %v1005
      %v1050 = vpop.f32.mrb[0].mxu0
      %v1051 = vadd.f32 0.0, %v1050
      %v1052 = vpop.f32.mrb[0].mxu0
      %v1053 = vpop.f32.mrb[0].mxu0
      %v1054 = vadd.f32 0.0, %v1053
      %v1055 = vpop.f32.mrb[0].mxu0
      %1056 = vmatprep.mubr.bf16.mxu0 0
      %1057 = vmatmul.mubr.bf16.gmra.mrb[0].mxu0 %v1008
      %v1058 = vpop.f32.mrb[0].mxu0
      %v1059 = vadd.f32 0.0, %v1058
      %v1060 = vpop.f32.mrb[0].mxu0
      %v1061 = vpop.f32.mrb[0].mxu0
      %v1062 = vadd.f32 0.0, %v1061
      %v1063 = vpop.f32.mrb[0].mxu0
      %1064 = vmatprep.mubr.bf16.mxu0 0
      %1065 = vmatmul.mubr.bf16.gmra.mrb[0].mxu0 %v1011
      %v1066 = vpop.f32.mrb[0].mxu0
      %v1067 = vadd.f32 0.0, %v1066
      %v1068 = vpop.f32.mrb[0].mxu0
      %v1069 = vpop.f32.mrb[0].mxu0
      %v1070 = vadd.f32 0.0, %v1069
      %v1071 = vpop.f32.mrb[0].mxu0
      %1072 = vmatprep.mubr.bf16.mxu0 0
      %1073 = vmatmul.mubr.bf16.gmra.mrb[0].mxu0 %v1014
      %v1074 = vpop.f32.mrb[0].mxu0
      %v1075 = vadd.f32 0.0, %v1074
      %v1076 = vpop.f32.mrb[0].mxu0
      %v1077 = vpop.f32.mrb[0].mxu0
      %v1078 = vadd.f32 0.0, %v1077
      %v1079 = vpop.f32.mrb[0].mxu0
      %1080 = vdwg.mxu0
      %v1081 = vadd.f32 %v804, %v1051
      %v1082 = vadd.f32 %v805, %v1054
      %v1083 = vadd.f32 %v806, %v1059
      %v1084 = vadd.f32 %v807, %v1062
      %v1085 = vadd.f32 %v808, %v1067
      %v1086 = vadd.f32 %v809, %v1070
      %v1087 = vadd.f32 %v810, %v1075
      %v1088 = vadd.f32 %v811, %v1078
      %s1089 = scalar_lea.vmem %s281, 64
      %v1090 = vld [vmem:[%s1089] sm:$0xf]
      %v1091 = vld [vmem:[%s1089 + $0x4] sm:$0xf]
      %v1092 = vld [vmem:[%s1089 + $0x8] sm:$0xf]
      %v1093 = vld [vmem:[%s1089 + $0xc] sm:$0xf]
      %v1094 = vunpack.c.l.b16 %v930
      %v1095 = vunpack.c.l.b16 %v934
      %v1096 = vunpack.c.l.b16 %v938
      %v1097 = vunpack.c.l.b16 %v942
      %v1098 = vunpack.c.l.b16 %v946
      %v1099 = vunpack.c.l.b16 %v950
      %v1100 = vpack.c.b16 %v1095, %v1094
      %v1101 = vpack.c.b16 %v1097, %v1096
      %v1102 = vpack.c.b16 %v1099, %v1098
      %v1107 = vunpack.c.l.b16 %v1090
      %v1108 = vunpack.c.l.b16 %v1091
      %v1109 = vunpack.c.l.b16 %v1092
      %v1110 = vunpack.c.l.b16 %v1093
      %v1111 = vpack.c.b16 %v1108, %v1107
      %v1112 = vpack.c.b16 %v1110, %v1109
      %v1116 = vsel %vm510, %v1100, 0
      %v1119 = vsel %vm510, %v1101, 0
      %v1122 = vsel %vm510, %v1102, 0
      %1124 = vmatprep.subr.bf16.mxu0 0
      %1125 = vmatpush1.bf16.msra.mxu0 %v1111
      %1126 = vmatprep.subr.bf16.mxu0 0
      %1127 = vmatpush1.bf16.msra.mxu0 %v1112
      %1128 = vmatprep.subr.bf16.mxu0 0
      %1129 = vmatpush1.bf16.msra.mxu0 0
      %1130 = vmatprep.subr.bf16.mxu0 0
      %1131 = vmatpush1.bf16.msra.mxu0 0
      %1132 = vmatprep.subr.bf16.mxu0 0
      %1133 = vmatpush1.bf16.msra.mxu0 0
      %1134 = vmatprep.subr.bf16.mxu0 0
      %1135 = vmatpush1.bf16.msra.mxu0 0
      %1136 = vmatprep.subr.bf16.mxu0 0
      %1137 = vmatpush1.bf16.msra.mxu0 0
      %1138 = vmatprep.subr.bf16.mxu0 0
      %1139 = vmatpush1.bf16.msra.mxu0 0
      %1140 = vmatprep.subr.bf16.mxu0 0
      %1141 = vmatpush1.bf16.msra.mxu0 0
      %1142 = vmatprep.subr.bf16.mxu0 0
      %1143 = vmatpush1.bf16.msra.mxu0 0
      %1144 = vmatprep.subr.bf16.mxu0 0
      %1145 = vmatpush1.bf16.msra.mxu0 0
      %1146 = vmatprep.subr.bf16.mxu0 0
      %1147 = vmatpush1.bf16.msra.mxu0 0
      %1148 = vmatprep.subr.bf16.mxu0 0
      %1149 = vmatpush1.bf16.msra.mxu0 0
      %1150 = vmatprep.subr.bf16.mxu0 0
      %1151 = vmatpush1.bf16.msra.mxu0 0
      %1152 = vmatprep.subr.bf16.mxu0 0
      %1153 = vmatpush1.bf16.msra.mxu0 0
      %1154 = vmatprep.subr.bf16.mxu0 0
      %1155 = vmatpush1.bf16.msra.mxu0 0
      %1156 = vmatprep.mubr.bf16.mxu0 0
      %1157 = vmatmul.mubr.bf16.gmra.mrb[0].mxu0 %v1014
      %v1158 = vpop.f32.mrb[0].mxu0
      %v1159 = vadd.f32 0.0, %v1158
      %v1160 = vpop.f32.mrb[0].mxu0
      %v1161 = vpop.f32.mrb[0].mxu0
      %v1162 = vadd.f32 0.0, %v1161
      %v1163 = vpop.f32.mrb[0].mxu0
      %1164 = vmatprep.mubr.bf16.mxu0 0
      %1165 = vmatmul.mubr.bf16.gmra.mrb[0].mxu0 %v1116
      %v1166 = vpop.f32.mrb[0].mxu0
      %v1167 = vadd.f32 0.0, %v1166
      %v1168 = vpop.f32.mrb[0].mxu0
      %v1169 = vpop.f32.mrb[0].mxu0
      %v1170 = vadd.f32 0.0, %v1169
      %v1171 = vpop.f32.mrb[0].mxu0
      %1172 = vmatprep.mubr.bf16.mxu0 0
      %1173 = vmatmul.mubr.bf16.gmra.mrb[0].mxu0 %v1119
      %v1174 = vpop.f32.mrb[0].mxu0
      %v1175 = vadd.f32 0.0, %v1174
      %v1176 = vpop.f32.mrb[0].mxu0
      %v1177 = vpop.f32.mrb[0].mxu0
      %v1178 = vadd.f32 0.0, %v1177
      %v1179 = vpop.f32.mrb[0].mxu0
      %1180 = vmatprep.mubr.bf16.mxu0 0
      %1181 = vmatmul.mubr.bf16.gmra.mrb[0].mxu0 %v1122
      %v1182 = vpop.f32.mrb[0].mxu0
      %v1183 = vadd.f32 0.0, %v1182
      %v1184 = vpop.f32.mrb[0].mxu0
      %v1185 = vpop.f32.mrb[0].mxu0
      %v1186 = vadd.f32 0.0, %v1185
      %v1187 = vpop.f32.mrb[0].mxu0
      %1188 = vdwg.mxu0
      %v1189 = vadd.f32 %v1081, %v1159
      %v1190 = vadd.f32 %v1082, %v1162
      %v1191 = vadd.f32 %v1083, %v1167
      %v1192 = vadd.f32 %v1084, %v1170
      %v1193 = vadd.f32 %v1085, %v1175
      %v1194 = vadd.f32 %v1086, %v1178
      %v1195 = vadd.f32 %v1087, %v1183
      %v1196 = vadd.f32 %v1088, %v1186
      %s1197 = scalar_lea.vmem %s281, 112
      %v1198 = vld [vmem:[%s1197] sm:$0xf]
      %v1199 = vld [vmem:[%s1197 + $0x4] sm:$0xf]
      %v1200 = vld [vmem:[%s1197 + $0x8] sm:$0xf]
      %v1201 = vld [vmem:[%s1197 + $0xc] sm:$0xf]
      %v1202 = vunpack.c.l.b16 %v954
      %v1203 = vunpack.c.l.b16 %v958
      %v1204 = vunpack.c.l.b16 %v962
      %v1205 = vunpack.c.l.b16 %v966
      %v1206 = vunpack.c.l.b16 %v970
      %v1207 = vunpack.c.l.b16 %v974
      %v1208 = vpack.c.b16 %v1203, %v1202
      %v1209 = vpack.c.b16 %v1205, %v1204
      %v1210 = vpack.c.b16 %v1207, %v1206
      %v1215 = vunpack.c.l.b16 %v1198
      %v1216 = vunpack.c.l.b16 %v1199
      %v1217 = vunpack.c.l.b16 %v1200
      %v1218 = vunpack.c.l.b16 %v1201
      %v1219 = vpack.c.b16 %v1216, %v1215
      %v1220 = vpack.c.b16 %v1218, %v1217
      %v1224 = vsel %vm510, %v1208, 0
      %v1227 = vsel %vm510, %v1209, 0
      %v1230 = vsel %vm510, %v1210, 0
      %1232 = vmatprep.subr.bf16.mxu0 0
      %1233 = vmatpush1.bf16.msra.mxu0 %v1219
      %1234 = vmatprep.subr.bf16.mxu0 0
      %1235 = vmatpush1.bf16.msra.mxu0 %v1220
      %1236 = vmatprep.subr.bf16.mxu0 0
      %1237 = vmatpush1.bf16.msra.mxu0 0
      %1238 = vmatprep.subr.bf16.mxu0 0
      %1239 = vmatpush1.bf16.msra.mxu0 0
      %1240 = vmatprep.subr.bf16.mxu0 0
      %1241 = vmatpush1.bf16.msra.mxu0 0
      %1242 = vmatprep.subr.bf16.mxu0 0
      %1243 = vmatpush1.bf16.msra.mxu0 0
      %1244 = vmatprep.subr.bf16.mxu0 0
      %1245 = vmatpush1.bf16.msra.mxu0 0
      %1246 = vmatprep.subr.bf16.mxu0 0
      %1247 = vmatpush1.bf16.msra.mxu0 0
      %1248 = vmatprep.subr.bf16.mxu0 0
      %1249 = vmatpush1.bf16.msra.mxu0 0
      %1250 = vmatprep.subr.bf16.mxu0 0
      %1251 = vmatpush1.bf16.msra.mxu0 0
      %1252 = vmatprep.subr.bf16.mxu0 0
      %1253 = vmatpush1.bf16.msra.mxu0 0
      %1254 = vmatprep.subr.bf16.mxu0 0
      %1255 = vmatpush1.bf16.msra.mxu0 0
      %1256 = vmatprep.subr.bf16.mxu0 0
      %1257 = vmatpush1.bf16.msra.mxu0 0
      %1258 = vmatprep.subr.bf16.mxu0 0
      %1259 = vmatpush1.bf16.msra.mxu0 0
      %1260 = vmatprep.subr.bf16.mxu0 0
      %1261 = vmatpush1.bf16.msra.mxu0 0
      %1262 = vmatprep.subr.bf16.mxu0 0
      %1263 = vmatpush1.bf16.msra.mxu0 0
      %1264 = vmatprep.mubr.bf16.mxu0 0
      %1265 = vmatmul.mubr.bf16.gmra.mrb[0].mxu0 %v1122
      %v1266 = vpop.f32.mrb[0].mxu0
      %v1267 = vadd.f32 0.0, %v1266
      %v1268 = vpop.f32.mrb[0].mxu0
      %v1269 = vpop.f32.mrb[0].mxu0
      %v1270 = vadd.f32 0.0, %v1269
      %v1271 = vpop.f32.mrb[0].mxu0
      %1272 = vmatprep.mubr.bf16.mxu0 0
      %1273 = vmatmul.mubr.bf16.gmra.mrb[0].mxu0 %v1224
      %v1274 = vpop.f32.mrb[0].mxu0
      %v1275 = vadd.f32 0.0, %v1274
      %v1276 = vpop.f32.mrb[0].mxu0
      %v1277 = vpop.f32.mrb[0].mxu0
      %v1278 = vadd.f32 0.0, %v1277
      %v1279 = vpop.f32.mrb[0].mxu0
      %1280 = vmatprep.mubr.bf16.mxu0 0
      %1281 = vmatmul.mubr.bf16.gmra.mrb[0].mxu0 %v1227
      %v1282 = vpop.f32.mrb[0].mxu0
      %v1283 = vadd.f32 0.0, %v1282
      %v1284 = vpop.f32.mrb[0].mxu0
      %v1285 = vpop.f32.mrb[0].mxu0
      %v1286 = vadd.f32 0.0, %v1285
      %v1287 = vpop.f32.mrb[0].mxu0
      %1288 = vmatprep.mubr.bf16.mxu0 0
      %1289 = vmatmul.mubr.bf16.gmra.mrb[0].mxu0 %v1230
      %v1290 = vpop.f32.mrb[0].mxu0
      %v1291 = vadd.f32 0.0, %v1290
      %v1292 = vpop.f32.mrb[0].mxu0
      %v1293 = vpop.f32.mrb[0].mxu0
      %v1294 = vadd.f32 0.0, %v1293
      %v1295 = vpop.f32.mrb[0].mxu0
      %1296 = vdwg.mxu0
      %v1297 = vadd.f32 %v1189, %v1267
      %v1298 = vadd.f32 %v1190, %v1270
      %v1299 = vadd.f32 %v1191, %v1275
      %v1300 = vadd.f32 %v1192, %v1278
      %v1301 = vadd.f32 %v1193, %v1283
      %v1302 = vadd.f32 %v1194, %v1286
      %v1303 = vadd.f32 %v1195, %v1291
      %v1304 = vadd.f32 %v1196, %v1294
      %v1305 = vld [vmem:[%s273 + $0x12c] sm:$0xf]
      %v1306 = vld [vmem:[%s273 + $0x144] sm:$0xf]
      %v1307 = vld [vmem:[%s273 + $0x15c] sm:$0xf]
      %v1308 = vld [vmem:[%s273 + $0x174] sm:$0xf]
      %v1309 = vld [vmem:[%s273 + $0x18c] sm:$0xf]
      %v1310 = vld [vmem:[%s273 + $0x1a4] sm:$0xf]
      %v1311 = vld [vmem:[%s273 + $0x1bc] sm:$0xf]
      %v1312 = vld [vmem:[%s273 + $0x1d4] sm:$0xf]
      %v1313 = vld [vmem:[%s273 + $0x1ec] sm:$0xf]
      %v1314 = vld [vmem:[%s273 + $0x204] sm:$0xf]
      %v1315 = vld [vmem:[%s273 + $0x21c] sm:$0xf]
      %v1316 = vld [vmem:[%s273 + $0x234] sm:$0xf]
      %v1317 = vld [vmem:[%s273 + $0x24c] sm:$0xf]
      %v1318 = vld [vmem:[%s273 + $0x264] sm:$0xf]
      %v1319 = vld [vmem:[%s273 + $0x27c] sm:$0xf]
      %v1320 = vld [vmem:[%s273 + $0x294] sm:$0xf]
      %v1321 = vld [vmem:[%s273 + $0x2ac] sm:$0xf]
      %v1322 = vld [vmem:[%s273 + $0x2c4] sm:$0xf]
      %v1323 = vld [vmem:[%s273 + $0x2dc] sm:$0xf]
      %v1324 = vld [vmem:[%s273 + $0x2f4] sm:$0xf]
      %s1325 = scalar_lea.vmem %s281, 32
      %v1326 = vld [vmem:[%s1325] sm:$0xf]
      %v1327 = vld [vmem:[%s1325 + $0x4] sm:$0xf]
      %v1328 = vld [vmem:[%s1325 + $0x8] sm:$0xf]
      %v1329 = vld [vmem:[%s1325 + $0xc] sm:$0xf]
      %v1338 = vunpack.c.l.b16 %v1305
      %v1339 = vunpack.c.l.b16 %v1306
      %v1340 = vunpack.c.l.b16 %v1307
      %v1341 = vunpack.c.l.b16 %v1308
      %v1342 = vunpack.c.l.b16 %v1309
      %v1343 = vunpack.c.l.b16 %v1310
      %v1344 = vunpack.c.l.b16 %v1311
      %v1345 = vunpack.c.l.b16 %v1312
      %v1346 = vpack.c.b16 %v1339, %v1338
      %v1347 = vpack.c.b16 %v1341, %v1340
      %v1348 = vpack.c.b16 %v1343, %v1342
      %v1349 = vpack.c.b16 %v1345, %v1344
      %v1354 = vunpack.c.l.b16 %v1326
      %v1355 = vunpack.c.l.b16 %v1327
      %v1356 = vunpack.c.l.b16 %v1328
      %v1357 = vunpack.c.l.b16 %v1329
      %v1358 = vpack.c.b16 %v1355, %v1354
      %v1359 = vpack.c.b16 %v1357, %v1356
      %v1363 = vsel %vm510, %v1346, 0
      %v1366 = vsel %vm510, %v1347, 0
      %v1369 = vsel %vm510, %v1348, 0
      %v1372 = vsel %vm510, %v1349, 0
      %1374 = vmatprep.subr.bf16.mxu0 0
      %1375 = vmatpush1.bf16.msra.mxu0 %v1358
      %1376 = vmatprep.subr.bf16.mxu0 0
      %1377 = vmatpush1.bf16.msra.mxu0 %v1359
      %1378 = vmatprep.subr.bf16.mxu0 0
      %1379 = vmatpush1.bf16.msra.mxu0 0
      %1380 = vmatprep.subr.bf16.mxu0 0
      %1381 = vmatpush1.bf16.msra.mxu0 0
      %1382 = vmatprep.subr.bf16.mxu0 0
      %1383 = vmatpush1.bf16.msra.mxu0 0
      %1384 = vmatprep.subr.bf16.mxu0 0
      %1385 = vmatpush1.bf16.msra.mxu0 0
      %1386 = vmatprep.subr.bf16.mxu0 0
      %1387 = vmatpush1.bf16.msra.mxu0 0
      %1388 = vmatprep.subr.bf16.mxu0 0
      %1389 = vmatpush1.bf16.msra.mxu0 0
      %1390 = vmatprep.subr.bf16.mxu0 0
      %1391 = vmatpush1.bf16.msra.mxu0 0
      %1392 = vmatprep.subr.bf16.mxu0 0
      %1393 = vmatpush1.bf16.msra.mxu0 0
      %1394 = vmatprep.subr.bf16.mxu0 0
      %1395 = vmatpush1.bf16.msra.mxu0 0
      %1396 = vmatprep.subr.bf16.mxu0 0
      %1397 = vmatpush1.bf16.msra.mxu0 0
      %1398 = vmatprep.subr.bf16.mxu0 0
      %1399 = vmatpush1.bf16.msra.mxu0 0
      %1400 = vmatprep.subr.bf16.mxu0 0
      %1401 = vmatpush1.bf16.msra.mxu0 0
      %1402 = vmatprep.subr.bf16.mxu0 0
      %1403 = vmatpush1.bf16.msra.mxu0 0
      %1404 = vmatprep.subr.bf16.mxu0 0
      %1405 = vmatpush1.bf16.msra.mxu0 0
      %1406 = vmatprep.mubr.bf16.mxu0 0
      %1407 = vmatmul.mubr.bf16.gmra.mrb[0].mxu0 %v1363
      %v1408 = vpop.f32.mrb[0].mxu0
      %v1409 = vadd.f32 0.0, %v1408
      %v1410 = vpop.f32.mrb[0].mxu0
      %v1411 = vpop.f32.mrb[0].mxu0
      %v1412 = vadd.f32 0.0, %v1411
      %v1413 = vpop.f32.mrb[0].mxu0
      %1414 = vmatprep.mubr.bf16.mxu0 0
      %1415 = vmatmul.mubr.bf16.gmra.mrb[0].mxu0 %v1366
      %v1416 = vpop.f32.mrb[0].mxu0
      %v1417 = vadd.f32 0.0, %v1416
      %v1418 = vpop.f32.mrb[0].mxu0
      %v1419 = vpop.f32.mrb[0].mxu0
      %v1420 = vadd.f32 0.0, %v1419
      %v1421 = vpop.f32.mrb[0].mxu0
      %1422 = vmatprep.mubr.bf16.mxu0 0
      %1423 = vmatmul.mubr.bf16.gmra.mrb[0].mxu0 %v1369
      %v1424 = vpop.f32.mrb[0].mxu0
      %v1425 = vadd.f32 0.0, %v1424
      %v1426 = vpop.f32.mrb[0].mxu0
      %v1427 = vpop.f32.mrb[0].mxu0
      %v1428 = vadd.f32 0.0, %v1427
      %v1429 = vpop.f32.mrb[0].mxu0
      %1430 = vmatprep.mubr.bf16.mxu0 0
      %1431 = vmatmul.mubr.bf16.gmra.mrb[0].mxu0 %v1372
      %v1432 = vpop.f32.mrb[0].mxu0
      %v1433 = vadd.f32 0.0, %v1432
      %v1434 = vpop.f32.mrb[0].mxu0
      %v1435 = vpop.f32.mrb[0].mxu0
      %v1436 = vadd.f32 0.0, %v1435
      %v1437 = vpop.f32.mrb[0].mxu0
      %1438 = vdwg.mxu0
      %v1439 = vadd.f32 %v1297, %v1409
      %v1440 = vadd.f32 %v1298, %v1412
      %v1441 = vadd.f32 %v1299, %v1417
      %v1442 = vadd.f32 %v1300, %v1420
      %v1443 = vadd.f32 %v1301, %v1425
      %v1444 = vadd.f32 %v1302, %v1428
      %v1445 = vadd.f32 %v1303, %v1433
      %v1446 = vadd.f32 %v1304, %v1436
      %s1447 = scalar_lea.vmem %s281, 80
      %v1448 = vld [vmem:[%s1447] sm:$0xf]
      %v1449 = vld [vmem:[%s1447 + $0x4] sm:$0xf]
      %v1450 = vld [vmem:[%s1447 + $0x8] sm:$0xf]
      %v1451 = vld [vmem:[%s1447 + $0xc] sm:$0xf]
      %v1458 = vunpack.c.l.b16 %v1313
      %v1459 = vunpack.c.l.b16 %v1314
      %v1460 = vunpack.c.l.b16 %v1315
      %v1461 = vunpack.c.l.b16 %v1316
      %v1462 = vunpack.c.l.b16 %v1317
      %v1463 = vunpack.c.l.b16 %v1318
      %v1464 = vpack.c.b16 %v1459, %v1458
      %v1465 = vpack.c.b16 %v1461, %v1460
      %v1466 = vpack.c.b16 %v1463, %v1462
      %v1471 = vunpack.c.l.b16 %v1448
      %v1472 = vunpack.c.l.b16 %v1449
      %v1473 = vunpack.c.l.b16 %v1450
      %v1474 = vunpack.c.l.b16 %v1451
      %v1475 = vpack.c.b16 %v1472, %v1471
      %v1476 = vpack.c.b16 %v1474, %v1473
      %v1480 = vsel %vm510, %v1464, 0
      %v1483 = vsel %vm510, %v1465, 0
      %v1486 = vsel %vm510, %v1466, 0
      %1488 = vmatprep.subr.bf16.mxu0 0
      %1489 = vmatpush1.bf16.msra.mxu0 %v1475
      %1490 = vmatprep.subr.bf16.mxu0 0
      %1491 = vmatpush1.bf16.msra.mxu0 %v1476
      %1492 = vmatprep.subr.bf16.mxu0 0
      %1493 = vmatpush1.bf16.msra.mxu0 0
      %1494 = vmatprep.subr.bf16.mxu0 0
      %1495 = vmatpush1.bf16.msra.mxu0 0
      %1496 = vmatprep.subr.bf16.mxu0 0
      %1497 = vmatpush1.bf16.msra.mxu0 0
      %1498 = vmatprep.subr.bf16.mxu0 0
      %1499 = vmatpush1.bf16.msra.mxu0 0
      %1500 = vmatprep.subr.bf16.mxu0 0
      %1501 = vmatpush1.bf16.msra.mxu0 0
      %1502 = vmatprep.subr.bf16.mxu0 0
      %1503 = vmatpush1.bf16.msra.mxu0 0
      %1504 = vmatprep.subr.bf16.mxu0 0
      %1505 = vmatpush1.bf16.msra.mxu0 0
      %1506 = vmatprep.subr.bf16.mxu0 0
      %1507 = vmatpush1.bf16.msra.mxu0 0
      %1508 = vmatprep.subr.bf16.mxu0 0
      %1509 = vmatpush1.bf16.msra.mxu0 0
      %1510 = vmatprep.subr.bf16.mxu0 0
      %1511 = vmatpush1.bf16.msra.mxu0 0
      %1512 = vmatprep.subr.bf16.mxu0 0
      %1513 = vmatpush1.bf16.msra.mxu0 0
      %1514 = vmatprep.subr.bf16.mxu0 0
      %1515 = vmatpush1.bf16.msra.mxu0 0
      %1516 = vmatprep.subr.bf16.mxu0 0
      %1517 = vmatpush1.bf16.msra.mxu0 0
      %1518 = vmatprep.subr.bf16.mxu0 0
      %1519 = vmatpush1.bf16.msra.mxu0 0
      %1520 = vmatprep.mubr.bf16.mxu0 0
      %1521 = vmatmul.mubr.bf16.gmra.mrb[0].mxu0 %v1372
      %v1522 = vpop.f32.mrb[0].mxu0
      %v1523 = vadd.f32 0.0, %v1522
      %v1524 = vpop.f32.mrb[0].mxu0
      %v1525 = vpop.f32.mrb[0].mxu0
      %v1526 = vadd.f32 0.0, %v1525
      %v1527 = vpop.f32.mrb[0].mxu0
      %1528 = vmatprep.mubr.bf16.mxu0 0
      %1529 = vmatmul.mubr.bf16.gmra.mrb[0].mxu0 %v1480
      %v1530 = vpop.f32.mrb[0].mxu0
      %v1531 = vadd.f32 0.0, %v1530
      %v1532 = vpop.f32.mrb[0].mxu0
      %v1533 = vpop.f32.mrb[0].mxu0
      %v1534 = vadd.f32 0.0, %v1533
      %v1535 = vpop.f32.mrb[0].mxu0
      %1536 = vmatprep.mubr.bf16.mxu0 0
      %1537 = vmatmul.mubr.bf16.gmra.mrb[0].mxu0 %v1483
      %v1538 = vpop.f32.mrb[0].mxu0
      %v1539 = vadd.f32 0.0, %v1538
      %v1540 = vpop.f32.mrb[0].mxu0
      %v1541 = vpop.f32.mrb[0].mxu0
      %v1542 = vadd.f32 0.0, %v1541
      %v1543 = vpop.f32.mrb[0].mxu0
      %1544 = vmatprep.mubr.bf16.mxu0 0
      %1545 = vmatmul.mubr.bf16.gmra.mrb[0].mxu0 %v1486
      %v1546 = vpop.f32.mrb[0].mxu0
      %v1547 = vadd.f32 0.0, %v1546
      %v1548 = vpop.f32.mrb[0].mxu0
      %v1549 = vpop.f32.mrb[0].mxu0
      %v1550 = vadd.f32 0.0, %v1549
      %v1551 = vpop.f32.mrb[0].mxu0
      %1552 = vdwg.mxu0
      %v1553 = vadd.f32 %v1439, %v1523
      %v1554 = vadd.f32 %v1440, %v1526
      %v1555 = vadd.f32 %v1441, %v1531
      %v1556 = vadd.f32 %v1442, %v1534
      %v1557 = vadd.f32 %v1443, %v1539
      %v1558 = vadd.f32 %v1444, %v1542
      %v1559 = vadd.f32 %v1445, %v1547
      %v1560 = vadd.f32 %v1446, %v1550
      %s1561 = scalar_lea.vmem %s281, 128
      %v1562 = vld [vmem:[%s1561] sm:$0xf]
      %v1563 = vld [vmem:[%s1561 + $0x4] sm:$0xf]
      %v1564 = vld [vmem:[%s1561 + $0x8] sm:$0xf]
      %v1565 = vld [vmem:[%s1561 + $0xc] sm:$0xf]
      %v1572 = vunpack.c.l.b16 %v1319
      %v1573 = vunpack.c.l.b16 %v1320
      %v1574 = vunpack.c.l.b16 %v1321
      %v1575 = vunpack.c.l.b16 %v1322
      %v1576 = vunpack.c.l.b16 %v1323
      %v1577 = vunpack.c.l.b16 %v1324
      %v1578 = vpack.c.b16 %v1573, %v1572
      %v1579 = vpack.c.b16 %v1575, %v1574
      %v1580 = vpack.c.b16 %v1577, %v1576
      %v1585 = vunpack.c.l.b16 %v1562
      %v1586 = vunpack.c.l.b16 %v1563
      %v1587 = vunpack.c.l.b16 %v1564
      %v1588 = vunpack.c.l.b16 %v1565
      %v1589 = vpack.c.b16 %v1586, %v1585
      %v1590 = vpack.c.b16 %v1588, %v1587
      %v1594 = vsel %vm510, %v1578, 0
      %v1597 = vsel %vm510, %v1579, 0
      %v1600 = vsel %vm510, %v1580, 0
      %1602 = vmatprep.subr.bf16.mxu0 0
      %1603 = vmatpush1.bf16.msra.mxu0 %v1589
      %1604 = vmatprep.subr.bf16.mxu0 0
      %1605 = vmatpush1.bf16.msra.mxu0 %v1590
      %1606 = vmatprep.subr.bf16.mxu0 0
      %1607 = vmatpush1.bf16.msra.mxu0 0
      %1608 = vmatprep.subr.bf16.mxu0 0
      %1609 = vmatpush1.bf16.msra.mxu0 0
      %1610 = vmatprep.subr.bf16.mxu0 0
      %1611 = vmatpush1.bf16.msra.mxu0 0
      %1612 = vmatprep.subr.bf16.mxu0 0
      %1613 = vmatpush1.bf16.msra.mxu0 0
      %1614 = vmatprep.subr.bf16.mxu0 0
      %1615 = vmatpush1.bf16.msra.mxu0 0
      %1616 = vmatprep.subr.bf16.mxu0 0
      %1617 = vmatpush1.bf16.msra.mxu0 0
      %1618 = vmatprep.subr.bf16.mxu0 0
      %1619 = vmatpush1.bf16.msra.mxu0 0
      %1620 = vmatprep.subr.bf16.mxu0 0
      %1621 = vmatpush1.bf16.msra.mxu0 0
      %1622 = vmatprep.subr.bf16.mxu0 0
      %1623 = vmatpush1.bf16.msra.mxu0 0
      %1624 = vmatprep.subr.bf16.mxu0 0
      %1625 = vmatpush1.bf16.msra.mxu0 0
      %1626 = vmatprep.subr.bf16.mxu0 0
      %1627 = vmatpush1.bf16.msra.mxu0 0
      %1628 = vmatprep.subr.bf16.mxu0 0
      %1629 = vmatpush1.bf16.msra.mxu0 0
      %1630 = vmatprep.subr.bf16.mxu0 0
      %1631 = vmatpush1.bf16.msra.mxu0 0
      %1632 = vmatprep.subr.bf16.mxu0 0
      %1633 = vmatpush1.bf16.msra.mxu0 0
      %1634 = vmatprep.mubr.bf16.mxu0 0
      %1635 = vmatmul.mubr.bf16.gmra.mrb[0].mxu0 %v1486
      %v1636 = vpop.f32.mrb[0].mxu0
      %v1637 = vadd.f32 0.0, %v1636
      %v1638 = vpop.f32.mrb[0].mxu0
      %v1639 = vpop.f32.mrb[0].mxu0
      %v1640 = vadd.f32 0.0, %v1639
      %v1641 = vpop.f32.mrb[0].mxu0
      %1642 = vmatprep.mubr.bf16.mxu0 0
      %1643 = vmatmul.mubr.bf16.gmra.mrb[0].mxu0 %v1594
      %v1644 = vpop.f32.mrb[0].mxu0
      %v1645 = vadd.f32 0.0, %v1644
      %v1646 = vpop.f32.mrb[0].mxu0
      %v1647 = vpop.f32.mrb[0].mxu0
      %v1648 = vadd.f32 0.0, %v1647
      %v1649 = vpop.f32.mrb[0].mxu0
      %1650 = vmatprep.mubr.bf16.mxu0 0
      %1651 = vmatmul.mubr.bf16.gmra.mrb[0].mxu0 %v1597
      %v1652 = vpop.f32.mrb[0].mxu0
      %v1653 = vadd.f32 0.0, %v1652
      %v1654 = vpop.f32.mrb[0].mxu0
      %v1655 = vpop.f32.mrb[0].mxu0
      %v1656 = vadd.f32 0.0, %v1655
      %v1657 = vpop.f32.mrb[0].mxu0
      %1658 = vmatprep.mubr.bf16.mxu0 0
      %1659 = vmatmul.mubr.bf16.gmra.mrb[0].mxu0 %v1600
      %v1660 = vpop.f32.mrb[0].mxu0
      %v1661 = vadd.f32 0.0, %v1660
      %v1662 = vpop.f32.mrb[0].mxu0
      %v1663 = vpop.f32.mrb[0].mxu0
      %v1664 = vadd.f32 0.0, %v1663
      %v1665 = vpop.f32.mrb[0].mxu0
      %1666 = vdwg.mxu0
      %v1667 = vadd.f32 %v1553, %v1637
      %v1668 = vadd.f32 %v1554, %v1640
      %v1669 = vadd.f32 %v1555, %v1645
      %v1670 = vadd.f32 %v1556, %v1648
      %v1671 = vadd.f32 %v1557, %v1653
      %v1672 = vadd.f32 %v1558, %v1656
      %v1673 = vadd.f32 %v1559, %v1661
      %v1674 = vadd.f32 %v1560, %v1664
      %vm1675 = vcmask 130048
      %1676 = vst.msk [vmem:[#allocation2] sm:$0xff] %vm1675, %v1667
      %1677 = vst.msk [vmem:[#allocation2 + $0x8] sm:$0xff] %vm1675, %v1668
      %1678 = vst.msk [vmem:[#allocation2 + $0x10] sm:$0xff] %vm1675, %v1669
      %1679 = vst.msk [vmem:[#allocation2 + $0x18] sm:$0xff] %vm1675, %v1670
      %1680 = vst.msk [vmem:[#allocation2 + $0x20] sm:$0xff] %vm1675, %v1671
      %1681 = vst.msk [vmem:[#allocation2 + $0x28] sm:$0xff] %vm1675, %v1672
      %1682 = vst.msk [vmem:[#allocation2 + $0x30] sm:$0xff] %vm1675, %v1673
      %1683 = vst.msk [vmem:[#allocation2 + $0x38] sm:$0xff] %vm1675, %v1674
      // Predicated region
      $region41: #{deeplabv3_forward.14} parent=35 // pred_check
        %p1684 = pneg %p298
      $region42: #{deeplabv3_forward.14} parent=35 // pred_check_branch
        %1686 = sbr.rel (%p1684) target = $region44
      $region43: #{deeplabv3_forward.14} parent=35 // pred_region
        %v1687 = vld [vmem:[#allocation2] sm:$0xff]
        %v1688 = vld [vmem:[#allocation2 + $0x8] sm:$0xff]
        %v1689 = vld [vmem:[#allocation2 + $0x10] sm:$0xff]
        %v1690 = vld [vmem:[#allocation2 + $0x18] sm:$0xff]
        %v1691 = vld [vmem:[#allocation2 + $0x20] sm:$0xff]
        %v1692 = vld [vmem:[#allocation2 + $0x28] sm:$0xff]
        %v1693 = vld [vmem:[#allocation2 + $0x30] sm:$0xff]
        %v1694 = vld [vmem:[#allocation2 + $0x38] sm:$0xff]
        %v1695 = vld [vmem:[%s285] sm:$0x1]
        %v1697 = vlaneseq
        %v1698 = vshrl.u32 %v1697, 7
        %v1699 = vsub.s32 0, %v1698
        %v1700 = vrot.slane %v1695, %v1699
        %v1702 = vmul.f32 %v1687, %v1700
        %v1703 = vmul.f32 %v1688, %v1700
        %v1704 = vmul.f32 %v1689, %v1700
        %v1705 = vmul.f32 %v1690, %v1700
        %v1706 = vmul.f32 %v1691, %v1700
        %v1707 = vmul.f32 %v1692, %v1700
        %v1708 = vmul.f32 %v1693, %v1700
        %v1709 = vmul.f32 %v1694, %v1700
        %v1710 = vld [vmem:[%s288] sm:$0x1]
        %v1712 = vlaneseq
        %v1713 = vshrl.u32 %v1712, 7
        %v1714 = vsub.s32 0, %v1713
        %v1715 = vrot.slane %v1710, %v1714
        %v1717 = vadd.f32 %v1702, %v1715
        %v1718 = vadd.f32 %v1703, %v1715
        %v1719 = vadd.f32 %v1704, %v1715
        %v1720 = vadd.f32 %v1705, %v1715
        %v1721 = vadd.f32 %v1706, %v1715
        %v1722 = vadd.f32 %v1707, %v1715
        %v1723 = vadd.f32 %v1708, %v1715
        %v1724 = vadd.f32 %v1709, %v1715
        %v1725 = vmax.f32 %v1717, 0.0
        %v1726 = vmax.f32 %v1718, 0.0
        %v1727 = vmax.f32 %v1719, 0.0
        %v1728 = vmax.f32 %v1720, 0.0
        %v1729 = vmax.f32 %v1721, 0.0
        %v1730 = vmax.f32 %v1722, 0.0
        %v1731 = vmax.f32 %v1723, 0.0
        %v1732 = vmax.f32 %v1724, 0.0
        %v1733 = vpack.c.bf16 %v1725, %v1725
        %v1734 = vpack.c.bf16 %v1726, %v1726
        %v1735 = vpack.c.bf16 %v1727, %v1727
        %v1736 = vpack.c.bf16 %v1728, %v1728
        %v1737 = vpack.c.bf16 %v1729, %v1729
        %v1738 = vpack.c.bf16 %v1730, %v1730
        %v1739 = vpack.c.bf16 %v1731, %v1731
        %v1740 = vpack.c.bf16 %v1732, %v1732
        %vm1741 = vcmask 125952
        %1742 = vst.msk [vmem:[%s296] sm:$0xf] %vm1741, %v1733
        %1743 = vst.msk [vmem:[%s296 + $0x4] sm:$0xf] %vm1741, %v1734
        %1744 = vst.msk [vmem:[%s296 + $0x8] sm:$0xf] %vm1741, %v1735
        %1745 = vst.msk [vmem:[%s296 + $0xc] sm:$0xf] %vm1741, %v1736
        %1746 = vst.msk [vmem:[%s296 + $0x10] sm:$0xf] %vm1741, %v1737
        %1747 = vst.msk [vmem:[%s296 + $0x14] sm:$0xf] %vm1741, %v1738
        %1748 = vst.msk [vmem:[%s296 + $0x18] sm:$0xf] %vm1741, %v1739
        %1749 = vst.msk [vmem:[%s296 + $0x1c] sm:$0xf] %vm1741, %v1740
      $region44: #{deeplabv3_forward.14} parent=35 // pred_fallthru
        _
      %p1750 = scmp.lt.s32.totalorder %s20, 1
      %s1751 = scalar_select %p1750, %s20, 1
      %p1752 = scmp.lt.s32.totalorder %s21, 0
      %s1753 = scalar_select %p1752, %s21, 0
      %s1754 = smul.addr %s1751, 8
      %s1755 = sadd.s32 %s1753, %s1754
      %s1756 = smul.addr %s1755, 4
      %s1757 = scalar_lea.vmem %s4, %s1756
      // Predicated region
      $region45: #{deeplabv3_forward.14} parent=35 // pred_check
        %p1758 = pneg %p162
      $region46: #{deeplabv3_forward.14} parent=35 // pred_check_branch
        %1760 = sbr.rel (%p1758) target = $region48
      $region47: #{deeplabv3_forward.14} parent=35 // pred_region
        _
      $region48: #{deeplabv3_forward.14} parent=35 // pred_fallthru
        _
    $region36: #{deeplabv3_forward.14} parent=5 // pred_fallthru
      _
    %p1761 = scmp.le.s32.totalorder 2, %s10
    // Predicated region
    $region49: #{deeplabv3_forward.14} parent=5 // pred_check
      %p1762 = pneg %p1761
    $region50: #{deeplabv3_forward.14} parent=5 // pred_check_branch
      %1764 = sbr.rel (%p1762) target = $region52
    $region51: #{deeplabv3_forward.14} parent=5 // pred_region
      %s1765 = ssub.s32 %s10, 2
      // Predicated region
      $region53: #{deeplabv3_forward.14} parent=51 // pred_check
        %p1766 = pneg %p168
      $region54: #{deeplabv3_forward.14} parent=51 // pred_check_branch
        %1768 = sbr.rel (%p1766) target = $region56
      $region55: #{deeplabv3_forward.14} parent=51 // pred_region
        %p1769 = scmp.lt.s32.totalorder %s23, 1
        %s1770 = scalar_select %p1769, %s23, 1
        %p1771 = scmp.lt.s32.totalorder %s24, 0
        %s1772 = scalar_select %p1771, %s24, 0
        %s1773 = smul.addr %s1770, 8
        %s1774 = sadd.s32 %s1772, %s1773
        %s1775 = smul.addr %s1774, 4
        %s1776 = scalar_lea.vmem %s4, %s1775
      $region56: #{deeplabv3_forward.14} parent=51 // pred_fallthru
        _
    $region52: #{deeplabv3_forward.14} parent=5 // pred_fallthru
      _
  $region6: #{deeplabv3_forward.14} parent=0 // loop_footer
    %s14 = sadd.s32 1, %s10
  $region7: #{deeplabv3_forward.14} parent=0 // loop_footer_branch
    %9 = sbr.rel target = $region3
  $region8: #{deeplabv3_forward.14} parent=0 // loop_exit
    _

// kernel: deeplabv3_forward.17
$region0: #{deeplabv3_forward.17}
  #allocation0 [shape = 'u32[]', space=smem, size = 0x4, offset = 0x4, fixed_abs, tag = 'smem constant byte address 0x4 - core index']
  #allocation1 [shape = 'u32[144,128]{1,0:T(1,128)}', space=vmem, size = 0x12000, scoped, tag = 'internal scratch']
  #allocation2 [shape = 'f32[1,32]{1,0:T(1,128)}', space=vmem, size = 0x200, scoped, tag = 'scratch operand']
  %s0 = inlined_call_operand.vmem [shape: bf16[2,64,32], index: 0, kind: input, shape index: {}]
  %s1 = inlined_call_operand.vmem [shape: f32[2,1,32], index: 1, kind: output, shape index: {}]
  %s2 = sld [smem:[#allocation0]]
  $region45: #{deeplabv3_forward.17} parent=0
    _
  %s4 = ssub.s32 1, %s2
  %s5 = scalar_select 0, %s4, %s2
  loop: start=0, step=1, limit=4
  $region2: #{deeplabv3_forward.17} parent=0 // loop_pre_header
    _
  $region3: #{deeplabv3_forward.17} parent=0 // loop_header
    %s7 = sphi 0, %s11
    %p8 = scmp.ge.s32.totalorder %s7, 4
    %s14 = sphi 0, %s26
    %s15 = sphi 0, %s22
    %s16 = sphi 0, %s14
    %s17 = sphi 0, %s15
    %s18 = sphi 0, %s16
    %s19 = sphi 0, %s17
    %s31 = sphi 0, %s33
    %s34 = sphi 0, %s31
    %s35 = sphi 0, %s34
    %s51 = sphi 0, %s35
    %s57 = sphi 0, %s59
    %s60 = sphi 0, %s57
    %s61 = sphi 0, %s60
    %s77 = sphi 0, %s61
  $region4: #{deeplabv3_forward.17} parent=0 // loop_header_branch
    %10 = sbr.rel (%p8) target = $region8
  $region5: #{deeplabv3_forward.17} parent=0 // loop_body
    %s12 = ssub.s32 %s7, 1
    %s13 = ssub.s32 %s7, 2
    %s20 = sadd.s32 1, %s15
    %p21 = scmp.ge.s32.totalorder %s20, 1
    %s22 = scalar_select %p21, 0, %s20
    %s23 = sadd.s32 1, %s14
    %s24 = scalar_select %p21, %s23, %s14
    %p25 = scmp.ge.s32.totalorder %s24, 2
    %s26 = scalar_select %p25, 0, %s24
    %s27 = ssub.s32 %s14, %s26
    %s28 = ssub.s32 %s15, %s22
    %s29 = sor.u32 %s27, %s28
    %p30 = scmp.eq.s32.totalorder %s29, 0
    %s32 = sadd.s32 %s31, 1
    %s33 = scalar_select %p30, %s31, %s32
    %p36 = pneg %p30
    %p37 = scmp.eq.s32.totalorder %s7, 1
    %p38 = por %p36, %p37
    %p39 = scmp.ne.s32.totalorder %s31, %s34
    %p40 = scmp.eq.s32.totalorder %s7, 0
    %p41 = por %p39, %p40
    %p42 = scmp.ne.s32.totalorder %s31, %s34
    %p43 = scmp.eq.s32.totalorder %s12, 1
    %p44 = por %p42, %p43
    %p45 = scmp.ne.s32.totalorder %s34, %s35
    %p46 = scmp.eq.s32.totalorder %s12, 0
    %p47 = por %p45, %p46
    %p48 = scmp.ne.s32.totalorder %s34, %s35
    %p49 = scmp.eq.s32.totalorder %s13, 1
    %p50 = por %p48, %p49
    %p52 = scmp.ne.s32.totalorder %s35, %s51
    %p53 = scmp.eq.s32.totalorder %s13, 0
    %p54 = por %p52, %p53
    %s55 = ssub.s32 %s14, %s26
    %p56 = scmp.eq.s32.totalorder %s55, 0
    %s58 = sadd.s32 %s57, 1
    %s59 = scalar_select %p56, %s57, %s58
    %p62 = pneg %p56
    %p63 = scmp.eq.s32.totalorder %s7, 1
    %p64 = por %p62, %p63
    %p65 = scmp.ne.s32.totalorder %s57, %s60
    %p66 = scmp.eq.s32.totalorder %s7, 0
    %p67 = por %p65, %p66
    %p68 = scmp.ne.s32.totalorder %s57, %s60
    %p69 = scmp.eq.s32.totalorder %s12, 1
    %p70 = por %p68, %p69
    %p71 = scmp.ne.s32.totalorder %s60, %s61
    %p72 = scmp.eq.s32.totalorder %s12, 0
    %p73 = por %p71, %p72
    %p74 = scmp.ne.s32.totalorder %s60, %s61
    %p75 = scmp.eq.s32.totalorder %s13, 1
    %p76 = por %p74, %p75
    %p78 = scmp.ne.s32.totalorder %s61, %s77
    %p79 = scmp.eq.s32.totalorder %s13, 0
    %p80 = por %p78, %p79
    %p81 = scmp.le.s32.totalorder 1, %s7
    %p82 = scmp.lt.s32.totalorder %s7, 3
    %p83 = pnand %p81, %p82
    %p84 = pneg %p83
    // Predicated region
    $region9: #{deeplabv3_forward.17} parent=5 // pred_check
      _
    $region10: #{deeplabv3_forward.17} parent=5 // pred_check_branch
      %86 = sbr.rel (%p83) target = $region12
    $region11: #{deeplabv3_forward.17} parent=5 // pred_region
      %s87 = ssub.s32 %s7, 1
    $region12: #{deeplabv3_forward.17} parent=5 // pred_fallthru
      _
    %p88 = scmp.lt.s32.totalorder %s7, 2
    // Predicated region
    $region13: #{deeplabv3_forward.17} parent=5 // pred_check
      %p89 = pneg %p88
    $region14: #{deeplabv3_forward.17} parent=5 // pred_check_branch
      %91 = sbr.rel (%p89) target = $region16
    $region15: #{deeplabv3_forward.17} parent=5 // pred_region
      // Predicated region
      $region17: #{deeplabv3_forward.17} parent=15 // pred_check
        %p92 = pneg %p41
      $region18: #{deeplabv3_forward.17} parent=15 // pred_check_branch
        %94 = sbr.rel (%p92) target = $region20
      $region19: #{deeplabv3_forward.17} parent=15 // pred_region
        %s95 = smul.u32 8, %s15
        %p96 = scmp.lt.s32.totalorder %s14, 1
        %s97 = scalar_select %p96, %s14, 1
        %p98 = scmp.lt.s32.totalorder %s95, 7
        %s99 = scalar_select %p98, %s95, 7
        %s100 = smul.addr %s97, 8
        %s101 = sadd.s32 %s99, %s100
        %s102 = smul.addr %s101, 4
        %s103 = scalar_lea.vmem %s0, %s102
        %s104 = smul.u32 8, %s15
      $region20: #{deeplabv3_forward.17} parent=15 // pred_fallthru
        _
    $region16: #{deeplabv3_forward.17} parent=5 // pred_fallthru
      _
    %p105 = scmp.le.s32.totalorder 1, %s7
    %p106 = scmp.lt.s32.totalorder %s7, 3
    %p107 = pnand %p105, %p106
    %p108 = pneg %p107
    // Predicated region
    $region21: #{deeplabv3_forward.17} parent=5 // pred_check
      _
    $region22: #{deeplabv3_forward.17} parent=5 // pred_check_branch
      %110 = sbr.rel (%p107) target = $region24
    $region23: #{deeplabv3_forward.17} parent=5 // pred_region
      %s111 = ssub.s32 %s7, 1
      %s112 = smul.u32 8, %s17
      %p113 = scmp.lt.s32.totalorder %s16, 1
      %s114 = scalar_select %p113, %s16, 1
      %p115 = scmp.lt.s32.totalorder %s112, 7
      %s116 = scalar_select %p115, %s112, 7
      %s117 = smul.addr %s114, 8
      %s118 = sadd.s32 %s116, %s117
      %s119 = smul.addr %s118, 4
      %s120 = scalar_lea.vmem %s0, %s119
      %p121 = pneg %p47
      %p122 = pneg %p44
      %p123 = pneg %p73
      %p124 = pneg %p70
      %p125 = scmp.lt.s32.totalorder %s16, 1
      %s126 = scalar_select %p125, %s16, 1
      %s127 = scalar_lea.vmem %s1, %s126
      %s128 = smul.u32 8, %s17
      %p129 = scmp.lt.s32.totalorder %s16, 1
      %s130 = scalar_select %p129, %s16, 1
      %p131 = scmp.lt.s32.totalorder %s128, 7
      %s132 = scalar_select %p131, %s128, 7
      %s133 = smul.addr %s130, 8
      %s134 = sadd.s32 %s132, %s133
      %s135 = smul.addr %s134, 4
      %s136 = scalar_lea.vmem %s0, %s135
      %s137 = smul.u32 8, %s17
      %p138 = scmp.lt.s32.totalorder %s16, 1
      %s139 = scalar_select %p138, %s16, 1
      %s140 = scalar_lea.vmem %s1, %s139
      %p141 = scmp.eq.s32.totalorder %s17, 0
      // Predicated region
      $region25: #{deeplabv3_forward.17} parent=23 // pred_check
        %p142 = pneg %p141
      $region26: #{deeplabv3_forward.17} parent=23 // pred_check_branch
        %144 = sbr.rel (%p142) target = $region28
      $region27: #{deeplabv3_forward.17} parent=23 // pred_region
        %vm145 = vcmask 253952
        %146 = vst.msk [vmem:[#allocation2] sm:$0x1] %vm145, 0.0
      $region28: #{deeplabv3_forward.17} parent=23 // pred_fallthru
        _
      %v147 = vld [vmem:[%s136] sm:$0xf]
      %v148 = vld [vmem:[%s136 + $0x4] sm:$0xf]
      %v149 = vld [vmem:[%s136 + $0x8] sm:$0xf]
      %v150 = vld [vmem:[%s136 + $0xc] sm:$0xf]
      %v151 = vld [vmem:[%s136 + $0x10] sm:$0xf]
      %v152 = vld [vmem:[%s136 + $0x14] sm:$0xf]
      %v153 = vld [vmem:[%s136 + $0x18] sm:$0xf]
      %v154 = vld [vmem:[%s136 + $0x1c] sm:$0xf]
      %v155 = vunpack.c.l.bf16 %v147
      %v156 = vunpack.c.l.bf16 %v148
      %v157 = vunpack.c.l.bf16 %v149
      %v158 = vunpack.c.l.bf16 %v150
      %v159 = vunpack.c.l.bf16 %v151
      %v160 = vunpack.c.l.bf16 %v152
      %v161 = vunpack.c.l.bf16 %v153
      %v162 = vunpack.c.l.bf16 %v154
      %v163 = vld [vmem:[#allocation2] sm:$0x1]
      %vm164 = vcmask 261120
      %v165 = vsel %vm164, %v155, 0.0
      %v166 = vsel %vm164, %v156, 0.0
      %v167 = vadd.f32 %v165, %v166
      %v168 = vsel %vm164, %v157, 0.0
      %v169 = vadd.f32 %v167, %v168
      %v170 = vsel %vm164, %v158, 0.0
      %v171 = vadd.f32 %v169, %v170
      %v172 = vsel %vm164, %v159, 0.0
      %v173 = vadd.f32 %v171, %v172
      %v174 = vsel %vm164, %v160, 0.0
      %v175 = vadd.f32 %v173, %v174
      %v176 = vsel %vm164, %v161, 0.0
      %v177 = vadd.f32 %v175, %v176
      %v178 = vsel %vm164, %v162, 0.0
      %v179 = vadd.f32 %v177, %v178
      %v180 = vrot.slane %v179, 4
      %v181 = vadd.f32 %v179, %v180
      %v182 = vrot.slane %v181, 2
      %v183 = vadd.f32 %v181, %v182
      %v184 = vrot.slane %v183, 1
      %v185 = vadd.f32 %v183, %v184
      %v186 = vadd.f32 %v163, %v185
      %vm187 = vcmask 253952
      %188 = vst.msk [vmem:[#allocation2] sm:$0x1] %vm187, %v186
      // Predicated region
      $region29: #{deeplabv3_forward.17} parent=23 // pred_check
        %p189 = pneg %p141
      $region30: #{deeplabv3_forward.17} parent=23 // pred_check_branch
        %191 = sbr.rel (%p189) target = $region32
      $region31: #{deeplabv3_forward.17} parent=23 // pred_region
        %v192 = vld [vmem:[#allocation2] sm:$0x1]
        %v193 = vmul.f32 %v192, 0.015625
        %194 = vst.msk [vmem:[%s140] sm:$0x1] %vm187, %v193
      $region32: #{deeplabv3_forward.17} parent=23 // pred_fallthru
        _
      %p195 = scmp.lt.s32.totalorder %s16, 1
      %s196 = scalar_select %p195, %s16, 1
      %s197 = scalar_lea.vmem %s1, %s196
      // Predicated region
      $region33: #{deeplabv3_forward.17} parent=23 // pred_check
        %p198 = pneg %p70
      $region34: #{deeplabv3_forward.17} parent=23 // pred_check_branch
        %200 = sbr.rel (%p198) target = $region36
      $region35: #{deeplabv3_forward.17} parent=23 // pred_region
        _
      $region36: #{deeplabv3_forward.17} parent=23 // pred_fallthru
        _
    $region24: #{deeplabv3_forward.17} parent=5 // pred_fallthru
      _
    %p201 = scmp.le.s32.totalorder 2, %s7
    // Predicated region
    $region37: #{deeplabv3_forward.17} parent=5 // pred_check
      %p202 = pneg %p201
    $region38: #{deeplabv3_forward.17} parent=5 // pred_check_branch
      %204 = sbr.rel (%p202) target = $region40
    $region39: #{deeplabv3_forward.17} parent=5 // pred_region
      %s205 = ssub.s32 %s7, 2
      // Predicated region
      $region41: #{deeplabv3_forward.17} parent=39 // pred_check
        %p206 = pneg %p76
      $region42: #{deeplabv3_forward.17} parent=39 // pred_check_branch
        %208 = sbr.rel (%p206) target = $region44
      $region43: #{deeplabv3_forward.17} parent=39 // pred_region
        %p209 = scmp.lt.s32.totalorder %s18, 1
        %s210 = scalar_select %p209, %s18, 1
        %s211 = scalar_lea.vmem %s1, %s210
      $region44: #{deeplabv3_forward.17} parent=39 // pred_fallthru
        _
    $region40: #{deeplabv3_forward.17} parent=5 // pred_fallthru
      _
  $region6: #{deeplabv3_forward.17} parent=0 // loop_footer
    %s11 = sadd.s32 1, %s7
  $region7: #{deeplabv3_forward.17} parent=0 // loop_footer_branch
    %6 = sbr.rel target = $region3
  $region8: #{deeplabv3_forward.17} parent=0 // loop_exit
    _

// kernel: deeplabv3_forward.15
$region0: #{deeplabv3_forward.15}
  #allocation0 [shape = 'u32[]', space=smem, size = 0x4, offset = 0x4, fixed_abs, tag = 'smem constant byte address 0x4 - core index']
  #allocation1 [shape = 'u32[144,128]{1,0:T(1,128)}', space=vmem, size = 0x12000, scoped, tag = 'internal scratch']
  #allocation2 [shape = 'f32[64,16]{1,0:T(8,128)}', space=vmem, size = 0x8000, scoped, tag = 'scratch operand']
  %s0 = inlined_call_operand.vmem [shape: bf16[2,44,44,32], index: 0, kind: input, shape index: {}]
  %s1 = inlined_call_operand.vmem [shape: bf16[9,32,16], index: 1, kind: input, shape index: {}]
  %s2 = inlined_call_operand.vmem [shape: f32[1,16], index: 2, kind: input, shape index: {}]
  %s3 = inlined_call_operand.vmem [shape: f32[1,16], index: 3, kind: input, shape index: {}]
  %s4 = inlined_call_operand.vmem [shape: bf16[2,8,8,16], index: 4, kind: output, shape index: {}]
  %s5 = sld [smem:[#allocation0]]
  $region57: #{deeplabv3_forward.15} parent=0
    _
  %s7 = ssub.s32 1, %s5
  %s8 = scalar_select 0, %s7, %s5
  loop: start=0, step=1, limit=4
  $region2: #{deeplabv3_forward.15} parent=0 // loop_pre_header
    _
  $region3: #{deeplabv3_forward.15} parent=0 // loop_header
    %s10 = sphi 0, %s14
    %p11 = scmp.ge.s32.totalorder %s10, 4
    %s17 = sphi 0, %s36
    %s18 = sphi 0, %s32
    %s19 = sphi 0, %s28
    %s20 = sphi 0, %s17
    %s21 = sphi 0, %s18
    %s22 = sphi 0, %s19
    %s23 = sphi 0, %s20
    %s24 = sphi 0, %s21
    %s25 = sphi 0, %s22
    %s41 = sphi 0, %s43
    %s44 = sphi 0, %s41
    %s45 = sphi 0, %s44
    %s61 = sphi 0, %s45
    %s69 = sphi 0, %s71
    %s72 = sphi 0, %s69
    %s73 = sphi 0, %s72
    %s89 = sphi 0, %s73
    %s95 = sphi 0, %s97
    %s98 = sphi 0, %s95
    %s99 = sphi 0, %s98
    %s115 = sphi 0, %s99
    %s121 = sphi 0, %s123
    %s124 = sphi 0, %s121
    %s125 = sphi 0, %s124
    %s141 = sphi 0, %s125
    %s149 = sphi 0, %s151
    %s152 = sphi 0, %s149
    %s153 = sphi 0, %s152
    %s169 = sphi 0, %s153
  $region4: #{deeplabv3_forward.15} parent=0 // loop_header_branch
    %13 = sbr.rel (%p11) target = $region8
  $region5: #{deeplabv3_forward.15} parent=0 // loop_body
    %s15 = ssub.s32 %s10, 1
    %s16 = ssub.s32 %s10, 2
    %s26 = sadd.s32 1, %s19
    %p27 = scmp.ge.s32.totalorder %s26, 1
    %s28 = scalar_select %p27, 0, %s26
    %s29 = sadd.s32 1, %s18
    %s30 = scalar_select %p27, %s29, %s18
    %p31 = scmp.ge.s32.totalorder %s30, 1
    %s32 = scalar_select %p31, 0, %s30
    %s33 = sadd.s32 1, %s17
    %s34 = scalar_select %p31, %s33, %s17
    %p35 = scmp.ge.s32.totalorder %s34, 2
    %s36 = scalar_select %p35, 0, %s34
    %s37 = ssub.s32 %s17, %s36
    %s38 = ssub.s32 %s19, %s28
    %s39 = sor.u32 %s37, %s38
    %p40 = scmp.eq.s32.totalorder %s39, 0
    %s42 = sadd.s32 %s41, 1
    %s43 = scalar_select %p40, %s41, %s42
    %p46 = pneg %p40
    %p47 = scmp.eq.s32.totalorder %s10, 1
    %p48 = por %p46, %p47
    %p49 = scmp.ne.s32.totalorder %s41, %s44
    %p50 = scmp.eq.s32.totalorder %s10, 0
    %p51 = por %p49, %p50
    %p52 = scmp.ne.s32.totalorder %s41, %s44
    %p53 = scmp.eq.s32.totalorder %s15, 1
    %p54 = por %p52, %p53
    %p55 = scmp.ne.s32.totalorder %s44, %s45
    %p56 = scmp.eq.s32.totalorder %s15, 0
    %p57 = por %p55, %p56
    %p58 = scmp.ne.s32.totalorder %s44, %s45
    %p59 = scmp.eq.s32.totalorder %s16, 1
    %p60 = por %p58, %p59
    %p62 = scmp.ne.s32.totalorder %s45, %s61
    %p63 = scmp.eq.s32.totalorder %s16, 0
    %p64 = por %p62, %p63
    %s65 = ssub.s32 %s19, %s28
    %s66 = ssub.s32 %s18, %s32
    %s67 = sor.u32 %s65, %s66
    %p68 = scmp.eq.s32.totalorder %s67, 0
    %s70 = sadd.s32 %s69, 1
    %s71 = scalar_select %p68, %s69, %s70
    %p74 = pneg %p68
    %p75 = scmp.eq.s32.totalorder %s10, 1
    %p76 = por %p74, %p75
    %p77 = scmp.ne.s32.totalorder %s69, %s72
    %p78 = scmp.eq.s32.totalorder %s10, 0
    %p79 = por %p77, %p78
    %p80 = scmp.ne.s32.totalorder %s69, %s72
    %p81 = scmp.eq.s32.totalorder %s15, 1
    %p82 = por %p80, %p81
    %p83 = scmp.ne.s32.totalorder %s72, %s73
    %p84 = scmp.eq.s32.totalorder %s15, 0
    %p85 = por %p83, %p84
    %p86 = scmp.ne.s32.totalorder %s72, %s73
    %p87 = scmp.eq.s32.totalorder %s16, 1
    %p88 = por %p86, %p87
    %p90 = scmp.ne.s32.totalorder %s73, %s89
    %p91 = scmp.eq.s32.totalorder %s16, 0
    %p92 = por %p90, %p91
    %s93 = ssub.s32 %s18, %s32
    %p94 = scmp.eq.s32.totalorder %s93, 0
    %s96 = sadd.s32 %s95, 1
    %s97 = scalar_select %p94, %s95, %s96
    %p100 = pneg %p94
    %p101 = scmp.eq.s32.totalorder %s10, 1
    %p102 = por %p100, %p101
    %p103 = scmp.ne.s32.totalorder %s95, %s98
    %p104 = scmp.eq.s32.totalorder %s10, 0
    %p105 = por %p103, %p104
    %p106 = scmp.ne.s32.totalorder %s95, %s98
    %p107 = scmp.eq.s32.totalorder %s15, 1
    %p108 = por %p106, %p107
    %p109 = scmp.ne.s32.totalorder %s98, %s99
    %p110 = scmp.eq.s32.totalorder %s15, 0
    %p111 = por %p109, %p110
    %p112 = scmp.ne.s32.totalorder %s98, %s99
    %p113 = scmp.eq.s32.totalorder %s16, 1
    %p114 = por %p112, %p113
    %p116 = scmp.ne.s32.totalorder %s99, %s115
    %p117 = scmp.eq.s32.totalorder %s16, 0
    %p118 = por %p116, %p117
    %s119 = ssub.s32 %s18, %s32
    %p120 = scmp.eq.s32.totalorder %s119, 0
    %s122 = sadd.s32 %s121, 1
    %s123 = scalar_select %p120, %s121, %s122
    %p126 = pneg %p120
    %p127 = scmp.eq.s32.totalorder %s10, 1
    %p128 = por %p126, %p127
    %p129 = scmp.ne.s32.totalorder %s121, %s124
    %p130 = scmp.eq.s32.totalorder %s10, 0
    %p131 = por %p129, %p130
    %p132 = scmp.ne.s32.totalorder %s121, %s124
    %p133 = scmp.eq.s32.totalorder %s15, 1
    %p134 = por %p132, %p133
    %p135 = scmp.ne.s32.totalorder %s124, %s125
    %p136 = scmp.eq.s32.totalorder %s15, 0
    %p137 = por %p135, %p136
    %p138 = scmp.ne.s32.totalorder %s124, %s125
    %p139 = scmp.eq.s32.totalorder %s16, 1
    %p140 = por %p138, %p139
    %p142 = scmp.ne.s32.totalorder %s125, %s141
    %p143 = scmp.eq.s32.totalorder %s16, 0
    %p144 = por %p142, %p143
    %s145 = ssub.s32 %s17, %s36
    %s146 = ssub.s32 %s18, %s32
    %s147 = sor.u32 %s145, %s146
    %p148 = scmp.eq.s32.totalorder %s147, 0
    %s150 = sadd.s32 %s149, 1
    %s151 = scalar_select %p148, %s149, %s150
    %p154 = pneg %p148
    %p155 = scmp.eq.s32.totalorder %s10, 1
    %p156 = por %p154, %p155
    %p157 = scmp.ne.s32.totalorder %s149, %s152
    %p158 = scmp.eq.s32.totalorder %s10, 0
    %p159 = por %p157, %p158
    %p160 = scmp.ne.s32.totalorder %s149, %s152
    %p161 = scmp.eq.s32.totalorder %s15, 1
    %p162 = por %p160, %p161
    %p163 = scmp.ne.s32.totalorder %s152, %s153
    %p164 = scmp.eq.s32.totalorder %s15, 0
    %p165 = por %p163, %p164
    %p166 = scmp.ne.s32.totalorder %s152, %s153
    %p167 = scmp.eq.s32.totalorder %s16, 1
    %p168 = por %p166, %p167
    %p170 = scmp.ne.s32.totalorder %s153, %s169
    %p171 = scmp.eq.s32.totalorder %s16, 0
    %p172 = por %p170, %p171
    %p173 = scmp.le.s32.totalorder 1, %s10
    %p174 = scmp.lt.s32.totalorder %s10, 3
    %p175 = pnand %p173, %p174
    %p176 = pneg %p175
    // Predicated region
    $region9: #{deeplabv3_forward.15} parent=5 // pred_check
      _
    $region10: #{deeplabv3_forward.15} parent=5 // pred_check_branch
      %178 = sbr.rel (%p175) target = $region12
    $region11: #{deeplabv3_forward.15} parent=5 // pred_region
      %s179 = ssub.s32 %s10, 1
      // Predicated region
      $region13: #{deeplabv3_forward.15} parent=11 // pred_check
        %p180 = pneg %p85
      $region14: #{deeplabv3_forward.15} parent=11 // pred_check_branch
        %182 = sbr.rel (%p180) target = $region16
      $region15: #{deeplabv3_forward.15} parent=11 // pred_region
        %s183 = smul.u32 4, %s22
        %p184 = scmp.lt.s32.totalorder %s183, 3
        %s185 = scalar_select %p184, %s183, 3
        %p186 = scmp.lt.s32.totalorder %s21, 0
        %s187 = scalar_select %p186, %s21, 0
        %s188 = sadd.s32 %s187, %s185
        %s189 = smul.addr %s188, 4
        %s190 = scalar_lea.vmem %s1, %s189
        %s191 = smul.u32 4, %s22
      $region16: #{deeplabv3_forward.15} parent=11 // pred_fallthru
        _
      // Predicated region
      $region17: #{deeplabv3_forward.15} parent=11 // pred_check
        %p192 = pneg %p111
      $region18: #{deeplabv3_forward.15} parent=11 // pred_check_branch
        %194 = sbr.rel (%p192) target = $region20
      $region19: #{deeplabv3_forward.15} parent=11 // pred_region
        %p195 = scmp.lt.s32.totalorder %s21, 0
        %s196 = scalar_select %p195, %s21, 0
        %s197 = scalar_lea.vmem %s2, %s196
      $region20: #{deeplabv3_forward.15} parent=11 // pred_fallthru
        _
      // Predicated region
      $region21: #{deeplabv3_forward.15} parent=11 // pred_check
        %p198 = pneg %p137
      $region22: #{deeplabv3_forward.15} parent=11 // pred_check_branch
        %200 = sbr.rel (%p198) target = $region24
      $region23: #{deeplabv3_forward.15} parent=11 // pred_region
        %p201 = scmp.lt.s32.totalorder %s21, 0
        %s202 = scalar_select %p201, %s21, 0
        %s203 = scalar_lea.vmem %s3, %s202
      $region24: #{deeplabv3_forward.15} parent=11 // pred_fallthru
        _
    $region12: #{deeplabv3_forward.15} parent=5 // pred_fallthru
      _
    %p204 = scmp.lt.s32.totalorder %s10, 2
    // Predicated region
    $region25: #{deeplabv3_forward.15} parent=5 // pred_check
      %p205 = pneg %p204
    $region26: #{deeplabv3_forward.15} parent=5 // pred_check_branch
      %207 = sbr.rel (%p205) target = $region28
    $region27: #{deeplabv3_forward.15} parent=5 // pred_region
      // Predicated region
      $region29: #{deeplabv3_forward.15} parent=27 // pred_check
        %p208 = pneg %p51
      $region30: #{deeplabv3_forward.15} parent=27 // pred_check_branch
        %210 = sbr.rel (%p208) target = $region32
      $region31: #{deeplabv3_forward.15} parent=27 // pred_region
        %p211 = scmp.lt.s32.totalorder %s17, 1
        %s212 = scalar_select %p211, %s17, 1
        %p213 = scmp.lt.s32.totalorder %s19, 0
        %s214 = scalar_select %p213, %s19, 0
        %s215 = smul.addr %s212, 264
        %s216 = sadd.s32 %s214, %s215
        %s217 = smul.addr %s216, 4
        %s218 = scalar_lea.vmem %s0, %s217
      $region32: #{deeplabv3_forward.15} parent=27 // pred_fallthru
        _
    $region28: #{deeplabv3_forward.15} parent=5 // pred_fallthru
      _
    %p219 = scmp.le.s32.totalorder 1, %s10
    %p220 = scmp.lt.s32.totalorder %s10, 3
    %p221 = pnand %p219, %p220
    %p222 = pneg %p221
    // Predicated region
    $region33: #{deeplabv3_forward.15} parent=5 // pred_check
      _
    $region34: #{deeplabv3_forward.15} parent=5 // pred_check_branch
      %224 = sbr.rel (%p221) target = $region36
    $region35: #{deeplabv3_forward.15} parent=5 // pred_region
      %s225 = ssub.s32 %s10, 1
      %p226 = scmp.lt.s32.totalorder %s20, 1
      %s227 = scalar_select %p226, %s20, 1
      %p228 = scmp.lt.s32.totalorder %s22, 0
      %s229 = scalar_select %p228, %s22, 0
      %s230 = smul.addr %s227, 264
      %s231 = sadd.s32 %s229, %s230
      %s232 = smul.addr %s231, 4
      %s233 = scalar_lea.vmem %s0, %s232
      %p234 = pneg %p57
      %p235 = pneg %p54
      %s236 = smul.u32 4, %s22
      %p237 = scmp.lt.s32.totalorder %s236, 3
      %s238 = scalar_select %p237, %s236, 3
      %p239 = scmp.lt.s32.totalorder %s21, 0
      %s240 = scalar_select %p239, %s21, 0
      %s241 = sadd.s32 %s240, %s238
      %s242 = smul.addr %s241, 4
      %s243 = scalar_lea.vmem %s1, %s242
      %p244 = pneg %p85
      %p245 = pneg %p82
      %p246 = scmp.lt.s32.totalorder %s21, 0
      %s247 = scalar_select %p246, %s21, 0
      %s248 = scalar_lea.vmem %s2, %s247
      %p249 = pneg %p111
      %p250 = pneg %p108
      %p251 = scmp.lt.s32.totalorder %s21, 0
      %s252 = scalar_select %p251, %s21, 0
      %s253 = scalar_lea.vmem %s3, %s252
      %p254 = pneg %p137
      %p255 = pneg %p134
      %p256 = pneg %p165
      %p257 = pneg %p162
      %p258 = scmp.lt.s32.totalorder %s20, 1
      %s259 = scalar_select %p258, %s20, 1
      %p260 = scmp.lt.s32.totalorder %s21, 0
      %s261 = scalar_select %p260, %s21, 0
      %s262 = smul.addr %s259, 8
      %s263 = sadd.s32 %s261, %s262
      %s264 = smul.addr %s263, 4
      %s265 = scalar_lea.vmem %s4, %s264
      %p266 = scmp.lt.s32.totalorder %s20, 1
      %s267 = scalar_select %p266, %s20, 1
      %p268 = scmp.lt.s32.totalorder %s22, 0
      %s269 = scalar_select %p268, %s22, 0
      %s270 = smul.addr %s267, 264
      %s271 = sadd.s32 %s269, %s270
      %s272 = smul.addr %s271, 4
      %s273 = scalar_lea.vmem %s0, %s272
      %s274 = smul.u32 4, %s22
      %p275 = scmp.lt.s32.totalorder %s274, 3
      %s276 = scalar_select %p275, %s274, 3
      %p277 = scmp.lt.s32.totalorder %s21, 0
      %s278 = scalar_select %p277, %s21, 0
      %s279 = sadd.s32 %s278, %s276
      %s280 = smul.addr %s279, 4
      %s281 = scalar_lea.vmem %s1, %s280
      %s282 = smul.u32 4, %s22
      %p283 = scmp.lt.s32.totalorder %s21, 0
      %s284 = scalar_select %p283, %s21, 0
      %s285 = scalar_lea.vmem %s2, %s284
      %p286 = scmp.lt.s32.totalorder %s21, 0
      %s287 = scalar_select %p286, %s21, 0
      %s288 = scalar_lea.vmem %s3, %s287
      %p289 = scmp.lt.s32.totalorder %s20, 1
      %s290 = scalar_select %p289, %s20, 1
      %p291 = scmp.lt.s32.totalorder %s21, 0
      %s292 = scalar_select %p291, %s21, 0
      %s293 = smul.addr %s290, 8
      %s294 = sadd.s32 %s292, %s293
      %s295 = smul.addr %s294, 4
      %s296 = scalar_lea.vmem %s4, %s295
      %p298 = scmp.eq.s32.totalorder %s22, 0
      // Predicated region
      $region37: #{deeplabv3_forward.15} parent=35 // pred_check
        %p299 = pneg %p298
      $region38: #{deeplabv3_forward.15} parent=35 // pred_check_branch
        %301 = sbr.rel (%p299) target = $region40
      $region39: #{deeplabv3_forward.15} parent=35 // pred_region
        %vm302 = vcmask 130048
        %303 = vst.msk [vmem:[#allocation2] sm:$0xff] %vm302, 0.0
        %304 = vst.msk [vmem:[#allocation2 + $0x8] sm:$0xff] %vm302, 0.0
        %305 = vst.msk [vmem:[#allocation2 + $0x10] sm:$0xff] %vm302, 0.0
        %306 = vst.msk [vmem:[#allocation2 + $0x18] sm:$0xff] %vm302, 0.0
        %307 = vst.msk [vmem:[#allocation2 + $0x20] sm:$0xff] %vm302, 0.0
        %308 = vst.msk [vmem:[#allocation2 + $0x28] sm:$0xff] %vm302, 0.0
        %309 = vst.msk [vmem:[#allocation2 + $0x30] sm:$0xff] %vm302, 0.0
        %310 = vst.msk [vmem:[#allocation2 + $0x38] sm:$0xff] %vm302, 0.0
      $region40: #{deeplabv3_forward.15} parent=35 // pred_fallthru
        _
      %v311 = vld [vmem:[#allocation2] sm:$0xff]
      %v312 = vld [vmem:[#allocation2 + $0x8] sm:$0xff]
      %v313 = vld [vmem:[#allocation2 + $0x10] sm:$0xff]
      %v314 = vld [vmem:[#allocation2 + $0x18] sm:$0xff]
      %v315 = vld [vmem:[#allocation2 + $0x20] sm:$0xff]
      %v316 = vld [vmem:[#allocation2 + $0x28] sm:$0xff]
      %v317 = vld [vmem:[#allocation2 + $0x30] sm:$0xff]
      %v318 = vld [vmem:[#allocation2 + $0x38] sm:$0xff]
      %v319 = vld [vmem:[%s273 + $0x90] sm:$0x8]
      %v320 = vld [vmem:[%s273 + $0x94] sm:$0x7]
      %v321 = vld [vmem:[%s273 + $0xa8] sm:$0x8]
      %v322 = vld [vmem:[%s273 + $0xac] sm:$0x7]
      %v323 = vld [vmem:[%s273 + $0xc0] sm:$0x8]
      %v324 = vld [vmem:[%s273 + $0xc4] sm:$0x7]
      %v325 = vld [vmem:[%s273 + $0xd8] sm:$0x8]
      %v326 = vld [vmem:[%s273 + $0xdc] sm:$0x7]
      %v327 = vld [vmem:[%s273 + $0xf0] sm:$0x8]
      %v328 = vld [vmem:[%s273 + $0xf4] sm:$0x7]
      %v329 = vld [vmem:[%s273 + $0x108] sm:$0x8]
      %v330 = vld [vmem:[%s273 + $0x10c] sm:$0x7]
      %v331 = vld [vmem:[%s273 + $0x120] sm:$0x8]
      %v332 = vld [vmem:[%s273 + $0x124] sm:$0x7]
      %v333 = vld [vmem:[%s273 + $0x138] sm:$0x8]
      %v334 = vld [vmem:[%s273 + $0x13c] sm:$0x7]
      %v335 = vld [vmem:[%s273 + $0x1b0] sm:$0x8]
      %v336 = vld [vmem:[%s273 + $0x1b4] sm:$0x7]
      %v337 = vld [vmem:[%s273 + $0x1c8] sm:$0x8]
      %v338 = vld [vmem:[%s273 + $0x1cc] sm:$0x7]
      %v339 = vld [vmem:[%s273 + $0x1e0] sm:$0x8]
      %v340 = vld [vmem:[%s273 + $0x1e4] sm:$0x7]
      %v341 = vld [vmem:[%s273 + $0x1f8] sm:$0x8]
      %v342 = vld [vmem:[%s273 + $0x1fc] sm:$0x7]
      %v343 = vld [vmem:[%s273 + $0x210] sm:$0x8]
      %v344 = vld [vmem:[%s273 + $0x214] sm:$0x7]
      %v345 = vld [vmem:[%s273 + $0x228] sm:$0x8]
      %v346 = vld [vmem:[%s273 + $0x22c] sm:$0x7]
      %v347 = vld [vmem:[%s273 + $0x240] sm:$0x8]
      %v348 = vld [vmem:[%s273 + $0x244] sm:$0x7]
      %v349 = vld [vmem:[%s273 + $0x258] sm:$0x8]
      %v350 = vld [vmem:[%s273 + $0x25c] sm:$0x7]
      %v351 = vld [vmem:[%s273 + $0x2d0] sm:$0x8]
      %v352 = vld [vmem:[%s273 + $0x2d4] sm:$0x7]
      %v353 = vld [vmem:[%s273 + $0x2e8] sm:$0x8]
      %v354 = vld [vmem:[%s273 + $0x2ec] sm:$0x7]
      %v355 = vld [vmem:[%s273 + $0x300] sm:$0x8]
      %v356 = vld [vmem:[%s273 + $0x304] sm:$0x7]
      %v357 = vld [vmem:[%s273 + $0x318] sm:$0x8]
      %v358 = vld [vmem:[%s273 + $0x31c] sm:$0x7]
      %v359 = vld [vmem:[%s273 + $0x330] sm:$0x8]
      %v360 = vld [vmem:[%s273 + $0x334] sm:$0x7]
      %v361 = vld [vmem:[%s273 + $0x348] sm:$0x8]
      %v362 = vld [vmem:[%s273 + $0x34c] sm:$0x7]
      %v363 = vld [vmem:[%s273 + $0x360] sm:$0x8]
      %v364 = vld [vmem:[%s273 + $0x364] sm:$0x7]
      %v365 = vld [vmem:[%s273 + $0x378] sm:$0x8]
      %v366 = vld [vmem:[%s273 + $0x37c] sm:$0x7]
      %vm415 = vcmask 1040384
      %vm416 = vcmask 1044484
      %vm417 = vmor %vm415, %vm416
      %v418 = vrot.slane %v319, 7
      %v419 = vrot.slane %v418, 4
      %v420 = vrot.slane %v320, 7
      %v421 = vsel %vm417, %v419, %v420
      %v422 = vrot.slane %v321, 7
      %v423 = vrot.slane %v422, 4
      %v424 = vrot.slane %v322, 7
      %v425 = vsel %vm417, %v423, %v424
      %v426 = vrot.slane %v323, 7
      %v427 = vrot.slane %v426, 4
      %v428 = vrot.slane %v324, 7
      %v429 = vsel %vm417, %v427, %v428
      %v430 = vrot.slane %v325, 7
      %v431 = vrot.slane %v430, 4
      %v432 = vrot.slane %v326, 7
      %v433 = vsel %vm417, %v431, %v432
      %v434 = vrot.slane %v327, 7
      %v435 = vrot.slane %v434, 4
      %v436 = vrot.slane %v328, 7
      %v437 = vsel %vm417, %v435, %v436
      %v438 = vrot.slane %v329, 7
      %v439 = vrot.slane %v438, 4
      %v440 = vrot.slane %v330, 7
      %v441 = vsel %vm417, %v439, %v440
      %v442 = vrot.slane %v331, 7
      %v443 = vrot.slane %v442, 4
      %v444 = vrot.slane %v332, 7
      %v445 = vsel %vm417, %v443, %v444
      %v446 = vrot.slane %v333, 7
      %v447 = vrot.slane %v446, 4
      %v448 = vrot.slane %v334, 7
      %v449 = vsel %vm417, %v447, %v448
      %v450 = vrot.slane %v335, 7
      %v451 = vrot.slane %v450, 4
      %v452 = vrot.slane %v336, 7
      %v453 = vsel %vm417, %v451, %v452
      %v454 = vrot.slane %v337, 7
      %v455 = vrot.slane %v454, 4
      %v456 = vrot.slane %v338, 7
      %v457 = vsel %vm417, %v455, %v456
      %v458 = vrot.slane %v339, 7
      %v459 = vrot.slane %v458, 4
      %v460 = vrot.slane %v340, 7
      %v461 = vsel %vm417, %v459, %v460
      %v462 = vrot.slane %v341, 7
      %v463 = vrot.slane %v462, 4
      %v464 = vrot.slane %v342, 7
      %v465 = vsel %vm417, %v463, %v464
      %v466 = vrot.slane %v343, 7
      %v467 = vrot.slane %v466, 4
      %v468 = vrot.slane %v344, 7
      %v469 = vsel %vm417, %v467, %v468
      %v470 = vrot.slane %v345, 7
      %v471 = vrot.slane %v470, 4
      %v472 = vrot.slane %v346, 7
      %v473 = vsel %vm417, %v471, %v472
      %v474 = vrot.slane %v347, 7
      %v475 = vrot.slane %v474, 4
      %v476 = vrot.slane %v348, 7
      %v477 = vsel %vm417, %v475, %v476
      %v478 = vrot.slane %v349, 7
      %v479 = vrot.slane %v478, 4
      %v480 = vrot.slane %v350, 7
      %v481 = vsel %vm417, %v479, %v480
      %v482 = vrot.slane %v351, 7
      %v483 = vrot.slane %v482, 4
      %v484 = vrot.slane %v352, 7
      %v485 = vsel %vm417, %v483, %v484
      %v486 = vrot.slane %v353, 7
      %v487 = vrot.slane %v486, 4
      %v488 = vrot.slane %v354, 7
      %v489 = vsel %vm417, %v487, %v488
      %v490 = vrot.slane %v355, 7
      %v491 = vrot.slane %v490, 4
      %v492 = vrot.slane %v356, 7
      %v493 = vsel %vm417, %v491, %v492
      %v494 = vrot.slane %v357, 7
      %v495 = vrot.slane %v494, 4
      %v496 = vrot.slane %v358, 7
      %v497 = vsel %vm417, %v495, %v496
      %v498 = vrot.slane %v359, 7
      %v499 = vrot.slane %v498, 4
      %v500 = vrot.slane %v360, 7
      %v501 = vsel %vm417, %v499, %v500
      %v502 = vrot.slane %v361, 7
      %v503 = vrot.slane %v502, 4
      %v504 = vrot.slane %v362, 7
      %v505 = vsel %vm417, %v503, %v504
      %v506 = vrot.slane %v363, 7
      %v507 = vrot.slane %v506, 4
      %v508 = vrot.slane %v364, 7
      %v509 = vsel %vm417, %v507, %v508
      %v510 = vrot.slane %v365, 7
      %v511 = vrot.slane %v510, 4
      %v512 = vrot.slane %v366, 7
      %v513 = vsel %vm417, %v511, %v512
      %v514 = vld [vmem:[%s281] sm:$0xf]
      %v515 = vld [vmem:[%s281 + $0x4] sm:$0xf]
      %v516 = vld [vmem:[%s281 + $0x8] sm:$0xf]
      %v517 = vld [vmem:[%s281 + $0xc] sm:$0xf]
      %v518 = vunpack.c.l.b16 %v421
      %v519 = vunpack.c.l.b16 %v425
      %v520 = vunpack.c.l.b16 %v429
      %v521 = vunpack.c.l.b16 %v433
      %v522 = vunpack.c.l.b16 %v437
      %v523 = vunpack.c.l.b16 %v441
      %v524 = vunpack.c.l.b16 %v445
      %v525 = vunpack.c.l.b16 %v449
      %v526 = vpack.c.b16 %v519, %v518
      %v527 = vpack.c.b16 %v521, %v520
      %v528 = vpack.c.b16 %v523, %v522
      %v529 = vpack.c.b16 %v525, %v524
      %v534 = vunpack.c.l.b16 %v514
      %v535 = vunpack.c.l.b16 %v515
      %v536 = vunpack.c.l.b16 %v516
      %v537 = vunpack.c.l.b16 %v517
      %v538 = vpack.c.b16 %v535, %v534
      %v539 = vpack.c.b16 %v537, %v536
      %vm542 = vcmask 261120
      %v544 = vsel %vm542, %v526, 0
      %v547 = vsel %vm542, %v527, 0
      %v550 = vsel %vm542, %v528, 0
      %v553 = vsel %vm542, %v529, 0
      %555 = vmatprep.subr.bf16.mxu0 0
      %556 = vmatpush1.bf16.msra.mxu0 %v538
      %557 = vmatprep.subr.bf16.mxu0 0
      %558 = vmatpush1.bf16.msra.mxu0 %v539
      %559 = vmatprep.subr.bf16.mxu0 0
      %560 = vmatpush1.bf16.msra.mxu0 0
      %561 = vmatprep.subr.bf16.mxu0 0
      %562 = vmatpush1.bf16.msra.mxu0 0
      %563 = vmatprep.subr.bf16.mxu0 0
      %564 = vmatpush1.bf16.msra.mxu0 0
      %565 = vmatprep.subr.bf16.mxu0 0
      %566 = vmatpush1.bf16.msra.mxu0 0
      %567 = vmatprep.subr.bf16.mxu0 0
      %568 = vmatpush1.bf16.msra.mxu0 0
      %569 = vmatprep.subr.bf16.mxu0 0
      %570 = vmatpush1.bf16.msra.mxu0 0
      %571 = vmatprep.subr.bf16.mxu0 0
      %572 = vmatpush1.bf16.msra.mxu0 0
      %573 = vmatprep.subr.bf16.mxu0 0
      %574 = vmatpush1.bf16.msra.mxu0 0
      %575 = vmatprep.subr.bf16.mxu0 0
      %576 = vmatpush1.bf16.msra.mxu0 0
      %577 = vmatprep.subr.bf16.mxu0 0
      %578 = vmatpush1.bf16.msra.mxu0 0
      %579 = vmatprep.subr.bf16.mxu0 0
      %580 = vmatpush1.bf16.msra.mxu0 0
      %581 = vmatprep.subr.bf16.mxu0 0
      %582 = vmatpush1.bf16.msra.mxu0 0
      %583 = vmatprep.subr.bf16.mxu0 0
      %584 = vmatpush1.bf16.msra.mxu0 0
      %585 = vmatprep.subr.bf16.mxu0 0
      %586 = vmatpush1.bf16.msra.mxu0 0
      %587 = vmatprep.mubr.bf16.mxu0 0
      %588 = vmatmul.mubr.bf16.gmra.mrb[0].mxu0 %v544
      %v589 = vpop.f32.mrb[0].mxu0
      %v590 = vadd.f32 0.0, %v589
      %v591 = vpop.f32.mrb[0].mxu0
      %v592 = vpop.f32.mrb[0].mxu0
      %v593 = vadd.f32 0.0, %v592
      %v594 = vpop.f32.mrb[0].mxu0
      %595 = vmatprep.mubr.bf16.mxu0 0
      %596 = vmatmul.mubr.bf16.gmra.mrb[0].mxu0 %v547
      %v597 = vpop.f32.mrb[0].mxu0
      %v598 = vadd.f32 0.0, %v597
      %v599 = vpop.f32.mrb[0].mxu0
      %v600 = vpop.f32.mrb[0].mxu0
      %v601 = vadd.f32 0.0, %v600
      %v602 = vpop.f32.mrb[0].mxu0
      %603 = vmatprep.mubr.bf16.mxu0 0
      %604 = vmatmul.mubr.bf16.gmra.mrb[0].mxu0 %v550
      %v605 = vpop.f32.mrb[0].mxu0
      %v606 = vadd.f32 0.0, %v605
      %v607 = vpop.f32.mrb[0].mxu0
      %v608 = vpop.f32.mrb[0].mxu0
      %v609 = vadd.f32 0.0, %v608
      %v610 = vpop.f32.mrb[0].mxu0
      %611 = vmatprep.mubr.bf16.mxu0 0
      %612 = vmatmul.mubr.bf16.gmra.mrb[0].mxu0 %v553
      %v613 = vpop.f32.mrb[0].mxu0
      %v614 = vadd.f32 0.0, %v613
      %v615 = vpop.f32.mrb[0].mxu0
      %v616 = vpop.f32.mrb[0].mxu0
      %v617 = vadd.f32 0.0, %v616
      %v618 = vpop.f32.mrb[0].mxu0
      %619 = vdwg.mxu0
      %v620 = vadd.f32 %v311, %v590
      %v621 = vadd.f32 %v312, %v593
      %v622 = vadd.f32 %v313, %v598
      %v623 = vadd.f32 %v314, %v601
      %v624 = vadd.f32 %v315, %v606
      %v625 = vadd.f32 %v316, %v609
      %v626 = vadd.f32 %v317, %v614
      %v627 = vadd.f32 %v318, %v617
      %s628 = scalar_lea.vmem %s281, 48
      %v629 = vld [vmem:[%s628] sm:$0xf]
      %v630 = vld [vmem:[%s628 + $0x4] sm:$0xf]
      %v631 = vld [vmem:[%s628 + $0x8] sm:$0xf]
      %v632 = vld [vmem:[%s628 + $0xc] sm:$0xf]
      %v633 = vunpack.c.l.b16 %v453
      %v634 = vunpack.c.l.b16 %v457
      %v635 = vunpack.c.l.b16 %v461
      %v636 = vunpack.c.l.b16 %v465
      %v637 = vunpack.c.l.b16 %v469
      %v638 = vunpack.c.l.b16 %v473
      %v639 = vunpack.c.l.b16 %v477
      %v640 = vunpack.c.l.b16 %v481
      %v641 = vpack.c.b16 %v634, %v633
      %v642 = vpack.c.b16 %v636, %v635
      %v643 = vpack.c.b16 %v638, %v637
      %v644 = vpack.c.b16 %v640, %v639
      %v649 = vunpack.c.l.b16 %v629
      %v650 = vunpack.c.l.b16 %v630
      %v651 = vunpack.c.l.b16 %v631
      %v652 = vunpack.c.l.b16 %v632
      %v653 = vpack.c.b16 %v650, %v649
      %v654 = vpack.c.b16 %v652, %v651
      %v658 = vsel %vm542, %v641, 0
      %v661 = vsel %vm542, %v642, 0
      %v664 = vsel %vm542, %v643, 0
      %v667 = vsel %vm542, %v644, 0
      %669 = vmatprep.subr.bf16.mxu0 0
      %670 = vmatpush1.bf16.msra.mxu0 %v653
      %671 = vmatprep.subr.bf16.mxu0 0
      %672 = vmatpush1.bf16.msra.mxu0 %v654
      %673 = vmatprep.subr.bf16.mxu0 0
      %674 = vmatpush1.bf16.msra.mxu0 0
      %675 = vmatprep.subr.bf16.mxu0 0
      %676 = vmatpush1.bf16.msra.mxu0 0
      %677 = vmatprep.subr.bf16.mxu0 0
      %678 = vmatpush1.bf16.msra.mxu0 0
      %679 = vmatprep.subr.bf16.mxu0 0
      %680 = vmatpush1.bf16.msra.mxu0 0
      %681 = vmatprep.subr.bf16.mxu0 0
      %682 = vmatpush1.bf16.msra.mxu0 0
      %683 = vmatprep.subr.bf16.mxu0 0
      %684 = vmatpush1.bf16.msra.mxu0 0
      %685 = vmatprep.subr.bf16.mxu0 0
      %686 = vmatpush1.bf16.msra.mxu0 0
      %687 = vmatprep.subr.bf16.mxu0 0
      %688 = vmatpush1.bf16.msra.mxu0 0
      %689 = vmatprep.subr.bf16.mxu0 0
      %690 = vmatpush1.bf16.msra.mxu0 0
      %691 = vmatprep.subr.bf16.mxu0 0
      %692 = vmatpush1.bf16.msra.mxu0 0
      %693 = vmatprep.subr.bf16.mxu0 0
      %694 = vmatpush1.bf16.msra.mxu0 0
      %695 = vmatprep.subr.bf16.mxu0 0
      %696 = vmatpush1.bf16.msra.mxu0 0
      %697 = vmatprep.subr.bf16.mxu0 0
      %698 = vmatpush1.bf16.msra.mxu0 0
      %699 = vmatprep.subr.bf16.mxu0 0
      %700 = vmatpush1.bf16.msra.mxu0 0
      %701 = vmatprep.mubr.bf16.mxu0 0
      %702 = vmatmul.mubr.bf16.gmra.mrb[0].mxu0 %v658
      %v703 = vpop.f32.mrb[0].mxu0
      %v704 = vadd.f32 0.0, %v703
      %v705 = vpop.f32.mrb[0].mxu0
      %v706 = vpop.f32.mrb[0].mxu0
      %v707 = vadd.f32 0.0, %v706
      %v708 = vpop.f32.mrb[0].mxu0
      %709 = vmatprep.mubr.bf16.mxu0 0
      %710 = vmatmul.mubr.bf16.gmra.mrb[0].mxu0 %v661
      %v711 = vpop.f32.mrb[0].mxu0
      %v712 = vadd.f32 0.0, %v711
      %v713 = vpop.f32.mrb[0].mxu0
      %v714 = vpop.f32.mrb[0].mxu0
      %v715 = vadd.f32 0.0, %v714
      %v716 = vpop.f32.mrb[0].mxu0
      %717 = vmatprep.mubr.bf16.mxu0 0
      %718 = vmatmul.mubr.bf16.gmra.mrb[0].mxu0 %v664
      %v719 = vpop.f32.mrb[0].mxu0
      %v720 = vadd.f32 0.0, %v719
      %v721 = vpop.f32.mrb[0].mxu0
      %v722 = vpop.f32.mrb[0].mxu0
      %v723 = vadd.f32 0.0, %v722
      %v724 = vpop.f32.mrb[0].mxu0
      %725 = vmatprep.mubr.bf16.mxu0 0
      %726 = vmatmul.mubr.bf16.gmra.mrb[0].mxu0 %v667
      %v727 = vpop.f32.mrb[0].mxu0
      %v728 = vadd.f32 0.0, %v727
      %v729 = vpop.f32.mrb[0].mxu0
      %v730 = vpop.f32.mrb[0].mxu0
      %v731 = vadd.f32 0.0, %v730
      %v732 = vpop.f32.mrb[0].mxu0
      %733 = vdwg.mxu0
      %v734 = vadd.f32 %v620, %v704
      %v735 = vadd.f32 %v621, %v707
      %v736 = vadd.f32 %v622, %v712
      %v737 = vadd.f32 %v623, %v715
      %v738 = vadd.f32 %v624, %v720
      %v739 = vadd.f32 %v625, %v723
      %v740 = vadd.f32 %v626, %v728
      %v741 = vadd.f32 %v627, %v731
      %s742 = scalar_lea.vmem %s281, 96
      %v743 = vld [vmem:[%s742] sm:$0xf]
      %v744 = vld [vmem:[%s742 + $0x4] sm:$0xf]
      %v745 = vld [vmem:[%s742 + $0x8] sm:$0xf]
      %v746 = vld [vmem:[%s742 + $0xc] sm:$0xf]
      %v747 = vunpack.c.l.b16 %v485
      %v748 = vunpack.c.l.b16 %v489
      %v749 = vunpack.c.l.b16 %v493
      %v750 = vunpack.c.l.b16 %v497
      %v751 = vunpack.c.l.b16 %v501
      %v752 = vunpack.c.l.b16 %v505
      %v753 = vunpack.c.l.b16 %v509
      %v754 = vunpack.c.l.b16 %v513
      %v755 = vpack.c.b16 %v748, %v747
      %v756 = vpack.c.b16 %v750, %v749
      %v757 = vpack.c.b16 %v752, %v751
      %v758 = vpack.c.b16 %v754, %v753
      %v763 = vunpack.c.l.b16 %v743
      %v764 = vunpack.c.l.b16 %v744
      %v765 = vunpack.c.l.b16 %v745
      %v766 = vunpack.c.l.b16 %v746
      %v767 = vpack.c.b16 %v764, %v763
      %v768 = vpack.c.b16 %v766, %v765
      %v772 = vsel %vm542, %v755, 0
      %v775 = vsel %vm542, %v756, 0
      %v778 = vsel %vm542, %v757, 0
      %v781 = vsel %vm542, %v758, 0
      %783 = vmatprep.subr.bf16.mxu0 0
      %784 = vmatpush1.bf16.msra.mxu0 %v767
      %785 = vmatprep.subr.bf16.mxu0 0
      %786 = vmatpush1.bf16.msra.mxu0 %v768
      %787 = vmatprep.subr.bf16.mxu0 0
      %788 = vmatpush1.bf16.msra.mxu0 0
      %789 = vmatprep.subr.bf16.mxu0 0
      %790 = vmatpush1.bf16.msra.mxu0 0
      %791 = vmatprep.subr.bf16.mxu0 0
      %792 = vmatpush1.bf16.msra.mxu0 0
      %793 = vmatprep.subr.bf16.mxu0 0
      %794 = vmatpush1.bf16.msra.mxu0 0
      %795 = vmatprep.subr.bf16.mxu0 0
      %796 = vmatpush1.bf16.msra.mxu0 0
      %797 = vmatprep.subr.bf16.mxu0 0
      %798 = vmatpush1.bf16.msra.mxu0 0
      %799 = vmatprep.subr.bf16.mxu0 0
      %800 = vmatpush1.bf16.msra.mxu0 0
      %801 = vmatprep.subr.bf16.mxu0 0
      %802 = vmatpush1.bf16.msra.mxu0 0
      %803 = vmatprep.subr.bf16.mxu0 0
      %804 = vmatpush1.bf16.msra.mxu0 0
      %805 = vmatprep.subr.bf16.mxu0 0
      %806 = vmatpush1.bf16.msra.mxu0 0
      %807 = vmatprep.subr.bf16.mxu0 0
      %808 = vmatpush1.bf16.msra.mxu0 0
      %809 = vmatprep.subr.bf16.mxu0 0
      %810 = vmatpush1.bf16.msra.mxu0 0
      %811 = vmatprep.subr.bf16.mxu0 0
      %812 = vmatpush1.bf16.msra.mxu0 0
      %813 = vmatprep.subr.bf16.mxu0 0
      %814 = vmatpush1.bf16.msra.mxu0 0
      %815 = vmatprep.mubr.bf16.mxu0 0
      %816 = vmatmul.mubr.bf16.gmra.mrb[0].mxu0 %v772
      %v817 = vpop.f32.mrb[0].mxu0
      %v818 = vadd.f32 0.0, %v817
      %v819 = vpop.f32.mrb[0].mxu0
      %v820 = vpop.f32.mrb[0].mxu0
      %v821 = vadd.f32 0.0, %v820
      %v822 = vpop.f32.mrb[0].mxu0
      %823 = vmatprep.mubr.bf16.mxu0 0
      %824 = vmatmul.mubr.bf16.gmra.mrb[0].mxu0 %v775
      %v825 = vpop.f32.mrb[0].mxu0
      %v826 = vadd.f32 0.0, %v825
      %v827 = vpop.f32.mrb[0].mxu0
      %v828 = vpop.f32.mrb[0].mxu0
      %v829 = vadd.f32 0.0, %v828
      %v830 = vpop.f32.mrb[0].mxu0
      %831 = vmatprep.mubr.bf16.mxu0 0
      %832 = vmatmul.mubr.bf16.gmra.mrb[0].mxu0 %v778
      %v833 = vpop.f32.mrb[0].mxu0
      %v834 = vadd.f32 0.0, %v833
      %v835 = vpop.f32.mrb[0].mxu0
      %v836 = vpop.f32.mrb[0].mxu0
      %v837 = vadd.f32 0.0, %v836
      %v838 = vpop.f32.mrb[0].mxu0
      %839 = vmatprep.mubr.bf16.mxu0 0
      %840 = vmatmul.mubr.bf16.gmra.mrb[0].mxu0 %v781
      %v841 = vpop.f32.mrb[0].mxu0
      %v842 = vadd.f32 0.0, %v841
      %v843 = vpop.f32.mrb[0].mxu0
      %v844 = vpop.f32.mrb[0].mxu0
      %v845 = vadd.f32 0.0, %v844
      %v846 = vpop.f32.mrb[0].mxu0
      %847 = vdwg.mxu0
      %v848 = vadd.f32 %v734, %v818
      %v849 = vadd.f32 %v735, %v821
      %v850 = vadd.f32 %v736, %v826
      %v851 = vadd.f32 %v737, %v829
      %v852 = vadd.f32 %v738, %v834
      %v853 = vadd.f32 %v739, %v837
      %v854 = vadd.f32 %v740, %v842
      %v855 = vadd.f32 %v741, %v845
      %v856 = vld [vmem:[%s273 + $0x98] sm:$0xe]
      %v857 = vld [vmem:[%s273 + $0x9c] sm:$0x1]
      %v858 = vld [vmem:[%s273 + $0xb0] sm:$0xe]
      %v859 = vld [vmem:[%s273 + $0xb4] sm:$0x1]
      %v860 = vld [vmem:[%s273 + $0xc8] sm:$0xe]
      %v861 = vld [vmem:[%s273 + $0xcc] sm:$0x1]
      %v862 = vld [vmem:[%s273 + $0xe0] sm:$0xe]
      %v863 = vld [vmem:[%s273 + $0xe4] sm:$0x1]
      %v864 = vld [vmem:[%s273 + $0xf8] sm:$0xe]
      %v865 = vld [vmem:[%s273 + $0xfc] sm:$0x1]
      %v866 = vld [vmem:[%s273 + $0x110] sm:$0xe]
      %v867 = vld [vmem:[%s273 + $0x114] sm:$0x1]
      %v868 = vld [vmem:[%s273 + $0x128] sm:$0xe]
      %v869 = vld [vmem:[%s273 + $0x12c] sm:$0x1]
      %v870 = vld [vmem:[%s273 + $0x140] sm:$0xe]
      %v871 = vld [vmem:[%s273 + $0x144] sm:$0x1]
      %v872 = vld [vmem:[%s273 + $0x1b8] sm:$0xe]
      %v873 = vld [vmem:[%s273 + $0x1bc] sm:$0x1]
      %v874 = vld [vmem:[%s273 + $0x1d0] sm:$0xe]
      %v875 = vld [vmem:[%s273 + $0x1d4] sm:$0x1]
      %v876 = vld [vmem:[%s273 + $0x1e8] sm:$0xe]
      %v877 = vld [vmem:[%s273 + $0x1ec] sm:$0x1]
      %v878 = vld [vmem:[%s273 + $0x200] sm:$0xe]
      %v879 = vld [vmem:[%s273 + $0x204] sm:$0x1]
      %v880 = vld [vmem:[%s273 + $0x218] sm:$0xe]
      %v881 = vld [vmem:[%s273 + $0x21c] sm:$0x1]
      %v882 = vld [vmem:[%s273 + $0x230] sm:$0xe]
      %v883 = vld [vmem:[%s273 + $0x234] sm:$0x1]
      %v884 = vld [vmem:[%s273 + $0x248] sm:$0xe]
      %v885 = vld [vmem:[%s273 + $0x24c] sm:$0x1]
      %v886 = vld [vmem:[%s273 + $0x260] sm:$0xe]
      %v887 = vld [vmem:[%s273 + $0x264] sm:$0x1]
      %v888 = vld [vmem:[%s273 + $0x2d8] sm:$0xe]
      %v889 = vld [vmem:[%s273 + $0x2dc] sm:$0x1]
      %v890 = vld [vmem:[%s273 + $0x2f0] sm:$0xe]
      %v891 = vld [vmem:[%s273 + $0x2f4] sm:$0x1]
      %v892 = vld [vmem:[%s273 + $0x308] sm:$0xe]
      %v893 = vld [vmem:[%s273 + $0x30c] sm:$0x1]
      %v894 = vld [vmem:[%s273 + $0x320] sm:$0xe]
      %v895 = vld [vmem:[%s273 + $0x324] sm:$0x1]
      %v896 = vld [vmem:[%s273 + $0x338] sm:$0xe]
      %v897 = vld [vmem:[%s273 + $0x33c] sm:$0x1]
      %v898 = vld [vmem:[%s273 + $0x350] sm:$0xe]
      %v899 = vld [vmem:[%s273 + $0x354] sm:$0x1]
      %v900 = vld [vmem:[%s273 + $0x368] sm:$0xe]
      %v901 = vld [vmem:[%s273 + $0x36c] sm:$0x1]
      %v902 = vld [vmem:[%s273 + $0x380] sm:$0xe]
      %v903 = vld [vmem:[%s273 + $0x384] sm:$0x1]
      %vm952 = vcmask 1042432
      %vm953 = vcmask 1046532
      %vm954 = vmor %vm952, %vm953
      %v955 = vrot.slane %v856, 5
      %v956 = vrot.slane %v955, 4
      %v957 = vrot.slane %v857, 5
      %v958 = vsel %vm954, %v956, %v957
      %v959 = vrot.slane %v858, 5
      %v960 = vrot.slane %v959, 4
      %v961 = vrot.slane %v859, 5
      %v962 = vsel %vm954, %v960, %v961
      %v963 = vrot.slane %v860, 5
      %v964 = vrot.slane %v963, 4
      %v965 = vrot.slane %v861, 5
      %v966 = vsel %vm954, %v964, %v965
      %v967 = vrot.slane %v862, 5
      %v968 = vrot.slane %v967, 4
      %v969 = vrot.slane %v863, 5
      %v970 = vsel %vm954, %v968, %v969
      %v971 = vrot.slane %v864, 5
      %v972 = vrot.slane %v971, 4
      %v973 = vrot.slane %v865, 5
      %v974 = vsel %vm954, %v972, %v973
      %v975 = vrot.slane %v866, 5
      %v976 = vrot.slane %v975, 4
      %v977 = vrot.slane %v867, 5
      %v978 = vsel %vm954, %v976, %v977
      %v979 = vrot.slane %v868, 5
      %v980 = vrot.slane %v979, 4
      %v981 = vrot.slane %v869, 5
      %v982 = vsel %vm954, %v980, %v981
      %v983 = vrot.slane %v870, 5
      %v984 = vrot.slane %v983, 4
      %v985 = vrot.slane %v871, 5
      %v986 = vsel %vm954, %v984, %v985
      %v987 = vrot.slane %v872, 5
      %v988 = vrot.slane %v987, 4
      %v989 = vrot.slane %v873, 5
      %v990 = vsel %vm954, %v988, %v989
      %v991 = vrot.slane %v874, 5
      %v992 = vrot.slane %v991, 4
      %v993 = vrot.slane %v875, 5
      %v994 = vsel %vm954, %v992, %v993
      %v995 = vrot.slane %v876, 5
      %v996 = vrot.slane %v995, 4
      %v997 = vrot.slane %v877, 5
      %v998 = vsel %vm954, %v996, %v997
      %v999 = vrot.slane %v878, 5
      %v1000 = vrot.slane %v999, 4
      %v1001 = vrot.slane %v879, 5
      %v1002 = vsel %vm954, %v1000, %v1001
      %v1003 = vrot.slane %v880, 5
      %v1004 = vrot.slane %v1003, 4
      %v1005 = vrot.slane %v881, 5
      %v1006 = vsel %vm954, %v1004, %v1005
      %v1007 = vrot.slane %v882, 5
      %v1008 = vrot.slane %v1007, 4
      %v1009 = vrot.slane %v883, 5
      %v1010 = vsel %vm954, %v1008, %v1009
      %v1011 = vrot.slane %v884, 5
      %v1012 = vrot.slane %v1011, 4
      %v1013 = vrot.slane %v885, 5
      %v1014 = vsel %vm954, %v1012, %v1013
      %v1015 = vrot.slane %v886, 5
      %v1016 = vrot.slane %v1015, 4
      %v1017 = vrot.slane %v887, 5
      %v1018 = vsel %vm954, %v1016, %v1017
      %v1019 = vrot.slane %v888, 5
      %v1020 = vrot.slane %v1019, 4
      %v1021 = vrot.slane %v889, 5
      %v1022 = vsel %vm954, %v1020, %v1021
      %v1023 = vrot.slane %v890, 5
      %v1024 = vrot.slane %v1023, 4
      %v1025 = vrot.slane %v891, 5
      %v1026 = vsel %vm954, %v1024, %v1025
      %v1027 = vrot.slane %v892, 5
      %v1028 = vrot.slane %v1027, 4
      %v1029 = vrot.slane %v893, 5
      %v1030 = vsel %vm954, %v1028, %v1029
      %v1031 = vrot.slane %v894, 5
      %v1032 = vrot.slane %v1031, 4
      %v1033 = vrot.slane %v895, 5
      %v1034 = vsel %vm954, %v1032, %v1033
      %v1035 = vrot.slane %v896, 5
      %v1036 = vrot.slane %v1035, 4
      %v1037 = vrot.slane %v897, 5
      %v1038 = vsel %vm954, %v1036, %v1037
      %v1039 = vrot.slane %v898, 5
      %v1040 = vrot.slane %v1039, 4
      %v1041 = vrot.slane %v899, 5
      %v1042 = vsel %vm954, %v1040, %v1041
      %v1043 = vrot.slane %v900, 5
      %v1044 = vrot.slane %v1043, 4
      %v1045 = vrot.slane %v901, 5
      %v1046 = vsel %vm954, %v1044, %v1045
      %v1047 = vrot.slane %v902, 5
      %v1048 = vrot.slane %v1047, 4
      %v1049 = vrot.slane %v903, 5
      %v1050 = vsel %vm954, %v1048, %v1049
      %s1051 = scalar_lea.vmem %s281, 16
      %v1052 = vld [vmem:[%s1051] sm:$0xf]
      %v1053 = vld [vmem:[%s1051 + $0x4] sm:$0xf]
      %v1054 = vld [vmem:[%s1051 + $0x8] sm:$0xf]
      %v1055 = vld [vmem:[%s1051 + $0xc] sm:$0xf]
      %v1056 = vunpack.c.l.b16 %v958
      %v1057 = vunpack.c.l.b16 %v962
      %v1058 = vunpack.c.l.b16 %v966
      %v1059 = vunpack.c.l.b16 %v970
      %v1060 = vunpack.c.l.b16 %v974
      %v1061 = vunpack.c.l.b16 %v978
      %v1062 = vunpack.c.l.b16 %v982
      %v1063 = vunpack.c.l.b16 %v986
      %v1064 = vpack.c.b16 %v1057, %v1056
      %v1065 = vpack.c.b16 %v1059, %v1058
      %v1066 = vpack.c.b16 %v1061, %v1060
      %v1067 = vpack.c.b16 %v1063, %v1062
      %v1072 = vunpack.c.l.b16 %v1052
      %v1073 = vunpack.c.l.b16 %v1053
      %v1074 = vunpack.c.l.b16 %v1054
      %v1075 = vunpack.c.l.b16 %v1055
      %v1076 = vpack.c.b16 %v1073, %v1072
      %v1077 = vpack.c.b16 %v1075, %v1074
      %v1081 = vsel %vm542, %v1064, 0
      %v1084 = vsel %vm542, %v1065, 0
      %v1087 = vsel %vm542, %v1066, 0
      %v1090 = vsel %vm542, %v1067, 0
      %1092 = vmatprep.subr.bf16.mxu0 0
      %1093 = vmatpush1.bf16.msra.mxu0 %v1076
      %1094 = vmatprep.subr.bf16.mxu0 0
      %1095 = vmatpush1.bf16.msra.mxu0 %v1077
      %1096 = vmatprep.subr.bf16.mxu0 0
      %1097 = vmatpush1.bf16.msra.mxu0 0
      %1098 = vmatprep.subr.bf16.mxu0 0
      %1099 = vmatpush1.bf16.msra.mxu0 0
      %1100 = vmatprep.subr.bf16.mxu0 0
      %1101 = vmatpush1.bf16.msra.mxu0 0
      %1102 = vmatprep.subr.bf16.mxu0 0
      %1103 = vmatpush1.bf16.msra.mxu0 0
      %1104 = vmatprep.subr.bf16.mxu0 0
      %1105 = vmatpush1.bf16.msra.mxu0 0
      %1106 = vmatprep.subr.bf16.mxu0 0
      %1107 = vmatpush1.bf16.msra.mxu0 0
      %1108 = vmatprep.subr.bf16.mxu0 0
      %1109 = vmatpush1.bf16.msra.mxu0 0
      %1110 = vmatprep.subr.bf16.mxu0 0
      %1111 = vmatpush1.bf16.msra.mxu0 0
      %1112 = vmatprep.subr.bf16.mxu0 0
      %1113 = vmatpush1.bf16.msra.mxu0 0
      %1114 = vmatprep.subr.bf16.mxu0 0
      %1115 = vmatpush1.bf16.msra.mxu0 0
      %1116 = vmatprep.subr.bf16.mxu0 0
      %1117 = vmatpush1.bf16.msra.mxu0 0
      %1118 = vmatprep.subr.bf16.mxu0 0
      %1119 = vmatpush1.bf16.msra.mxu0 0
      %1120 = vmatprep.subr.bf16.mxu0 0
      %1121 = vmatpush1.bf16.msra.mxu0 0
      %1122 = vmatprep.subr.bf16.mxu0 0
      %1123 = vmatpush1.bf16.msra.mxu0 0
      %1124 = vmatprep.mubr.bf16.mxu0 0
      %1125 = vmatmul.mubr.bf16.gmra.mrb[0].mxu0 %v1081
      %v1126 = vpop.f32.mrb[0].mxu0
      %v1127 = vadd.f32 0.0, %v1126
      %v1128 = vpop.f32.mrb[0].mxu0
      %v1129 = vpop.f32.mrb[0].mxu0
      %v1130 = vadd.f32 0.0, %v1129
      %v1131 = vpop.f32.mrb[0].mxu0
      %1132 = vmatprep.mubr.bf16.mxu0 0
      %1133 = vmatmul.mubr.bf16.gmra.mrb[0].mxu0 %v1084
      %v1134 = vpop.f32.mrb[0].mxu0
      %v1135 = vadd.f32 0.0, %v1134
      %v1136 = vpop.f32.mrb[0].mxu0
      %v1137 = vpop.f32.mrb[0].mxu0
      %v1138 = vadd.f32 0.0, %v1137
      %v1139 = vpop.f32.mrb[0].mxu0
      %1140 = vmatprep.mubr.bf16.mxu0 0
      %1141 = vmatmul.mubr.bf16.gmra.mrb[0].mxu0 %v1087
      %v1142 = vpop.f32.mrb[0].mxu0
      %v1143 = vadd.f32 0.0, %v1142
      %v1144 = vpop.f32.mrb[0].mxu0
      %v1145 = vpop.f32.mrb[0].mxu0
      %v1146 = vadd.f32 0.0, %v1145
      %v1147 = vpop.f32.mrb[0].mxu0
      %1148 = vmatprep.mubr.bf16.mxu0 0
      %1149 = vmatmul.mubr.bf16.gmra.mrb[0].mxu0 %v1090
      %v1150 = vpop.f32.mrb[0].mxu0
      %v1151 = vadd.f32 0.0, %v1150
      %v1152 = vpop.f32.mrb[0].mxu0
      %v1153 = vpop.f32.mrb[0].mxu0
      %v1154 = vadd.f32 0.0, %v1153
      %v1155 = vpop.f32.mrb[0].mxu0
      %1156 = vdwg.mxu0
      %v1157 = vadd.f32 %v848, %v1127
      %v1158 = vadd.f32 %v849, %v1130
      %v1159 = vadd.f32 %v850, %v1135
      %v1160 = vadd.f32 %v851, %v1138
      %v1161 = vadd.f32 %v852, %v1143
      %v1162 = vadd.f32 %v853, %v1146
      %v1163 = vadd.f32 %v854, %v1151
      %v1164 = vadd.f32 %v855, %v1154
      %s1165 = scalar_lea.vmem %s281, 64
      %v1166 = vld [vmem:[%s1165] sm:$0xf]
      %v1167 = vld [vmem:[%s1165 + $0x4] sm:$0xf]
      %v1168 = vld [vmem:[%s1165 + $0x8] sm:$0xf]
      %v1169 = vld [vmem:[%s1165 + $0xc] sm:$0xf]
      %v1170 = vunpack.c.l.b16 %v990
      %v1171 = vunpack.c.l.b16 %v994
      %v1172 = vunpack.c.l.b16 %v998
      %v1173 = vunpack.c.l.b16 %v1002
      %v1174 = vunpack.c.l.b16 %v1006
      %v1175 = vunpack.c.l.b16 %v1010
      %v1176 = vunpack.c.l.b16 %v1014
      %v1177 = vunpack.c.l.b16 %v1018
      %v1178 = vpack.c.b16 %v1171, %v1170
      %v1179 = vpack.c.b16 %v1173, %v1172
      %v1180 = vpack.c.b16 %v1175, %v1174
      %v1181 = vpack.c.b16 %v1177, %v1176
      %v1186 = vunpack.c.l.b16 %v1166
      %v1187 = vunpack.c.l.b16 %v1167
      %v1188 = vunpack.c.l.b16 %v1168
      %v1189 = vunpack.c.l.b16 %v1169
      %v1190 = vpack.c.b16 %v1187, %v1186
      %v1191 = vpack.c.b16 %v1189, %v1188
      %v1195 = vsel %vm542, %v1178, 0
      %v1198 = vsel %vm542, %v1179, 0
      %v1201 = vsel %vm542, %v1180, 0
      %v1204 = vsel %vm542, %v1181, 0
      %1206 = vmatprep.subr.bf16.mxu0 0
      %1207 = vmatpush1.bf16.msra.mxu0 %v1190
      %1208 = vmatprep.subr.bf16.mxu0 0
      %1209 = vmatpush1.bf16.msra.mxu0 %v1191
      %1210 = vmatprep.subr.bf16.mxu0 0
      %1211 = vmatpush1.bf16.msra.mxu0 0
      %1212 = vmatprep.subr.bf16.mxu0 0
      %1213 = vmatpush1.bf16.msra.mxu0 0
      %1214 = vmatprep.subr.bf16.mxu0 0
      %1215 = vmatpush1.bf16.msra.mxu0 0
      %1216 = vmatprep.subr.bf16.mxu0 0
      %1217 = vmatpush1.bf16.msra.mxu0 0
      %1218 = vmatprep.subr.bf16.mxu0 0
      %1219 = vmatpush1.bf16.msra.mxu0 0
      %1220 = vmatprep.subr.bf16.mxu0 0
      %1221 = vmatpush1.bf16.msra.mxu0 0
      %1222 = vmatprep.subr.bf16.mxu0 0
      %1223 = vmatpush1.bf16.msra.mxu0 0
      %1224 = vmatprep.subr.bf16.mxu0 0
      %1225 = vmatpush1.bf16.msra.mxu0 0
      %1226 = vmatprep.subr.bf16.mxu0 0
      %1227 = vmatpush1.bf16.msra.mxu0 0
      %1228 = vmatprep.subr.bf16.mxu0 0
      %1229 = vmatpush1.bf16.msra.mxu0 0
      %1230 = vmatprep.subr.bf16.mxu0 0
      %1231 = vmatpush1.bf16.msra.mxu0 0
      %1232 = vmatprep.subr.bf16.mxu0 0
      %1233 = vmatpush1.bf16.msra.mxu0 0
      %1234 = vmatprep.subr.bf16.mxu0 0
      %1235 = vmatpush1.bf16.msra.mxu0 0
      %1236 = vmatprep.subr.bf16.mxu0 0
      %1237 = vmatpush1.bf16.msra.mxu0 0
      %1238 = vmatprep.mubr.bf16.mxu0 0
      %1239 = vmatmul.mubr.bf16.gmra.mrb[0].mxu0 %v1195
      %v1240 = vpop.f32.mrb[0].mxu0
      %v1241 = vadd.f32 0.0, %v1240
      %v1242 = vpop.f32.mrb[0].mxu0
      %v1243 = vpop.f32.mrb[0].mxu0
      %v1244 = vadd.f32 0.0, %v1243
      %v1245 = vpop.f32.mrb[0].mxu0
      %1246 = vmatprep.mubr.bf16.mxu0 0
      %1247 = vmatmul.mubr.bf16.gmra.mrb[0].mxu0 %v1198
      %v1248 = vpop.f32.mrb[0].mxu0
      %v1249 = vadd.f32 0.0, %v1248
      %v1250 = vpop.f32.mrb[0].mxu0
      %v1251 = vpop.f32.mrb[0].mxu0
      %v1252 = vadd.f32 0.0, %v1251
      %v1253 = vpop.f32.mrb[0].mxu0
      %1254 = vmatprep.mubr.bf16.mxu0 0
      %1255 = vmatmul.mubr.bf16.gmra.mrb[0].mxu0 %v1201
      %v1256 = vpop.f32.mrb[0].mxu0
      %v1257 = vadd.f32 0.0, %v1256
      %v1258 = vpop.f32.mrb[0].mxu0
      %v1259 = vpop.f32.mrb[0].mxu0
      %v1260 = vadd.f32 0.0, %v1259
      %v1261 = vpop.f32.mrb[0].mxu0
      %1262 = vmatprep.mubr.bf16.mxu0 0
      %1263 = vmatmul.mubr.bf16.gmra.mrb[0].mxu0 %v1204
      %v1264 = vpop.f32.mrb[0].mxu0
      %v1265 = vadd.f32 0.0, %v1264
      %v1266 = vpop.f32.mrb[0].mxu0
      %v1267 = vpop.f32.mrb[0].mxu0
      %v1268 = vadd.f32 0.0, %v1267
      %v1269 = vpop.f32.mrb[0].mxu0
      %1270 = vdwg.mxu0
      %v1271 = vadd.f32 %v1157, %v1241
      %v1272 = vadd.f32 %v1158, %v1244
      %v1273 = vadd.f32 %v1159, %v1249
      %v1274 = vadd.f32 %v1160, %v1252
      %v1275 = vadd.f32 %v1161, %v1257
      %v1276 = vadd.f32 %v1162, %v1260
      %v1277 = vadd.f32 %v1163, %v1265
      %v1278 = vadd.f32 %v1164, %v1268
      %s1279 = scalar_lea.vmem %s281, 112
      %v1280 = vld [vmem:[%s1279] sm:$0xf]
      %v1281 = vld [vmem:[%s1279 + $0x4] sm:$0xf]
      %v1282 = vld [vmem:[%s1279 + $0x8] sm:$0xf]
      %v1283 = vld [vmem:[%s1279 + $0xc] sm:$0xf]
      %v1284 = vunpack.c.l.b16 %v1022
      %v1285 = vunpack.c.l.b16 %v1026
      %v1286 = vunpack.c.l.b16 %v1030
      %v1287 = vunpack.c.l.b16 %v1034
      %v1288 = vunpack.c.l.b16 %v1038
      %v1289 = vunpack.c.l.b16 %v1042
      %v1290 = vunpack.c.l.b16 %v1046
      %v1291 = vunpack.c.l.b16 %v1050
      %v1292 = vpack.c.b16 %v1285, %v1284
      %v1293 = vpack.c.b16 %v1287, %v1286
      %v1294 = vpack.c.b16 %v1289, %v1288
      %v1295 = vpack.c.b16 %v1291, %v1290
      %v1300 = vunpack.c.l.b16 %v1280
      %v1301 = vunpack.c.l.b16 %v1281
      %v1302 = vunpack.c.l.b16 %v1282
      %v1303 = vunpack.c.l.b16 %v1283
      %v1304 = vpack.c.b16 %v1301, %v1300
      %v1305 = vpack.c.b16 %v1303, %v1302
      %v1309 = vsel %vm542, %v1292, 0
      %v1312 = vsel %vm542, %v1293, 0
      %v1315 = vsel %vm542, %v1294, 0
      %v1318 = vsel %vm542, %v1295, 0
      %1320 = vmatprep.subr.bf16.mxu0 0
      %1321 = vmatpush1.bf16.msra.mxu0 %v1304
      %1322 = vmatprep.subr.bf16.mxu0 0
      %1323 = vmatpush1.bf16.msra.mxu0 %v1305
      %1324 = vmatprep.subr.bf16.mxu0 0
      %1325 = vmatpush1.bf16.msra.mxu0 0
      %1326 = vmatprep.subr.bf16.mxu0 0
      %1327 = vmatpush1.bf16.msra.mxu0 0
      %1328 = vmatprep.subr.bf16.mxu0 0
      %1329 = vmatpush1.bf16.msra.mxu0 0
      %1330 = vmatprep.subr.bf16.mxu0 0
      %1331 = vmatpush1.bf16.msra.mxu0 0
      %1332 = vmatprep.subr.bf16.mxu0 0
      %1333 = vmatpush1.bf16.msra.mxu0 0
      %1334 = vmatprep.subr.bf16.mxu0 0
      %1335 = vmatpush1.bf16.msra.mxu0 0
      %1336 = vmatprep.subr.bf16.mxu0 0
      %1337 = vmatpush1.bf16.msra.mxu0 0
      %1338 = vmatprep.subr.bf16.mxu0 0
      %1339 = vmatpush1.bf16.msra.mxu0 0
      %1340 = vmatprep.subr.bf16.mxu0 0
      %1341 = vmatpush1.bf16.msra.mxu0 0
      %1342 = vmatprep.subr.bf16.mxu0 0
      %1343 = vmatpush1.bf16.msra.mxu0 0
      %1344 = vmatprep.subr.bf16.mxu0 0
      %1345 = vmatpush1.bf16.msra.mxu0 0
      %1346 = vmatprep.subr.bf16.mxu0 0
      %1347 = vmatpush1.bf16.msra.mxu0 0
      %1348 = vmatprep.subr.bf16.mxu0 0
      %1349 = vmatpush1.bf16.msra.mxu0 0
      %1350 = vmatprep.subr.bf16.mxu0 0
      %1351 = vmatpush1.bf16.msra.mxu0 0
      %1352 = vmatprep.mubr.bf16.mxu0 0
      %1353 = vmatmul.mubr.bf16.gmra.mrb[0].mxu0 %v1309
      %v1354 = vpop.f32.mrb[0].mxu0
      %v1355 = vadd.f32 0.0, %v1354
      %v1356 = vpop.f32.mrb[0].mxu0
      %v1357 = vpop.f32.mrb[0].mxu0
      %v1358 = vadd.f32 0.0, %v1357
      %v1359 = vpop.f32.mrb[0].mxu0
      %1360 = vmatprep.mubr.bf16.mxu0 0
      %1361 = vmatmul.mubr.bf16.gmra.mrb[0].mxu0 %v1312
      %v1362 = vpop.f32.mrb[0].mxu0
      %v1363 = vadd.f32 0.0, %v1362
      %v1364 = vpop.f32.mrb[0].mxu0
      %v1365 = vpop.f32.mrb[0].mxu0
      %v1366 = vadd.f32 0.0, %v1365
      %v1367 = vpop.f32.mrb[0].mxu0
      %1368 = vmatprep.mubr.bf16.mxu0 0
      %1369 = vmatmul.mubr.bf16.gmra.mrb[0].mxu0 %v1315
      %v1370 = vpop.f32.mrb[0].mxu0
      %v1371 = vadd.f32 0.0, %v1370
      %v1372 = vpop.f32.mrb[0].mxu0
      %v1373 = vpop.f32.mrb[0].mxu0
      %v1374 = vadd.f32 0.0, %v1373
      %v1375 = vpop.f32.mrb[0].mxu0
      %1376 = vmatprep.mubr.bf16.mxu0 0
      %1377 = vmatmul.mubr.bf16.gmra.mrb[0].mxu0 %v1318
      %v1378 = vpop.f32.mrb[0].mxu0
      %v1379 = vadd.f32 0.0, %v1378
      %v1380 = vpop.f32.mrb[0].mxu0
      %v1381 = vpop.f32.mrb[0].mxu0
      %v1382 = vadd.f32 0.0, %v1381
      %v1383 = vpop.f32.mrb[0].mxu0
      %1384 = vdwg.mxu0
      %v1385 = vadd.f32 %v1271, %v1355
      %v1386 = vadd.f32 %v1272, %v1358
      %v1387 = vadd.f32 %v1273, %v1363
      %v1388 = vadd.f32 %v1274, %v1366
      %v1389 = vadd.f32 %v1275, %v1371
      %v1390 = vadd.f32 %v1276, %v1374
      %v1391 = vadd.f32 %v1277, %v1379
      %v1392 = vadd.f32 %v1278, %v1382
      %v1393 = vld [vmem:[%s273 + $0x9c] sm:$0x8]
      %v1394 = vld [vmem:[%s273 + $0xa0] sm:$0x7]
      %v1395 = vld [vmem:[%s273 + $0xb4] sm:$0x8]
      %v1396 = vld [vmem:[%s273 + $0xb8] sm:$0x7]
      %v1397 = vld [vmem:[%s273 + $0xcc] sm:$0x8]
      %v1398 = vld [vmem:[%s273 + $0xd0] sm:$0x7]
      %v1399 = vld [vmem:[%s273 + $0xe4] sm:$0x8]
      %v1400 = vld [vmem:[%s273 + $0xe8] sm:$0x7]
      %v1401 = vld [vmem:[%s273 + $0xfc] sm:$0x8]
      %v1402 = vld [vmem:[%s273 + $0x100] sm:$0x7]
      %v1403 = vld [vmem:[%s273 + $0x114] sm:$0x8]
      %v1404 = vld [vmem:[%s273 + $0x118] sm:$0x7]
      %v1405 = vld [vmem:[%s273 + $0x12c] sm:$0x8]
      %v1406 = vld [vmem:[%s273 + $0x130] sm:$0x7]
      %v1407 = vld [vmem:[%s273 + $0x144] sm:$0x8]
      %v1408 = vld [vmem:[%s273 + $0x148] sm:$0x7]
      %v1409 = vld [vmem:[%s273 + $0x1bc] sm:$0x8]
      %v1410 = vld [vmem:[%s273 + $0x1c0] sm:$0x7]
      %v1411 = vld [vmem:[%s273 + $0x1d4] sm:$0x8]
      %v1412 = vld [vmem:[%s273 + $0x1d8] sm:$0x7]
      %v1413 = vld [vmem:[%s273 + $0x1ec] sm:$0x8]
      %v1414 = vld [vmem:[%s273 + $0x1f0] sm:$0x7]
      %v1415 = vld [vmem:[%s273 + $0x204] sm:$0x8]
      %v1416 = vld [vmem:[%s273 + $0x208] sm:$0x7]
      %v1417 = vld [vmem:[%s273 + $0x21c] sm:$0x8]
      %v1418 = vld [vmem:[%s273 + $0x220] sm:$0x7]
      %v1419 = vld [vmem:[%s273 + $0x234] sm:$0x8]
      %v1420 = vld [vmem:[%s273 + $0x238] sm:$0x7]
      %v1421 = vld [vmem:[%s273 + $0x24c] sm:$0x8]
      %v1422 = vld [vmem:[%s273 + $0x250] sm:$0x7]
      %v1423 = vld [vmem:[%s273 + $0x264] sm:$0x8]
      %v1424 = vld [vmem:[%s273 + $0x268] sm:$0x7]
      %v1425 = vld [vmem:[%s273 + $0x2dc] sm:$0x8]
      %v1426 = vld [vmem:[%s273 + $0x2e0] sm:$0x7]
      %v1427 = vld [vmem:[%s273 + $0x2f4] sm:$0x8]
      %v1428 = vld [vmem:[%s273 + $0x2f8] sm:$0x7]
      %v1429 = vld [vmem:[%s273 + $0x30c] sm:$0x8]
      %v1430 = vld [vmem:[%s273 + $0x310] sm:$0x7]
      %v1431 = vld [vmem:[%s273 + $0x324] sm:$0x8]
      %v1432 = vld [vmem:[%s273 + $0x328] sm:$0x7]
      %v1433 = vld [vmem:[%s273 + $0x33c] sm:$0x8]
      %v1434 = vld [vmem:[%s273 + $0x340] sm:$0x7]
      %v1435 = vld [vmem:[%s273 + $0x354] sm:$0x8]
      %v1436 = vld [vmem:[%s273 + $0x358] sm:$0x7]
      %v1437 = vld [vmem:[%s273 + $0x36c] sm:$0x8]
      %v1438 = vld [vmem:[%s273 + $0x370] sm:$0x7]
      %v1439 = vld [vmem:[%s273 + $0x384] sm:$0x8]
      %v1440 = vld [vmem:[%s273 + $0x388] sm:$0x7]
      %v1489 = vrot.slane %v1393, 7
      %v1490 = vrot.slane %v1489, 4
      %v1491 = vrot.slane %v1394, 7
      %v1492 = vsel %vm417, %v1490, %v1491
      %v1493 = vrot.slane %v1395, 7
      %v1494 = vrot.slane %v1493, 4
      %v1495 = vrot.slane %v1396, 7
      %v1496 = vsel %vm417, %v1494, %v1495
      %v1497 = vrot.slane %v1397, 7
      %v1498 = vrot.slane %v1497, 4
      %v1499 = vrot.slane %v1398, 7
      %v1500 = vsel %vm417, %v1498, %v1499
      %v1501 = vrot.slane %v1399, 7
      %v1502 = vrot.slane %v1501, 4
      %v1503 = vrot.slane %v1400, 7
      %v1504 = vsel %vm417, %v1502, %v1503
      %v1505 = vrot.slane %v1401, 7
      %v1506 = vrot.slane %v1505, 4
      %v1507 = vrot.slane %v1402, 7
      %v1508 = vsel %vm417, %v1506, %v1507
      %v1509 = vrot.slane %v1403, 7
      %v1510 = vrot.slane %v1509, 4
      %v1511 = vrot.slane %v1404, 7
      %v1512 = vsel %vm417, %v1510, %v1511
      %v1513 = vrot.slane %v1405, 7
      %v1514 = vrot.slane %v1513, 4
      %v1515 = vrot.slane %v1406, 7
      %v1516 = vsel %vm417, %v1514, %v1515
      %v1517 = vrot.slane %v1407, 7
      %v1518 = vrot.slane %v1517, 4
      %v1519 = vrot.slane %v1408, 7
      %v1520 = vsel %vm417, %v1518, %v1519
      %v1521 = vrot.slane %v1409, 7
      %v1522 = vrot.slane %v1521, 4
      %v1523 = vrot.slane %v1410, 7
      %v1524 = vsel %vm417, %v1522, %v1523
      %v1525 = vrot.slane %v1411, 7
      %v1526 = vrot.slane %v1525, 4
      %v1527 = vrot.slane %v1412, 7
      %v1528 = vsel %vm417, %v1526, %v1527
      %v1529 = vrot.slane %v1413, 7
      %v1530 = vrot.slane %v1529, 4
      %v1531 = vrot.slane %v1414, 7
      %v1532 = vsel %vm417, %v1530, %v1531
      %v1533 = vrot.slane %v1415, 7
      %v1534 = vrot.slane %v1533, 4
      %v1535 = vrot.slane %v1416, 7
      %v1536 = vsel %vm417, %v1534, %v1535
      %v1537 = vrot.slane %v1417, 7
      %v1538 = vrot.slane %v1537, 4
      %v1539 = vrot.slane %v1418, 7
      %v1540 = vsel %vm417, %v1538, %v1539
      %v1541 = vrot.slane %v1419, 7
      %v1542 = vrot.slane %v1541, 4
      %v1543 = vrot.slane %v1420, 7
      %v1544 = vsel %vm417, %v1542, %v1543
      %v1545 = vrot.slane %v1421, 7
      %v1546 = vrot.slane %v1545, 4
      %v1547 = vrot.slane %v1422, 7
      %v1548 = vsel %vm417, %v1546, %v1547
      %v1549 = vrot.slane %v1423, 7
      %v1550 = vrot.slane %v1549, 4
      %v1551 = vrot.slane %v1424, 7
      %v1552 = vsel %vm417, %v1550, %v1551
      %v1553 = vrot.slane %v1425, 7
      %v1554 = vrot.slane %v1553, 4
      %v1555 = vrot.slane %v1426, 7
      %v1556 = vsel %vm417, %v1554, %v1555
      %v1557 = vrot.slane %v1427, 7
      %v1558 = vrot.slane %v1557, 4
      %v1559 = vrot.slane %v1428, 7
      %v1560 = vsel %vm417, %v1558, %v1559
      %v1561 = vrot.slane %v1429, 7
      %v1562 = vrot.slane %v1561, 4
      %v1563 = vrot.slane %v1430, 7
      %v1564 = vsel %vm417, %v1562, %v1563
      %v1565 = vrot.slane %v1431, 7
      %v1566 = vrot.slane %v1565, 4
      %v1567 = vrot.slane %v1432, 7
      %v1568 = vsel %vm417, %v1566, %v1567
      %v1569 = vrot.slane %v1433, 7
      %v1570 = vrot.slane %v1569, 4
      %v1571 = vrot.slane %v1434, 7
      %v1572 = vsel %vm417, %v1570, %v1571
      %v1573 = vrot.slane %v1435, 7
      %v1574 = vrot.slane %v1573, 4
      %v1575 = vrot.slane %v1436, 7
      %v1576 = vsel %vm417, %v1574, %v1575
      %v1577 = vrot.slane %v1437, 7
      %v1578 = vrot.slane %v1577, 4
      %v1579 = vrot.slane %v1438, 7
      %v1580 = vsel %vm417, %v1578, %v1579
      %v1581 = vrot.slane %v1439, 7
      %v1582 = vrot.slane %v1581, 4
      %v1583 = vrot.slane %v1440, 7
      %v1584 = vsel %vm417, %v1582, %v1583
      %s1585 = scalar_lea.vmem %s281, 32
      %v1586 = vld [vmem:[%s1585] sm:$0xf]
      %v1587 = vld [vmem:[%s1585 + $0x4] sm:$0xf]
      %v1588 = vld [vmem:[%s1585 + $0x8] sm:$0xf]
      %v1589 = vld [vmem:[%s1585 + $0xc] sm:$0xf]
      %v1590 = vunpack.c.l.b16 %v1492
      %v1591 = vunpack.c.l.b16 %v1496
      %v1592 = vunpack.c.l.b16 %v1500
      %v1593 = vunpack.c.l.b16 %v1504
      %v1594 = vunpack.c.l.b16 %v1508
      %v1595 = vunpack.c.l.b16 %v1512
      %v1596 = vunpack.c.l.b16 %v1516
      %v1597 = vunpack.c.l.b16 %v1520
      %v1598 = vpack.c.b16 %v1591, %v1590
      %v1599 = vpack.c.b16 %v1593, %v1592
      %v1600 = vpack.c.b16 %v1595, %v1594
      %v1601 = vpack.c.b16 %v1597, %v1596
      %v1606 = vunpack.c.l.b16 %v1586
      %v1607 = vunpack.c.l.b16 %v1587
      %v1608 = vunpack.c.l.b16 %v1588
      %v1609 = vunpack.c.l.b16 %v1589
      %v1610 = vpack.c.b16 %v1607, %v1606
      %v1611 = vpack.c.b16 %v1609, %v1608
      %v1615 = vsel %vm542, %v1598, 0
      %v1618 = vsel %vm542, %v1599, 0
      %v1621 = vsel %vm542, %v1600, 0
      %v1624 = vsel %vm542, %v1601, 0
      %1626 = vmatprep.subr.bf16.mxu0 0
      %1627 = vmatpush1.bf16.msra.mxu0 %v1610
      %1628 = vmatprep.subr.bf16.mxu0 0
      %1629 = vmatpush1.bf16.msra.mxu0 %v1611
      %1630 = vmatprep.subr.bf16.mxu0 0
      %1631 = vmatpush1.bf16.msra.mxu0 0
      %1632 = vmatprep.subr.bf16.mxu0 0
      %1633 = vmatpush1.bf16.msra.mxu0 0
      %1634 = vmatprep.subr.bf16.mxu0 0
      %1635 = vmatpush1.bf16.msra.mxu0 0
      %1636 = vmatprep.subr.bf16.mxu0 0
      %1637 = vmatpush1.bf16.msra.mxu0 0
      %1638 = vmatprep.subr.bf16.mxu0 0
      %1639 = vmatpush1.bf16.msra.mxu0 0
      %1640 = vmatprep.subr.bf16.mxu0 0
      %1641 = vmatpush1.bf16.msra.mxu0 0
      %1642 = vmatprep.subr.bf16.mxu0 0
      %1643 = vmatpush1.bf16.msra.mxu0 0
      %1644 = vmatprep.subr.bf16.mxu0 0
      %1645 = vmatpush1.bf16.msra.mxu0 0
      %1646 = vmatprep.subr.bf16.mxu0 0
      %1647 = vmatpush1.bf16.msra.mxu0 0
      %1648 = vmatprep.subr.bf16.mxu0 0
      %1649 = vmatpush1.bf16.msra.mxu0 0
      %1650 = vmatprep.subr.bf16.mxu0 0
      %1651 = vmatpush1.bf16.msra.mxu0 0
      %1652 = vmatprep.subr.bf16.mxu0 0
      %1653 = vmatpush1.bf16.msra.mxu0 0
      %1654 = vmatprep.subr.bf16.mxu0 0
      %1655 = vmatpush1.bf16.msra.mxu0 0
      %1656 = vmatprep.subr.bf16.mxu0 0
      %1657 = vmatpush1.bf16.msra.mxu0 0
      %1658 = vmatprep.mubr.bf16.mxu0 0
      %1659 = vmatmul.mubr.bf16.gmra.mrb[0].mxu0 %v1615
      %v1660 = vpop.f32.mrb[0].mxu0
      %v1661 = vadd.f32 0.0, %v1660
      %v1662 = vpop.f32.mrb[0].mxu0
      %v1663 = vpop.f32.mrb[0].mxu0
      %v1664 = vadd.f32 0.0, %v1663
      %v1665 = vpop.f32.mrb[0].mxu0
      %1666 = vmatprep.mubr.bf16.mxu0 0
      %1667 = vmatmul.mubr.bf16.gmra.mrb[0].mxu0 %v1618
      %v1668 = vpop.f32.mrb[0].mxu0
      %v1669 = vadd.f32 0.0, %v1668
      %v1670 = vpop.f32.mrb[0].mxu0
      %v1671 = vpop.f32.mrb[0].mxu0
      %v1672 = vadd.f32 0.0, %v1671
      %v1673 = vpop.f32.mrb[0].mxu0
      %1674 = vmatprep.mubr.bf16.mxu0 0
      %1675 = vmatmul.mubr.bf16.gmra.mrb[0].mxu0 %v1621
      %v1676 = vpop.f32.mrb[0].mxu0
      %v1677 = vadd.f32 0.0, %v1676
      %v1678 = vpop.f32.mrb[0].mxu0
      %v1679 = vpop.f32.mrb[0].mxu0
      %v1680 = vadd.f32 0.0, %v1679
      %v1681 = vpop.f32.mrb[0].mxu0
      %1682 = vmatprep.mubr.bf16.mxu0 0
      %1683 = vmatmul.mubr.bf16.gmra.mrb[0].mxu0 %v1624
      %v1684 = vpop.f32.mrb[0].mxu0
      %v1685 = vadd.f32 0.0, %v1684
      %v1686 = vpop.f32.mrb[0].mxu0
      %v1687 = vpop.f32.mrb[0].mxu0
      %v1688 = vadd.f32 0.0, %v1687
      %v1689 = vpop.f32.mrb[0].mxu0
      %1690 = vdwg.mxu0
      %v1691 = vadd.f32 %v1385, %v1661
      %v1692 = vadd.f32 %v1386, %v1664
      %v1693 = vadd.f32 %v1387, %v1669
      %v1694 = vadd.f32 %v1388, %v1672
      %v1695 = vadd.f32 %v1389, %v1677
      %v1696 = vadd.f32 %v1390, %v1680
      %v1697 = vadd.f32 %v1391, %v1685
      %v1698 = vadd.f32 %v1392, %v1688
      %s1699 = scalar_lea.vmem %s281, 80
      %v1700 = vld [vmem:[%s1699] sm:$0xf]
      %v1701 = vld [vmem:[%s1699 + $0x4] sm:$0xf]
      %v1702 = vld [vmem:[%s1699 + $0x8] sm:$0xf]
      %v1703 = vld [vmem:[%s1699 + $0xc] sm:$0xf]
      %v1704 = vunpack.c.l.b16 %v1524
      %v1705 = vunpack.c.l.b16 %v1528
      %v1706 = vunpack.c.l.b16 %v1532
      %v1707 = vunpack.c.l.b16 %v1536
      %v1708 = vunpack.c.l.b16 %v1540
      %v1709 = vunpack.c.l.b16 %v1544
      %v1710 = vunpack.c.l.b16 %v1548
      %v1711 = vunpack.c.l.b16 %v1552
      %v1712 = vpack.c.b16 %v1705, %v1704
      %v1713 = vpack.c.b16 %v1707, %v1706
      %v1714 = vpack.c.b16 %v1709, %v1708
      %v1715 = vpack.c.b16 %v1711, %v1710
      %v1720 = vunpack.c.l.b16 %v1700
      %v1721 = vunpack.c.l.b16 %v1701
      %v1722 = vunpack.c.l.b16 %v1702
      %v1723 = vunpack.c.l.b16 %v1703
      %v1724 = vpack.c.b16 %v1721, %v1720
      %v1725 = vpack.c.b16 %v1723, %v1722
      %v1729 = vsel %vm542, %v1712, 0
      %v1732 = vsel %vm542, %v1713, 0
      %v1735 = vsel %vm542, %v1714, 0
      %v1738 = vsel %vm542, %v1715, 0
      %1740 = vmatprep.subr.bf16.mxu0 0
      %1741 = vmatpush1.bf16.msra.mxu0 %v1724
      %1742 = vmatprep.subr.bf16.mxu0 0
      %1743 = vmatpush1.bf16.msra.mxu0 %v1725
      %1744 = vmatprep.subr.bf16.mxu0 0
      %1745 = vmatpush1.bf16.msra.mxu0 0
      %1746 = vmatprep.subr.bf16.mxu0 0
      %1747 = vmatpush1.bf16.msra.mxu0 0
      %1748 = vmatprep.subr.bf16.mxu0 0
      %1749 = vmatpush1.bf16.msra.mxu0 0
      %1750 = vmatprep.subr.bf16.mxu0 0
      %1751 = vmatpush1.bf16.msra.mxu0 0
      %1752 = vmatprep.subr.bf16.mxu0 0
      %1753 = vmatpush1.bf16.msra.mxu0 0
      %1754 = vmatprep.subr.bf16.mxu0 0
      %1755 = vmatpush1.bf16.msra.mxu0 0
      %1756 = vmatprep.subr.bf16.mxu0 0
      %1757 = vmatpush1.bf16.msra.mxu0 0
      %1758 = vmatprep.subr.bf16.mxu0 0
      %1759 = vmatpush1.bf16.msra.mxu0 0
      %1760 = vmatprep.subr.bf16.mxu0 0
      %1761 = vmatpush1.bf16.msra.mxu0 0
      %1762 = vmatprep.subr.bf16.mxu0 0
      %1763 = vmatpush1.bf16.msra.mxu0 0
      %1764 = vmatprep.subr.bf16.mxu0 0
      %1765 = vmatpush1.bf16.msra.mxu0 0
      %1766 = vmatprep.subr.bf16.mxu0 0
      %1767 = vmatpush1.bf16.msra.mxu0 0
      %1768 = vmatprep.subr.bf16.mxu0 0
      %1769 = vmatpush1.bf16.msra.mxu0 0
      %1770 = vmatprep.subr.bf16.mxu0 0
      %1771 = vmatpush1.bf16.msra.mxu0 0
      %1772 = vmatprep.mubr.bf16.mxu0 0
      %1773 = vmatmul.mubr.bf16.gmra.mrb[0].mxu0 %v1729
      %v1774 = vpop.f32.mrb[0].mxu0
      %v1775 = vadd.f32 0.0, %v1774
      %v1776 = vpop.f32.mrb[0].mxu0
      %v1777 = vpop.f32.mrb[0].mxu0
      %v1778 = vadd.f32 0.0, %v1777
      %v1779 = vpop.f32.mrb[0].mxu0
      %1780 = vmatprep.mubr.bf16.mxu0 0
      %1781 = vmatmul.mubr.bf16.gmra.mrb[0].mxu0 %v1732
      %v1782 = vpop.f32.mrb[0].mxu0
      %v1783 = vadd.f32 0.0, %v1782
      %v1784 = vpop.f32.mrb[0].mxu0
      %v1785 = vpop.f32.mrb[0].mxu0
      %v1786 = vadd.f32 0.0, %v1785
      %v1787 = vpop.f32.mrb[0].mxu0
      %1788 = vmatprep.mubr.bf16.mxu0 0
      %1789 = vmatmul.mubr.bf16.gmra.mrb[0].mxu0 %v1735
      %v1790 = vpop.f32.mrb[0].mxu0
      %v1791 = vadd.f32 0.0, %v1790
      %v1792 = vpop.f32.mrb[0].mxu0
      %v1793 = vpop.f32.mrb[0].mxu0
      %v1794 = vadd.f32 0.0, %v1793
      %v1795 = vpop.f32.mrb[0].mxu0
      %1796 = vmatprep.mubr.bf16.mxu0 0
      %1797 = vmatmul.mubr.bf16.gmra.mrb[0].mxu0 %v1738
      %v1798 = vpop.f32.mrb[0].mxu0
      %v1799 = vadd.f32 0.0, %v1798
      %v1800 = vpop.f32.mrb[0].mxu0
      %v1801 = vpop.f32.mrb[0].mxu0
      %v1802 = vadd.f32 0.0, %v1801
      %v1803 = vpop.f32.mrb[0].mxu0
      %1804 = vdwg.mxu0
      %v1805 = vadd.f32 %v1691, %v1775
      %v1806 = vadd.f32 %v1692, %v1778
      %v1807 = vadd.f32 %v1693, %v1783
      %v1808 = vadd.f32 %v1694, %v1786
      %v1809 = vadd.f32 %v1695, %v1791
      %v1810 = vadd.f32 %v1696, %v1794
      %v1811 = vadd.f32 %v1697, %v1799
      %v1812 = vadd.f32 %v1698, %v1802
      %s1813 = scalar_lea.vmem %s281, 128
      %v1814 = vld [vmem:[%s1813] sm:$0xf]
      %v1815 = vld [vmem:[%s1813 + $0x4] sm:$0xf]
      %v1816 = vld [vmem:[%s1813 + $0x8] sm:$0xf]
      %v1817 = vld [vmem:[%s1813 + $0xc] sm:$0xf]
      %v1818 = vunpack.c.l.b16 %v1556
      %v1819 = vunpack.c.l.b16 %v1560
      %v1820 = vunpack.c.l.b16 %v1564
      %v1821 = vunpack.c.l.b16 %v1568
      %v1822 = vunpack.c.l.b16 %v1572
      %v1823 = vunpack.c.l.b16 %v1576
      %v1824 = vunpack.c.l.b16 %v1580
      %v1825 = vunpack.c.l.b16 %v1584
      %v1826 = vpack.c.b16 %v1819, %v1818
      %v1827 = vpack.c.b16 %v1821, %v1820
      %v1828 = vpack.c.b16 %v1823, %v1822
      %v1829 = vpack.c.b16 %v1825, %v1824
      %v1834 = vunpack.c.l.b16 %v1814
      %v1835 = vunpack.c.l.b16 %v1815
      %v1836 = vunpack.c.l.b16 %v1816
      %v1837 = vunpack.c.l.b16 %v1817
      %v1838 = vpack.c.b16 %v1835, %v1834
      %v1839 = vpack.c.b16 %v1837, %v1836
      %v1843 = vsel %vm542, %v1826, 0
      %v1846 = vsel %vm542, %v1827, 0
      %v1849 = vsel %vm542, %v1828, 0
      %v1852 = vsel %vm542, %v1829, 0
      %1854 = vmatprep.subr.bf16.mxu0 0
      %1855 = vmatpush1.bf16.msra.mxu0 %v1838
      %1856 = vmatprep.subr.bf16.mxu0 0
      %1857 = vmatpush1.bf16.msra.mxu0 %v1839
      %1858 = vmatprep.subr.bf16.mxu0 0
      %1859 = vmatpush1.bf16.msra.mxu0 0
      %1860 = vmatprep.subr.bf16.mxu0 0
      %1861 = vmatpush1.bf16.msra.mxu0 0
      %1862 = vmatprep.subr.bf16.mxu0 0
      %1863 = vmatpush1.bf16.msra.mxu0 0
      %1864 = vmatprep.subr.bf16.mxu0 0
      %1865 = vmatpush1.bf16.msra.mxu0 0
      %1866 = vmatprep.subr.bf16.mxu0 0
      %1867 = vmatpush1.bf16.msra.mxu0 0
      %1868 = vmatprep.subr.bf16.mxu0 0
      %1869 = vmatpush1.bf16.msra.mxu0 0
      %1870 = vmatprep.subr.bf16.mxu0 0
      %1871 = vmatpush1.bf16.msra.mxu0 0
      %1872 = vmatprep.subr.bf16.mxu0 0
      %1873 = vmatpush1.bf16.msra.mxu0 0
      %1874 = vmatprep.subr.bf16.mxu0 0
      %1875 = vmatpush1.bf16.msra.mxu0 0
      %1876 = vmatprep.subr.bf16.mxu0 0
      %1877 = vmatpush1.bf16.msra.mxu0 0
      %1878 = vmatprep.subr.bf16.mxu0 0
      %1879 = vmatpush1.bf16.msra.mxu0 0
      %1880 = vmatprep.subr.bf16.mxu0 0
      %1881 = vmatpush1.bf16.msra.mxu0 0
      %1882 = vmatprep.subr.bf16.mxu0 0
      %1883 = vmatpush1.bf16.msra.mxu0 0
      %1884 = vmatprep.subr.bf16.mxu0 0
      %1885 = vmatpush1.bf16.msra.mxu0 0
      %1886 = vmatprep.mubr.bf16.mxu0 0
      %1887 = vmatmul.mubr.bf16.gmra.mrb[0].mxu0 %v1843
      %v1888 = vpop.f32.mrb[0].mxu0
      %v1889 = vadd.f32 0.0, %v1888
      %v1890 = vpop.f32.mrb[0].mxu0
      %v1891 = vpop.f32.mrb[0].mxu0
      %v1892 = vadd.f32 0.0, %v1891
      %v1893 = vpop.f32.mrb[0].mxu0
      %1894 = vmatprep.mubr.bf16.mxu0 0
      %1895 = vmatmul.mubr.bf16.gmra.mrb[0].mxu0 %v1846
      %v1896 = vpop.f32.mrb[0].mxu0
      %v1897 = vadd.f32 0.0, %v1896
      %v1898 = vpop.f32.mrb[0].mxu0
      %v1899 = vpop.f32.mrb[0].mxu0
      %v1900 = vadd.f32 0.0, %v1899
      %v1901 = vpop.f32.mrb[0].mxu0
      %1902 = vmatprep.mubr.bf16.mxu0 0
      %1903 = vmatmul.mubr.bf16.gmra.mrb[0].mxu0 %v1849
      %v1904 = vpop.f32.mrb[0].mxu0
      %v1905 = vadd.f32 0.0, %v1904
      %v1906 = vpop.f32.mrb[0].mxu0
      %v1907 = vpop.f32.mrb[0].mxu0
      %v1908 = vadd.f32 0.0, %v1907
      %v1909 = vpop.f32.mrb[0].mxu0
      %1910 = vmatprep.mubr.bf16.mxu0 0
      %1911 = vmatmul.mubr.bf16.gmra.mrb[0].mxu0 %v1852
      %v1912 = vpop.f32.mrb[0].mxu0
      %v1913 = vadd.f32 0.0, %v1912
      %v1914 = vpop.f32.mrb[0].mxu0
      %v1915 = vpop.f32.mrb[0].mxu0
      %v1916 = vadd.f32 0.0, %v1915
      %v1917 = vpop.f32.mrb[0].mxu0
      %1918 = vdwg.mxu0
      %v1919 = vadd.f32 %v1805, %v1889
      %v1920 = vadd.f32 %v1806, %v1892
      %v1921 = vadd.f32 %v1807, %v1897
      %v1922 = vadd.f32 %v1808, %v1900
      %v1923 = vadd.f32 %v1809, %v1905
      %v1924 = vadd.f32 %v1810, %v1908
      %v1925 = vadd.f32 %v1811, %v1913
      %v1926 = vadd.f32 %v1812, %v1916
      %vm1927 = vcmask 130048
      %1928 = vst.msk [vmem:[#allocation2] sm:$0xff] %vm1927, %v1919
      %1929 = vst.msk [vmem:[#allocation2 + $0x8] sm:$0xff] %vm1927, %v1920
      %1930 = vst.msk [vmem:[#allocation2 + $0x10] sm:$0xff] %vm1927, %v1921
      %1931 = vst.msk [vmem:[#allocation2 + $0x18] sm:$0xff] %vm1927, %v1922
      %1932 = vst.msk [vmem:[#allocation2 + $0x20] sm:$0xff] %vm1927, %v1923
      %1933 = vst.msk [vmem:[#allocation2 + $0x28] sm:$0xff] %vm1927, %v1924
      %1934 = vst.msk [vmem:[#allocation2 + $0x30] sm:$0xff] %vm1927, %v1925
      %1935 = vst.msk [vmem:[#allocation2 + $0x38] sm:$0xff] %vm1927, %v1926
      // Predicated region
      $region41: #{deeplabv3_forward.15} parent=35 // pred_check
        %p1936 = pneg %p298
      $region42: #{deeplabv3_forward.15} parent=35 // pred_check_branch
        %1938 = sbr.rel (%p1936) target = $region44
      $region43: #{deeplabv3_forward.15} parent=35 // pred_region
        %v1939 = vld [vmem:[#allocation2] sm:$0xff]
        %v1940 = vld [vmem:[#allocation2 + $0x8] sm:$0xff]
        %v1941 = vld [vmem:[#allocation2 + $0x10] sm:$0xff]
        %v1942 = vld [vmem:[#allocation2 + $0x18] sm:$0xff]
        %v1943 = vld [vmem:[#allocation2 + $0x20] sm:$0xff]
        %v1944 = vld [vmem:[#allocation2 + $0x28] sm:$0xff]
        %v1945 = vld [vmem:[#allocation2 + $0x30] sm:$0xff]
        %v1946 = vld [vmem:[#allocation2 + $0x38] sm:$0xff]
        %v1947 = vld [vmem:[%s285] sm:$0x1]
        %v1949 = vlaneseq
        %v1950 = vshrl.u32 %v1949, 7
        %v1951 = vsub.s32 0, %v1950
        %v1952 = vrot.slane %v1947, %v1951
        %v1954 = vmul.f32 %v1939, %v1952
        %v1955 = vmul.f32 %v1940, %v1952
        %v1956 = vmul.f32 %v1941, %v1952
        %v1957 = vmul.f32 %v1942, %v1952
        %v1958 = vmul.f32 %v1943, %v1952
        %v1959 = vmul.f32 %v1944, %v1952
        %v1960 = vmul.f32 %v1945, %v1952
        %v1961 = vmul.f32 %v1946, %v1952
        %v1962 = vld [vmem:[%s288] sm:$0x1]
        %v1964 = vlaneseq
        %v1965 = vshrl.u32 %v1964, 7
        %v1966 = vsub.s32 0, %v1965
        %v1967 = vrot.slane %v1962, %v1966
        %v1969 = vadd.f32 %v1954, %v1967
        %v1970 = vadd.f32 %v1955, %v1967
        %v1971 = vadd.f32 %v1956, %v1967
        %v1972 = vadd.f32 %v1957, %v1967
        %v1973 = vadd.f32 %v1958, %v1967
        %v1974 = vadd.f32 %v1959, %v1967
        %v1975 = vadd.f32 %v1960, %v1967
        %v1976 = vadd.f32 %v1961, %v1967
        %v1977 = vmax.f32 %v1969, 0.0
        %v1978 = vmax.f32 %v1970, 0.0
        %v1979 = vmax.f32 %v1971, 0.0
        %v1980 = vmax.f32 %v1972, 0.0
        %v1981 = vmax.f32 %v1973, 0.0
        %v1982 = vmax.f32 %v1974, 0.0
        %v1983 = vmax.f32 %v1975, 0.0
        %v1984 = vmax.f32 %v1976, 0.0
        %v1985 = vpack.c.bf16 %v1977, %v1977
        %v1986 = vpack.c.bf16 %v1978, %v1978
        %v1987 = vpack.c.bf16 %v1979, %v1979
        %v1988 = vpack.c.bf16 %v1980, %v1980
        %v1989 = vpack.c.bf16 %v1981, %v1981
        %v1990 = vpack.c.bf16 %v1982, %v1982
        %v1991 = vpack.c.bf16 %v1983, %v1983
        %v1992 = vpack.c.bf16 %v1984, %v1984
        %vm1993 = vcmask 125952
        %1994 = vst.msk [vmem:[%s296] sm:$0xf] %vm1993, %v1985
        %1995 = vst.msk [vmem:[%s296 + $0x4] sm:$0xf] %vm1993, %v1986
        %1996 = vst.msk [vmem:[%s296 + $0x8] sm:$0xf] %vm1993, %v1987
        %1997 = vst.msk [vmem:[%s296 + $0xc] sm:$0xf] %vm1993, %v1988
        %1998 = vst.msk [vmem:[%s296 + $0x10] sm:$0xf] %vm1993, %v1989
        %1999 = vst.msk [vmem:[%s296 + $0x14] sm:$0xf] %vm1993, %v1990
        %2000 = vst.msk [vmem:[%s296 + $0x18] sm:$0xf] %vm1993, %v1991
        %2001 = vst.msk [vmem:[%s296 + $0x1c] sm:$0xf] %vm1993, %v1992
      $region44: #{deeplabv3_forward.15} parent=35 // pred_fallthru
        _
      %p2002 = scmp.lt.s32.totalorder %s20, 1
      %s2003 = scalar_select %p2002, %s20, 1
      %p2004 = scmp.lt.s32.totalorder %s21, 0
      %s2005 = scalar_select %p2004, %s21, 0
      %s2006 = smul.addr %s2003, 8
      %s2007 = sadd.s32 %s2005, %s2006
      %s2008 = smul.addr %s2007, 4
      %s2009 = scalar_lea.vmem %s4, %s2008
      // Predicated region
      $region45: #{deeplabv3_forward.15} parent=35 // pred_check
        %p2010 = pneg %p162
      $region46: #{deeplabv3_forward.15} parent=35 // pred_check_branch
        %2012 = sbr.rel (%p2010) target = $region48
      $region47: #{deeplabv3_forward.15} parent=35 // pred_region
        _
      $region48: #{deeplabv3_forward.15} parent=35 // pred_fallthru
        _
    $region36: #{deeplabv3_forward.15} parent=5 // pred_fallthru
      _
    %p2013 = scmp.le.s32.totalorder 2, %s10
    // Predicated region
    $region49: #{deeplabv3_forward.15} parent=5 // pred_check
      %p2014 = pneg %p2013
    $region50: #{deeplabv3_forward.15} parent=5 // pred_check_branch
      %2016 = sbr.rel (%p2014) target = $region52
    $region51: #{deeplabv3_forward.15} parent=5 // pred_region
      %s2017 = ssub.s32 %s10, 2
      // Predicated region
      $region53: #{deeplabv3_forward.15} parent=51 // pred_check
        %p2018 = pneg %p168
      $region54: #{deeplabv3_forward.15} parent=51 // pred_check_branch
        %2020 = sbr.rel (%p2018) target = $region56
      $region55: #{deeplabv3_forward.15} parent=51 // pred_region
        %p2021 = scmp.lt.s32.totalorder %s23, 1
        %s2022 = scalar_select %p2021, %s23, 1
        %p2023 = scmp.lt.s32.totalorder %s24, 0
        %s2024 = scalar_select %p2023, %s24, 0
        %s2025 = smul.addr %s2022, 8
        %s2026 = sadd.s32 %s2024, %s2025
        %s2027 = smul.addr %s2026, 4
        %s2028 = scalar_lea.vmem %s4, %s2027
      $region56: #{deeplabv3_forward.15} parent=51 // pred_fallthru
        _
    $region52: #{deeplabv3_forward.15} parent=5 // pred_fallthru
      _
  $region6: #{deeplabv3_forward.15} parent=0 // loop_footer
    %s14 = sadd.s32 1, %s10
  $region7: #{deeplabv3_forward.15} parent=0 // loop_footer_branch
    %9 = sbr.rel target = $region3
  $region8: #{deeplabv3_forward.15} parent=0 // loop_exit
    _

// kernel: deeplabv3_forward.16
$region0: #{deeplabv3_forward.16}
  #allocation0 [shape = 'u32[]', space=smem, size = 0x4, offset = 0x4, fixed_abs, tag = 'smem constant byte address 0x4 - core index']
  #allocation1 [shape = 'u32[144,128]{1,0:T(1,128)}', space=vmem, size = 0x12000, scoped, tag = 'internal scratch']
  #allocation2 [shape = 'f32[64,16]{1,0:T(8,128)}', space=vmem, size = 0x8000, scoped, tag = 'scratch operand']
  %s0 = inlined_call_operand.vmem [shape: bf16[2,44,44,32], index: 0, kind: input, shape index: {}]
  %s1 = inlined_call_operand.vmem [shape: bf16[9,32,16], index: 1, kind: input, shape index: {}]
  %s2 = inlined_call_operand.vmem [shape: f32[1,16], index: 2, kind: input, shape index: {}]
  %s3 = inlined_call_operand.vmem [shape: f32[1,16], index: 3, kind: input, shape index: {}]
  %s4 = inlined_call_operand.vmem [shape: bf16[2,8,8,16], index: 4, kind: output, shape index: {}]
  %s5 = sld [smem:[#allocation0]]
  $region57: #{deeplabv3_forward.16} parent=0
    _
  %s7 = ssub.s32 1, %s5
  %s8 = scalar_select 0, %s7, %s5
  loop: start=0, step=1, limit=4
  $region2: #{deeplabv3_forward.16} parent=0 // loop_pre_header
    _
  $region3: #{deeplabv3_forward.16} parent=0 // loop_header
    %s10 = sphi 0, %s14
    %p11 = scmp.ge.s32.totalorder %s10, 4
    %s17 = sphi 0, %s36
    %s18 = sphi 0, %s32
    %s19 = sphi 0, %s28
    %s20 = sphi 0, %s17
    %s21 = sphi 0, %s18
    %s22 = sphi 0, %s19
    %s23 = sphi 0, %s20
    %s24 = sphi 0, %s21
    %s25 = sphi 0, %s22
    %s41 = sphi 0, %s43
    %s44 = sphi 0, %s41
    %s45 = sphi 0, %s44
    %s61 = sphi 0, %s45
    %s69 = sphi 0, %s71
    %s72 = sphi 0, %s69
    %s73 = sphi 0, %s72
    %s89 = sphi 0, %s73
    %s95 = sphi 0, %s97
    %s98 = sphi 0, %s95
    %s99 = sphi 0, %s98
    %s115 = sphi 0, %s99
    %s121 = sphi 0, %s123
    %s124 = sphi 0, %s121
    %s125 = sphi 0, %s124
    %s141 = sphi 0, %s125
    %s149 = sphi 0, %s151
    %s152 = sphi 0, %s149
    %s153 = sphi 0, %s152
    %s169 = sphi 0, %s153
  $region4: #{deeplabv3_forward.16} parent=0 // loop_header_branch
    %13 = sbr.rel (%p11) target = $region8
  $region5: #{deeplabv3_forward.16} parent=0 // loop_body
    %s15 = ssub.s32 %s10, 1
    %s16 = ssub.s32 %s10, 2
    %s26 = sadd.s32 1, %s19
    %p27 = scmp.ge.s32.totalorder %s26, 1
    %s28 = scalar_select %p27, 0, %s26
    %s29 = sadd.s32 1, %s18
    %s30 = scalar_select %p27, %s29, %s18
    %p31 = scmp.ge.s32.totalorder %s30, 1
    %s32 = scalar_select %p31, 0, %s30
    %s33 = sadd.s32 1, %s17
    %s34 = scalar_select %p31, %s33, %s17
    %p35 = scmp.ge.s32.totalorder %s34, 2
    %s36 = scalar_select %p35, 0, %s34
    %s37 = ssub.s32 %s17, %s36
    %s38 = ssub.s32 %s19, %s28
    %s39 = sor.u32 %s37, %s38
    %p40 = scmp.eq.s32.totalorder %s39, 0
    %s42 = sadd.s32 %s41, 1
    %s43 = scalar_select %p40, %s41, %s42
    %p46 = pneg %p40
    %p47 = scmp.eq.s32.totalorder %s10, 1
    %p48 = por %p46, %p47
    %p49 = scmp.ne.s32.totalorder %s41, %s44
    %p50 = scmp.eq.s32.totalorder %s10, 0
    %p51 = por %p49, %p50
    %p52 = scmp.ne.s32.totalorder %s41, %s44
    %p53 = scmp.eq.s32.totalorder %s15, 1
    %p54 = por %p52, %p53
    %p55 = scmp.ne.s32.totalorder %s44, %s45
    %p56 = scmp.eq.s32.totalorder %s15, 0
    %p57 = por %p55, %p56
    %p58 = scmp.ne.s32.totalorder %s44, %s45
    %p59 = scmp.eq.s32.totalorder %s16, 1
    %p60 = por %p58, %p59
    %p62 = scmp.ne.s32.totalorder %s45, %s61
    %p63 = scmp.eq.s32.totalorder %s16, 0
    %p64 = por %p62, %p63
    %s65 = ssub.s32 %s19, %s28
    %s66 = ssub.s32 %s18, %s32
    %s67 = sor.u32 %s65, %s66
    %p68 = scmp.eq.s32.totalorder %s67, 0
    %s70 = sadd.s32 %s69, 1
    %s71 = scalar_select %p68, %s69, %s70
    %p74 = pneg %p68
    %p75 = scmp.eq.s32.totalorder %s10, 1
    %p76 = por %p74, %p75
    %p77 = scmp.ne.s32.totalorder %s69, %s72
    %p78 = scmp.eq.s32.totalorder %s10, 0
    %p79 = por %p77, %p78
    %p80 = scmp.ne.s32.totalorder %s69, %s72
    %p81 = scmp.eq.s32.totalorder %s15, 1
    %p82 = por %p80, %p81
    %p83 = scmp.ne.s32.totalorder %s72, %s73
    %p84 = scmp.eq.s32.totalorder %s15, 0
    %p85 = por %p83, %p84
    %p86 = scmp.ne.s32.totalorder %s72, %s73
    %p87 = scmp.eq.s32.totalorder %s16, 1
    %p88 = por %p86, %p87
    %p90 = scmp.ne.s32.totalorder %s73, %s89
    %p91 = scmp.eq.s32.totalorder %s16, 0
    %p92 = por %p90, %p91
    %s93 = ssub.s32 %s18, %s32
    %p94 = scmp.eq.s32.totalorder %s93, 0
    %s96 = sadd.s32 %s95, 1
    %s97 = scalar_select %p94, %s95, %s96
    %p100 = pneg %p94
    %p101 = scmp.eq.s32.totalorder %s10, 1
    %p102 = por %p100, %p101
    %p103 = scmp.ne.s32.totalorder %s95, %s98
    %p104 = scmp.eq.s32.totalorder %s10, 0
    %p105 = por %p103, %p104
    %p106 = scmp.ne.s32.totalorder %s95, %s98
    %p107 = scmp.eq.s32.totalorder %s15, 1
    %p108 = por %p106, %p107
    %p109 = scmp.ne.s32.totalorder %s98, %s99
    %p110 = scmp.eq.s32.totalorder %s15, 0
    %p111 = por %p109, %p110
    %p112 = scmp.ne.s32.totalorder %s98, %s99
    %p113 = scmp.eq.s32.totalorder %s16, 1
    %p114 = por %p112, %p113
    %p116 = scmp.ne.s32.totalorder %s99, %s115
    %p117 = scmp.eq.s32.totalorder %s16, 0
    %p118 = por %p116, %p117
    %s119 = ssub.s32 %s18, %s32
    %p120 = scmp.eq.s32.totalorder %s119, 0
    %s122 = sadd.s32 %s121, 1
    %s123 = scalar_select %p120, %s121, %s122
    %p126 = pneg %p120
    %p127 = scmp.eq.s32.totalorder %s10, 1
    %p128 = por %p126, %p127
    %p129 = scmp.ne.s32.totalorder %s121, %s124
    %p130 = scmp.eq.s32.totalorder %s10, 0
    %p131 = por %p129, %p130
    %p132 = scmp.ne.s32.totalorder %s121, %s124
    %p133 = scmp.eq.s32.totalorder %s15, 1
    %p134 = por %p132, %p133
    %p135 = scmp.ne.s32.totalorder %s124, %s125
    %p136 = scmp.eq.s32.totalorder %s15, 0
    %p137 = por %p135, %p136
    %p138 = scmp.ne.s32.totalorder %s124, %s125
    %p139 = scmp.eq.s32.totalorder %s16, 1
    %p140 = por %p138, %p139
    %p142 = scmp.ne.s32.totalorder %s125, %s141
    %p143 = scmp.eq.s32.totalorder %s16, 0
    %p144 = por %p142, %p143
    %s145 = ssub.s32 %s17, %s36
    %s146 = ssub.s32 %s18, %s32
    %s147 = sor.u32 %s145, %s146
    %p148 = scmp.eq.s32.totalorder %s147, 0
    %s150 = sadd.s32 %s149, 1
    %s151 = scalar_select %p148, %s149, %s150
    %p154 = pneg %p148
    %p155 = scmp.eq.s32.totalorder %s10, 1
    %p156 = por %p154, %p155
    %p157 = scmp.ne.s32.totalorder %s149, %s152
    %p158 = scmp.eq.s32.totalorder %s10, 0
    %p159 = por %p157, %p158
    %p160 = scmp.ne.s32.totalorder %s149, %s152
    %p161 = scmp.eq.s32.totalorder %s15, 1
    %p162 = por %p160, %p161
    %p163 = scmp.ne.s32.totalorder %s152, %s153
    %p164 = scmp.eq.s32.totalorder %s15, 0
    %p165 = por %p163, %p164
    %p166 = scmp.ne.s32.totalorder %s152, %s153
    %p167 = scmp.eq.s32.totalorder %s16, 1
    %p168 = por %p166, %p167
    %p170 = scmp.ne.s32.totalorder %s153, %s169
    %p171 = scmp.eq.s32.totalorder %s16, 0
    %p172 = por %p170, %p171
    %p173 = scmp.le.s32.totalorder 1, %s10
    %p174 = scmp.lt.s32.totalorder %s10, 3
    %p175 = pnand %p173, %p174
    %p176 = pneg %p175
    // Predicated region
    $region9: #{deeplabv3_forward.16} parent=5 // pred_check
      _
    $region10: #{deeplabv3_forward.16} parent=5 // pred_check_branch
      %178 = sbr.rel (%p175) target = $region12
    $region11: #{deeplabv3_forward.16} parent=5 // pred_region
      %s179 = ssub.s32 %s10, 1
      // Predicated region
      $region13: #{deeplabv3_forward.16} parent=11 // pred_check
        %p180 = pneg %p85
      $region14: #{deeplabv3_forward.16} parent=11 // pred_check_branch
        %182 = sbr.rel (%p180) target = $region16
      $region15: #{deeplabv3_forward.16} parent=11 // pred_region
        %s183 = smul.u32 4, %s22
        %p184 = scmp.lt.s32.totalorder %s183, 3
        %s185 = scalar_select %p184, %s183, 3
        %p186 = scmp.lt.s32.totalorder %s21, 0
        %s187 = scalar_select %p186, %s21, 0
        %s188 = sadd.s32 %s187, %s185
        %s189 = smul.addr %s188, 4
        %s190 = scalar_lea.vmem %s1, %s189
        %s191 = smul.u32 4, %s22
      $region16: #{deeplabv3_forward.16} parent=11 // pred_fallthru
        _
      // Predicated region
      $region17: #{deeplabv3_forward.16} parent=11 // pred_check
        %p192 = pneg %p111
      $region18: #{deeplabv3_forward.16} parent=11 // pred_check_branch
        %194 = sbr.rel (%p192) target = $region20
      $region19: #{deeplabv3_forward.16} parent=11 // pred_region
        %p195 = scmp.lt.s32.totalorder %s21, 0
        %s196 = scalar_select %p195, %s21, 0
        %s197 = scalar_lea.vmem %s2, %s196
      $region20: #{deeplabv3_forward.16} parent=11 // pred_fallthru
        _
      // Predicated region
      $region21: #{deeplabv3_forward.16} parent=11 // pred_check
        %p198 = pneg %p137
      $region22: #{deeplabv3_forward.16} parent=11 // pred_check_branch
        %200 = sbr.rel (%p198) target = $region24
      $region23: #{deeplabv3_forward.16} parent=11 // pred_region
        %p201 = scmp.lt.s32.totalorder %s21, 0
        %s202 = scalar_select %p201, %s21, 0
        %s203 = scalar_lea.vmem %s3, %s202
      $region24: #{deeplabv3_forward.16} parent=11 // pred_fallthru
        _
    $region12: #{deeplabv3_forward.16} parent=5 // pred_fallthru
      _
    %p204 = scmp.lt.s32.totalorder %s10, 2
    // Predicated region
    $region25: #{deeplabv3_forward.16} parent=5 // pred_check
      %p205 = pneg %p204
    $region26: #{deeplabv3_forward.16} parent=5 // pred_check_branch
      %207 = sbr.rel (%p205) target = $region28
    $region27: #{deeplabv3_forward.16} parent=5 // pred_region
      // Predicated region
      $region29: #{deeplabv3_forward.16} parent=27 // pred_check
        %p208 = pneg %p51
      $region30: #{deeplabv3_forward.16} parent=27 // pred_check_branch
        %210 = sbr.rel (%p208) target = $region32
      $region31: #{deeplabv3_forward.16} parent=27 // pred_region
        %p211 = scmp.lt.s32.totalorder %s17, 1
        %s212 = scalar_select %p211, %s17, 1
        %p213 = scmp.lt.s32.totalorder %s19, 0
        %s214 = scalar_select %p213, %s19, 0
        %s215 = smul.addr %s212, 264
        %s216 = sadd.s32 %s214, %s215
        %s217 = smul.addr %s216, 4
        %s218 = scalar_lea.vmem %s0, %s217
      $region32: #{deeplabv3_forward.16} parent=27 // pred_fallthru
        _
    $region28: #{deeplabv3_forward.16} parent=5 // pred_fallthru
      _
    %p219 = scmp.le.s32.totalorder 1, %s10
    %p220 = scmp.lt.s32.totalorder %s10, 3
    %p221 = pnand %p219, %p220
    %p222 = pneg %p221
    // Predicated region
    $region33: #{deeplabv3_forward.16} parent=5 // pred_check
      _
    $region34: #{deeplabv3_forward.16} parent=5 // pred_check_branch
      %224 = sbr.rel (%p221) target = $region36
    $region35: #{deeplabv3_forward.16} parent=5 // pred_region
      %s225 = ssub.s32 %s10, 1
      %p226 = scmp.lt.s32.totalorder %s20, 1
      %s227 = scalar_select %p226, %s20, 1
      %p228 = scmp.lt.s32.totalorder %s22, 0
      %s229 = scalar_select %p228, %s22, 0
      %s230 = smul.addr %s227, 264
      %s231 = sadd.s32 %s229, %s230
      %s232 = smul.addr %s231, 4
      %s233 = scalar_lea.vmem %s0, %s232
      %p234 = pneg %p57
      %p235 = pneg %p54
      %s236 = smul.u32 4, %s22
      %p237 = scmp.lt.s32.totalorder %s236, 3
      %s238 = scalar_select %p237, %s236, 3
      %p239 = scmp.lt.s32.totalorder %s21, 0
      %s240 = scalar_select %p239, %s21, 0
      %s241 = sadd.s32 %s240, %s238
      %s242 = smul.addr %s241, 4
      %s243 = scalar_lea.vmem %s1, %s242
      %p244 = pneg %p85
      %p245 = pneg %p82
      %p246 = scmp.lt.s32.totalorder %s21, 0
      %s247 = scalar_select %p246, %s21, 0
      %s248 = scalar_lea.vmem %s2, %s247
      %p249 = pneg %p111
      %p250 = pneg %p108
      %p251 = scmp.lt.s32.totalorder %s21, 0
      %s252 = scalar_select %p251, %s21, 0
      %s253 = scalar_lea.vmem %s3, %s252
      %p254 = pneg %p137
      %p255 = pneg %p134
      %p256 = pneg %p165
      %p257 = pneg %p162
      %p258 = scmp.lt.s32.totalorder %s20, 1
      %s259 = scalar_select %p258, %s20, 1
      %p260 = scmp.lt.s32.totalorder %s21, 0
      %s261 = scalar_select %p260, %s21, 0
      %s262 = smul.addr %s259, 8
      %s263 = sadd.s32 %s261, %s262
      %s264 = smul.addr %s263, 4
      %s265 = scalar_lea.vmem %s4, %s264
      %p266 = scmp.lt.s32.totalorder %s20, 1
      %s267 = scalar_select %p266, %s20, 1
      %p268 = scmp.lt.s32.totalorder %s22, 0
      %s269 = scalar_select %p268, %s22, 0
      %s270 = smul.addr %s267, 264
      %s271 = sadd.s32 %s269, %s270
      %s272 = smul.addr %s271, 4
      %s273 = scalar_lea.vmem %s0, %s272
      %s274 = smul.u32 4, %s22
      %p275 = scmp.lt.s32.totalorder %s274, 3
      %s276 = scalar_select %p275, %s274, 3
      %p277 = scmp.lt.s32.totalorder %s21, 0
      %s278 = scalar_select %p277, %s21, 0
      %s279 = sadd.s32 %s278, %s276
      %s280 = smul.addr %s279, 4
      %s281 = scalar_lea.vmem %s1, %s280
      %s282 = smul.u32 4, %s22
      %p283 = scmp.lt.s32.totalorder %s21, 0
      %s284 = scalar_select %p283, %s21, 0
      %s285 = scalar_lea.vmem %s2, %s284
      %p286 = scmp.lt.s32.totalorder %s21, 0
      %s287 = scalar_select %p286, %s21, 0
      %s288 = scalar_lea.vmem %s3, %s287
      %p289 = scmp.lt.s32.totalorder %s20, 1
      %s290 = scalar_select %p289, %s20, 1
      %p291 = scmp.lt.s32.totalorder %s21, 0
      %s292 = scalar_select %p291, %s21, 0
      %s293 = smul.addr %s290, 8
      %s294 = sadd.s32 %s292, %s293
      %s295 = smul.addr %s294, 4
      %s296 = scalar_lea.vmem %s4, %s295
      %p298 = scmp.eq.s32.totalorder %s22, 0
      // Predicated region
      $region37: #{deeplabv3_forward.16} parent=35 // pred_check
        %p299 = pneg %p298
      $region38: #{deeplabv3_forward.16} parent=35 // pred_check_branch
        %301 = sbr.rel (%p299) target = $region40
      $region39: #{deeplabv3_forward.16} parent=35 // pred_region
        %vm302 = vcmask 130048
        %303 = vst.msk [vmem:[#allocation2] sm:$0xff] %vm302, 0.0
        %304 = vst.msk [vmem:[#allocation2 + $0x8] sm:$0xff] %vm302, 0.0
        %305 = vst.msk [vmem:[#allocation2 + $0x10] sm:$0xff] %vm302, 0.0
        %306 = vst.msk [vmem:[#allocation2 + $0x18] sm:$0xff] %vm302, 0.0
        %307 = vst.msk [vmem:[#allocation2 + $0x20] sm:$0xff] %vm302, 0.0
        %308 = vst.msk [vmem:[#allocation2 + $0x28] sm:$0xff] %vm302, 0.0
        %309 = vst.msk [vmem:[#allocation2 + $0x30] sm:$0xff] %vm302, 0.0
        %310 = vst.msk [vmem:[#allocation2 + $0x38] sm:$0xff] %vm302, 0.0
      $region40: #{deeplabv3_forward.16} parent=35 // pred_fallthru
        _
      %v311 = vld [vmem:[#allocation2] sm:$0xff]
      %v312 = vld [vmem:[#allocation2 + $0x8] sm:$0xff]
      %v313 = vld [vmem:[#allocation2 + $0x10] sm:$0xff]
      %v314 = vld [vmem:[#allocation2 + $0x18] sm:$0xff]
      %v315 = vld [vmem:[#allocation2 + $0x20] sm:$0xff]
      %v316 = vld [vmem:[#allocation2 + $0x28] sm:$0xff]
      %v317 = vld [vmem:[#allocation2 + $0x30] sm:$0xff]
      %v318 = vld [vmem:[#allocation2 + $0x38] sm:$0xff]
      %v319 = vld [vmem:[%s273] sm:$0xf]
      %v320 = vld [vmem:[%s273 + $0x18] sm:$0xf]
      %v321 = vld [vmem:[%s273 + $0x30] sm:$0xf]
      %v322 = vld [vmem:[%s273 + $0x48] sm:$0xf]
      %v323 = vld [vmem:[%s273 + $0x60] sm:$0xf]
      %v324 = vld [vmem:[%s273 + $0x78] sm:$0xf]
      %v325 = vld [vmem:[%s273 + $0x90] sm:$0xf]
      %v326 = vld [vmem:[%s273 + $0xa8] sm:$0xf]
      %v327 = vld [vmem:[%s273 + $0x1b0] sm:$0xf]
      %v328 = vld [vmem:[%s273 + $0x1c8] sm:$0xf]
      %v329 = vld [vmem:[%s273 + $0x1e0] sm:$0xf]
      %v330 = vld [vmem:[%s273 + $0x1f8] sm:$0xf]
      %v331 = vld [vmem:[%s273 + $0x210] sm:$0xf]
      %v332 = vld [vmem:[%s273 + $0x228] sm:$0xf]
      %v333 = vld [vmem:[%s273 + $0x240] sm:$0xf]
      %v334 = vld [vmem:[%s273 + $0x258] sm:$0xf]
      %v335 = vld [vmem:[%s273 + $0x360] sm:$0xf]
      %v336 = vld [vmem:[%s273 + $0x378] sm:$0xf]
      %v337 = vld [vmem:[%s273 + $0x390] sm:$0xf]
      %v338 = vld [vmem:[%s273 + $0x3a8] sm:$0xf]
      %v339 = vld [vmem:[%s273 + $0x3c0] sm:$0xf]
      %v340 = vld [vmem:[%s273 + $0x3d8] sm:$0xf]
      %v341 = vld [vmem:[%s273 + $0x3f0] sm:$0xf]
      %v342 = vld [vmem:[%s273 + $0x408] sm:$0xf]
      %v343 = vld [vmem:[%s281] sm:$0xf]
      %v344 = vld [vmem:[%s281 + $0x4] sm:$0xf]
      %v345 = vld [vmem:[%s281 + $0x8] sm:$0xf]
      %v346 = vld [vmem:[%s281 + $0xc] sm:$0xf]
      %v355 = vunpack.c.l.b16 %v319
      %v356 = vunpack.c.l.b16 %v320
      %v357 = vunpack.c.l.b16 %v321
      %v358 = vunpack.c.l.b16 %v322
      %v359 = vunpack.c.l.b16 %v323
      %v360 = vunpack.c.l.b16 %v324
      %v361 = vunpack.c.l.b16 %v325
      %v362 = vunpack.c.l.b16 %v326
      %v363 = vpack.c.b16 %v356, %v355
      %v364 = vpack.c.b16 %v358, %v357
      %v365 = vpack.c.b16 %v360, %v359
      %v366 = vpack.c.b16 %v362, %v361
      %v371 = vunpack.c.l.b16 %v343
      %v372 = vunpack.c.l.b16 %v344
      %v373 = vunpack.c.l.b16 %v345
      %v374 = vunpack.c.l.b16 %v346
      %v375 = vpack.c.b16 %v372, %v371
      %v376 = vpack.c.b16 %v374, %v373
      %vm379 = vcmask 261120
      %v381 = vsel %vm379, %v363, 0
      %v384 = vsel %vm379, %v364, 0
      %v387 = vsel %vm379, %v365, 0
      %v390 = vsel %vm379, %v366, 0
      %392 = vmatprep.subr.bf16.mxu0 0
      %393 = vmatpush1.bf16.msra.mxu0 %v375
      %394 = vmatprep.subr.bf16.mxu0 0
      %395 = vmatpush1.bf16.msra.mxu0 %v376
      %396 = vmatprep.subr.bf16.mxu0 0
      %397 = vmatpush1.bf16.msra.mxu0 0
      %398 = vmatprep.subr.bf16.mxu0 0
      %399 = vmatpush1.bf16.msra.mxu0 0
      %400 = vmatprep.subr.bf16.mxu0 0
      %401 = vmatpush1.bf16.msra.mxu0 0
      %402 = vmatprep.subr.bf16.mxu0 0
      %403 = vmatpush1.bf16.msra.mxu0 0
      %404 = vmatprep.subr.bf16.mxu0 0
      %405 = vmatpush1.bf16.msra.mxu0 0
      %406 = vmatprep.subr.bf16.mxu0 0
      %407 = vmatpush1.bf16.msra.mxu0 0
      %408 = vmatprep.subr.bf16.mxu0 0
      %409 = vmatpush1.bf16.msra.mxu0 0
      %410 = vmatprep.subr.bf16.mxu0 0
      %411 = vmatpush1.bf16.msra.mxu0 0
      %412 = vmatprep.subr.bf16.mxu0 0
      %413 = vmatpush1.bf16.msra.mxu0 0
      %414 = vmatprep.subr.bf16.mxu0 0
      %415 = vmatpush1.bf16.msra.mxu0 0
      %416 = vmatprep.subr.bf16.mxu0 0
      %417 = vmatpush1.bf16.msra.mxu0 0
      %418 = vmatprep.subr.bf16.mxu0 0
      %419 = vmatpush1.bf16.msra.mxu0 0
      %420 = vmatprep.subr.bf16.mxu0 0
      %421 = vmatpush1.bf16.msra.mxu0 0
      %422 = vmatprep.subr.bf16.mxu0 0
      %423 = vmatpush1.bf16.msra.mxu0 0
      %424 = vmatprep.mubr.bf16.mxu0 0
      %425 = vmatmul.mubr.bf16.gmra.mrb[0].mxu0 %v381
      %v426 = vpop.f32.mrb[0].mxu0
      %v427 = vadd.f32 0.0, %v426
      %v428 = vpop.f32.mrb[0].mxu0
      %v429 = vpop.f32.mrb[0].mxu0
      %v430 = vadd.f32 0.0, %v429
      %v431 = vpop.f32.mrb[0].mxu0
      %432 = vmatprep.mubr.bf16.mxu0 0
      %433 = vmatmul.mubr.bf16.gmra.mrb[0].mxu0 %v384
      %v434 = vpop.f32.mrb[0].mxu0
      %v435 = vadd.f32 0.0, %v434
      %v436 = vpop.f32.mrb[0].mxu0
      %v437 = vpop.f32.mrb[0].mxu0
      %v438 = vadd.f32 0.0, %v437
      %v439 = vpop.f32.mrb[0].mxu0
      %440 = vmatprep.mubr.bf16.mxu0 0
      %441 = vmatmul.mubr.bf16.gmra.mrb[0].mxu0 %v387
      %v442 = vpop.f32.mrb[0].mxu0
      %v443 = vadd.f32 0.0, %v442
      %v444 = vpop.f32.mrb[0].mxu0
      %v445 = vpop.f32.mrb[0].mxu0
      %v446 = vadd.f32 0.0, %v445
      %v447 = vpop.f32.mrb[0].mxu0
      %448 = vmatprep.mubr.bf16.mxu0 0
      %449 = vmatmul.mubr.bf16.gmra.mrb[0].mxu0 %v390
      %v450 = vpop.f32.mrb[0].mxu0
      %v451 = vadd.f32 0.0, %v450
      %v452 = vpop.f32.mrb[0].mxu0
      %v453 = vpop.f32.mrb[0].mxu0
      %v454 = vadd.f32 0.0, %v453
      %v455 = vpop.f32.mrb[0].mxu0
      %456 = vdwg.mxu0
      %v457 = vadd.f32 %v311, %v427
      %v458 = vadd.f32 %v312, %v430
      %v459 = vadd.f32 %v313, %v435
      %v460 = vadd.f32 %v314, %v438
      %v461 = vadd.f32 %v315, %v443
      %v462 = vadd.f32 %v316, %v446
      %v463 = vadd.f32 %v317, %v451
      %v464 = vadd.f32 %v318, %v454
      %s465 = scalar_lea.vmem %s281, 48
      %v466 = vld [vmem:[%s465] sm:$0xf]
      %v467 = vld [vmem:[%s465 + $0x4] sm:$0xf]
      %v468 = vld [vmem:[%s465 + $0x8] sm:$0xf]
      %v469 = vld [vmem:[%s465 + $0xc] sm:$0xf]
      %v478 = vunpack.c.l.b16 %v327
      %v479 = vunpack.c.l.b16 %v328
      %v480 = vunpack.c.l.b16 %v329
      %v481 = vunpack.c.l.b16 %v330
      %v482 = vunpack.c.l.b16 %v331
      %v483 = vunpack.c.l.b16 %v332
      %v484 = vunpack.c.l.b16 %v333
      %v485 = vunpack.c.l.b16 %v334
      %v486 = vpack.c.b16 %v479, %v478
      %v487 = vpack.c.b16 %v481, %v480
      %v488 = vpack.c.b16 %v483, %v482
      %v489 = vpack.c.b16 %v485, %v484
      %v494 = vunpack.c.l.b16 %v466
      %v495 = vunpack.c.l.b16 %v467
      %v496 = vunpack.c.l.b16 %v468
      %v497 = vunpack.c.l.b16 %v469
      %v498 = vpack.c.b16 %v495, %v494
      %v499 = vpack.c.b16 %v497, %v496
      %v503 = vsel %vm379, %v486, 0
      %v506 = vsel %vm379, %v487, 0
      %v509 = vsel %vm379, %v488, 0
      %v512 = vsel %vm379, %v489, 0
      %514 = vmatprep.subr.bf16.mxu0 0
      %515 = vmatpush1.bf16.msra.mxu0 %v498
      %516 = vmatprep.subr.bf16.mxu0 0
      %517 = vmatpush1.bf16.msra.mxu0 %v499
      %518 = vmatprep.subr.bf16.mxu0 0
      %519 = vmatpush1.bf16.msra.mxu0 0
      %520 = vmatprep.subr.bf16.mxu0 0
      %521 = vmatpush1.bf16.msra.mxu0 0
      %522 = vmatprep.subr.bf16.mxu0 0
      %523 = vmatpush1.bf16.msra.mxu0 0
      %524 = vmatprep.subr.bf16.mxu0 0
      %525 = vmatpush1.bf16.msra.mxu0 0
      %526 = vmatprep.subr.bf16.mxu0 0
      %527 = vmatpush1.bf16.msra.mxu0 0
      %528 = vmatprep.subr.bf16.mxu0 0
      %529 = vmatpush1.bf16.msra.mxu0 0
      %530 = vmatprep.subr.bf16.mxu0 0
      %531 = vmatpush1.bf16.msra.mxu0 0
      %532 = vmatprep.subr.bf16.mxu0 0
      %533 = vmatpush1.bf16.msra.mxu0 0
      %534 = vmatprep.subr.bf16.mxu0 0
      %535 = vmatpush1.bf16.msra.mxu0 0
      %536 = vmatprep.subr.bf16.mxu0 0
      %537 = vmatpush1.bf16.msra.mxu0 0
      %538 = vmatprep.subr.bf16.mxu0 0
      %539 = vmatpush1.bf16.msra.mxu0 0
      %540 = vmatprep.subr.bf16.mxu0 0
      %541 = vmatpush1.bf16.msra.mxu0 0
      %542 = vmatprep.subr.bf16.mxu0 0
      %543 = vmatpush1.bf16.msra.mxu0 0
      %544 = vmatprep.subr.bf16.mxu0 0
      %545 = vmatpush1.bf16.msra.mxu0 0
      %546 = vmatprep.mubr.bf16.mxu0 0
      %547 = vmatmul.mubr.bf16.gmra.mrb[0].mxu0 %v503
      %v548 = vpop.f32.mrb[0].mxu0
      %v549 = vadd.f32 0.0, %v548
      %v550 = vpop.f32.mrb[0].mxu0
      %v551 = vpop.f32.mrb[0].mxu0
      %v552 = vadd.f32 0.0, %v551
      %v553 = vpop.f32.mrb[0].mxu0
      %554 = vmatprep.mubr.bf16.mxu0 0
      %555 = vmatmul.mubr.bf16.gmra.mrb[0].mxu0 %v506
      %v556 = vpop.f32.mrb[0].mxu0
      %v557 = vadd.f32 0.0, %v556
      %v558 = vpop.f32.mrb[0].mxu0
      %v559 = vpop.f32.mrb[0].mxu0
      %v560 = vadd.f32 0.0, %v559
      %v561 = vpop.f32.mrb[0].mxu0
      %562 = vmatprep.mubr.bf16.mxu0 0
      %563 = vmatmul.mubr.bf16.gmra.mrb[0].mxu0 %v509
      %v564 = vpop.f32.mrb[0].mxu0
      %v565 = vadd.f32 0.0, %v564
      %v566 = vpop.f32.mrb[0].mxu0
      %v567 = vpop.f32.mrb[0].mxu0
      %v568 = vadd.f32 0.0, %v567
      %v569 = vpop.f32.mrb[0].mxu0
      %570 = vmatprep.mubr.bf16.mxu0 0
      %571 = vmatmul.mubr.bf16.gmra.mrb[0].mxu0 %v512
      %v572 = vpop.f32.mrb[0].mxu0
      %v573 = vadd.f32 0.0, %v572
      %v574 = vpop.f32.mrb[0].mxu0
      %v575 = vpop.f32.mrb[0].mxu0
      %v576 = vadd.f32 0.0, %v575
      %v577 = vpop.f32.mrb[0].mxu0
      %578 = vdwg.mxu0
      %v579 = vadd.f32 %v457, %v549
      %v580 = vadd.f32 %v458, %v552
      %v581 = vadd.f32 %v459, %v557
      %v582 = vadd.f32 %v460, %v560
      %v583 = vadd.f32 %v461, %v565
      %v584 = vadd.f32 %v462, %v568
      %v585 = vadd.f32 %v463, %v573
      %v586 = vadd.f32 %v464, %v576
      %s587 = scalar_lea.vmem %s281, 96
      %v588 = vld [vmem:[%s587] sm:$0xf]
      %v589 = vld [vmem:[%s587 + $0x4] sm:$0xf]
      %v590 = vld [vmem:[%s587 + $0x8] sm:$0xf]
      %v591 = vld [vmem:[%s587 + $0xc] sm:$0xf]
      %v600 = vunpack.c.l.b16 %v335
      %v601 = vunpack.c.l.b16 %v336
      %v602 = vunpack.c.l.b16 %v337
      %v603 = vunpack.c.l.b16 %v338
      %v604 = vunpack.c.l.b16 %v339
      %v605 = vunpack.c.l.b16 %v340
      %v606 = vunpack.c.l.b16 %v341
      %v607 = vunpack.c.l.b16 %v342
      %v608 = vpack.c.b16 %v601, %v600
      %v609 = vpack.c.b16 %v603, %v602
      %v610 = vpack.c.b16 %v605, %v604
      %v611 = vpack.c.b16 %v607, %v606
      %v616 = vunpack.c.l.b16 %v588
      %v617 = vunpack.c.l.b16 %v589
      %v618 = vunpack.c.l.b16 %v590
      %v619 = vunpack.c.l.b16 %v591
      %v620 = vpack.c.b16 %v617, %v616
      %v621 = vpack.c.b16 %v619, %v618
      %v625 = vsel %vm379, %v608, 0
      %v628 = vsel %vm379, %v609, 0
      %v631 = vsel %vm379, %v610, 0
      %v634 = vsel %vm379, %v611, 0
      %636 = vmatprep.subr.bf16.mxu0 0
      %637 = vmatpush1.bf16.msra.mxu0 %v620
      %638 = vmatprep.subr.bf16.mxu0 0
      %639 = vmatpush1.bf16.msra.mxu0 %v621
      %640 = vmatprep.subr.bf16.mxu0 0
      %641 = vmatpush1.bf16.msra.mxu0 0
      %642 = vmatprep.subr.bf16.mxu0 0
      %643 = vmatpush1.bf16.msra.mxu0 0
      %644 = vmatprep.subr.bf16.mxu0 0
      %645 = vmatpush1.bf16.msra.mxu0 0
      %646 = vmatprep.subr.bf16.mxu0 0
      %647 = vmatpush1.bf16.msra.mxu0 0
      %648 = vmatprep.subr.bf16.mxu0 0
      %649 = vmatpush1.bf16.msra.mxu0 0
      %650 = vmatprep.subr.bf16.mxu0 0
      %651 = vmatpush1.bf16.msra.mxu0 0
      %652 = vmatprep.subr.bf16.mxu0 0
      %653 = vmatpush1.bf16.msra.mxu0 0
      %654 = vmatprep.subr.bf16.mxu0 0
      %655 = vmatpush1.bf16.msra.mxu0 0
      %656 = vmatprep.subr.bf16.mxu0 0
      %657 = vmatpush1.bf16.msra.mxu0 0
      %658 = vmatprep.subr.bf16.mxu0 0
      %659 = vmatpush1.bf16.msra.mxu0 0
      %660 = vmatprep.subr.bf16.mxu0 0
      %661 = vmatpush1.bf16.msra.mxu0 0
      %662 = vmatprep.subr.bf16.mxu0 0
      %663 = vmatpush1.bf16.msra.mxu0 0
      %664 = vmatprep.subr.bf16.mxu0 0
      %665 = vmatpush1.bf16.msra.mxu0 0
      %666 = vmatprep.subr.bf16.mxu0 0
      %667 = vmatpush1.bf16.msra.mxu0 0
      %668 = vmatprep.mubr.bf16.mxu0 0
      %669 = vmatmul.mubr.bf16.gmra.mrb[0].mxu0 %v625
      %v670 = vpop.f32.mrb[0].mxu0
      %v671 = vadd.f32 0.0, %v670
      %v672 = vpop.f32.mrb[0].mxu0
      %v673 = vpop.f32.mrb[0].mxu0
      %v674 = vadd.f32 0.0, %v673
      %v675 = vpop.f32.mrb[0].mxu0
      %676 = vmatprep.mubr.bf16.mxu0 0
      %677 = vmatmul.mubr.bf16.gmra.mrb[0].mxu0 %v628
      %v678 = vpop.f32.mrb[0].mxu0
      %v679 = vadd.f32 0.0, %v678
      %v680 = vpop.f32.mrb[0].mxu0
      %v681 = vpop.f32.mrb[0].mxu0
      %v682 = vadd.f32 0.0, %v681
      %v683 = vpop.f32.mrb[0].mxu0
      %684 = vmatprep.mubr.bf16.mxu0 0
      %685 = vmatmul.mubr.bf16.gmra.mrb[0].mxu0 %v631
      %v686 = vpop.f32.mrb[0].mxu0
      %v687 = vadd.f32 0.0, %v686
      %v688 = vpop.f32.mrb[0].mxu0
      %v689 = vpop.f32.mrb[0].mxu0
      %v690 = vadd.f32 0.0, %v689
      %v691 = vpop.f32.mrb[0].mxu0
      %692 = vmatprep.mubr.bf16.mxu0 0
      %693 = vmatmul.mubr.bf16.gmra.mrb[0].mxu0 %v634
      %v694 = vpop.f32.mrb[0].mxu0
      %v695 = vadd.f32 0.0, %v694
      %v696 = vpop.f32.mrb[0].mxu0
      %v697 = vpop.f32.mrb[0].mxu0
      %v698 = vadd.f32 0.0, %v697
      %v699 = vpop.f32.mrb[0].mxu0
      %700 = vdwg.mxu0
      %v701 = vadd.f32 %v579, %v671
      %v702 = vadd.f32 %v580, %v674
      %v703 = vadd.f32 %v581, %v679
      %v704 = vadd.f32 %v582, %v682
      %v705 = vadd.f32 %v583, %v687
      %v706 = vadd.f32 %v584, %v690
      %v707 = vadd.f32 %v585, %v695
      %v708 = vadd.f32 %v586, %v698
      %v709 = vld [vmem:[%s273 + $0x8] sm:$0xe]
      %v710 = vld [vmem:[%s273 + $0xc] sm:$0x1]
      %v711 = vld [vmem:[%s273 + $0x20] sm:$0xe]
      %v712 = vld [vmem:[%s273 + $0x24] sm:$0x1]
      %v713 = vld [vmem:[%s273 + $0x38] sm:$0xe]
      %v714 = vld [vmem:[%s273 + $0x3c] sm:$0x1]
      %v715 = vld [vmem:[%s273 + $0x50] sm:$0xe]
      %v716 = vld [vmem:[%s273 + $0x54] sm:$0x1]
      %v717 = vld [vmem:[%s273 + $0x68] sm:$0xe]
      %v718 = vld [vmem:[%s273 + $0x6c] sm:$0x1]
      %v719 = vld [vmem:[%s273 + $0x80] sm:$0xe]
      %v720 = vld [vmem:[%s273 + $0x84] sm:$0x1]
      %v721 = vld [vmem:[%s273 + $0x98] sm:$0xe]
      %v722 = vld [vmem:[%s273 + $0x9c] sm:$0x1]
      %v723 = vld [vmem:[%s273 + $0xb0] sm:$0xe]
      %v724 = vld [vmem:[%s273 + $0xb4] sm:$0x1]
      %v725 = vld [vmem:[%s273 + $0x1b8] sm:$0xe]
      %v726 = vld [vmem:[%s273 + $0x1bc] sm:$0x1]
      %v727 = vld [vmem:[%s273 + $0x1d0] sm:$0xe]
      %v728 = vld [vmem:[%s273 + $0x1d4] sm:$0x1]
      %v729 = vld [vmem:[%s273 + $0x1e8] sm:$0xe]
      %v730 = vld [vmem:[%s273 + $0x1ec] sm:$0x1]
      %v731 = vld [vmem:[%s273 + $0x200] sm:$0xe]
      %v732 = vld [vmem:[%s273 + $0x204] sm:$0x1]
      %v733 = vld [vmem:[%s273 + $0x218] sm:$0xe]
      %v734 = vld [vmem:[%s273 + $0x21c] sm:$0x1]
      %v735 = vld [vmem:[%s273 + $0x230] sm:$0xe]
      %v736 = vld [vmem:[%s273 + $0x234] sm:$0x1]
      %v737 = vld [vmem:[%s273 + $0x248] sm:$0xe]
      %v738 = vld [vmem:[%s273 + $0x24c] sm:$0x1]
      %v739 = vld [vmem:[%s273 + $0x260] sm:$0xe]
      %v740 = vld [vmem:[%s273 + $0x264] sm:$0x1]
      %v741 = vld [vmem:[%s273 + $0x368] sm:$0xe]
      %v742 = vld [vmem:[%s273 + $0x36c] sm:$0x1]
      %v743 = vld [vmem:[%s273 + $0x380] sm:$0xe]
      %v744 = vld [vmem:[%s273 + $0x384] sm:$0x1]
      %v745 = vld [vmem:[%s273 + $0x398] sm:$0xe]
      %v746 = vld [vmem:[%s273 + $0x39c] sm:$0x1]
      %v747 = vld [vmem:[%s273 + $0x3b0] sm:$0xe]
      %v748 = vld [vmem:[%s273 + $0x3b4] sm:$0x1]
      %v749 = vld [vmem:[%s273 + $0x3c8] sm:$0xe]
      %v750 = vld [vmem:[%s273 + $0x3cc] sm:$0x1]
      %v751 = vld [vmem:[%s273 + $0x3e0] sm:$0xe]
      %v752 = vld [vmem:[%s273 + $0x3e4] sm:$0x1]
      %v753 = vld [vmem:[%s273 + $0x3f8] sm:$0xe]
      %v754 = vld [vmem:[%s273 + $0x3fc] sm:$0x1]
      %v755 = vld [vmem:[%s273 + $0x410] sm:$0xe]
      %v756 = vld [vmem:[%s273 + $0x414] sm:$0x1]
      %vm805 = vcmask 1042432
      %vm806 = vcmask 1046532
      %vm807 = vmor %vm805, %vm806
      %v808 = vrot.slane %v709, 5
      %v809 = vrot.slane %v808, 4
      %v810 = vrot.slane %v710, 5
      %v811 = vsel %vm807, %v809, %v810
      %v812 = vrot.slane %v711, 5
      %v813 = vrot.slane %v812, 4
      %v814 = vrot.slane %v712, 5
      %v815 = vsel %vm807, %v813, %v814
      %v816 = vrot.slane %v713, 5
      %v817 = vrot.slane %v816, 4
      %v818 = vrot.slane %v714, 5
      %v819 = vsel %vm807, %v817, %v818
      %v820 = vrot.slane %v715, 5
      %v821 = vrot.slane %v820, 4
      %v822 = vrot.slane %v716, 5
      %v823 = vsel %vm807, %v821, %v822
      %v824 = vrot.slane %v717, 5
      %v825 = vrot.slane %v824, 4
      %v826 = vrot.slane %v718, 5
      %v827 = vsel %vm807, %v825, %v826
      %v828 = vrot.slane %v719, 5
      %v829 = vrot.slane %v828, 4
      %v830 = vrot.slane %v720, 5
      %v831 = vsel %vm807, %v829, %v830
      %v832 = vrot.slane %v721, 5
      %v833 = vrot.slane %v832, 4
      %v834 = vrot.slane %v722, 5
      %v835 = vsel %vm807, %v833, %v834
      %v836 = vrot.slane %v723, 5
      %v837 = vrot.slane %v836, 4
      %v838 = vrot.slane %v724, 5
      %v839 = vsel %vm807, %v837, %v838
      %v840 = vrot.slane %v725, 5
      %v841 = vrot.slane %v840, 4
      %v842 = vrot.slane %v726, 5
      %v843 = vsel %vm807, %v841, %v842
      %v844 = vrot.slane %v727, 5
      %v845 = vrot.slane %v844, 4
      %v846 = vrot.slane %v728, 5
      %v847 = vsel %vm807, %v845, %v846
      %v848 = vrot.slane %v729, 5
      %v849 = vrot.slane %v848, 4
      %v850 = vrot.slane %v730, 5
      %v851 = vsel %vm807, %v849, %v850
      %v852 = vrot.slane %v731, 5
      %v853 = vrot.slane %v852, 4
      %v854 = vrot.slane %v732, 5
      %v855 = vsel %vm807, %v853, %v854
      %v856 = vrot.slane %v733, 5
      %v857 = vrot.slane %v856, 4
      %v858 = vrot.slane %v734, 5
      %v859 = vsel %vm807, %v857, %v858
      %v860 = vrot.slane %v735, 5
      %v861 = vrot.slane %v860, 4
      %v862 = vrot.slane %v736, 5
      %v863 = vsel %vm807, %v861, %v862
      %v864 = vrot.slane %v737, 5
      %v865 = vrot.slane %v864, 4
      %v866 = vrot.slane %v738, 5
      %v867 = vsel %vm807, %v865, %v866
      %v868 = vrot.slane %v739, 5
      %v869 = vrot.slane %v868, 4
      %v870 = vrot.slane %v740, 5
      %v871 = vsel %vm807, %v869, %v870
      %v872 = vrot.slane %v741, 5
      %v873 = vrot.slane %v872, 4
      %v874 = vrot.slane %v742, 5
      %v875 = vsel %vm807, %v873, %v874
      %v876 = vrot.slane %v743, 5
      %v877 = vrot.slane %v876, 4
      %v878 = vrot.slane %v744, 5
      %v879 = vsel %vm807, %v877, %v878
      %v880 = vrot.slane %v745, 5
      %v881 = vrot.slane %v880, 4
      %v882 = vrot.slane %v746, 5
      %v883 = vsel %vm807, %v881, %v882
      %v884 = vrot.slane %v747, 5
      %v885 = vrot.slane %v884, 4
      %v886 = vrot.slane %v748, 5
      %v887 = vsel %vm807, %v885, %v886
      %v888 = vrot.slane %v749, 5
      %v889 = vrot.slane %v888, 4
      %v890 = vrot.slane %v750, 5
      %v891 = vsel %vm807, %v889, %v890
      %v892 = vrot.slane %v751, 5
      %v893 = vrot.slane %v892, 4
      %v894 = vrot.slane %v752, 5
      %v895 = vsel %vm807, %v893, %v894
      %v896 = vrot.slane %v753, 5
      %v897 = vrot.slane %v896, 4
      %v898 = vrot.slane %v754, 5
      %v899 = vsel %vm807, %v897, %v898
      %v900 = vrot.slane %v755, 5
      %v901 = vrot.slane %v900, 4
      %v902 = vrot.slane %v756, 5
      %v903 = vsel %vm807, %v901, %v902
      %s904 = scalar_lea.vmem %s281, 16
      %v905 = vld [vmem:[%s904] sm:$0xf]
      %v906 = vld [vmem:[%s904 + $0x4] sm:$0xf]
      %v907 = vld [vmem:[%s904 + $0x8] sm:$0xf]
      %v908 = vld [vmem:[%s904 + $0xc] sm:$0xf]
      %v909 = vunpack.c.l.b16 %v811
      %v910 = vunpack.c.l.b16 %v815
      %v911 = vunpack.c.l.b16 %v819
      %v912 = vunpack.c.l.b16 %v823
      %v913 = vunpack.c.l.b16 %v827
      %v914 = vunpack.c.l.b16 %v831
      %v915 = vunpack.c.l.b16 %v835
      %v916 = vunpack.c.l.b16 %v839
      %v917 = vpack.c.b16 %v910, %v909
      %v918 = vpack.c.b16 %v912, %v911
      %v919 = vpack.c.b16 %v914, %v913
      %v920 = vpack.c.b16 %v916, %v915
      %v925 = vunpack.c.l.b16 %v905
      %v926 = vunpack.c.l.b16 %v906
      %v927 = vunpack.c.l.b16 %v907
      %v928 = vunpack.c.l.b16 %v908
      %v929 = vpack.c.b16 %v926, %v925
      %v930 = vpack.c.b16 %v928, %v927
      %v934 = vsel %vm379, %v917, 0
      %v937 = vsel %vm379, %v918, 0
      %v940 = vsel %vm379, %v919, 0
      %v943 = vsel %vm379, %v920, 0
      %945 = vmatprep.subr.bf16.mxu0 0
      %946 = vmatpush1.bf16.msra.mxu0 %v929
      %947 = vmatprep.subr.bf16.mxu0 0
      %948 = vmatpush1.bf16.msra.mxu0 %v930
      %949 = vmatprep.subr.bf16.mxu0 0
      %950 = vmatpush1.bf16.msra.mxu0 0
      %951 = vmatprep.subr.bf16.mxu0 0
      %952 = vmatpush1.bf16.msra.mxu0 0
      %953 = vmatprep.subr.bf16.mxu0 0
      %954 = vmatpush1.bf16.msra.mxu0 0
      %955 = vmatprep.subr.bf16.mxu0 0
      %956 = vmatpush1.bf16.msra.mxu0 0
      %957 = vmatprep.subr.bf16.mxu0 0
      %958 = vmatpush1.bf16.msra.mxu0 0
      %959 = vmatprep.subr.bf16.mxu0 0
      %960 = vmatpush1.bf16.msra.mxu0 0
      %961 = vmatprep.subr.bf16.mxu0 0
      %962 = vmatpush1.bf16.msra.mxu0 0
      %963 = vmatprep.subr.bf16.mxu0 0
      %964 = vmatpush1.bf16.msra.mxu0 0
      %965 = vmatprep.subr.bf16.mxu0 0
      %966 = vmatpush1.bf16.msra.mxu0 0
      %967 = vmatprep.subr.bf16.mxu0 0
      %968 = vmatpush1.bf16.msra.mxu0 0
      %969 = vmatprep.subr.bf16.mxu0 0
      %970 = vmatpush1.bf16.msra.mxu0 0
      %971 = vmatprep.subr.bf16.mxu0 0
      %972 = vmatpush1.bf16.msra.mxu0 0
      %973 = vmatprep.subr.bf16.mxu0 0
      %974 = vmatpush1.bf16.msra.mxu0 0
      %975 = vmatprep.subr.bf16.mxu0 0
      %976 = vmatpush1.bf16.msra.mxu0 0
      %977 = vmatprep.mubr.bf16.mxu0 0
      %978 = vmatmul.mubr.bf16.gmra.mrb[0].mxu0 %v934
      %v979 = vpop.f32.mrb[0].mxu0
      %v980 = vadd.f32 0.0, %v979
      %v981 = vpop.f32.mrb[0].mxu0
      %v982 = vpop.f32.mrb[0].mxu0
      %v983 = vadd.f32 0.0, %v982
      %v984 = vpop.f32.mrb[0].mxu0
      %985 = vmatprep.mubr.bf16.mxu0 0
      %986 = vmatmul.mubr.bf16.gmra.mrb[0].mxu0 %v937
      %v987 = vpop.f32.mrb[0].mxu0
      %v988 = vadd.f32 0.0, %v987
      %v989 = vpop.f32.mrb[0].mxu0
      %v990 = vpop.f32.mrb[0].mxu0
      %v991 = vadd.f32 0.0, %v990
      %v992 = vpop.f32.mrb[0].mxu0
      %993 = vmatprep.mubr.bf16.mxu0 0
      %994 = vmatmul.mubr.bf16.gmra.mrb[0].mxu0 %v940
      %v995 = vpop.f32.mrb[0].mxu0
      %v996 = vadd.f32 0.0, %v995
      %v997 = vpop.f32.mrb[0].mxu0
      %v998 = vpop.f32.mrb[0].mxu0
      %v999 = vadd.f32 0.0, %v998
      %v1000 = vpop.f32.mrb[0].mxu0
      %1001 = vmatprep.mubr.bf16.mxu0 0
      %1002 = vmatmul.mubr.bf16.gmra.mrb[0].mxu0 %v943
      %v1003 = vpop.f32.mrb[0].mxu0
      %v1004 = vadd.f32 0.0, %v1003
      %v1005 = vpop.f32.mrb[0].mxu0
      %v1006 = vpop.f32.mrb[0].mxu0
      %v1007 = vadd.f32 0.0, %v1006
      %v1008 = vpop.f32.mrb[0].mxu0
      %1009 = vdwg.mxu0
      %v1010 = vadd.f32 %v701, %v980
      %v1011 = vadd.f32 %v702, %v983
      %v1012 = vadd.f32 %v703, %v988
      %v1013 = vadd.f32 %v704, %v991
      %v1014 = vadd.f32 %v705, %v996
      %v1015 = vadd.f32 %v706, %v999
      %v1016 = vadd.f32 %v707, %v1004
      %v1017 = vadd.f32 %v708, %v1007
      %s1018 = scalar_lea.vmem %s281, 64
      %v1019 = vld [vmem:[%s1018] sm:$0xf]
      %v1020 = vld [vmem:[%s1018 + $0x4] sm:$0xf]
      %v1021 = vld [vmem:[%s1018 + $0x8] sm:$0xf]
      %v1022 = vld [vmem:[%s1018 + $0xc] sm:$0xf]
      %v1023 = vunpack.c.l.b16 %v843
      %v1024 = vunpack.c.l.b16 %v847
      %v1025 = vunpack.c.l.b16 %v851
      %v1026 = vunpack.c.l.b16 %v855
      %v1027 = vunpack.c.l.b16 %v859
      %v1028 = vunpack.c.l.b16 %v863
      %v1029 = vunpack.c.l.b16 %v867
      %v1030 = vunpack.c.l.b16 %v871
      %v1031 = vpack.c.b16 %v1024, %v1023
      %v1032 = vpack.c.b16 %v1026, %v1025
      %v1033 = vpack.c.b16 %v1028, %v1027
      %v1034 = vpack.c.b16 %v1030, %v1029
      %v1039 = vunpack.c.l.b16 %v1019
      %v1040 = vunpack.c.l.b16 %v1020
      %v1041 = vunpack.c.l.b16 %v1021
      %v1042 = vunpack.c.l.b16 %v1022
      %v1043 = vpack.c.b16 %v1040, %v1039
      %v1044 = vpack.c.b16 %v1042, %v1041
      %v1048 = vsel %vm379, %v1031, 0
      %v1051 = vsel %vm379, %v1032, 0
      %v1054 = vsel %vm379, %v1033, 0
      %v1057 = vsel %vm379, %v1034, 0
      %1059 = vmatprep.subr.bf16.mxu0 0
      %1060 = vmatpush1.bf16.msra.mxu0 %v1043
      %1061 = vmatprep.subr.bf16.mxu0 0
      %1062 = vmatpush1.bf16.msra.mxu0 %v1044
      %1063 = vmatprep.subr.bf16.mxu0 0
      %1064 = vmatpush1.bf16.msra.mxu0 0
      %1065 = vmatprep.subr.bf16.mxu0 0
      %1066 = vmatpush1.bf16.msra.mxu0 0
      %1067 = vmatprep.subr.bf16.mxu0 0
      %1068 = vmatpush1.bf16.msra.mxu0 0
      %1069 = vmatprep.subr.bf16.mxu0 0
      %1070 = vmatpush1.bf16.msra.mxu0 0
      %1071 = vmatprep.subr.bf16.mxu0 0
      %1072 = vmatpush1.bf16.msra.mxu0 0
      %1073 = vmatprep.subr.bf16.mxu0 0
      %1074 = vmatpush1.bf16.msra.mxu0 0
      %1075 = vmatprep.subr.bf16.mxu0 0
      %1076 = vmatpush1.bf16.msra.mxu0 0
      %1077 = vmatprep.subr.bf16.mxu0 0
      %1078 = vmatpush1.bf16.msra.mxu0 0
      %1079 = vmatprep.subr.bf16.mxu0 0
      %1080 = vmatpush1.bf16.msra.mxu0 0
      %1081 = vmatprep.subr.bf16.mxu0 0
      %1082 = vmatpush1.bf16.msra.mxu0 0
      %1083 = vmatprep.subr.bf16.mxu0 0
      %1084 = vmatpush1.bf16.msra.mxu0 0
      %1085 = vmatprep.subr.bf16.mxu0 0
      %1086 = vmatpush1.bf16.msra.mxu0 0
      %1087 = vmatprep.subr.bf16.mxu0 0
      %1088 = vmatpush1.bf16.msra.mxu0 0
      %1089 = vmatprep.subr.bf16.mxu0 0
      %1090 = vmatpush1.bf16.msra.mxu0 0
      %1091 = vmatprep.mubr.bf16.mxu0 0
      %1092 = vmatmul.mubr.bf16.gmra.mrb[0].mxu0 %v1048
      %v1093 = vpop.f32.mrb[0].mxu0
      %v1094 = vadd.f32 0.0, %v1093
      %v1095 = vpop.f32.mrb[0].mxu0
      %v1096 = vpop.f32.mrb[0].mxu0
      %v1097 = vadd.f32 0.0, %v1096
      %v1098 = vpop.f32.mrb[0].mxu0
      %1099 = vmatprep.mubr.bf16.mxu0 0
      %1100 = vmatmul.mubr.bf16.gmra.mrb[0].mxu0 %v1051
      %v1101 = vpop.f32.mrb[0].mxu0
      %v1102 = vadd.f32 0.0, %v1101
      %v1103 = vpop.f32.mrb[0].mxu0
      %v1104 = vpop.f32.mrb[0].mxu0
      %v1105 = vadd.f32 0.0, %v1104
      %v1106 = vpop.f32.mrb[0].mxu0
      %1107 = vmatprep.mubr.bf16.mxu0 0
      %1108 = vmatmul.mubr.bf16.gmra.mrb[0].mxu0 %v1054
      %v1109 = vpop.f32.mrb[0].mxu0
      %v1110 = vadd.f32 0.0, %v1109
      %v1111 = vpop.f32.mrb[0].mxu0
      %v1112 = vpop.f32.mrb[0].mxu0
      %v1113 = vadd.f32 0.0, %v1112
      %v1114 = vpop.f32.mrb[0].mxu0
      %1115 = vmatprep.mubr.bf16.mxu0 0
      %1116 = vmatmul.mubr.bf16.gmra.mrb[0].mxu0 %v1057
      %v1117 = vpop.f32.mrb[0].mxu0
      %v1118 = vadd.f32 0.0, %v1117
      %v1119 = vpop.f32.mrb[0].mxu0
      %v1120 = vpop.f32.mrb[0].mxu0
      %v1121 = vadd.f32 0.0, %v1120
      %v1122 = vpop.f32.mrb[0].mxu0
      %1123 = vdwg.mxu0
      %v1124 = vadd.f32 %v1010, %v1094
      %v1125 = vadd.f32 %v1011, %v1097
      %v1126 = vadd.f32 %v1012, %v1102
      %v1127 = vadd.f32 %v1013, %v1105
      %v1128 = vadd.f32 %v1014, %v1110
      %v1129 = vadd.f32 %v1015, %v1113
      %v1130 = vadd.f32 %v1016, %v1118
      %v1131 = vadd.f32 %v1017, %v1121
      %s1132 = scalar_lea.vmem %s281, 112
      %v1133 = vld [vmem:[%s1132] sm:$0xf]
      %v1134 = vld [vmem:[%s1132 + $0x4] sm:$0xf]
      %v1135 = vld [vmem:[%s1132 + $0x8] sm:$0xf]
      %v1136 = vld [vmem:[%s1132 + $0xc] sm:$0xf]
      %v1137 = vunpack.c.l.b16 %v875
      %v1138 = vunpack.c.l.b16 %v879
      %v1139 = vunpack.c.l.b16 %v883
      %v1140 = vunpack.c.l.b16 %v887
      %v1141 = vunpack.c.l.b16 %v891
      %v1142 = vunpack.c.l.b16 %v895
      %v1143 = vunpack.c.l.b16 %v899
      %v1144 = vunpack.c.l.b16 %v903
      %v1145 = vpack.c.b16 %v1138, %v1137
      %v1146 = vpack.c.b16 %v1140, %v1139
      %v1147 = vpack.c.b16 %v1142, %v1141
      %v1148 = vpack.c.b16 %v1144, %v1143
      %v1153 = vunpack.c.l.b16 %v1133
      %v1154 = vunpack.c.l.b16 %v1134
      %v1155 = vunpack.c.l.b16 %v1135
      %v1156 = vunpack.c.l.b16 %v1136
      %v1157 = vpack.c.b16 %v1154, %v1153
      %v1158 = vpack.c.b16 %v1156, %v1155
      %v1162 = vsel %vm379, %v1145, 0
      %v1165 = vsel %vm379, %v1146, 0
      %v1168 = vsel %vm379, %v1147, 0
      %v1171 = vsel %vm379, %v1148, 0
      %1173 = vmatprep.subr.bf16.mxu0 0
      %1174 = vmatpush1.bf16.msra.mxu0 %v1157
      %1175 = vmatprep.subr.bf16.mxu0 0
      %1176 = vmatpush1.bf16.msra.mxu0 %v1158
      %1177 = vmatprep.subr.bf16.mxu0 0
      %1178 = vmatpush1.bf16.msra.mxu0 0
      %1179 = vmatprep.subr.bf16.mxu0 0
      %1180 = vmatpush1.bf16.msra.mxu0 0
      %1181 = vmatprep.subr.bf16.mxu0 0
      %1182 = vmatpush1.bf16.msra.mxu0 0
      %1183 = vmatprep.subr.bf16.mxu0 0
      %1184 = vmatpush1.bf16.msra.mxu0 0
      %1185 = vmatprep.subr.bf16.mxu0 0
      %1186 = vmatpush1.bf16.msra.mxu0 0
      %1187 = vmatprep.subr.bf16.mxu0 0
      %1188 = vmatpush1.bf16.msra.mxu0 0
      %1189 = vmatprep.subr.bf16.mxu0 0
      %1190 = vmatpush1.bf16.msra.mxu0 0
      %1191 = vmatprep.subr.bf16.mxu0 0
      %1192 = vmatpush1.bf16.msra.mxu0 0
      %1193 = vmatprep.subr.bf16.mxu0 0
      %1194 = vmatpush1.bf16.msra.mxu0 0
      %1195 = vmatprep.subr.bf16.mxu0 0
      %1196 = vmatpush1.bf16.msra.mxu0 0
      %1197 = vmatprep.subr.bf16.mxu0 0
      %1198 = vmatpush1.bf16.msra.mxu0 0
      %1199 = vmatprep.subr.bf16.mxu0 0
      %1200 = vmatpush1.bf16.msra.mxu0 0
      %1201 = vmatprep.subr.bf16.mxu0 0
      %1202 = vmatpush1.bf16.msra.mxu0 0
      %1203 = vmatprep.subr.bf16.mxu0 0
      %1204 = vmatpush1.bf16.msra.mxu0 0
      %1205 = vmatprep.mubr.bf16.mxu0 0
      %1206 = vmatmul.mubr.bf16.gmra.mrb[0].mxu0 %v1162
      %v1207 = vpop.f32.mrb[0].mxu0
      %v1208 = vadd.f32 0.0, %v1207
      %v1209 = vpop.f32.mrb[0].mxu0
      %v1210 = vpop.f32.mrb[0].mxu0
      %v1211 = vadd.f32 0.0, %v1210
      %v1212 = vpop.f32.mrb[0].mxu0
      %1213 = vmatprep.mubr.bf16.mxu0 0
      %1214 = vmatmul.mubr.bf16.gmra.mrb[0].mxu0 %v1165
      %v1215 = vpop.f32.mrb[0].mxu0
      %v1216 = vadd.f32 0.0, %v1215
      %v1217 = vpop.f32.mrb[0].mxu0
      %v1218 = vpop.f32.mrb[0].mxu0
      %v1219 = vadd.f32 0.0, %v1218
      %v1220 = vpop.f32.mrb[0].mxu0
      %1221 = vmatprep.mubr.bf16.mxu0 0
      %1222 = vmatmul.mubr.bf16.gmra.mrb[0].mxu0 %v1168
      %v1223 = vpop.f32.mrb[0].mxu0
      %v1224 = vadd.f32 0.0, %v1223
      %v1225 = vpop.f32.mrb[0].mxu0
      %v1226 = vpop.f32.mrb[0].mxu0
      %v1227 = vadd.f32 0.0, %v1226
      %v1228 = vpop.f32.mrb[0].mxu0
      %1229 = vmatprep.mubr.bf16.mxu0 0
      %1230 = vmatmul.mubr.bf16.gmra.mrb[0].mxu0 %v1171
      %v1231 = vpop.f32.mrb[0].mxu0
      %v1232 = vadd.f32 0.0, %v1231
      %v1233 = vpop.f32.mrb[0].mxu0
      %v1234 = vpop.f32.mrb[0].mxu0
      %v1235 = vadd.f32 0.0, %v1234
      %v1236 = vpop.f32.mrb[0].mxu0
      %1237 = vdwg.mxu0
      %v1238 = vadd.f32 %v1124, %v1208
      %v1239 = vadd.f32 %v1125, %v1211
      %v1240 = vadd.f32 %v1126, %v1216
      %v1241 = vadd.f32 %v1127, %v1219
      %v1242 = vadd.f32 %v1128, %v1224
      %v1243 = vadd.f32 %v1129, %v1227
      %v1244 = vadd.f32 %v1130, %v1232
      %v1245 = vadd.f32 %v1131, %v1235
      %v1246 = vld [vmem:[%s273 + $0x10] sm:$0xc]
      %v1247 = vld [vmem:[%s273 + $0x14] sm:$0x3]
      %v1248 = vld [vmem:[%s273 + $0x28] sm:$0xc]
      %v1249 = vld [vmem:[%s273 + $0x2c] sm:$0x3]
      %v1250 = vld [vmem:[%s273 + $0x40] sm:$0xc]
      %v1251 = vld [vmem:[%s273 + $0x44] sm:$0x3]
      %v1252 = vld [vmem:[%s273 + $0x58] sm:$0xc]
      %v1253 = vld [vmem:[%s273 + $0x5c] sm:$0x3]
      %v1254 = vld [vmem:[%s273 + $0x70] sm:$0xc]
      %v1255 = vld [vmem:[%s273 + $0x74] sm:$0x3]
      %v1256 = vld [vmem:[%s273 + $0x88] sm:$0xc]
      %v1257 = vld [vmem:[%s273 + $0x8c] sm:$0x3]
      %v1258 = vld [vmem:[%s273 + $0xa0] sm:$0xc]
      %v1259 = vld [vmem:[%s273 + $0xa4] sm:$0x3]
      %v1260 = vld [vmem:[%s273 + $0xb8] sm:$0xc]
      %v1261 = vld [vmem:[%s273 + $0xbc] sm:$0x3]
      %v1262 = vld [vmem:[%s273 + $0x1c0] sm:$0xc]
      %v1263 = vld [vmem:[%s273 + $0x1c4] sm:$0x3]
      %v1264 = vld [vmem:[%s273 + $0x1d8] sm:$0xc]
      %v1265 = vld [vmem:[%s273 + $0x1dc] sm:$0x3]
      %v1266 = vld [vmem:[%s273 + $0x1f0] sm:$0xc]
      %v1267 = vld [vmem:[%s273 + $0x1f4] sm:$0x3]
      %v1268 = vld [vmem:[%s273 + $0x208] sm:$0xc]
      %v1269 = vld [vmem:[%s273 + $0x20c] sm:$0x3]
      %v1270 = vld [vmem:[%s273 + $0x220] sm:$0xc]
      %v1271 = vld [vmem:[%s273 + $0x224] sm:$0x3]
      %v1272 = vld [vmem:[%s273 + $0x238] sm:$0xc]
      %v1273 = vld [vmem:[%s273 + $0x23c] sm:$0x3]
      %v1274 = vld [vmem:[%s273 + $0x250] sm:$0xc]
      %v1275 = vld [vmem:[%s273 + $0x254] sm:$0x3]
      %v1276 = vld [vmem:[%s273 + $0x268] sm:$0xc]
      %v1277 = vld [vmem:[%s273 + $0x26c] sm:$0x3]
      %v1278 = vld [vmem:[%s273 + $0x370] sm:$0xc]
      %v1279 = vld [vmem:[%s273 + $0x374] sm:$0x3]
      %v1280 = vld [vmem:[%s273 + $0x388] sm:$0xc]
      %v1281 = vld [vmem:[%s273 + $0x38c] sm:$0x3]
      %v1282 = vld [vmem:[%s273 + $0x3a0] sm:$0xc]
      %v1283 = vld [vmem:[%s273 + $0x3a4] sm:$0x3]
      %v1284 = vld [vmem:[%s273 + $0x3b8] sm:$0xc]
      %v1285 = vld [vmem:[%s273 + $0x3bc] sm:$0x3]
      %v1286 = vld [vmem:[%s273 + $0x3d0] sm:$0xc]
      %v1287 = vld [vmem:[%s273 + $0x3d4] sm:$0x3]
      %v1288 = vld [vmem:[%s273 + $0x3e8] sm:$0xc]
      %v1289 = vld [vmem:[%s273 + $0x3ec] sm:$0x3]
      %v1290 = vld [vmem:[%s273 + $0x400] sm:$0xc]
      %v1291 = vld [vmem:[%s273 + $0x404] sm:$0x3]
      %v1292 = vld [vmem:[%s273 + $0x418] sm:$0xc]
      %v1293 = vld [vmem:[%s273 + $0x41c] sm:$0x3]
      %vm1342 = vcmask 1041408
      %vm1343 = vcmask 1045508
      %vm1344 = vmor %vm1342, %vm1343
      %v1345 = vrot.slane %v1246, 6
      %v1346 = vrot.slane %v1345, 4
      %v1347 = vrot.slane %v1247, 6
      %v1348 = vsel %vm1344, %v1346, %v1347
      %v1349 = vrot.slane %v1248, 6
      %v1350 = vrot.slane %v1349, 4
      %v1351 = vrot.slane %v1249, 6
      %v1352 = vsel %vm1344, %v1350, %v1351
      %v1353 = vrot.slane %v1250, 6
      %v1354 = vrot.slane %v1353, 4
      %v1355 = vrot.slane %v1251, 6
      %v1356 = vsel %vm1344, %v1354, %v1355
      %v1357 = vrot.slane %v1252, 6
      %v1358 = vrot.slane %v1357, 4
      %v1359 = vrot.slane %v1253, 6
      %v1360 = vsel %vm1344, %v1358, %v1359
      %v1361 = vrot.slane %v1254, 6
      %v1362 = vrot.slane %v1361, 4
      %v1363 = vrot.slane %v1255, 6
      %v1364 = vsel %vm1344, %v1362, %v1363
      %v1365 = vrot.slane %v1256, 6
      %v1366 = vrot.slane %v1365, 4
      %v1367 = vrot.slane %v1257, 6
      %v1368 = vsel %vm1344, %v1366, %v1367
      %v1369 = vrot.slane %v1258, 6
      %v1370 = vrot.slane %v1369, 4
      %v1371 = vrot.slane %v1259, 6
      %v1372 = vsel %vm1344, %v1370, %v1371
      %v1373 = vrot.slane %v1260, 6
      %v1374 = vrot.slane %v1373, 4
      %v1375 = vrot.slane %v1261, 6
      %v1376 = vsel %vm1344, %v1374, %v1375
      %v1377 = vrot.slane %v1262, 6
      %v1378 = vrot.slane %v1377, 4
      %v1379 = vrot.slane %v1263, 6
      %v1380 = vsel %vm1344, %v1378, %v1379
      %v1381 = vrot.slane %v1264, 6
      %v1382 = vrot.slane %v1381, 4
      %v1383 = vrot.slane %v1265, 6
      %v1384 = vsel %vm1344, %v1382, %v1383
      %v1385 = vrot.slane %v1266, 6
      %v1386 = vrot.slane %v1385, 4
      %v1387 = vrot.slane %v1267, 6
      %v1388 = vsel %vm1344, %v1386, %v1387
      %v1389 = vrot.slane %v1268, 6
      %v1390 = vrot.slane %v1389, 4
      %v1391 = vrot.slane %v1269, 6
      %v1392 = vsel %vm1344, %v1390, %v1391
      %v1393 = vrot.slane %v1270, 6
      %v1394 = vrot.slane %v1393, 4
      %v1395 = vrot.slane %v1271, 6
      %v1396 = vsel %vm1344, %v1394, %v1395
      %v1397 = vrot.slane %v1272, 6
      %v1398 = vrot.slane %v1397, 4
      %v1399 = vrot.slane %v1273, 6
      %v1400 = vsel %vm1344, %v1398, %v1399
      %v1401 = vrot.slane %v1274, 6
      %v1402 = vrot.slane %v1401, 4
      %v1403 = vrot.slane %v1275, 6
      %v1404 = vsel %vm1344, %v1402, %v1403
      %v1405 = vrot.slane %v1276, 6
      %v1406 = vrot.slane %v1405, 4
      %v1407 = vrot.slane %v1277, 6
      %v1408 = vsel %vm1344, %v1406, %v1407
      %v1409 = vrot.slane %v1278, 6
      %v1410 = vrot.slane %v1409, 4
      %v1411 = vrot.slane %v1279, 6
      %v1412 = vsel %vm1344, %v1410, %v1411
      %v1413 = vrot.slane %v1280, 6
      %v1414 = vrot.slane %v1413, 4
      %v1415 = vrot.slane %v1281, 6
      %v1416 = vsel %vm1344, %v1414, %v1415
      %v1417 = vrot.slane %v1282, 6
      %v1418 = vrot.slane %v1417, 4
      %v1419 = vrot.slane %v1283, 6
      %v1420 = vsel %vm1344, %v1418, %v1419
      %v1421 = vrot.slane %v1284, 6
      %v1422 = vrot.slane %v1421, 4
      %v1423 = vrot.slane %v1285, 6
      %v1424 = vsel %vm1344, %v1422, %v1423
      %v1425 = vrot.slane %v1286, 6
      %v1426 = vrot.slane %v1425, 4
      %v1427 = vrot.slane %v1287, 6
      %v1428 = vsel %vm1344, %v1426, %v1427
      %v1429 = vrot.slane %v1288, 6
      %v1430 = vrot.slane %v1429, 4
      %v1431 = vrot.slane %v1289, 6
      %v1432 = vsel %vm1344, %v1430, %v1431
      %v1433 = vrot.slane %v1290, 6
      %v1434 = vrot.slane %v1433, 4
      %v1435 = vrot.slane %v1291, 6
      %v1436 = vsel %vm1344, %v1434, %v1435
      %v1437 = vrot.slane %v1292, 6
      %v1438 = vrot.slane %v1437, 4
      %v1439 = vrot.slane %v1293, 6
      %v1440 = vsel %vm1344, %v1438, %v1439
      %s1441 = scalar_lea.vmem %s281, 32
      %v1442 = vld [vmem:[%s1441] sm:$0xf]
      %v1443 = vld [vmem:[%s1441 + $0x4] sm:$0xf]
      %v1444 = vld [vmem:[%s1441 + $0x8] sm:$0xf]
      %v1445 = vld [vmem:[%s1441 + $0xc] sm:$0xf]
      %v1446 = vunpack.c.l.b16 %v1348
      %v1447 = vunpack.c.l.b16 %v1352
      %v1448 = vunpack.c.l.b16 %v1356
      %v1449 = vunpack.c.l.b16 %v1360
      %v1450 = vunpack.c.l.b16 %v1364
      %v1451 = vunpack.c.l.b16 %v1368
      %v1452 = vunpack.c.l.b16 %v1372
      %v1453 = vunpack.c.l.b16 %v1376
      %v1454 = vpack.c.b16 %v1447, %v1446
      %v1455 = vpack.c.b16 %v1449, %v1448
      %v1456 = vpack.c.b16 %v1451, %v1450
      %v1457 = vpack.c.b16 %v1453, %v1452
      %v1462 = vunpack.c.l.b16 %v1442
      %v1463 = vunpack.c.l.b16 %v1443
      %v1464 = vunpack.c.l.b16 %v1444
      %v1465 = vunpack.c.l.b16 %v1445
      %v1466 = vpack.c.b16 %v1463, %v1462
      %v1467 = vpack.c.b16 %v1465, %v1464
      %v1471 = vsel %vm379, %v1454, 0
      %v1474 = vsel %vm379, %v1455, 0
      %v1477 = vsel %vm379, %v1456, 0
      %v1480 = vsel %vm379, %v1457, 0
      %1482 = vmatprep.subr.bf16.mxu0 0
      %1483 = vmatpush1.bf16.msra.mxu0 %v1466
      %1484 = vmatprep.subr.bf16.mxu0 0
      %1485 = vmatpush1.bf16.msra.mxu0 %v1467
      %1486 = vmatprep.subr.bf16.mxu0 0
      %1487 = vmatpush1.bf16.msra.mxu0 0
      %1488 = vmatprep.subr.bf16.mxu0 0
      %1489 = vmatpush1.bf16.msra.mxu0 0
      %1490 = vmatprep.subr.bf16.mxu0 0
      %1491 = vmatpush1.bf16.msra.mxu0 0
      %1492 = vmatprep.subr.bf16.mxu0 0
      %1493 = vmatpush1.bf16.msra.mxu0 0
      %1494 = vmatprep.subr.bf16.mxu0 0
      %1495 = vmatpush1.bf16.msra.mxu0 0
      %1496 = vmatprep.subr.bf16.mxu0 0
      %1497 = vmatpush1.bf16.msra.mxu0 0
      %1498 = vmatprep.subr.bf16.mxu0 0
      %1499 = vmatpush1.bf16.msra.mxu0 0
      %1500 = vmatprep.subr.bf16.mxu0 0
      %1501 = vmatpush1.bf16.msra.mxu0 0
      %1502 = vmatprep.subr.bf16.mxu0 0
      %1503 = vmatpush1.bf16.msra.mxu0 0
      %1504 = vmatprep.subr.bf16.mxu0 0
      %1505 = vmatpush1.bf16.msra.mxu0 0
      %1506 = vmatprep.subr.bf16.mxu0 0
      %1507 = vmatpush1.bf16.msra.mxu0 0
      %1508 = vmatprep.subr.bf16.mxu0 0
      %1509 = vmatpush1.bf16.msra.mxu0 0
      %1510 = vmatprep.subr.bf16.mxu0 0
      %1511 = vmatpush1.bf16.msra.mxu0 0
      %1512 = vmatprep.subr.bf16.mxu0 0
      %1513 = vmatpush1.bf16.msra.mxu0 0
      %1514 = vmatprep.mubr.bf16.mxu0 0
      %1515 = vmatmul.mubr.bf16.gmra.mrb[0].mxu0 %v1471
      %v1516 = vpop.f32.mrb[0].mxu0
      %v1517 = vadd.f32 0.0, %v1516
      %v1518 = vpop.f32.mrb[0].mxu0
      %v1519 = vpop.f32.mrb[0].mxu0
      %v1520 = vadd.f32 0.0, %v1519
      %v1521 = vpop.f32.mrb[0].mxu0
      %1522 = vmatprep.mubr.bf16.mxu0 0
      %1523 = vmatmul.mubr.bf16.gmra.mrb[0].mxu0 %v1474
      %v1524 = vpop.f32.mrb[0].mxu0
      %v1525 = vadd.f32 0.0, %v1524
      %v1526 = vpop.f32.mrb[0].mxu0
      %v1527 = vpop.f32.mrb[0].mxu0
      %v1528 = vadd.f32 0.0, %v1527
      %v1529 = vpop.f32.mrb[0].mxu0
      %1530 = vmatprep.mubr.bf16.mxu0 0
      %1531 = vmatmul.mubr.bf16.gmra.mrb[0].mxu0 %v1477
      %v1532 = vpop.f32.mrb[0].mxu0
      %v1533 = vadd.f32 0.0, %v1532
      %v1534 = vpop.f32.mrb[0].mxu0
      %v1535 = vpop.f32.mrb[0].mxu0
      %v1536 = vadd.f32 0.0, %v1535
      %v1537 = vpop.f32.mrb[0].mxu0
      %1538 = vmatprep.mubr.bf16.mxu0 0
      %1539 = vmatmul.mubr.bf16.gmra.mrb[0].mxu0 %v1480
      %v1540 = vpop.f32.mrb[0].mxu0
      %v1541 = vadd.f32 0.0, %v1540
      %v1542 = vpop.f32.mrb[0].mxu0
      %v1543 = vpop.f32.mrb[0].mxu0
      %v1544 = vadd.f32 0.0, %v1543
      %v1545 = vpop.f32.mrb[0].mxu0
      %1546 = vdwg.mxu0
      %v1547 = vadd.f32 %v1238, %v1517
      %v1548 = vadd.f32 %v1239, %v1520
      %v1549 = vadd.f32 %v1240, %v1525
      %v1550 = vadd.f32 %v1241, %v1528
      %v1551 = vadd.f32 %v1242, %v1533
      %v1552 = vadd.f32 %v1243, %v1536
      %v1553 = vadd.f32 %v1244, %v1541
      %v1554 = vadd.f32 %v1245, %v1544
      %s1555 = scalar_lea.vmem %s281, 80
      %v1556 = vld [vmem:[%s1555] sm:$0xf]
      %v1557 = vld [vmem:[%s1555 + $0x4] sm:$0xf]
      %v1558 = vld [vmem:[%s1555 + $0x8] sm:$0xf]
      %v1559 = vld [vmem:[%s1555 + $0xc] sm:$0xf]
      %v1560 = vunpack.c.l.b16 %v1380
      %v1561 = vunpack.c.l.b16 %v1384
      %v1562 = vunpack.c.l.b16 %v1388
      %v1563 = vunpack.c.l.b16 %v1392
      %v1564 = vunpack.c.l.b16 %v1396
      %v1565 = vunpack.c.l.b16 %v1400
      %v1566 = vunpack.c.l.b16 %v1404
      %v1567 = vunpack.c.l.b16 %v1408
      %v1568 = vpack.c.b16 %v1561, %v1560
      %v1569 = vpack.c.b16 %v1563, %v1562
      %v1570 = vpack.c.b16 %v1565, %v1564
      %v1571 = vpack.c.b16 %v1567, %v1566
      %v1576 = vunpack.c.l.b16 %v1556
      %v1577 = vunpack.c.l.b16 %v1557
      %v1578 = vunpack.c.l.b16 %v1558
      %v1579 = vunpack.c.l.b16 %v1559
      %v1580 = vpack.c.b16 %v1577, %v1576
      %v1581 = vpack.c.b16 %v1579, %v1578
      %v1585 = vsel %vm379, %v1568, 0
      %v1588 = vsel %vm379, %v1569, 0
      %v1591 = vsel %vm379, %v1570, 0
      %v1594 = vsel %vm379, %v1571, 0
      %1596 = vmatprep.subr.bf16.mxu0 0
      %1597 = vmatpush1.bf16.msra.mxu0 %v1580
      %1598 = vmatprep.subr.bf16.mxu0 0
      %1599 = vmatpush1.bf16.msra.mxu0 %v1581
      %1600 = vmatprep.subr.bf16.mxu0 0
      %1601 = vmatpush1.bf16.msra.mxu0 0
      %1602 = vmatprep.subr.bf16.mxu0 0
      %1603 = vmatpush1.bf16.msra.mxu0 0
      %1604 = vmatprep.subr.bf16.mxu0 0
      %1605 = vmatpush1.bf16.msra.mxu0 0
      %1606 = vmatprep.subr.bf16.mxu0 0
      %1607 = vmatpush1.bf16.msra.mxu0 0
      %1608 = vmatprep.subr.bf16.mxu0 0
      %1609 = vmatpush1.bf16.msra.mxu0 0
      %1610 = vmatprep.subr.bf16.mxu0 0
      %1611 = vmatpush1.bf16.msra.mxu0 0
      %1612 = vmatprep.subr.bf16.mxu0 0
      %1613 = vmatpush1.bf16.msra.mxu0 0
      %1614 = vmatprep.subr.bf16.mxu0 0
      %1615 = vmatpush1.bf16.msra.mxu0 0
      %1616 = vmatprep.subr.bf16.mxu0 0
      %1617 = vmatpush1.bf16.msra.mxu0 0
      %1618 = vmatprep.subr.bf16.mxu0 0
      %1619 = vmatpush1.bf16.msra.mxu0 0
      %1620 = vmatprep.subr.bf16.mxu0 0
      %1621 = vmatpush1.bf16.msra.mxu0 0
      %1622 = vmatprep.subr.bf16.mxu0 0
      %1623 = vmatpush1.bf16.msra.mxu0 0
      %1624 = vmatprep.subr.bf16.mxu0 0
      %1625 = vmatpush1.bf16.msra.mxu0 0
      %1626 = vmatprep.subr.bf16.mxu0 0
      %1627 = vmatpush1.bf16.msra.mxu0 0
      %1628 = vmatprep.mubr.bf16.mxu0 0
      %1629 = vmatmul.mubr.bf16.gmra.mrb[0].mxu0 %v1585
      %v1630 = vpop.f32.mrb[0].mxu0
      %v1631 = vadd.f32 0.0, %v1630
      %v1632 = vpop.f32.mrb[0].mxu0
      %v1633 = vpop.f32.mrb[0].mxu0
      %v1634 = vadd.f32 0.0, %v1633
      %v1635 = vpop.f32.mrb[0].mxu0
      %1636 = vmatprep.mubr.bf16.mxu0 0
      %1637 = vmatmul.mubr.bf16.gmra.mrb[0].mxu0 %v1588
      %v1638 = vpop.f32.mrb[0].mxu0
      %v1639 = vadd.f32 0.0, %v1638
      %v1640 = vpop.f32.mrb[0].mxu0
      %v1641 = vpop.f32.mrb[0].mxu0
      %v1642 = vadd.f32 0.0, %v1641
      %v1643 = vpop.f32.mrb[0].mxu0
      %1644 = vmatprep.mubr.bf16.mxu0 0
      %1645 = vmatmul.mubr.bf16.gmra.mrb[0].mxu0 %v1591
      %v1646 = vpop.f32.mrb[0].mxu0
      %v1647 = vadd.f32 0.0, %v1646
      %v1648 = vpop.f32.mrb[0].mxu0
      %v1649 = vpop.f32.mrb[0].mxu0
      %v1650 = vadd.f32 0.0, %v1649
      %v1651 = vpop.f32.mrb[0].mxu0
      %1652 = vmatprep.mubr.bf16.mxu0 0
      %1653 = vmatmul.mubr.bf16.gmra.mrb[0].mxu0 %v1594
      %v1654 = vpop.f32.mrb[0].mxu0
      %v1655 = vadd.f32 0.0, %v1654
      %v1656 = vpop.f32.mrb[0].mxu0
      %v1657 = vpop.f32.mrb[0].mxu0
      %v1658 = vadd.f32 0.0, %v1657
      %v1659 = vpop.f32.mrb[0].mxu0
      %1660 = vdwg.mxu0
      %v1661 = vadd.f32 %v1547, %v1631
      %v1662 = vadd.f32 %v1548, %v1634
      %v1663 = vadd.f32 %v1549, %v1639
      %v1664 = vadd.f32 %v1550, %v1642
      %v1665 = vadd.f32 %v1551, %v1647
      %v1666 = vadd.f32 %v1552, %v1650
      %v1667 = vadd.f32 %v1553, %v1655
      %v1668 = vadd.f32 %v1554, %v1658
      %s1669 = scalar_lea.vmem %s281, 128
      %v1670 = vld [vmem:[%s1669] sm:$0xf]
      %v1671 = vld [vmem:[%s1669 + $0x4] sm:$0xf]
      %v1672 = vld [vmem:[%s1669 + $0x8] sm:$0xf]
      %v1673 = vld [vmem:[%s1669 + $0xc] sm:$0xf]
      %v1674 = vunpack.c.l.b16 %v1412
      %v1675 = vunpack.c.l.b16 %v1416
      %v1676 = vunpack.c.l.b16 %v1420
      %v1677 = vunpack.c.l.b16 %v1424
      %v1678 = vunpack.c.l.b16 %v1428
      %v1679 = vunpack.c.l.b16 %v1432
      %v1680 = vunpack.c.l.b16 %v1436
      %v1681 = vunpack.c.l.b16 %v1440
      %v1682 = vpack.c.b16 %v1675, %v1674
      %v1683 = vpack.c.b16 %v1677, %v1676
      %v1684 = vpack.c.b16 %v1679, %v1678
      %v1685 = vpack.c.b16 %v1681, %v1680
      %v1690 = vunpack.c.l.b16 %v1670
      %v1691 = vunpack.c.l.b16 %v1671
      %v1692 = vunpack.c.l.b16 %v1672
      %v1693 = vunpack.c.l.b16 %v1673
      %v1694 = vpack.c.b16 %v1691, %v1690
      %v1695 = vpack.c.b16 %v1693, %v1692
      %v1699 = vsel %vm379, %v1682, 0
      %v1702 = vsel %vm379, %v1683, 0
      %v1705 = vsel %vm379, %v1684, 0
      %v1708 = vsel %vm379, %v1685, 0
      %1710 = vmatprep.subr.bf16.mxu0 0
      %1711 = vmatpush1.bf16.msra.mxu0 %v1694
      %1712 = vmatprep.subr.bf16.mxu0 0
      %1713 = vmatpush1.bf16.msra.mxu0 %v1695
      %1714 = vmatprep.subr.bf16.mxu0 0
      %1715 = vmatpush1.bf16.msra.mxu0 0
      %1716 = vmatprep.subr.bf16.mxu0 0
      %1717 = vmatpush1.bf16.msra.mxu0 0
      %1718 = vmatprep.subr.bf16.mxu0 0
      %1719 = vmatpush1.bf16.msra.mxu0 0
      %1720 = vmatprep.subr.bf16.mxu0 0
      %1721 = vmatpush1.bf16.msra.mxu0 0
      %1722 = vmatprep.subr.bf16.mxu0 0
      %1723 = vmatpush1.bf16.msra.mxu0 0
      %1724 = vmatprep.subr.bf16.mxu0 0
      %1725 = vmatpush1.bf16.msra.mxu0 0
      %1726 = vmatprep.subr.bf16.mxu0 0
      %1727 = vmatpush1.bf16.msra.mxu0 0
      %1728 = vmatprep.subr.bf16.mxu0 0
      %1729 = vmatpush1.bf16.msra.mxu0 0
      %1730 = vmatprep.subr.bf16.mxu0 0
      %1731 = vmatpush1.bf16.msra.mxu0 0
      %1732 = vmatprep.subr.bf16.mxu0 0
      %1733 = vmatpush1.bf16.msra.mxu0 0
      %1734 = vmatprep.subr.bf16.mxu0 0
      %1735 = vmatpush1.bf16.msra.mxu0 0
      %1736 = vmatprep.subr.bf16.mxu0 0
      %1737 = vmatpush1.bf16.msra.mxu0 0
      %1738 = vmatprep.subr.bf16.mxu0 0
      %1739 = vmatpush1.bf16.msra.mxu0 0
      %1740 = vmatprep.subr.bf16.mxu0 0
      %1741 = vmatpush1.bf16.msra.mxu0 0
      %1742 = vmatprep.mubr.bf16.mxu0 0
      %1743 = vmatmul.mubr.bf16.gmra.mrb[0].mxu0 %v1699
      %v1744 = vpop.f32.mrb[0].mxu0
      %v1745 = vadd.f32 0.0, %v1744
      %v1746 = vpop.f32.mrb[0].mxu0
      %v1747 = vpop.f32.mrb[0].mxu0
      %v1748 = vadd.f32 0.0, %v1747
      %v1749 = vpop.f32.mrb[0].mxu0
      %1750 = vmatprep.mubr.bf16.mxu0 0
      %1751 = vmatmul.mubr.bf16.gmra.mrb[0].mxu0 %v1702
      %v1752 = vpop.f32.mrb[0].mxu0
      %v1753 = vadd.f32 0.0, %v1752
      %v1754 = vpop.f32.mrb[0].mxu0
      %v1755 = vpop.f32.mrb[0].mxu0
      %v1756 = vadd.f32 0.0, %v1755
      %v1757 = vpop.f32.mrb[0].mxu0
      %1758 = vmatprep.mubr.bf16.mxu0 0
      %1759 = vmatmul.mubr.bf16.gmra.mrb[0].mxu0 %v1705
      %v1760 = vpop.f32.mrb[0].mxu0
      %v1761 = vadd.f32 0.0, %v1760
      %v1762 = vpop.f32.mrb[0].mxu0
      %v1763 = vpop.f32.mrb[0].mxu0
      %v1764 = vadd.f32 0.0, %v1763
      %v1765 = vpop.f32.mrb[0].mxu0
      %1766 = vmatprep.mubr.bf16.mxu0 0
      %1767 = vmatmul.mubr.bf16.gmra.mrb[0].mxu0 %v1708
      %v1768 = vpop.f32.mrb[0].mxu0
      %v1769 = vadd.f32 0.0, %v1768
      %v1770 = vpop.f32.mrb[0].mxu0
      %v1771 = vpop.f32.mrb[0].mxu0
      %v1772 = vadd.f32 0.0, %v1771
      %v1773 = vpop.f32.mrb[0].mxu0
      %1774 = vdwg.mxu0
      %v1775 = vadd.f32 %v1661, %v1745
      %v1776 = vadd.f32 %v1662, %v1748
      %v1777 = vadd.f32 %v1663, %v1753
      %v1778 = vadd.f32 %v1664, %v1756
      %v1779 = vadd.f32 %v1665, %v1761
      %v1780 = vadd.f32 %v1666, %v1764
      %v1781 = vadd.f32 %v1667, %v1769
      %v1782 = vadd.f32 %v1668, %v1772
      %vm1783 = vcmask 130048
      %1784 = vst.msk [vmem:[#allocation2] sm:$0xff] %vm1783, %v1775
      %1785 = vst.msk [vmem:[#allocation2 + $0x8] sm:$0xff] %vm1783, %v1776
      %1786 = vst.msk [vmem:[#allocation2 + $0x10] sm:$0xff] %vm1783, %v1777
      %1787 = vst.msk [vmem:[#allocation2 + $0x18] sm:$0xff] %vm1783, %v1778
      %1788 = vst.msk [vmem:[#allocation2 + $0x20] sm:$0xff] %vm1783, %v1779
      %1789 = vst.msk [vmem:[#allocation2 + $0x28] sm:$0xff] %vm1783, %v1780
      %1790 = vst.msk [vmem:[#allocation2 + $0x30] sm:$0xff] %vm1783, %v1781
      %1791 = vst.msk [vmem:[#allocation2 + $0x38] sm:$0xff] %vm1783, %v1782
      // Predicated region
      $region41: #{deeplabv3_forward.16} parent=35 // pred_check
        %p1792 = pneg %p298
      $region42: #{deeplabv3_forward.16} parent=35 // pred_check_branch
        %1794 = sbr.rel (%p1792) target = $region44
      $region43: #{deeplabv3_forward.16} parent=35 // pred_region
        %v1795 = vld [vmem:[#allocation2] sm:$0xff]
        %v1796 = vld [vmem:[#allocation2 + $0x8] sm:$0xff]
        %v1797 = vld [vmem:[#allocation2 + $0x10] sm:$0xff]
        %v1798 = vld [vmem:[#allocation2 + $0x18] sm:$0xff]
        %v1799 = vld [vmem:[#allocation2 + $0x20] sm:$0xff]
        %v1800 = vld [vmem:[#allocation2 + $0x28] sm:$0xff]
        %v1801 = vld [vmem:[#allocation2 + $0x30] sm:$0xff]
        %v1802 = vld [vmem:[#allocation2 + $0x38] sm:$0xff]
        %v1803 = vld [vmem:[%s285] sm:$0x1]
        %v1805 = vlaneseq
        %v1806 = vshrl.u32 %v1805, 7
        %v1807 = vsub.s32 0, %v1806
        %v1808 = vrot.slane %v1803, %v1807
        %v1810 = vmul.f32 %v1795, %v1808
        %v1811 = vmul.f32 %v1796, %v1808
        %v1812 = vmul.f32 %v1797, %v1808
        %v1813 = vmul.f32 %v1798, %v1808
        %v1814 = vmul.f32 %v1799, %v1808
        %v1815 = vmul.f32 %v1800, %v1808
        %v1816 = vmul.f32 %v1801, %v1808
        %v1817 = vmul.f32 %v1802, %v1808
        %v1818 = vld [vmem:[%s288] sm:$0x1]
        %v1820 = vlaneseq
        %v1821 = vshrl.u32 %v1820, 7
        %v1822 = vsub.s32 0, %v1821
        %v1823 = vrot.slane %v1818, %v1822
        %v1825 = vadd.f32 %v1810, %v1823
        %v1826 = vadd.f32 %v1811, %v1823
        %v1827 = vadd.f32 %v1812, %v1823
        %v1828 = vadd.f32 %v1813, %v1823
        %v1829 = vadd.f32 %v1814, %v1823
        %v1830 = vadd.f32 %v1815, %v1823
        %v1831 = vadd.f32 %v1816, %v1823
        %v1832 = vadd.f32 %v1817, %v1823
        %v1833 = vmax.f32 %v1825, 0.0
        %v1834 = vmax.f32 %v1826, 0.0
        %v1835 = vmax.f32 %v1827, 0.0
        %v1836 = vmax.f32 %v1828, 0.0
        %v1837 = vmax.f32 %v1829, 0.0
        %v1838 = vmax.f32 %v1830, 0.0
        %v1839 = vmax.f32 %v1831, 0.0
        %v1840 = vmax.f32 %v1832, 0.0
        %v1841 = vpack.c.bf16 %v1833, %v1833
        %v1842 = vpack.c.bf16 %v1834, %v1834
        %v1843 = vpack.c.bf16 %v1835, %v1835
        %v1844 = vpack.c.bf16 %v1836, %v1836
        %v1845 = vpack.c.bf16 %v1837, %v1837
        %v1846 = vpack.c.bf16 %v1838, %v1838
        %v1847 = vpack.c.bf16 %v1839, %v1839
        %v1848 = vpack.c.bf16 %v1840, %v1840
        %vm1849 = vcmask 125952
        %1850 = vst.msk [vmem:[%s296] sm:$0xf] %vm1849, %v1841
        %1851 = vst.msk [vmem:[%s296 + $0x4] sm:$0xf] %vm1849, %v1842
        %1852 = vst.msk [vmem:[%s296 + $0x8] sm:$0xf] %vm1849, %v1843
        %1853 = vst.msk [vmem:[%s296 + $0xc] sm:$0xf] %vm1849, %v1844
        %1854 = vst.msk [vmem:[%s296 + $0x10] sm:$0xf] %vm1849, %v1845
        %1855 = vst.msk [vmem:[%s296 + $0x14] sm:$0xf] %vm1849, %v1846
        %1856 = vst.msk [vmem:[%s296 + $0x18] sm:$0xf] %vm1849, %v1847
        %1857 = vst.msk [vmem:[%s296 + $0x1c] sm:$0xf] %vm1849, %v1848
      $region44: #{deeplabv3_forward.16} parent=35 // pred_fallthru
        _
      %p1858 = scmp.lt.s32.totalorder %s20, 1
      %s1859 = scalar_select %p1858, %s20, 1
      %p1860 = scmp.lt.s32.totalorder %s21, 0
      %s1861 = scalar_select %p1860, %s21, 0
      %s1862 = smul.addr %s1859, 8
      %s1863 = sadd.s32 %s1861, %s1862
      %s1864 = smul.addr %s1863, 4
      %s1865 = scalar_lea.vmem %s4, %s1864
      // Predicated region
      $region45: #{deeplabv3_forward.16} parent=35 // pred_check
        %p1866 = pneg %p162
      $region46: #{deeplabv3_forward.16} parent=35 // pred_check_branch
        %1868 = sbr.rel (%p1866) target = $region48
      $region47: #{deeplabv3_forward.16} parent=35 // pred_region
        _
      $region48: #{deeplabv3_forward.16} parent=35 // pred_fallthru
        _
    $region36: #{deeplabv3_forward.16} parent=5 // pred_fallthru
      _
    %p1869 = scmp.le.s32.totalorder 2, %s10
    // Predicated region
    $region49: #{deeplabv3_forward.16} parent=5 // pred_check
      %p1870 = pneg %p1869
    $region50: #{deeplabv3_forward.16} parent=5 // pred_check_branch
      %1872 = sbr.rel (%p1870) target = $region52
    $region51: #{deeplabv3_forward.16} parent=5 // pred_region
      %s1873 = ssub.s32 %s10, 2
      // Predicated region
      $region53: #{deeplabv3_forward.16} parent=51 // pred_check
        %p1874 = pneg %p168
      $region54: #{deeplabv3_forward.16} parent=51 // pred_check_branch
        %1876 = sbr.rel (%p1874) target = $region56
      $region55: #{deeplabv3_forward.16} parent=51 // pred_region
        %p1877 = scmp.lt.s32.totalorder %s23, 1
        %s1878 = scalar_select %p1877, %s23, 1
        %p1879 = scmp.lt.s32.totalorder %s24, 0
        %s1880 = scalar_select %p1879, %s24, 0
        %s1881 = smul.addr %s1878, 8
        %s1882 = sadd.s32 %s1880, %s1881
        %s1883 = smul.addr %s1882, 4
        %s1884 = scalar_lea.vmem %s4, %s1883
      $region56: #{deeplabv3_forward.16} parent=51 // pred_fallthru
        _
    $region52: #{deeplabv3_forward.16} parent=5 // pred_fallthru
      _
  $region6: #{deeplabv3_forward.16} parent=0 // loop_footer
    %s14 = sadd.s32 1, %s10
  $region7: #{deeplabv3_forward.16} parent=0 // loop_footer_branch
    %9 = sbr.rel target = $region3
  $region8: #{deeplabv3_forward.16} parent=0 // loop_exit
    _

// kernel: deeplabv3_forward.18
$region0: #{deeplabv3_forward.18}
  #allocation0 [shape = 'u32[]', space=smem, size = 0x4, offset = 0x4, fixed_abs, tag = 'smem constant byte address 0x4 - core index']
  #allocation1 [shape = 'u32[144,128]{1,0:T(1,128)}', space=vmem, size = 0x12000, scoped, tag = 'internal scratch']
  #allocation2 [shape = 'f32[8,16]{1,0:T(8,128)}', space=vmem, size = 0x1000, scoped, tag = 'scratch operand']
  %s0 = inlined_call_operand.vmem [shape: bf16[8,32], index: 0, kind: input, shape index: {}]
  %s1 = inlined_call_operand.vmem [shape: bf16[32,16], index: 1, kind: input, shape index: {}]
  %s2 = inlined_call_operand.vmem [shape: f32[1,16], index: 2, kind: input, shape index: {}]
  %s3 = inlined_call_operand.vmem [shape: f32[1,16], index: 3, kind: input, shape index: {}]
  %s4 = inlined_call_operand.vmem [shape: f32[8,16], index: 4, kind: output, shape index: {}]
  %s5 = sld [smem:[#allocation0]]
  $region34: #{deeplabv3_forward.18} parent=0
    _
  %s7 = ssub.s32 1, %s5
  %s8 = scalar_select 0, %s7, %s5
  // Predicated region
  $region2: #{deeplabv3_forward.18} parent=0 // pred_check
    _
  $region3: #{deeplabv3_forward.18} parent=0 // pred_check_branch
    %10 = sbr.rel (0) target = $region5
  $region4: #{deeplabv3_forward.18} parent=0 // pred_region
    _
  $region5: #{deeplabv3_forward.18} parent=0 // pred_fallthru
    _
  // Predicated region
  $region6: #{deeplabv3_forward.18} parent=0 // pred_check
    _
  $region7: #{deeplabv3_forward.18} parent=0 // pred_check_branch
    %12 = sbr.rel (0) target = $region9
  $region8: #{deeplabv3_forward.18} parent=0 // pred_region
    _
  $region9: #{deeplabv3_forward.18} parent=0 // pred_fallthru
    _
  // Predicated region
  $region10: #{deeplabv3_forward.18} parent=0 // pred_check
    _
  $region11: #{deeplabv3_forward.18} parent=0 // pred_check_branch
    %14 = sbr.rel (0) target = $region13
  $region12: #{deeplabv3_forward.18} parent=0 // pred_region
    _
  $region13: #{deeplabv3_forward.18} parent=0 // pred_fallthru
    _
  // Predicated region
  $region14: #{deeplabv3_forward.18} parent=0 // pred_check
    _
  $region15: #{deeplabv3_forward.18} parent=0 // pred_check_branch
    %16 = sbr.rel (0) target = $region17
  $region16: #{deeplabv3_forward.18} parent=0 // pred_region
    _
  $region17: #{deeplabv3_forward.18} parent=0 // pred_fallthru
    _
  %p18 = scmp.eq.s32.totalorder 0, 0
  // Predicated region
  $region18: #{deeplabv3_forward.18} parent=0 // pred_check
    %p19 = pneg %p18
  $region19: #{deeplabv3_forward.18} parent=0 // pred_check_branch
    %21 = sbr.rel (%p19) target = $region21
  $region20: #{deeplabv3_forward.18} parent=0 // pred_region
    %vm22 = vcmask 130048
    %23 = vst.msk [vmem:[#allocation2] sm:$0xff] %vm22, 0.0
  $region21: #{deeplabv3_forward.18} parent=0 // pred_fallthru
    _
  %v24 = vld [vmem:[#allocation2] sm:$0xff]
  %v25 = vld [vmem:[%s0] sm:$0xf]
  %v26 = vld [vmem:[%s1] sm:$0xf]
  %v27 = vld [vmem:[%s1 + $0x4] sm:$0xf]
  %v28 = vld [vmem:[%s1 + $0x8] sm:$0xf]
  %v29 = vld [vmem:[%s1 + $0xc] sm:$0xf]
  %v34 = vunpack.c.l.b16 %v26
  %v35 = vunpack.c.l.b16 %v27
  %v36 = vunpack.c.l.b16 %v28
  %v37 = vunpack.c.l.b16 %v29
  %v38 = vpack.c.b16 %v35, %v34
  %v39 = vpack.c.b16 %v37, %v36
  %vm42 = vcmask 261120
  %v44 = vsel %vm42, %v25, 0
  %46 = vmatprep.subr.bf16.mxu0 0
  %47 = vmatpush1.bf16.msra.mxu0 %v38
  %48 = vmatprep.subr.bf16.mxu0 0
  %49 = vmatpush1.bf16.msra.mxu0 %v39
  %50 = vmatprep.subr.bf16.mxu0 0
  %51 = vmatpush1.bf16.msra.mxu0 0
  %52 = vmatprep.subr.bf16.mxu0 0
  %53 = vmatpush1.bf16.msra.mxu0 0
  %54 = vmatprep.subr.bf16.mxu0 0
  %55 = vmatpush1.bf16.msra.mxu0 0
  %56 = vmatprep.subr.bf16.mxu0 0
  %57 = vmatpush1.bf16.msra.mxu0 0
  %58 = vmatprep.subr.bf16.mxu0 0
  %59 = vmatpush1.bf16.msra.mxu0 0
  %60 = vmatprep.subr.bf16.mxu0 0
  %61 = vmatpush1.bf16.msra.mxu0 0
  %62 = vmatprep.subr.bf16.mxu0 0
  %63 = vmatpush1.bf16.msra.mxu0 0
  %64 = vmatprep.subr.bf16.mxu0 0
  %65 = vmatpush1.bf16.msra.mxu0 0
  %66 = vmatprep.subr.bf16.mxu0 0
  %67 = vmatpush1.bf16.msra.mxu0 0
  %68 = vmatprep.subr.bf16.mxu0 0
  %69 = vmatpush1.bf16.msra.mxu0 0
  %70 = vmatprep.subr.bf16.mxu0 0
  %71 = vmatpush1.bf16.msra.mxu0 0
  %72 = vmatprep.subr.bf16.mxu0 0
  %73 = vmatpush1.bf16.msra.mxu0 0
  %74 = vmatprep.subr.bf16.mxu0 0
  %75 = vmatpush1.bf16.msra.mxu0 0
  %76 = vmatprep.subr.bf16.mxu0 0
  %77 = vmatpush1.bf16.msra.mxu0 0
  %78 = vmatprep.mubr.bf16.mxu0 0
  %79 = vmatmul.mubr.bf16.gmra.mrb[0].mxu0 %v44
  %v80 = vpop.f32.mrb[0].mxu0
  %v81 = vadd.f32 0.0, %v80
  %v82 = vpop.f32.mrb[0].mxu0
  %v83 = vpop.f32.mrb[0].mxu0
  %v84 = vpop.f32.mrb[0].mxu0
  %85 = vdwg.mxu0
  %v86 = vadd.f32 %v24, %v81
  %vm87 = vcmask 130048
  %88 = vst.msk [vmem:[#allocation2] sm:$0xff] %vm87, %v86
  // Predicated region
  $region22: #{deeplabv3_forward.18} parent=0 // pred_check
    %p89 = pneg %p18
  $region23: #{deeplabv3_forward.18} parent=0 // pred_check_branch
    %91 = sbr.rel (%p89) target = $region25
  $region24: #{deeplabv3_forward.18} parent=0 // pred_region
    %v92 = vld [vmem:[#allocation2] sm:$0xff]
    %v93 = vld [vmem:[%s2] sm:$0x1]
    %v95 = vlaneseq
    %v96 = vshrl.u32 %v95, 7
    %v97 = vsub.s32 0, %v96
    %v98 = vrot.slane %v93, %v97
    %v100 = vmul.f32 %v92, %v98
    %v101 = vld [vmem:[%s3] sm:$0x1]
    %v103 = vlaneseq
    %v104 = vshrl.u32 %v103, 7
    %v105 = vsub.s32 0, %v104
    %v106 = vrot.slane %v101, %v105
    %v108 = vadd.f32 %v100, %v106
    %v109 = vmax.f32 %v108, 0.0
    %110 = vst.msk [vmem:[%s4] sm:$0xff] %vm87, %v109
  $region25: #{deeplabv3_forward.18} parent=0 // pred_fallthru
    _
  // Predicated region
  $region26: #{deeplabv3_forward.18} parent=0 // pred_check
    _
  $region27: #{deeplabv3_forward.18} parent=0 // pred_check_branch
    %112 = sbr.rel (0) target = $region29
  $region28: #{deeplabv3_forward.18} parent=0 // pred_region
    _
  $region29: #{deeplabv3_forward.18} parent=0 // pred_fallthru
    _
  // Predicated region
  $region30: #{deeplabv3_forward.18} parent=0 // pred_check
    _
  $region31: #{deeplabv3_forward.18} parent=0 // pred_check_branch
    %114 = sbr.rel (0) target = $region33
  $region32: #{deeplabv3_forward.18} parent=0 // pred_region
    _
  $region33: #{deeplabv3_forward.18} parent=0 // pred_fallthru
    _

// kernel: deeplabv3_forward.19
$region0: #{deeplabv3_forward.19}
  #allocation0 [shape = 'u32[]', space=smem, size = 0x4, offset = 0x4, fixed_abs, tag = 'smem constant byte address 0x4 - core index']
  #allocation1 [shape = 'u32[144,128]{1,0:T(1,128)}', space=vmem, size = 0x12000, scoped, tag = 'internal scratch']
  #allocation2 [shape = 'f32[8,16]{1,0:T(8,128)}', space=vmem, size = 0x1000, scoped, tag = 'scratch operand']
  %s0 = inlined_call_operand.vmem [shape: bf16[8,16], index: 0, kind: input, shape index: {}]
  %s1 = inlined_call_operand.vmem [shape: bf16[16,16], index: 1, kind: input, shape index: {}]
  %s2 = inlined_call_operand.vmem [shape: f32[8,16], index: 2, kind: output, shape index: {}]
  %s3 = sld [smem:[#allocation0]]
  $region26: #{deeplabv3_forward.19} parent=0
    _
  %s5 = ssub.s32 1, %s3
  %s6 = scalar_select 0, %s5, %s3
  // Predicated region
  $region2: #{deeplabv3_forward.19} parent=0 // pred_check
    _
  $region3: #{deeplabv3_forward.19} parent=0 // pred_check_branch
    %8 = sbr.rel (0) target = $region5
  $region4: #{deeplabv3_forward.19} parent=0 // pred_region
    _
  $region5: #{deeplabv3_forward.19} parent=0 // pred_fallthru
    _
  // Predicated region
  $region6: #{deeplabv3_forward.19} parent=0 // pred_check
    _
  $region7: #{deeplabv3_forward.19} parent=0 // pred_check_branch
    %10 = sbr.rel (0) target = $region9
  $region8: #{deeplabv3_forward.19} parent=0 // pred_region
    _
  $region9: #{deeplabv3_forward.19} parent=0 // pred_fallthru
    _
  %p12 = scmp.eq.s32.totalorder 0, 0
  // Predicated region
  $region10: #{deeplabv3_forward.19} parent=0 // pred_check
    %p13 = pneg %p12
  $region11: #{deeplabv3_forward.19} parent=0 // pred_check_branch
    %15 = sbr.rel (%p13) target = $region13
  $region12: #{deeplabv3_forward.19} parent=0 // pred_region
    %vm16 = vcmask 130048
    %17 = vst.msk [vmem:[#allocation2] sm:$0xff] %vm16, 0.0
  $region13: #{deeplabv3_forward.19} parent=0 // pred_fallthru
    _
  %v18 = vld [vmem:[#allocation2] sm:$0xff]
  %v19 = vld [vmem:[%s0] sm:$0xf]
  %v20 = vld [vmem:[%s1] sm:$0xf]
  %v21 = vld [vmem:[%s1 + $0x4] sm:$0xf]
  %v24 = vunpack.c.l.b16 %v20
  %v25 = vunpack.c.l.b16 %v21
  %v26 = vpack.c.b16 %v25, %v24
  %vm28 = vcmask 130048
  %v30 = vsel %vm28, %v19, 0
  %32 = vmatprep.subr.bf16.mxu0 0
  %33 = vmatpush1.bf16.msra.mxu0 %v26
  %34 = vmatprep.subr.bf16.mxu0 0
  %35 = vmatpush1.bf16.msra.mxu0 0
  %36 = vmatprep.subr.bf16.mxu0 0
  %37 = vmatpush1.bf16.msra.mxu0 0
  %38 = vmatprep.subr.bf16.mxu0 0
  %39 = vmatpush1.bf16.msra.mxu0 0
  %40 = vmatprep.subr.bf16.mxu0 0
  %41 = vmatpush1.bf16.msra.mxu0 0
  %42 = vmatprep.subr.bf16.mxu0 0
  %43 = vmatpush1.bf16.msra.mxu0 0
  %44 = vmatprep.subr.bf16.mxu0 0
  %45 = vmatpush1.bf16.msra.mxu0 0
  %46 = vmatprep.subr.bf16.mxu0 0
  %47 = vmatpush1.bf16.msra.mxu0 0
  %48 = vmatprep.subr.bf16.mxu0 0
  %49 = vmatpush1.bf16.msra.mxu0 0
  %50 = vmatprep.subr.bf16.mxu0 0
  %51 = vmatpush1.bf16.msra.mxu0 0
  %52 = vmatprep.subr.bf16.mxu0 0
  %53 = vmatpush1.bf16.msra.mxu0 0
  %54 = vmatprep.subr.bf16.mxu0 0
  %55 = vmatpush1.bf16.msra.mxu0 0
  %56 = vmatprep.subr.bf16.mxu0 0
  %57 = vmatpush1.bf16.msra.mxu0 0
  %58 = vmatprep.subr.bf16.mxu0 0
  %59 = vmatpush1.bf16.msra.mxu0 0
  %60 = vmatprep.subr.bf16.mxu0 0
  %61 = vmatpush1.bf16.msra.mxu0 0
  %62 = vmatprep.subr.bf16.mxu0 0
  %63 = vmatpush1.bf16.msra.mxu0 0
  %64 = vmatprep.mubr.bf16.mxu0 0
  %65 = vmatmul.mubr.bf16.gmra.mrb[0].mxu0 %v30
  %v66 = vpop.f32.mrb[0].mxu0
  %v67 = vadd.f32 0.0, %v66
  %v68 = vpop.f32.mrb[0].mxu0
  %v69 = vpop.f32.mrb[0].mxu0
  %v70 = vpop.f32.mrb[0].mxu0
  %71 = vdwg.mxu0
  %v72 = vadd.f32 %v18, %v67
  %73 = vst.msk [vmem:[#allocation2] sm:$0xff] %vm28, %v72
  // Predicated region
  $region14: #{deeplabv3_forward.19} parent=0 // pred_check
    %p74 = pneg %p12
  $region15: #{deeplabv3_forward.19} parent=0 // pred_check_branch
    %76 = sbr.rel (%p74) target = $region17
  $region16: #{deeplabv3_forward.19} parent=0 // pred_region
    %v77 = vld [vmem:[#allocation2] sm:$0xff]
    %78 = vst.msk [vmem:[%s2] sm:$0xff] %vm28, %v77
  $region17: #{deeplabv3_forward.19} parent=0 // pred_fallthru
    _
  // Predicated region
  $region18: #{deeplabv3_forward.19} parent=0 // pred_check
    _
  $region19: #{deeplabv3_forward.19} parent=0 // pred_check_branch
    %80 = sbr.rel (0) target = $region21
  $region20: #{deeplabv3_forward.19} parent=0 // pred_region
    _
  $region21: #{deeplabv3_forward.19} parent=0 // pred_fallthru
    _
  // Predicated region
  $region22: #{deeplabv3_forward.19} parent=0 // pred_check
    _
  $region23: #{deeplabv3_forward.19} parent=0 // pred_check_branch
    %82 = sbr.rel (0) target = $region25
  $region24: #{deeplabv3_forward.19} parent=0 // pred_region
    _
  $region25: #{deeplabv3_forward.19} parent=0 // pred_fallthru
    _

// kernel: deeplabv3_forward.13
$region0: #{deeplabv3_forward.13}
  #allocation0 [shape = 'u32[]', space=smem, size = 0x4, offset = 0x4, fixed_abs, tag = 'smem constant byte address 0x4 - core index']
  #allocation1 [shape = 'u32[144,128]{1,0:T(1,128)}', space=vmem, size = 0x12000, scoped, tag = 'internal scratch']
  #allocation2 [shape = 'f32[128,16]{1,0:T(8,128)}', space=vmem, size = 0x10000, scoped, tag = 'scratch operand']
  %s0 = inlined_call_operand.vmem [shape: bf16[128,32], index: 0, kind: input, shape index: {}]
  %s1 = inlined_call_operand.vmem [shape: bf16[32,16], index: 1, kind: input, shape index: {}]
  %s2 = inlined_call_operand.vmem [shape: f32[1,16], index: 2, kind: input, shape index: {}]
  %s3 = inlined_call_operand.vmem [shape: f32[1,16], index: 3, kind: input, shape index: {}]
  %s4 = inlined_call_operand.vmem [shape: bf16[128,16], index: 4, kind: output, shape index: {}]
  %s5 = sld [smem:[#allocation0]]
  $region34: #{deeplabv3_forward.13} parent=0
    _
  %s7 = ssub.s32 1, %s5
  %s8 = scalar_select 0, %s7, %s5
  // Predicated region
  $region2: #{deeplabv3_forward.13} parent=0 // pred_check
    _
  $region3: #{deeplabv3_forward.13} parent=0 // pred_check_branch
    %10 = sbr.rel (0) target = $region5
  $region4: #{deeplabv3_forward.13} parent=0 // pred_region
    _
  $region5: #{deeplabv3_forward.13} parent=0 // pred_fallthru
    _
  // Predicated region
  $region6: #{deeplabv3_forward.13} parent=0 // pred_check
    _
  $region7: #{deeplabv3_forward.13} parent=0 // pred_check_branch
    %12 = sbr.rel (0) target = $region9
  $region8: #{deeplabv3_forward.13} parent=0 // pred_region
    _
  $region9: #{deeplabv3_forward.13} parent=0 // pred_fallthru
    _
  // Predicated region
  $region10: #{deeplabv3_forward.13} parent=0 // pred_check
    _
  $region11: #{deeplabv3_forward.13} parent=0 // pred_check_branch
    %14 = sbr.rel (0) target = $region13
  $region12: #{deeplabv3_forward.13} parent=0 // pred_region
    _
  $region13: #{deeplabv3_forward.13} parent=0 // pred_fallthru
    _
  // Predicated region
  $region14: #{deeplabv3_forward.13} parent=0 // pred_check
    _
  $region15: #{deeplabv3_forward.13} parent=0 // pred_check_branch
    %16 = sbr.rel (0) target = $region17
  $region16: #{deeplabv3_forward.13} parent=0 // pred_region
    _
  $region17: #{deeplabv3_forward.13} parent=0 // pred_fallthru
    _
  %p18 = scmp.eq.s32.totalorder 0, 0
  // Predicated region
  $region18: #{deeplabv3_forward.13} parent=0 // pred_check
    %p19 = pneg %p18
  $region19: #{deeplabv3_forward.13} parent=0 // pred_check_branch
    %21 = sbr.rel (%p19) target = $region21
  $region20: #{deeplabv3_forward.13} parent=0 // pred_region
    %vm22 = vcmask 130048
    %23 = vst.msk [vmem:[#allocation2] sm:$0xff] %vm22, 0.0
    %24 = vst.msk [vmem:[#allocation2 + $0x8] sm:$0xff] %vm22, 0.0
    %25 = vst.msk [vmem:[#allocation2 + $0x10] sm:$0xff] %vm22, 0.0
    %26 = vst.msk [vmem:[#allocation2 + $0x18] sm:$0xff] %vm22, 0.0
    %27 = vst.msk [vmem:[#allocation2 + $0x20] sm:$0xff] %vm22, 0.0
    %28 = vst.msk [vmem:[#allocation2 + $0x28] sm:$0xff] %vm22, 0.0
    %29 = vst.msk [vmem:[#allocation2 + $0x30] sm:$0xff] %vm22, 0.0
    %30 = vst.msk [vmem:[#allocation2 + $0x38] sm:$0xff] %vm22, 0.0
    %31 = vst.msk [vmem:[#allocation2 + $0x40] sm:$0xff] %vm22, 0.0
    %32 = vst.msk [vmem:[#allocation2 + $0x48] sm:$0xff] %vm22, 0.0
    %33 = vst.msk [vmem:[#allocation2 + $0x50] sm:$0xff] %vm22, 0.0
    %34 = vst.msk [vmem:[#allocation2 + $0x58] sm:$0xff] %vm22, 0.0
    %35 = vst.msk [vmem:[#allocation2 + $0x60] sm:$0xff] %vm22, 0.0
    %36 = vst.msk [vmem:[#allocation2 + $0x68] sm:$0xff] %vm22, 0.0
    %37 = vst.msk [vmem:[#allocation2 + $0x70] sm:$0xff] %vm22, 0.0
    %38 = vst.msk [vmem:[#allocation2 + $0x78] sm:$0xff] %vm22, 0.0
  $region21: #{deeplabv3_forward.13} parent=0 // pred_fallthru
    _
  %v39 = vld [vmem:[#allocation2] sm:$0xff]
  %v40 = vld [vmem:[#allocation2 + $0x8] sm:$0xff]
  %v41 = vld [vmem:[#allocation2 + $0x10] sm:$0xff]
  %v42 = vld [vmem:[#allocation2 + $0x18] sm:$0xff]
  %v43 = vld [vmem:[#allocation2 + $0x20] sm:$0xff]
  %v44 = vld [vmem:[#allocation2 + $0x28] sm:$0xff]
  %v45 = vld [vmem:[#allocation2 + $0x30] sm:$0xff]
  %v46 = vld [vmem:[#allocation2 + $0x38] sm:$0xff]
  %v47 = vld [vmem:[#allocation2 + $0x40] sm:$0xff]
  %v48 = vld [vmem:[#allocation2 + $0x48] sm:$0xff]
  %v49 = vld [vmem:[#allocation2 + $0x50] sm:$0xff]
  %v50 = vld [vmem:[#allocation2 + $0x58] sm:$0xff]
  %v51 = vld [vmem:[#allocation2 + $0x60] sm:$0xff]
  %v52 = vld [vmem:[#allocation2 + $0x68] sm:$0xff]
  %v53 = vld [vmem:[#allocation2 + $0x70] sm:$0xff]
  %v54 = vld [vmem:[#allocation2 + $0x78] sm:$0xff]
  %v55 = vld [vmem:[%s0] sm:$0xf]
  %v56 = vld [vmem:[%s0 + $0x4] sm:$0xf]
  %v57 = vld [vmem:[%s0 + $0x8] sm:$0xf]
  %v58 = vld [vmem:[%s0 + $0xc] sm:$0xf]
  %v59 = vld [vmem:[%s0 + $0x10] sm:$0xf]
  %v60 = vld [vmem:[%s0 + $0x14] sm:$0xf]
  %v61 = vld [vmem:[%s0 + $0x18] sm:$0xf]
  %v62 = vld [vmem:[%s0 + $0x1c] sm:$0xf]
  %v63 = vld [vmem:[%s0 + $0x20] sm:$0xf]
  %v64 = vld [vmem:[%s0 + $0x24] sm:$0xf]
  %v65 = vld [vmem:[%s0 + $0x28] sm:$0xf]
  %v66 = vld [vmem:[%s0 + $0x2c] sm:$0xf]
  %v67 = vld [vmem:[%s0 + $0x30] sm:$0xf]
  %v68 = vld [vmem:[%s0 + $0x34] sm:$0xf]
  %v69 = vld [vmem:[%s0 + $0x38] sm:$0xf]
  %v70 = vld [vmem:[%s0 + $0x3c] sm:$0xf]
  %v71 = vld [vmem:[%s1] sm:$0xf]
  %v72 = vld [vmem:[%s1 + $0x4] sm:$0xf]
  %v73 = vld [vmem:[%s1 + $0x8] sm:$0xf]
  %v74 = vld [vmem:[%s1 + $0xc] sm:$0xf]
  %v91 = vunpack.c.l.b16 %v55
  %v92 = vunpack.c.l.b16 %v56
  %v93 = vunpack.c.l.b16 %v57
  %v94 = vunpack.c.l.b16 %v58
  %v95 = vunpack.c.l.b16 %v59
  %v96 = vunpack.c.l.b16 %v60
  %v97 = vunpack.c.l.b16 %v61
  %v98 = vunpack.c.l.b16 %v62
  %v99 = vunpack.c.l.b16 %v63
  %v100 = vunpack.c.l.b16 %v64
  %v101 = vunpack.c.l.b16 %v65
  %v102 = vunpack.c.l.b16 %v66
  %v103 = vunpack.c.l.b16 %v67
  %v104 = vunpack.c.l.b16 %v68
  %v105 = vunpack.c.l.b16 %v69
  %v106 = vunpack.c.l.b16 %v70
  %v107 = vpack.c.b16 %v92, %v91
  %v108 = vpack.c.b16 %v94, %v93
  %v109 = vpack.c.b16 %v96, %v95
  %v110 = vpack.c.b16 %v98, %v97
  %v111 = vpack.c.b16 %v100, %v99
  %v112 = vpack.c.b16 %v102, %v101
  %v113 = vpack.c.b16 %v104, %v103
  %v114 = vpack.c.b16 %v106, %v105
  %v119 = vunpack.c.l.b16 %v71
  %v120 = vunpack.c.l.b16 %v72
  %v121 = vunpack.c.l.b16 %v73
  %v122 = vunpack.c.l.b16 %v74
  %v123 = vpack.c.b16 %v120, %v119
  %v124 = vpack.c.b16 %v122, %v121
  %vm127 = vcmask 261120
  %v129 = vsel %vm127, %v107, 0
  %v132 = vsel %vm127, %v108, 0
  %v135 = vsel %vm127, %v109, 0
  %v138 = vsel %vm127, %v110, 0
  %v141 = vsel %vm127, %v111, 0
  %v144 = vsel %vm127, %v112, 0
  %v147 = vsel %vm127, %v113, 0
  %v150 = vsel %vm127, %v114, 0
  %152 = vmatprep.subr.bf16.mxu0 0
  %153 = vmatpush1.bf16.msra.mxu0 %v123
  %154 = vmatprep.subr.bf16.mxu0 0
  %155 = vmatpush1.bf16.msra.mxu0 %v124
  %156 = vmatprep.subr.bf16.mxu0 0
  %157 = vmatpush1.bf16.msra.mxu0 0
  %158 = vmatprep.subr.bf16.mxu0 0
  %159 = vmatpush1.bf16.msra.mxu0 0
  %160 = vmatprep.subr.bf16.mxu0 0
  %161 = vmatpush1.bf16.msra.mxu0 0
  %162 = vmatprep.subr.bf16.mxu0 0
  %163 = vmatpush1.bf16.msra.mxu0 0
  %164 = vmatprep.subr.bf16.mxu0 0
  %165 = vmatpush1.bf16.msra.mxu0 0
  %166 = vmatprep.subr.bf16.mxu0 0
  %167 = vmatpush1.bf16.msra.mxu0 0
  %168 = vmatprep.subr.bf16.mxu0 0
  %169 = vmatpush1.bf16.msra.mxu0 0
  %170 = vmatprep.subr.bf16.mxu0 0
  %171 = vmatpush1.bf16.msra.mxu0 0
  %172 = vmatprep.subr.bf16.mxu0 0
  %173 = vmatpush1.bf16.msra.mxu0 0
  %174 = vmatprep.subr.bf16.mxu0 0
  %175 = vmatpush1.bf16.msra.mxu0 0
  %176 = vmatprep.subr.bf16.mxu0 0
  %177 = vmatpush1.bf16.msra.mxu0 0
  %178 = vmatprep.subr.bf16.mxu0 0
  %179 = vmatpush1.bf16.msra.mxu0 0
  %180 = vmatprep.subr.bf16.mxu0 0
  %181 = vmatpush1.bf16.msra.mxu0 0
  %182 = vmatprep.subr.bf16.mxu0 0
  %183 = vmatpush1.bf16.msra.mxu0 0
  %184 = vmatprep.mubr.bf16.mxu0 0
  %185 = vmatmul.mubr.bf16.gmra.mrb[0].mxu0 %v129
  %v186 = vpop.f32.mrb[0].mxu0
  %v187 = vadd.f32 0.0, %v186
  %v188 = vpop.f32.mrb[0].mxu0
  %v189 = vpop.f32.mrb[0].mxu0
  %v190 = vadd.f32 0.0, %v189
  %v191 = vpop.f32.mrb[0].mxu0
  %192 = vmatprep.mubr.bf16.mxu0 0
  %193 = vmatmul.mubr.bf16.gmra.mrb[0].mxu0 %v132
  %v194 = vpop.f32.mrb[0].mxu0
  %v195 = vadd.f32 0.0, %v194
  %v196 = vpop.f32.mrb[0].mxu0
  %v197 = vpop.f32.mrb[0].mxu0
  %v198 = vadd.f32 0.0, %v197
  %v199 = vpop.f32.mrb[0].mxu0
  %200 = vmatprep.mubr.bf16.mxu0 0
  %201 = vmatmul.mubr.bf16.gmra.mrb[0].mxu0 %v135
  %v202 = vpop.f32.mrb[0].mxu0
  %v203 = vadd.f32 0.0, %v202
  %v204 = vpop.f32.mrb[0].mxu0
  %v205 = vpop.f32.mrb[0].mxu0
  %v206 = vadd.f32 0.0, %v205
  %v207 = vpop.f32.mrb[0].mxu0
  %208 = vmatprep.mubr.bf16.mxu0 0
  %209 = vmatmul.mubr.bf16.gmra.mrb[0].mxu0 %v138
  %v210 = vpop.f32.mrb[0].mxu0
  %v211 = vadd.f32 0.0, %v210
  %v212 = vpop.f32.mrb[0].mxu0
  %v213 = vpop.f32.mrb[0].mxu0
  %v214 = vadd.f32 0.0, %v213
  %v215 = vpop.f32.mrb[0].mxu0
  %216 = vmatprep.mubr.bf16.mxu0 0
  %217 = vmatmul.mubr.bf16.gmra.mrb[0].mxu0 %v141
  %v218 = vpop.f32.mrb[0].mxu0
  %v219 = vadd.f32 0.0, %v218
  %v220 = vpop.f32.mrb[0].mxu0
  %v221 = vpop.f32.mrb[0].mxu0
  %v222 = vadd.f32 0.0, %v221
  %v223 = vpop.f32.mrb[0].mxu0
  %224 = vmatprep.mubr.bf16.mxu0 0
  %225 = vmatmul.mubr.bf16.gmra.mrb[0].mxu0 %v144
  %v226 = vpop.f32.mrb[0].mxu0
  %v227 = vadd.f32 0.0, %v226
  %v228 = vpop.f32.mrb[0].mxu0
  %v229 = vpop.f32.mrb[0].mxu0
  %v230 = vadd.f32 0.0, %v229
  %v231 = vpop.f32.mrb[0].mxu0
  %232 = vmatprep.mubr.bf16.mxu0 0
  %233 = vmatmul.mubr.bf16.gmra.mrb[0].mxu0 %v147
  %v234 = vpop.f32.mrb[0].mxu0
  %v235 = vadd.f32 0.0, %v234
  %v236 = vpop.f32.mrb[0].mxu0
  %v237 = vpop.f32.mrb[0].mxu0
  %v238 = vadd.f32 0.0, %v237
  %v239 = vpop.f32.mrb[0].mxu0
  %240 = vmatprep.mubr.bf16.mxu0 0
  %241 = vmatmul.mubr.bf16.gmra.mrb[0].mxu0 %v150
  %v242 = vpop.f32.mrb[0].mxu0
  %v243 = vadd.f32 0.0, %v242
  %v244 = vpop.f32.mrb[0].mxu0
  %v245 = vpop.f32.mrb[0].mxu0
  %v246 = vadd.f32 0.0, %v245
  %v247 = vpop.f32.mrb[0].mxu0
  %248 = vdwg.mxu0
  %v249 = vadd.f32 %v39, %v187
  %v250 = vadd.f32 %v40, %v190
  %v251 = vadd.f32 %v41, %v195
  %v252 = vadd.f32 %v42, %v198
  %v253 = vadd.f32 %v43, %v203
  %v254 = vadd.f32 %v44, %v206
  %v255 = vadd.f32 %v45, %v211
  %v256 = vadd.f32 %v46, %v214
  %v257 = vadd.f32 %v47, %v219
  %v258 = vadd.f32 %v48, %v222
  %v259 = vadd.f32 %v49, %v227
  %v260 = vadd.f32 %v50, %v230
  %v261 = vadd.f32 %v51, %v235
  %v262 = vadd.f32 %v52, %v238
  %v263 = vadd.f32 %v53, %v243
  %v264 = vadd.f32 %v54, %v246
  %vm265 = vcmask 130048
  %266 = vst.msk [vmem:[#allocation2] sm:$0xff] %vm265, %v249
  %267 = vst.msk [vmem:[#allocation2 + $0x8] sm:$0xff] %vm265, %v250
  %268 = vst.msk [vmem:[#allocation2 + $0x10] sm:$0xff] %vm265, %v251
  %269 = vst.msk [vmem:[#allocation2 + $0x18] sm:$0xff] %vm265, %v252
  %270 = vst.msk [vmem:[#allocation2 + $0x20] sm:$0xff] %vm265, %v253
  %271 = vst.msk [vmem:[#allocation2 + $0x28] sm:$0xff] %vm265, %v254
  %272 = vst.msk [vmem:[#allocation2 + $0x30] sm:$0xff] %vm265, %v255
  %273 = vst.msk [vmem:[#allocation2 + $0x38] sm:$0xff] %vm265, %v256
  %274 = vst.msk [vmem:[#allocation2 + $0x40] sm:$0xff] %vm265, %v257
  %275 = vst.msk [vmem:[#allocation2 + $0x48] sm:$0xff] %vm265, %v258
  %276 = vst.msk [vmem:[#allocation2 + $0x50] sm:$0xff] %vm265, %v259
  %277 = vst.msk [vmem:[#allocation2 + $0x58] sm:$0xff] %vm265, %v260
  %278 = vst.msk [vmem:[#allocation2 + $0x60] sm:$0xff] %vm265, %v261
  %279 = vst.msk [vmem:[#allocation2 + $0x68] sm:$0xff] %vm265, %v262
  %280 = vst.msk [vmem:[#allocation2 + $0x70] sm:$0xff] %vm265, %v263
  %281 = vst.msk [vmem:[#allocation2 + $0x78] sm:$0xff] %vm265, %v264
  // Predicated region
  $region22: #{deeplabv3_forward.13} parent=0 // pred_check
    %p282 = pneg %p18
  $region23: #{deeplabv3_forward.13} parent=0 // pred_check_branch
    %284 = sbr.rel (%p282) target = $region25
  $region24: #{deeplabv3_forward.13} parent=0 // pred_region
    %v285 = vld [vmem:[#allocation2] sm:$0xff]
    %v286 = vld [vmem:[#allocation2 + $0x8] sm:$0xff]
    %v287 = vld [vmem:[#allocation2 + $0x10] sm:$0xff]
    %v288 = vld [vmem:[#allocation2 + $0x18] sm:$0xff]
    %v289 = vld [vmem:[#allocation2 + $0x20] sm:$0xff]
    %v290 = vld [vmem:[#allocation2 + $0x28] sm:$0xff]
    %v291 = vld [vmem:[#allocation2 + $0x30] sm:$0xff]
    %v292 = vld [vmem:[#allocation2 + $0x38] sm:$0xff]
    %v293 = vld [vmem:[#allocation2 + $0x40] sm:$0xff]
    %v294 = vld [vmem:[#allocation2 + $0x48] sm:$0xff]
    %v295 = vld [vmem:[#allocation2 + $0x50] sm:$0xff]
    %v296 = vld [vmem:[#allocation2 + $0x58] sm:$0xff]
    %v297 = vld [vmem:[#allocation2 + $0x60] sm:$0xff]
    %v298 = vld [vmem:[#allocation2 + $0x68] sm:$0xff]
    %v299 = vld [vmem:[#allocation2 + $0x70] sm:$0xff]
    %v300 = vld [vmem:[#allocation2 + $0x78] sm:$0xff]
    %v301 = vld [vmem:[%s2] sm:$0x1]
    %v303 = vlaneseq
    %v304 = vshrl.u32 %v303, 7
    %v305 = vsub.s32 0, %v304
    %v306 = vrot.slane %v301, %v305
    %v308 = vmul.f32 %v285, %v306
    %v309 = vmul.f32 %v286, %v306
    %v310 = vmul.f32 %v287, %v306
    %v311 = vmul.f32 %v288, %v306
    %v312 = vmul.f32 %v289, %v306
    %v313 = vmul.f32 %v290, %v306
    %v314 = vmul.f32 %v291, %v306
    %v315 = vmul.f32 %v292, %v306
    %v316 = vmul.f32 %v293, %v306
    %v317 = vmul.f32 %v294, %v306
    %v318 = vmul.f32 %v295, %v306
    %v319 = vmul.f32 %v296, %v306
    %v320 = vmul.f32 %v297, %v306
    %v321 = vmul.f32 %v298, %v306
    %v322 = vmul.f32 %v299, %v306
    %v323 = vmul.f32 %v300, %v306
    %v324 = vld [vmem:[%s3] sm:$0x1]
    %v326 = vlaneseq
    %v327 = vshrl.u32 %v326, 7
    %v328 = vsub.s32 0, %v327
    %v329 = vrot.slane %v324, %v328
    %v331 = vadd.f32 %v308, %v329
    %v332 = vadd.f32 %v309, %v329
    %v333 = vadd.f32 %v310, %v329
    %v334 = vadd.f32 %v311, %v329
    %v335 = vadd.f32 %v312, %v329
    %v336 = vadd.f32 %v313, %v329
    %v337 = vadd.f32 %v314, %v329
    %v338 = vadd.f32 %v315, %v329
    %v339 = vadd.f32 %v316, %v329
    %v340 = vadd.f32 %v317, %v329
    %v341 = vadd.f32 %v318, %v329
    %v342 = vadd.f32 %v319, %v329
    %v343 = vadd.f32 %v320, %v329
    %v344 = vadd.f32 %v321, %v329
    %v345 = vadd.f32 %v322, %v329
    %v346 = vadd.f32 %v323, %v329
    %v347 = vmax.f32 %v331, 0.0
    %v348 = vmax.f32 %v332, 0.0
    %v349 = vmax.f32 %v333, 0.0
    %v350 = vmax.f32 %v334, 0.0
    %v351 = vmax.f32 %v335, 0.0
    %v352 = vmax.f32 %v336, 0.0
    %v353 = vmax.f32 %v337, 0.0
    %v354 = vmax.f32 %v338, 0.0
    %v355 = vmax.f32 %v339, 0.0
    %v356 = vmax.f32 %v340, 0.0
    %v357 = vmax.f32 %v341, 0.0
    %v358 = vmax.f32 %v342, 0.0
    %v359 = vmax.f32 %v343, 0.0
    %v360 = vmax.f32 %v344, 0.0
    %v361 = vmax.f32 %v345, 0.0
    %v362 = vmax.f32 %v346, 0.0
    %v363 = vpack.c.bf16 %v348, %v347
    %v364 = vpack.c.bf16 %v350, %v349
    %v365 = vpack.c.bf16 %v352, %v351
    %v366 = vpack.c.bf16 %v354, %v353
    %v367 = vpack.c.bf16 %v356, %v355
    %v368 = vpack.c.bf16 %v358, %v357
    %v369 = vpack.c.bf16 %v360, %v359
    %v370 = vpack.c.bf16 %v362, %v361
    %v379 = vunpack.c.l.b16 %v363
    %v380 = vunpack.c.h.b16 %v363
    %v381 = vunpack.c.l.b16 %v364
    %v382 = vunpack.c.h.b16 %v364
    %v383 = vunpack.c.l.b16 %v365
    %v384 = vunpack.c.h.b16 %v365
    %v385 = vunpack.c.l.b16 %v366
    %v386 = vunpack.c.h.b16 %v366
    %v387 = vunpack.c.l.b16 %v367
    %v388 = vunpack.c.h.b16 %v367
    %v389 = vunpack.c.l.b16 %v368
    %v390 = vunpack.c.h.b16 %v368
    %v391 = vunpack.c.l.b16 %v369
    %v392 = vunpack.c.h.b16 %v369
    %v393 = vunpack.c.l.b16 %v370
    %v394 = vunpack.c.h.b16 %v370
    %v395 = vpack.c.b16 %v379, %v379
    %v396 = vpack.c.b16 %v380, %v380
    %v397 = vpack.c.b16 %v381, %v381
    %v398 = vpack.c.b16 %v382, %v382
    %v399 = vpack.c.b16 %v383, %v383
    %v400 = vpack.c.b16 %v384, %v384
    %v401 = vpack.c.b16 %v385, %v385
    %v402 = vpack.c.b16 %v386, %v386
    %v403 = vpack.c.b16 %v387, %v387
    %v404 = vpack.c.b16 %v388, %v388
    %v405 = vpack.c.b16 %v389, %v389
    %v406 = vpack.c.b16 %v390, %v390
    %v407 = vpack.c.b16 %v391, %v391
    %v408 = vpack.c.b16 %v392, %v392
    %v409 = vpack.c.b16 %v393, %v393
    %v410 = vpack.c.b16 %v394, %v394
    %vm427 = vcmask 125952
    %428 = vst.msk [vmem:[%s4] sm:$0xf] %vm427, %v395
    %429 = vst.msk [vmem:[%s4 + $0x4] sm:$0xf] %vm427, %v396
    %430 = vst.msk [vmem:[%s4 + $0x8] sm:$0xf] %vm427, %v397
    %431 = vst.msk [vmem:[%s4 + $0xc] sm:$0xf] %vm427, %v398
    %432 = vst.msk [vmem:[%s4 + $0x10] sm:$0xf] %vm427, %v399
    %433 = vst.msk [vmem:[%s4 + $0x14] sm:$0xf] %vm427, %v400
    %434 = vst.msk [vmem:[%s4 + $0x18] sm:$0xf] %vm427, %v401
    %435 = vst.msk [vmem:[%s4 + $0x1c] sm:$0xf] %vm427, %v402
    %436 = vst.msk [vmem:[%s4 + $0x20] sm:$0xf] %vm427, %v403
    %437 = vst.msk [vmem:[%s4 + $0x24] sm:$0xf] %vm427, %v404
    %438 = vst.msk [vmem:[%s4 + $0x28] sm:$0xf] %vm427, %v405
    %439 = vst.msk [vmem:[%s4 + $0x2c] sm:$0xf] %vm427, %v406
    %440 = vst.msk [vmem:[%s4 + $0x30] sm:$0xf] %vm427, %v407
    %441 = vst.msk [vmem:[%s4 + $0x34] sm:$0xf] %vm427, %v408
    %442 = vst.msk [vmem:[%s4 + $0x38] sm:$0xf] %vm427, %v409
    %443 = vst.msk [vmem:[%s4 + $0x3c] sm:$0xf] %vm427, %v410
  $region25: #{deeplabv3_forward.13} parent=0 // pred_fallthru
    _
  // Predicated region
  $region26: #{deeplabv3_forward.13} parent=0 // pred_check
    _
  $region27: #{deeplabv3_forward.13} parent=0 // pred_check_branch
    %445 = sbr.rel (0) target = $region29
  $region28: #{deeplabv3_forward.13} parent=0 // pred_region
    _
  $region29: #{deeplabv3_forward.13} parent=0 // pred_fallthru
    _
  // Predicated region
  $region30: #{deeplabv3_forward.13} parent=0 // pred_check
    _
  $region31: #{deeplabv3_forward.13} parent=0 // pred_check_branch
    %447 = sbr.rel (0) target = $region33
  $region32: #{deeplabv3_forward.13} parent=0 // pred_region
    _
  $region33: #{deeplabv3_forward.13} parent=0 // pred_fallthru
    _

// kernel: deeplabv3_forward.20
$region0: #{deeplabv3_forward.20}
  #allocation0 [shape = 'u32[]', space=smem, size = 0x4, offset = 0x4, fixed_abs, tag = 'smem constant byte address 0x4 - core index']
  #allocation1 [shape = 'u32[144,128]{1,0:T(1,128)}', space=vmem, size = 0x12000, scoped, tag = 'internal scratch']
  %s0 = inlined_call_operand.vmem [shape: bf16[2,64,16], index: 0, kind: input, shape index: {}]
  %s1 = inlined_call_operand.vmem [shape: bf16[2,64,16], index: 1, kind: input, shape index: {}]
  %s2 = inlined_call_operand.vmem [shape: bf16[2,64,16], index: 2, kind: input, shape index: {}]
  %s3 = inlined_call_operand.vmem [shape: bf16[2,64,16], index: 3, kind: input, shape index: {}]
  %s4 = inlined_call_operand.vmem [shape: f32[2,1,16], index: 4, kind: input, shape index: {}]
  %s5 = inlined_call_operand.vmem [shape: bf16[4,16,16], index: 5, kind: input, shape index: {}]
  %s6 = inlined_call_operand.vmem [shape: f32[1,16], index: 6, kind: input, shape index: {}]
  %s7 = inlined_call_operand.vmem [shape: f32[1,16], index: 7, kind: input, shape index: {}]
  %s8 = inlined_call_operand.vmem [shape: bf16[2,64,16], index: 8, kind: output, shape index: {}]
  %s9 = sld [smem:[#allocation0]]
  $region65: #{deeplabv3_forward.20} parent=0
    _
  %s11 = ssub.s32 1, %s9
  %s12 = scalar_select 0, %s11, %s9
  loop: start=0, step=1, limit=4
  $region2: #{deeplabv3_forward.20} parent=0 // loop_pre_header
    _
  $region3: #{deeplabv3_forward.20} parent=0 // loop_header
    %s14 = sphi 0, %s18
    %p15 = scmp.ge.s32.totalorder %s14, 4
    %s21 = sphi 0, %s33
    %s22 = sphi 0, %s29
    %s23 = sphi 0, %s21
    %s24 = sphi 0, %s22
    %s25 = sphi 0, %s23
    %s26 = sphi 0, %s24
    %s38 = sphi 0, %s40
    %s41 = sphi 0, %s38
    %s42 = sphi 0, %s41
    %s58 = sphi 0, %s42
    %s66 = sphi 0, %s68
    %s69 = sphi 0, %s66
    %s70 = sphi 0, %s69
    %s86 = sphi 0, %s70
    %s94 = sphi 0, %s96
    %s97 = sphi 0, %s94
    %s98 = sphi 0, %s97
    %s114 = sphi 0, %s98
    %s122 = sphi 0, %s124
    %s125 = sphi 0, %s122
    %s126 = sphi 0, %s125
    %s142 = sphi 0, %s126
    %s148 = sphi 0, %s150
    %s151 = sphi 0, %s148
    %s152 = sphi 0, %s151
    %s168 = sphi 0, %s152
    %s172 = sphi 0, %s172
    %s174 = sphi 0, %s172
    %s175 = sphi 0, %s174
    %s189 = sphi 0, %s175
    %s193 = sphi 0, %s193
    %s195 = sphi 0, %s193
    %s196 = sphi 0, %s195
    %s210 = sphi 0, %s196
    %s214 = sphi 0, %s214
    %s216 = sphi 0, %s214
    %s217 = sphi 0, %s216
    %s231 = sphi 0, %s217
    %s239 = sphi 0, %s241
    %s242 = sphi 0, %s239
    %s243 = sphi 0, %s242
    %s259 = sphi 0, %s243
  $region4: #{deeplabv3_forward.20} parent=0 // loop_header_branch
    %17 = sbr.rel (%p15) target = $region8
  $region5: #{deeplabv3_forward.20} parent=0 // loop_body
    %s19 = ssub.s32 %s14, 1
    %s20 = ssub.s32 %s14, 2
    %s27 = sadd.s32 1, %s22
    %p28 = scmp.ge.s32.totalorder %s27, 1
    %s29 = scalar_select %p28, 0, %s27
    %s30 = sadd.s32 1, %s21
    %s31 = scalar_select %p28, %s30, %s21
    %p32 = scmp.ge.s32.totalorder %s31, 2
    %s33 = scalar_select %p32, 0, %s31
    %s34 = ssub.s32 %s21, %s33
    %s35 = ssub.s32 %s22, %s29
    %s36 = sor.u32 %s34, %s35
    %p37 = scmp.eq.s32.totalorder %s36, 0
    %s39 = sadd.s32 %s38, 1
    %s40 = scalar_select %p37, %s38, %s39
    %p43 = pneg %p37
    %p44 = scmp.eq.s32.totalorder %s14, 1
    %p45 = por %p43, %p44
    %p46 = scmp.ne.s32.totalorder %s38, %s41
    %p47 = scmp.eq.s32.totalorder %s14, 0
    %p48 = por %p46, %p47
    %p49 = scmp.ne.s32.totalorder %s38, %s41
    %p50 = scmp.eq.s32.totalorder %s19, 1
    %p51 = por %p49, %p50
    %p52 = scmp.ne.s32.totalorder %s41, %s42
    %p53 = scmp.eq.s32.totalorder %s19, 0
    %p54 = por %p52, %p53
    %p55 = scmp.ne.s32.totalorder %s41, %s42
    %p56 = scmp.eq.s32.totalorder %s20, 1
    %p57 = por %p55, %p56
    %p59 = scmp.ne.s32.totalorder %s42, %s58
    %p60 = scmp.eq.s32.totalorder %s20, 0
    %p61 = por %p59, %p60
    %s62 = ssub.s32 %s21, %s33
    %s63 = ssub.s32 %s22, %s29
    %s64 = sor.u32 %s62, %s63
    %p65 = scmp.eq.s32.totalorder %s64, 0
    %s67 = sadd.s32 %s66, 1
    %s68 = scalar_select %p65, %s66, %s67
    %p71 = pneg %p65
    %p72 = scmp.eq.s32.totalorder %s14, 1
    %p73 = por %p71, %p72
    %p74 = scmp.ne.s32.totalorder %s66, %s69
    %p75 = scmp.eq.s32.totalorder %s14, 0
    %p76 = por %p74, %p75
    %p77 = scmp.ne.s32.totalorder %s66, %s69
    %p78 = scmp.eq.s32.totalorder %s19, 1
    %p79 = por %p77, %p78
    %p80 = scmp.ne.s32.totalorder %s69, %s70
    %p81 = scmp.eq.s32.totalorder %s19, 0
    %p82 = por %p80, %p81
    %p83 = scmp.ne.s32.totalorder %s69, %s70
    %p84 = scmp.eq.s32.totalorder %s20, 1
    %p85 = por %p83, %p84
    %p87 = scmp.ne.s32.totalorder %s70, %s86
    %p88 = scmp.eq.s32.totalorder %s20, 0
    %p89 = por %p87, %p88
    %s90 = ssub.s32 %s21, %s33
    %s91 = ssub.s32 %s22, %s29
    %s92 = sor.u32 %s90, %s91
    %p93 = scmp.eq.s32.totalorder %s92, 0
    %s95 = sadd.s32 %s94, 1
    %s96 = scalar_select %p93, %s94, %s95
    %p99 = pneg %p93
    %p100 = scmp.eq.s32.totalorder %s14, 1
    %p101 = por %p99, %p100
    %p102 = scmp.ne.s32.totalorder %s94, %s97
    %p103 = scmp.eq.s32.totalorder %s14, 0
    %p104 = por %p102, %p103
    %p105 = scmp.ne.s32.totalorder %s94, %s97
    %p106 = scmp.eq.s32.totalorder %s19, 1
    %p107 = por %p105, %p106
    %p108 = scmp.ne.s32.totalorder %s97, %s98
    %p109 = scmp.eq.s32.totalorder %s19, 0
    %p110 = por %p108, %p109
    %p111 = scmp.ne.s32.totalorder %s97, %s98
    %p112 = scmp.eq.s32.totalorder %s20, 1
    %p113 = por %p111, %p112
    %p115 = scmp.ne.s32.totalorder %s98, %s114
    %p116 = scmp.eq.s32.totalorder %s20, 0
    %p117 = por %p115, %p116
    %s118 = ssub.s32 %s21, %s33
    %s119 = ssub.s32 %s22, %s29
    %s120 = sor.u32 %s118, %s119
    %p121 = scmp.eq.s32.totalorder %s120, 0
    %s123 = sadd.s32 %s122, 1
    %s124 = scalar_select %p121, %s122, %s123
    %p127 = pneg %p121
    %p128 = scmp.eq.s32.totalorder %s14, 1
    %p129 = por %p127, %p128
    %p130 = scmp.ne.s32.totalorder %s122, %s125
    %p131 = scmp.eq.s32.totalorder %s14, 0
    %p132 = por %p130, %p131
    %p133 = scmp.ne.s32.totalorder %s122, %s125
    %p134 = scmp.eq.s32.totalorder %s19, 1
    %p135 = por %p133, %p134
    %p136 = scmp.ne.s32.totalorder %s125, %s126
    %p137 = scmp.eq.s32.totalorder %s19, 0
    %p138 = por %p136, %p137
    %p139 = scmp.ne.s32.totalorder %s125, %s126
    %p140 = scmp.eq.s32.totalorder %s20, 1
    %p141 = por %p139, %p140
    %p143 = scmp.ne.s32.totalorder %s126, %s142
    %p144 = scmp.eq.s32.totalorder %s20, 0
    %p145 = por %p143, %p144
    %s146 = ssub.s32 %s21, %s33
    %p147 = scmp.eq.s32.totalorder %s146, 0
    %s149 = sadd.s32 %s148, 1
    %s150 = scalar_select %p147, %s148, %s149
    %p153 = pneg %p147
    %p154 = scmp.eq.s32.totalorder %s14, 1
    %p155 = por %p153, %p154
    %p156 = scmp.ne.s32.totalorder %s148, %s151
    %p157 = scmp.eq.s32.totalorder %s14, 0
    %p158 = por %p156, %p157
    %p159 = scmp.ne.s32.totalorder %s148, %s151
    %p160 = scmp.eq.s32.totalorder %s19, 1
    %p161 = por %p159, %p160
    %p162 = scmp.ne.s32.totalorder %s151, %s152
    %p163 = scmp.eq.s32.totalorder %s19, 0
    %p164 = por %p162, %p163
    %p165 = scmp.ne.s32.totalorder %s151, %s152
    %p166 = scmp.eq.s32.totalorder %s20, 1
    %p167 = por %p165, %p166
    %p169 = scmp.ne.s32.totalorder %s152, %s168
    %p170 = scmp.eq.s32.totalorder %s20, 0
    %p171 = por %p169, %p170
    %s173 = sadd.s32 %s172, 1
    %p176 = scmp.eq.s32.totalorder %s14, 1
    %p177 = scmp.ne.s32.totalorder %s172, %s174
    %p178 = scmp.eq.s32.totalorder %s14, 0
    %p179 = por %p177, %p178
    %p180 = scmp.ne.s32.totalorder %s172, %s174
    %p181 = scmp.eq.s32.totalorder %s19, 1
    %p182 = por %p180, %p181
    %p183 = scmp.ne.s32.totalorder %s174, %s175
    %p184 = scmp.eq.s32.totalorder %s19, 0
    %p185 = por %p183, %p184
    %p186 = scmp.ne.s32.totalorder %s174, %s175
    %p187 = scmp.eq.s32.totalorder %s20, 1
    %p188 = por %p186, %p187
    %p190 = scmp.ne.s32.totalorder %s175, %s189
    %p191 = scmp.eq.s32.totalorder %s20, 0
    %p192 = por %p190, %p191
    %s194 = sadd.s32 %s193, 1
    %p197 = scmp.eq.s32.totalorder %s14, 1
    %p198 = scmp.ne.s32.totalorder %s193, %s195
    %p199 = scmp.eq.s32.totalorder %s14, 0
    %p200 = por %p198, %p199
    %p201 = scmp.ne.s32.totalorder %s193, %s195
    %p202 = scmp.eq.s32.totalorder %s19, 1
    %p203 = por %p201, %p202
    %p204 = scmp.ne.s32.totalorder %s195, %s196
    %p205 = scmp.eq.s32.totalorder %s19, 0
    %p206 = por %p204, %p205
    %p207 = scmp.ne.s32.totalorder %s195, %s196
    %p208 = scmp.eq.s32.totalorder %s20, 1
    %p209 = por %p207, %p208
    %p211 = scmp.ne.s32.totalorder %s196, %s210
    %p212 = scmp.eq.s32.totalorder %s20, 0
    %p213 = por %p211, %p212
    %s215 = sadd.s32 %s214, 1
    %p218 = scmp.eq.s32.totalorder %s14, 1
    %p219 = scmp.ne.s32.totalorder %s214, %s216
    %p220 = scmp.eq.s32.totalorder %s14, 0
    %p221 = por %p219, %p220
    %p222 = scmp.ne.s32.totalorder %s214, %s216
    %p223 = scmp.eq.s32.totalorder %s19, 1
    %p224 = por %p222, %p223
    %p225 = scmp.ne.s32.totalorder %s216, %s217
    %p226 = scmp.eq.s32.totalorder %s19, 0
    %p227 = por %p225, %p226
    %p228 = scmp.ne.s32.totalorder %s216, %s217
    %p229 = scmp.eq.s32.totalorder %s20, 1
    %p230 = por %p228, %p229
    %p232 = scmp.ne.s32.totalorder %s217, %s231
    %p233 = scmp.eq.s32.totalorder %s20, 0
    %p234 = por %p232, %p233
    %s235 = ssub.s32 %s21, %s33
    %s236 = ssub.s32 %s22, %s29
    %s237 = sor.u32 %s235, %s236
    %p238 = scmp.eq.s32.totalorder %s237, 0
    %s240 = sadd.s32 %s239, 1
    %s241 = scalar_select %p238, %s239, %s240
    %p244 = pneg %p238
    %p245 = scmp.eq.s32.totalorder %s14, 1
    %p246 = por %p244, %p245
    %p247 = scmp.ne.s32.totalorder %s239, %s242
    %p248 = scmp.eq.s32.totalorder %s14, 0
    %p249 = por %p247, %p248
    %p250 = scmp.ne.s32.totalorder %s239, %s242
    %p251 = scmp.eq.s32.totalorder %s19, 1
    %p252 = por %p250, %p251
    %p253 = scmp.ne.s32.totalorder %s242, %s243
    %p254 = scmp.eq.s32.totalorder %s19, 0
    %p255 = por %p253, %p254
    %p256 = scmp.ne.s32.totalorder %s242, %s243
    %p257 = scmp.eq.s32.totalorder %s20, 1
    %p258 = por %p256, %p257
    %p260 = scmp.ne.s32.totalorder %s243, %s259
    %p261 = scmp.eq.s32.totalorder %s20, 0
    %p262 = por %p260, %p261
    %p263 = scmp.le.s32.totalorder 1, %s14
    %p264 = scmp.lt.s32.totalorder %s14, 3
    %p265 = pnand %p263, %p264
    %p266 = pneg %p265
    // Predicated region
    $region9: #{deeplabv3_forward.20} parent=5 // pred_check
      _
    $region10: #{deeplabv3_forward.20} parent=5 // pred_check_branch
      %268 = sbr.rel (%p265) target = $region12
    $region11: #{deeplabv3_forward.20} parent=5 // pred_region
      %s269 = ssub.s32 %s14, 1
      // Predicated region
      $region13: #{deeplabv3_forward.20} parent=11 // pred_check
        %p270 = pneg %p185
      $region14: #{deeplabv3_forward.20} parent=11 // pred_check_branch
        %272 = sbr.rel (%p270) target = $region16
      $region15: #{deeplabv3_forward.20} parent=11 // pred_region
        _
      $region16: #{deeplabv3_forward.20} parent=11 // pred_fallthru
        _
      // Predicated region
      $region17: #{deeplabv3_forward.20} parent=11 // pred_check
        %p273 = pneg %p206
      $region18: #{deeplabv3_forward.20} parent=11 // pred_check_branch
        %275 = sbr.rel (%p273) target = $region20
      $region19: #{deeplabv3_forward.20} parent=11 // pred_region
        _
      $region20: #{deeplabv3_forward.20} parent=11 // pred_fallthru
        _
      // Predicated region
      $region21: #{deeplabv3_forward.20} parent=11 // pred_check
        %p276 = pneg %p227
      $region22: #{deeplabv3_forward.20} parent=11 // pred_check_branch
        %278 = sbr.rel (%p276) target = $region24
      $region23: #{deeplabv3_forward.20} parent=11 // pred_region
        _
      $region24: #{deeplabv3_forward.20} parent=11 // pred_fallthru
        _
    $region12: #{deeplabv3_forward.20} parent=5 // pred_fallthru
      _
    %p279 = scmp.lt.s32.totalorder %s14, 2
    // Predicated region
    $region25: #{deeplabv3_forward.20} parent=5 // pred_check
      %p280 = pneg %p279
    $region26: #{deeplabv3_forward.20} parent=5 // pred_check_branch
      %282 = sbr.rel (%p280) target = $region28
    $region27: #{deeplabv3_forward.20} parent=5 // pred_region
      // Predicated region
      $region29: #{deeplabv3_forward.20} parent=27 // pred_check
        %p283 = pneg %p48
      $region30: #{deeplabv3_forward.20} parent=27 // pred_check_branch
        %285 = sbr.rel (%p283) target = $region32
      $region31: #{deeplabv3_forward.20} parent=27 // pred_region
        %s286 = smul.u32 8, %s22
        %p287 = scmp.lt.s32.totalorder %s21, 1
        %s288 = scalar_select %p287, %s21, 1
        %p289 = scmp.lt.s32.totalorder %s286, 7
        %s290 = scalar_select %p289, %s286, 7
        %s291 = smul.addr %s288, 8
        %s292 = sadd.s32 %s290, %s291
        %s293 = smul.addr %s292, 4
        %s294 = scalar_lea.vmem %s0, %s293
        %s295 = smul.u32 8, %s22
      $region32: #{deeplabv3_forward.20} parent=27 // pred_fallthru
        _
      // Predicated region
      $region33: #{deeplabv3_forward.20} parent=27 // pred_check
        %p296 = pneg %p76
      $region34: #{deeplabv3_forward.20} parent=27 // pred_check_branch
        %298 = sbr.rel (%p296) target = $region36
      $region35: #{deeplabv3_forward.20} parent=27 // pred_region
        %s299 = smul.u32 8, %s22
        %p300 = scmp.lt.s32.totalorder %s21, 1
        %s301 = scalar_select %p300, %s21, 1
        %p302 = scmp.lt.s32.totalorder %s299, 7
        %s303 = scalar_select %p302, %s299, 7
        %s304 = smul.addr %s301, 8
        %s305 = sadd.s32 %s303, %s304
        %s306 = smul.addr %s305, 4
        %s307 = scalar_lea.vmem %s1, %s306
        %s308 = smul.u32 8, %s22
      $region36: #{deeplabv3_forward.20} parent=27 // pred_fallthru
        _
      // Predicated region
      $region37: #{deeplabv3_forward.20} parent=27 // pred_check
        %p309 = pneg %p104
      $region38: #{deeplabv3_forward.20} parent=27 // pred_check_branch
        %311 = sbr.rel (%p309) target = $region40
      $region39: #{deeplabv3_forward.20} parent=27 // pred_region
        %s312 = smul.u32 8, %s22
        %p313 = scmp.lt.s32.totalorder %s21, 1
        %s314 = scalar_select %p313, %s21, 1
        %p315 = scmp.lt.s32.totalorder %s312, 7
        %s316 = scalar_select %p315, %s312, 7
        %s317 = smul.addr %s314, 8
        %s318 = sadd.s32 %s316, %s317
        %s319 = smul.addr %s318, 4
        %s320 = scalar_lea.vmem %s2, %s319
        %s321 = smul.u32 8, %s22
      $region40: #{deeplabv3_forward.20} parent=27 // pred_fallthru
        _
      // Predicated region
      $region41: #{deeplabv3_forward.20} parent=27 // pred_check
        %p322 = pneg %p132
      $region42: #{deeplabv3_forward.20} parent=27 // pred_check_branch
        %324 = sbr.rel (%p322) target = $region44
      $region43: #{deeplabv3_forward.20} parent=27 // pred_region
        %s325 = smul.u32 8, %s22
        %p326 = scmp.lt.s32.totalorder %s21, 1
        %s327 = scalar_select %p326, %s21, 1
        %p328 = scmp.lt.s32.totalorder %s325, 7
        %s329 = scalar_select %p328, %s325, 7
        %s330 = smul.addr %s327, 8
        %s331 = sadd.s32 %s329, %s330
        %s332 = smul.addr %s331, 4
        %s333 = scalar_lea.vmem %s3, %s332
        %s334 = smul.u32 8, %s22
      $region44: #{deeplabv3_forward.20} parent=27 // pred_fallthru
        _
      // Predicated region
      $region45: #{deeplabv3_forward.20} parent=27 // pred_check
        %p335 = pneg %p158
      $region46: #{deeplabv3_forward.20} parent=27 // pred_check_branch
        %337 = sbr.rel (%p335) target = $region48
      $region47: #{deeplabv3_forward.20} parent=27 // pred_region
        %p338 = scmp.lt.s32.totalorder %s21, 1
        %s339 = scalar_select %p338, %s21, 1
        %s340 = scalar_lea.vmem %s4, %s339
      $region48: #{deeplabv3_forward.20} parent=27 // pred_fallthru
        _
    $region28: #{deeplabv3_forward.20} parent=5 // pred_fallthru
      _
    %p341 = scmp.le.s32.totalorder 1, %s14
    %p342 = scmp.lt.s32.totalorder %s14, 3
    %p343 = pnand %p341, %p342
    %p344 = pneg %p343
    // Predicated region
    $region49: #{deeplabv3_forward.20} parent=5 // pred_check
      _
    $region50: #{deeplabv3_forward.20} parent=5 // pred_check_branch
      %346 = sbr.rel (%p343) target = $region52
    $region51: #{deeplabv3_forward.20} parent=5 // pred_region
      %s347 = ssub.s32 %s14, 1
      %s348 = smul.u32 8, %s24
      %p349 = scmp.lt.s32.totalorder %s23, 1
      %s350 = scalar_select %p349, %s23, 1
      %p351 = scmp.lt.s32.totalorder %s348, 7
      %s352 = scalar_select %p351, %s348, 7
      %s353 = smul.addr %s350, 8
      %s354 = sadd.s32 %s352, %s353
      %s355 = smul.addr %s354, 4
      %s356 = scalar_lea.vmem %s0, %s355
      %p357 = pneg %p54
      %p358 = pneg %p51
      %s359 = smul.u32 8, %s24
      %p360 = scmp.lt.s32.totalorder %s23, 1
      %s361 = scalar_select %p360, %s23, 1
      %p362 = scmp.lt.s32.totalorder %s359, 7
      %s363 = scalar_select %p362, %s359, 7
      %s364 = smul.addr %s361, 8
      %s365 = sadd.s32 %s363, %s364
      %s366 = smul.addr %s365, 4
      %s367 = scalar_lea.vmem %s1, %s366
      %p368 = pneg %p82
      %p369 = pneg %p79
      %s370 = smul.u32 8, %s24
      %p371 = scmp.lt.s32.totalorder %s23, 1
      %s372 = scalar_select %p371, %s23, 1
      %p373 = scmp.lt.s32.totalorder %s370, 7
      %s374 = scalar_select %p373, %s370, 7
      %s375 = smul.addr %s372, 8
      %s376 = sadd.s32 %s374, %s375
      %s377 = smul.addr %s376, 4
      %s378 = scalar_lea.vmem %s2, %s377
      %p379 = pneg %p110
      %p380 = pneg %p107
      %s381 = smul.u32 8, %s24
      %p382 = scmp.lt.s32.totalorder %s23, 1
      %s383 = scalar_select %p382, %s23, 1
      %p384 = scmp.lt.s32.totalorder %s381, 7
      %s385 = scalar_select %p384, %s381, 7
      %s386 = smul.addr %s383, 8
      %s387 = sadd.s32 %s385, %s386
      %s388 = smul.addr %s387, 4
      %s389 = scalar_lea.vmem %s3, %s388
      %p390 = pneg %p138
      %p391 = pneg %p135
      %p392 = scmp.lt.s32.totalorder %s23, 1
      %s393 = scalar_select %p392, %s23, 1
      %s394 = scalar_lea.vmem %s4, %s393
      %p395 = pneg %p164
      %p396 = pneg %p161
      %p397 = pneg %p185
      %p398 = pneg %p182
      %p399 = pneg %p206
      %p400 = pneg %p203
      %p401 = pneg %p227
      %p402 = pneg %p224
      %p403 = pneg %p255
      %p404 = pneg %p252
      %s405 = smul.u32 8, %s24
      %p406 = scmp.lt.s32.totalorder %s23, 1
      %s407 = scalar_select %p406, %s23, 1
      %p408 = scmp.lt.s32.totalorder %s405, 7
      %s409 = scalar_select %p408, %s405, 7
      %s410 = smul.addr %s407, 8
      %s411 = sadd.s32 %s409, %s410
      %s412 = smul.addr %s411, 4
      %s413 = scalar_lea.vmem %s8, %s412
      %s414 = smul.u32 8, %s24
      %p415 = scmp.lt.s32.totalorder %s23, 1
      %s416 = scalar_select %p415, %s23, 1
      %p417 = scmp.lt.s32.totalorder %s414, 7
      %s418 = scalar_select %p417, %s414, 7
      %s419 = smul.addr %s416, 8
      %s420 = sadd.s32 %s418, %s419
      %s421 = smul.addr %s420, 4
      %s422 = scalar_lea.vmem %s0, %s421
      %s423 = smul.u32 8, %s24
      %s424 = smul.u32 8, %s24
      %p425 = scmp.lt.s32.totalorder %s23, 1
      %s426 = scalar_select %p425, %s23, 1
      %p427 = scmp.lt.s32.totalorder %s424, 7
      %s428 = scalar_select %p427, %s424, 7
      %s429 = smul.addr %s426, 8
      %s430 = sadd.s32 %s428, %s429
      %s431 = smul.addr %s430, 4
      %s432 = scalar_lea.vmem %s1, %s431
      %s433 = smul.u32 8, %s24
      %s434 = smul.u32 8, %s24
      %p435 = scmp.lt.s32.totalorder %s23, 1
      %s436 = scalar_select %p435, %s23, 1
      %p437 = scmp.lt.s32.totalorder %s434, 7
      %s438 = scalar_select %p437, %s434, 7
      %s439 = smul.addr %s436, 8
      %s440 = sadd.s32 %s438, %s439
      %s441 = smul.addr %s440, 4
      %s442 = scalar_lea.vmem %s2, %s441
      %s443 = smul.u32 8, %s24
      %s444 = smul.u32 8, %s24
      %p445 = scmp.lt.s32.totalorder %s23, 1
      %s446 = scalar_select %p445, %s23, 1
      %p447 = scmp.lt.s32.totalorder %s444, 7
      %s448 = scalar_select %p447, %s444, 7
      %s449 = smul.addr %s446, 8
      %s450 = sadd.s32 %s448, %s449
      %s451 = smul.addr %s450, 4
      %s452 = scalar_lea.vmem %s3, %s451
      %s453 = smul.u32 8, %s24
      %p454 = scmp.lt.s32.totalorder %s23, 1
      %s455 = scalar_select %p454, %s23, 1
      %s456 = scalar_lea.vmem %s4, %s455
      %s457 = smul.u32 8, %s24
      %p458 = scmp.lt.s32.totalorder %s23, 1
      %s459 = scalar_select %p458, %s23, 1
      %p460 = scmp.lt.s32.totalorder %s457, 7
      %s461 = scalar_select %p460, %s457, 7
      %s462 = smul.addr %s459, 8
      %s463 = sadd.s32 %s461, %s462
      %s464 = smul.addr %s463, 4
      %s465 = scalar_lea.vmem %s8, %s464
      %s466 = smul.u32 8, %s24
      %v468 = vld [vmem:[%s422] sm:$0xf]
      %v469 = vld [vmem:[%s422 + $0x4] sm:$0xf]
      %v470 = vld [vmem:[%s422 + $0x8] sm:$0xf]
      %v471 = vld [vmem:[%s422 + $0xc] sm:$0xf]
      %v472 = vld [vmem:[%s422 + $0x10] sm:$0xf]
      %v473 = vld [vmem:[%s422 + $0x14] sm:$0xf]
      %v474 = vld [vmem:[%s422 + $0x18] sm:$0xf]
      %v475 = vld [vmem:[%s422 + $0x1c] sm:$0xf]
      %v476 = vld [vmem:[%s5] sm:$0xf]
      %v477 = vld [vmem:[%s5 + $0x4] sm:$0xf]
      %v478 = vld [vmem:[%s432] sm:$0xf]
      %v479 = vld [vmem:[%s432 + $0x4] sm:$0xf]
      %v480 = vld [vmem:[%s432 + $0x8] sm:$0xf]
      %v481 = vld [vmem:[%s432 + $0xc] sm:$0xf]
      %v482 = vld [vmem:[%s432 + $0x10] sm:$0xf]
      %v483 = vld [vmem:[%s432 + $0x14] sm:$0xf]
      %v484 = vld [vmem:[%s432 + $0x18] sm:$0xf]
      %v485 = vld [vmem:[%s432 + $0x1c] sm:$0xf]
      %s486 = scalar_lea.vmem %s5, 8
      %v487 = vld [vmem:[%s486] sm:$0xf]
      %v488 = vld [vmem:[%s486 + $0x4] sm:$0xf]
      %v497 = vunpack.c.l.b16 %v478
      %v498 = vunpack.c.l.b16 %v479
      %v499 = vunpack.c.l.b16 %v480
      %v500 = vunpack.c.l.b16 %v481
      %v501 = vunpack.c.l.b16 %v482
      %v502 = vunpack.c.l.b16 %v483
      %v503 = vunpack.c.l.b16 %v484
      %v504 = vunpack.c.l.b16 %v485
      %v505 = vpack.c.b16 %v498, %v497
      %v506 = vpack.c.b16 %v500, %v499
      %v507 = vpack.c.b16 %v502, %v501
      %v508 = vpack.c.b16 %v504, %v503
      %v511 = vunpack.c.l.b16 %v487
      %v512 = vunpack.c.l.b16 %v488
      %v513 = vpack.c.b16 %v512, %v511
      %vm515 = vcmask 130048
      %v517 = vsel %vm515, %v505, 0
      %v520 = vsel %vm515, %v506, 0
      %v523 = vsel %vm515, %v507, 0
      %v526 = vsel %vm515, %v508, 0
      %528 = vmatprep.subr.bf16.mxu0 0
      %529 = vmatpush1.bf16.msra.mxu0 %v513
      %530 = vmatprep.subr.bf16.mxu0 0
      %531 = vmatpush1.bf16.msra.mxu0 0
      %532 = vmatprep.subr.bf16.mxu0 0
      %533 = vmatpush1.bf16.msra.mxu0 0
      %534 = vmatprep.subr.bf16.mxu0 0
      %535 = vmatpush1.bf16.msra.mxu0 0
      %536 = vmatprep.subr.bf16.mxu0 0
      %537 = vmatpush1.bf16.msra.mxu0 0
      %538 = vmatprep.subr.bf16.mxu0 0
      %539 = vmatpush1.bf16.msra.mxu0 0
      %540 = vmatprep.subr.bf16.mxu0 0
      %541 = vmatpush1.bf16.msra.mxu0 0
      %542 = vmatprep.subr.bf16.mxu0 0
      %543 = vmatpush1.bf16.msra.mxu0 0
      %544 = vmatprep.subr.bf16.mxu0 0
      %545 = vmatpush1.bf16.msra.mxu0 0
      %546 = vmatprep.subr.bf16.mxu0 0
      %547 = vmatpush1.bf16.msra.mxu0 0
      %548 = vmatprep.subr.bf16.mxu0 0
      %549 = vmatpush1.bf16.msra.mxu0 0
      %550 = vmatprep.subr.bf16.mxu0 0
      %551 = vmatpush1.bf16.msra.mxu0 0
      %552 = vmatprep.subr.bf16.mxu0 0
      %553 = vmatpush1.bf16.msra.mxu0 0
      %554 = vmatprep.subr.bf16.mxu0 0
      %555 = vmatpush1.bf16.msra.mxu0 0
      %556 = vmatprep.subr.bf16.mxu0 0
      %557 = vmatpush1.bf16.msra.mxu0 0
      %558 = vmatprep.subr.bf16.mxu0 0
      %559 = vmatpush1.bf16.msra.mxu0 0
      %560 = vmatprep.mubr.bf16.mxu0 0
      %561 = vmatmul.mubr.bf16.gmra.mrb[0].mxu0 %v517
      %v562 = vpop.f32.mrb[0].mxu0
      %v563 = vadd.f32 0.0, %v562
      %v564 = vpop.f32.mrb[0].mxu0
      %v565 = vpop.f32.mrb[0].mxu0
      %v566 = vadd.f32 0.0, %v565
      %v567 = vpop.f32.mrb[0].mxu0
      %568 = vmatprep.mubr.bf16.mxu0 0
      %569 = vmatmul.mubr.bf16.gmra.mrb[0].mxu0 %v520
      %v570 = vpop.f32.mrb[0].mxu0
      %v571 = vadd.f32 0.0, %v570
      %v572 = vpop.f32.mrb[0].mxu0
      %v573 = vpop.f32.mrb[0].mxu0
      %v574 = vadd.f32 0.0, %v573
      %v575 = vpop.f32.mrb[0].mxu0
      %576 = vmatprep.mubr.bf16.mxu0 0
      %577 = vmatmul.mubr.bf16.gmra.mrb[0].mxu0 %v523
      %v578 = vpop.f32.mrb[0].mxu0
      %v579 = vadd.f32 0.0, %v578
      %v580 = vpop.f32.mrb[0].mxu0
      %v581 = vpop.f32.mrb[0].mxu0
      %v582 = vadd.f32 0.0, %v581
      %v583 = vpop.f32.mrb[0].mxu0
      %584 = vmatprep.mubr.bf16.mxu0 0
      %585 = vmatmul.mubr.bf16.gmra.mrb[0].mxu0 %v526
      %v586 = vpop.f32.mrb[0].mxu0
      %v587 = vadd.f32 0.0, %v586
      %v588 = vpop.f32.mrb[0].mxu0
      %v589 = vpop.f32.mrb[0].mxu0
      %v590 = vadd.f32 0.0, %v589
      %v591 = vpop.f32.mrb[0].mxu0
      %592 = vdwg.mxu0
      %v601 = vunpack.c.l.b16 %v468
      %v602 = vunpack.c.l.b16 %v469
      %v603 = vunpack.c.l.b16 %v470
      %v604 = vunpack.c.l.b16 %v471
      %v605 = vunpack.c.l.b16 %v472
      %v606 = vunpack.c.l.b16 %v473
      %v607 = vunpack.c.l.b16 %v474
      %v608 = vunpack.c.l.b16 %v475
      %v609 = vpack.c.b16 %v602, %v601
      %v610 = vpack.c.b16 %v604, %v603
      %v611 = vpack.c.b16 %v606, %v605
      %v612 = vpack.c.b16 %v608, %v607
      %v615 = vunpack.c.l.b16 %v476
      %v616 = vunpack.c.l.b16 %v477
      %v617 = vpack.c.b16 %v616, %v615
      %v620 = vsel %vm515, %v609, 0
      %v623 = vsel %vm515, %v610, 0
      %v626 = vsel %vm515, %v611, 0
      %v629 = vsel %vm515, %v612, 0
      %631 = vmatprep.subr.bf16.mxu0 0
      %632 = vmatpush1.bf16.msra.mxu0 %v617
      %633 = vmatprep.subr.bf16.mxu0 0
      %634 = vmatpush1.bf16.msra.mxu0 0
      %635 = vmatprep.subr.bf16.mxu0 0
      %636 = vmatpush1.bf16.msra.mxu0 0
      %637 = vmatprep.subr.bf16.mxu0 0
      %638 = vmatpush1.bf16.msra.mxu0 0
      %639 = vmatprep.subr.bf16.mxu0 0
      %640 = vmatpush1.bf16.msra.mxu0 0
      %641 = vmatprep.subr.bf16.mxu0 0
      %642 = vmatpush1.bf16.msra.mxu0 0
      %643 = vmatprep.subr.bf16.mxu0 0
      %644 = vmatpush1.bf16.msra.mxu0 0
      %645 = vmatprep.subr.bf16.mxu0 0
      %646 = vmatpush1.bf16.msra.mxu0 0
      %647 = vmatprep.subr.bf16.mxu0 0
      %648 = vmatpush1.bf16.msra.mxu0 0
      %649 = vmatprep.subr.bf16.mxu0 0
      %650 = vmatpush1.bf16.msra.mxu0 0
      %651 = vmatprep.subr.bf16.mxu0 0
      %652 = vmatpush1.bf16.msra.mxu0 0
      %653 = vmatprep.subr.bf16.mxu0 0
      %654 = vmatpush1.bf16.msra.mxu0 0
      %655 = vmatprep.subr.bf16.mxu0 0
      %656 = vmatpush1.bf16.msra.mxu0 0
      %657 = vmatprep.subr.bf16.mxu0 0
      %658 = vmatpush1.bf16.msra.mxu0 0
      %659 = vmatprep.subr.bf16.mxu0 0
      %660 = vmatpush1.bf16.msra.mxu0 0
      %661 = vmatprep.subr.bf16.mxu0 0
      %662 = vmatpush1.bf16.msra.mxu0 0
      %663 = vmatprep.mubr.bf16.mxu0 0
      %664 = vmatmul.mubr.bf16.gmra.mrb[0].mxu0 %v620
      %v665 = vpop.f32.mrb[0].mxu0
      %v666 = vadd.f32 %v563, %v665
      %v667 = vpop.f32.mrb[0].mxu0
      %v668 = vpop.f32.mrb[0].mxu0
      %v669 = vadd.f32 %v566, %v668
      %v670 = vpop.f32.mrb[0].mxu0
      %671 = vmatprep.mubr.bf16.mxu0 0
      %672 = vmatmul.mubr.bf16.gmra.mrb[0].mxu0 %v623
      %v673 = vpop.f32.mrb[0].mxu0
      %v674 = vadd.f32 %v571, %v673
      %v675 = vpop.f32.mrb[0].mxu0
      %v676 = vpop.f32.mrb[0].mxu0
      %v677 = vadd.f32 %v574, %v676
      %v678 = vpop.f32.mrb[0].mxu0
      %679 = vmatprep.mubr.bf16.mxu0 0
      %680 = vmatmul.mubr.bf16.gmra.mrb[0].mxu0 %v626
      %v681 = vpop.f32.mrb[0].mxu0
      %v682 = vadd.f32 %v579, %v681
      %v683 = vpop.f32.mrb[0].mxu0
      %v684 = vpop.f32.mrb[0].mxu0
      %v685 = vadd.f32 %v582, %v684
      %v686 = vpop.f32.mrb[0].mxu0
      %687 = vmatprep.mubr.bf16.mxu0 0
      %688 = vmatmul.mubr.bf16.gmra.mrb[0].mxu0 %v629
      %v689 = vpop.f32.mrb[0].mxu0
      %v690 = vadd.f32 %v587, %v689
      %v691 = vpop.f32.mrb[0].mxu0
      %v692 = vpop.f32.mrb[0].mxu0
      %v693 = vadd.f32 %v590, %v692
      %v694 = vpop.f32.mrb[0].mxu0
      %695 = vdwg.mxu0
      %v696 = vld [vmem:[%s442] sm:$0xf]
      %v697 = vld [vmem:[%s442 + $0x4] sm:$0xf]
      %v698 = vld [vmem:[%s442 + $0x8] sm:$0xf]
      %v699 = vld [vmem:[%s442 + $0xc] sm:$0xf]
      %v700 = vld [vmem:[%s442 + $0x10] sm:$0xf]
      %v701 = vld [vmem:[%s442 + $0x14] sm:$0xf]
      %v702 = vld [vmem:[%s442 + $0x18] sm:$0xf]
      %v703 = vld [vmem:[%s442 + $0x1c] sm:$0xf]
      %s704 = scalar_lea.vmem %s5, 16
      %v705 = vld [vmem:[%s704] sm:$0xf]
      %v706 = vld [vmem:[%s704 + $0x4] sm:$0xf]
      %v715 = vunpack.c.l.b16 %v696
      %v716 = vunpack.c.l.b16 %v697
      %v717 = vunpack.c.l.b16 %v698
      %v718 = vunpack.c.l.b16 %v699
      %v719 = vunpack.c.l.b16 %v700
      %v720 = vunpack.c.l.b16 %v701
      %v721 = vunpack.c.l.b16 %v702
      %v722 = vunpack.c.l.b16 %v703
      %v723 = vpack.c.b16 %v716, %v715
      %v724 = vpack.c.b16 %v718, %v717
      %v725 = vpack.c.b16 %v720, %v719
      %v726 = vpack.c.b16 %v722, %v721
      %v729 = vunpack.c.l.b16 %v705
      %v730 = vunpack.c.l.b16 %v706
      %v731 = vpack.c.b16 %v730, %v729
      %v734 = vsel %vm515, %v723, 0
      %v737 = vsel %vm515, %v724, 0
      %v740 = vsel %vm515, %v725, 0
      %v743 = vsel %vm515, %v726, 0
      %745 = vmatprep.subr.bf16.mxu0 0
      %746 = vmatpush1.bf16.msra.mxu0 %v731
      %747 = vmatprep.subr.bf16.mxu0 0
      %748 = vmatpush1.bf16.msra.mxu0 0
      %749 = vmatprep.subr.bf16.mxu0 0
      %750 = vmatpush1.bf16.msra.mxu0 0
      %751 = vmatprep.subr.bf16.mxu0 0
      %752 = vmatpush1.bf16.msra.mxu0 0
      %753 = vmatprep.subr.bf16.mxu0 0
      %754 = vmatpush1.bf16.msra.mxu0 0
      %755 = vmatprep.subr.bf16.mxu0 0
      %756 = vmatpush1.bf16.msra.mxu0 0
      %757 = vmatprep.subr.bf16.mxu0 0
      %758 = vmatpush1.bf16.msra.mxu0 0
      %759 = vmatprep.subr.bf16.mxu0 0
      %760 = vmatpush1.bf16.msra.mxu0 0
      %761 = vmatprep.subr.bf16.mxu0 0
      %762 = vmatpush1.bf16.msra.mxu0 0
      %763 = vmatprep.subr.bf16.mxu0 0
      %764 = vmatpush1.bf16.msra.mxu0 0
      %765 = vmatprep.subr.bf16.mxu0 0
      %766 = vmatpush1.bf16.msra.mxu0 0
      %767 = vmatprep.subr.bf16.mxu0 0
      %768 = vmatpush1.bf16.msra.mxu0 0
      %769 = vmatprep.subr.bf16.mxu0 0
      %770 = vmatpush1.bf16.msra.mxu0 0
      %771 = vmatprep.subr.bf16.mxu0 0
      %772 = vmatpush1.bf16.msra.mxu0 0
      %773 = vmatprep.subr.bf16.mxu0 0
      %774 = vmatpush1.bf16.msra.mxu0 0
      %775 = vmatprep.subr.bf16.mxu0 0
      %776 = vmatpush1.bf16.msra.mxu0 0
      %777 = vmatprep.mubr.bf16.mxu0 0
      %778 = vmatmul.mubr.bf16.gmra.mrb[0].mxu0 %v734
      %v779 = vpop.f32.mrb[0].mxu0
      %v780 = vadd.f32 0.0, %v779
      %v781 = vpop.f32.mrb[0].mxu0
      %v782 = vpop.f32.mrb[0].mxu0
      %v783 = vadd.f32 0.0, %v782
      %v784 = vpop.f32.mrb[0].mxu0
      %785 = vmatprep.mubr.bf16.mxu0 0
      %786 = vmatmul.mubr.bf16.gmra.mrb[0].mxu0 %v737
      %v787 = vpop.f32.mrb[0].mxu0
      %v788 = vadd.f32 0.0, %v787
      %v789 = vpop.f32.mrb[0].mxu0
      %v790 = vpop.f32.mrb[0].mxu0
      %v791 = vadd.f32 0.0, %v790
      %v792 = vpop.f32.mrb[0].mxu0
      %793 = vmatprep.mubr.bf16.mxu0 0
      %794 = vmatmul.mubr.bf16.gmra.mrb[0].mxu0 %v740
      %v795 = vpop.f32.mrb[0].mxu0
      %v796 = vadd.f32 0.0, %v795
      %v797 = vpop.f32.mrb[0].mxu0
      %v798 = vpop.f32.mrb[0].mxu0
      %v799 = vadd.f32 0.0, %v798
      %v800 = vpop.f32.mrb[0].mxu0
      %801 = vmatprep.mubr.bf16.mxu0 0
      %802 = vmatmul.mubr.bf16.gmra.mrb[0].mxu0 %v743
      %v803 = vpop.f32.mrb[0].mxu0
      %v804 = vadd.f32 0.0, %v803
      %v805 = vpop.f32.mrb[0].mxu0
      %v806 = vpop.f32.mrb[0].mxu0
      %v807 = vadd.f32 0.0, %v806
      %v808 = vpop.f32.mrb[0].mxu0
      %809 = vdwg.mxu0
      %v810 = vadd.f32 %v666, %v780
      %v811 = vadd.f32 %v669, %v783
      %v812 = vadd.f32 %v674, %v788
      %v813 = vadd.f32 %v677, %v791
      %v814 = vadd.f32 %v682, %v796
      %v815 = vadd.f32 %v685, %v799
      %v816 = vadd.f32 %v690, %v804
      %v817 = vadd.f32 %v693, %v807
      %v818 = vld [vmem:[%s452] sm:$0xf]
      %v819 = vld [vmem:[%s452 + $0x4] sm:$0xf]
      %v820 = vld [vmem:[%s452 + $0x8] sm:$0xf]
      %v821 = vld [vmem:[%s452 + $0xc] sm:$0xf]
      %v822 = vld [vmem:[%s452 + $0x10] sm:$0xf]
      %v823 = vld [vmem:[%s452 + $0x14] sm:$0xf]
      %v824 = vld [vmem:[%s452 + $0x18] sm:$0xf]
      %v825 = vld [vmem:[%s452 + $0x1c] sm:$0xf]
      %s826 = scalar_lea.vmem %s5, 24
      %v827 = vld [vmem:[%s826] sm:$0xf]
      %v828 = vld [vmem:[%s826 + $0x4] sm:$0xf]
      %v837 = vunpack.c.l.b16 %v818
      %v838 = vunpack.c.l.b16 %v819
      %v839 = vunpack.c.l.b16 %v820
      %v840 = vunpack.c.l.b16 %v821
      %v841 = vunpack.c.l.b16 %v822
      %v842 = vunpack.c.l.b16 %v823
      %v843 = vunpack.c.l.b16 %v824
      %v844 = vunpack.c.l.b16 %v825
      %v845 = vpack.c.b16 %v838, %v837
      %v846 = vpack.c.b16 %v840, %v839
      %v847 = vpack.c.b16 %v842, %v841
      %v848 = vpack.c.b16 %v844, %v843
      %v851 = vunpack.c.l.b16 %v827
      %v852 = vunpack.c.l.b16 %v828
      %v853 = vpack.c.b16 %v852, %v851
      %v856 = vsel %vm515, %v845, 0
      %v859 = vsel %vm515, %v846, 0
      %v862 = vsel %vm515, %v847, 0
      %v865 = vsel %vm515, %v848, 0
      %867 = vmatprep.subr.bf16.mxu0 0
      %868 = vmatpush1.bf16.msra.mxu0 %v853
      %869 = vmatprep.subr.bf16.mxu0 0
      %870 = vmatpush1.bf16.msra.mxu0 0
      %871 = vmatprep.subr.bf16.mxu0 0
      %872 = vmatpush1.bf16.msra.mxu0 0
      %873 = vmatprep.subr.bf16.mxu0 0
      %874 = vmatpush1.bf16.msra.mxu0 0
      %875 = vmatprep.subr.bf16.mxu0 0
      %876 = vmatpush1.bf16.msra.mxu0 0
      %877 = vmatprep.subr.bf16.mxu0 0
      %878 = vmatpush1.bf16.msra.mxu0 0
      %879 = vmatprep.subr.bf16.mxu0 0
      %880 = vmatpush1.bf16.msra.mxu0 0
      %881 = vmatprep.subr.bf16.mxu0 0
      %882 = vmatpush1.bf16.msra.mxu0 0
      %883 = vmatprep.subr.bf16.mxu0 0
      %884 = vmatpush1.bf16.msra.mxu0 0
      %885 = vmatprep.subr.bf16.mxu0 0
      %886 = vmatpush1.bf16.msra.mxu0 0
      %887 = vmatprep.subr.bf16.mxu0 0
      %888 = vmatpush1.bf16.msra.mxu0 0
      %889 = vmatprep.subr.bf16.mxu0 0
      %890 = vmatpush1.bf16.msra.mxu0 0
      %891 = vmatprep.subr.bf16.mxu0 0
      %892 = vmatpush1.bf16.msra.mxu0 0
      %893 = vmatprep.subr.bf16.mxu0 0
      %894 = vmatpush1.bf16.msra.mxu0 0
      %895 = vmatprep.subr.bf16.mxu0 0
      %896 = vmatpush1.bf16.msra.mxu0 0
      %897 = vmatprep.subr.bf16.mxu0 0
      %898 = vmatpush1.bf16.msra.mxu0 0
      %899 = vmatprep.mubr.bf16.mxu0 0
      %900 = vmatmul.mubr.bf16.gmra.mrb[0].mxu0 %v856
      %v901 = vpop.f32.mrb[0].mxu0
      %v902 = vadd.f32 0.0, %v901
      %v903 = vpop.f32.mrb[0].mxu0
      %v904 = vpop.f32.mrb[0].mxu0
      %v905 = vadd.f32 0.0, %v904
      %v906 = vpop.f32.mrb[0].mxu0
      %907 = vmatprep.mubr.bf16.mxu0 0
      %908 = vmatmul.mubr.bf16.gmra.mrb[0].mxu0 %v859
      %v909 = vpop.f32.mrb[0].mxu0
      %v910 = vadd.f32 0.0, %v909
      %v911 = vpop.f32.mrb[0].mxu0
      %v912 = vpop.f32.mrb[0].mxu0
      %v913 = vadd.f32 0.0, %v912
      %v914 = vpop.f32.mrb[0].mxu0
      %915 = vmatprep.mubr.bf16.mxu0 0
      %916 = vmatmul.mubr.bf16.gmra.mrb[0].mxu0 %v862
      %v917 = vpop.f32.mrb[0].mxu0
      %v918 = vadd.f32 0.0, %v917
      %v919 = vpop.f32.mrb[0].mxu0
      %v920 = vpop.f32.mrb[0].mxu0
      %v921 = vadd.f32 0.0, %v920
      %v922 = vpop.f32.mrb[0].mxu0
      %923 = vmatprep.mubr.bf16.mxu0 0
      %924 = vmatmul.mubr.bf16.gmra.mrb[0].mxu0 %v865
      %v925 = vpop.f32.mrb[0].mxu0
      %v926 = vadd.f32 0.0, %v925
      %v927 = vpop.f32.mrb[0].mxu0
      %v928 = vpop.f32.mrb[0].mxu0
      %v929 = vadd.f32 0.0, %v928
      %v930 = vpop.f32.mrb[0].mxu0
      %931 = vdwg.mxu0
      %v932 = vadd.f32 %v810, %v902
      %v933 = vadd.f32 %v811, %v905
      %v934 = vadd.f32 %v812, %v910
      %v935 = vadd.f32 %v813, %v913
      %v936 = vadd.f32 %v814, %v918
      %v937 = vadd.f32 %v815, %v921
      %v938 = vadd.f32 %v816, %v926
      %v939 = vadd.f32 %v817, %v929
      %v940 = vld [vmem:[%s456] sm:$0x1]
      %v942 = vlaneseq
      %v943 = vshrl.u32 %v942, 7
      %v944 = vsub.s32 0, %v943
      %v945 = vrot.slane %v940, %v944
      %v947 = vadd.f32 %v932, %v945
      %v948 = vadd.f32 %v933, %v945
      %v949 = vadd.f32 %v934, %v945
      %v950 = vadd.f32 %v935, %v945
      %v951 = vadd.f32 %v936, %v945
      %v952 = vadd.f32 %v937, %v945
      %v953 = vadd.f32 %v938, %v945
      %v954 = vadd.f32 %v939, %v945
      %v955 = vld [vmem:[%s6] sm:$0x1]
      %v957 = vlaneseq
      %v958 = vshrl.u32 %v957, 7
      %v959 = vsub.s32 0, %v958
      %v960 = vrot.slane %v955, %v959
      %v962 = vmul.f32 %v947, %v960
      %v963 = vmul.f32 %v948, %v960
      %v964 = vmul.f32 %v949, %v960
      %v965 = vmul.f32 %v950, %v960
      %v966 = vmul.f32 %v951, %v960
      %v967 = vmul.f32 %v952, %v960
      %v968 = vmul.f32 %v953, %v960
      %v969 = vmul.f32 %v954, %v960
      %v970 = vld [vmem:[%s7] sm:$0x1]
      %v972 = vlaneseq
      %v973 = vshrl.u32 %v972, 7
      %v974 = vsub.s32 0, %v973
      %v975 = vrot.slane %v970, %v974
      %v977 = vadd.f32 %v962, %v975
      %v978 = vadd.f32 %v963, %v975
      %v979 = vadd.f32 %v964, %v975
      %v980 = vadd.f32 %v965, %v975
      %v981 = vadd.f32 %v966, %v975
      %v982 = vadd.f32 %v967, %v975
      %v983 = vadd.f32 %v968, %v975
      %v984 = vadd.f32 %v969, %v975
      %v985 = vmax.f32 %v977, 0.0
      %v986 = vmax.f32 %v978, 0.0
      %v987 = vmax.f32 %v979, 0.0
      %v988 = vmax.f32 %v980, 0.0
      %v989 = vmax.f32 %v981, 0.0
      %v990 = vmax.f32 %v982, 0.0
      %v991 = vmax.f32 %v983, 0.0
      %v992 = vmax.f32 %v984, 0.0
      %v993 = vpack.c.bf16 %v986, %v985
      %v994 = vpack.c.bf16 %v988, %v987
      %v995 = vpack.c.bf16 %v990, %v989
      %v996 = vpack.c.bf16 %v992, %v991
      %v1001 = vunpack.c.l.b16 %v993
      %v1002 = vunpack.c.h.b16 %v993
      %v1003 = vunpack.c.l.b16 %v994
      %v1004 = vunpack.c.h.b16 %v994
      %v1005 = vunpack.c.l.b16 %v995
      %v1006 = vunpack.c.h.b16 %v995
      %v1007 = vunpack.c.l.b16 %v996
      %v1008 = vunpack.c.h.b16 %v996
      %v1009 = vpack.c.b16 %v1001, %v1001
      %v1010 = vpack.c.b16 %v1002, %v1002
      %v1011 = vpack.c.b16 %v1003, %v1003
      %v1012 = vpack.c.b16 %v1004, %v1004
      %v1013 = vpack.c.b16 %v1005, %v1005
      %v1014 = vpack.c.b16 %v1006, %v1006
      %v1015 = vpack.c.b16 %v1007, %v1007
      %v1016 = vpack.c.b16 %v1008, %v1008
      %vm1025 = vcmask 125952
      %1026 = vst.msk [vmem:[%s465] sm:$0xf] %vm1025, %v1009
      %1027 = vst.msk [vmem:[%s465 + $0x4] sm:$0xf] %vm1025, %v1010
      %1028 = vst.msk [vmem:[%s465 + $0x8] sm:$0xf] %vm1025, %v1011
      %1029 = vst.msk [vmem:[%s465 + $0xc] sm:$0xf] %vm1025, %v1012
      %1030 = vst.msk [vmem:[%s465 + $0x10] sm:$0xf] %vm1025, %v1013
      %1031 = vst.msk [vmem:[%s465 + $0x14] sm:$0xf] %vm1025, %v1014
      %1032 = vst.msk [vmem:[%s465 + $0x18] sm:$0xf] %vm1025, %v1015
      %1033 = vst.msk [vmem:[%s465 + $0x1c] sm:$0xf] %vm1025, %v1016
      %s1034 = smul.u32 8, %s24
      %p1035 = scmp.lt.s32.totalorder %s23, 1
      %s1036 = scalar_select %p1035, %s23, 1
      %p1037 = scmp.lt.s32.totalorder %s1034, 7
      %s1038 = scalar_select %p1037, %s1034, 7
      %s1039 = smul.addr %s1036, 8
      %s1040 = sadd.s32 %s1038, %s1039
      %s1041 = smul.addr %s1040, 4
      %s1042 = scalar_lea.vmem %s8, %s1041
      // Predicated region
      $region53: #{deeplabv3_forward.20} parent=51 // pred_check
        %p1043 = pneg %p252
      $region54: #{deeplabv3_forward.20} parent=51 // pred_check_branch
        %1045 = sbr.rel (%p1043) target = $region56
      $region55: #{deeplabv3_forward.20} parent=51 // pred_region
        %s1046 = smul.u32 8, %s24
      $region56: #{deeplabv3_forward.20} parent=51 // pred_fallthru
        _
    $region52: #{deeplabv3_forward.20} parent=5 // pred_fallthru
      _
    %p1047 = scmp.le.s32.totalorder 2, %s14
    // Predicated region
    $region57: #{deeplabv3_forward.20} parent=5 // pred_check
      %p1048 = pneg %p1047
    $region58: #{deeplabv3_forward.20} parent=5 // pred_check_branch
      %1050 = sbr.rel (%p1048) target = $region60
    $region59: #{deeplabv3_forward.20} parent=5 // pred_region
      %s1051 = ssub.s32 %s14, 2
      // Predicated region
      $region61: #{deeplabv3_forward.20} parent=59 // pred_check
        %p1052 = pneg %p258
      $region62: #{deeplabv3_forward.20} parent=59 // pred_check_branch
        %1054 = sbr.rel (%p1052) target = $region64
      $region63: #{deeplabv3_forward.20} parent=59 // pred_region
        %s1055 = smul.u32 8, %s26
        %p1056 = scmp.lt.s32.totalorder %s25, 1
        %s1057 = scalar_select %p1056, %s25, 1
        %p1058 = scmp.lt.s32.totalorder %s1055, 7
        %s1059 = scalar_select %p1058, %s1055, 7
        %s1060 = smul.addr %s1057, 8
        %s1061 = sadd.s32 %s1059, %s1060
        %s1062 = smul.addr %s1061, 4
        %s1063 = scalar_lea.vmem %s8, %s1062
      $region64: #{deeplabv3_forward.20} parent=59 // pred_fallthru
        _
    $region60: #{deeplabv3_forward.20} parent=5 // pred_fallthru
      _
  $region6: #{deeplabv3_forward.20} parent=0 // loop_footer
    %s18 = sadd.s32 1, %s14
  $region7: #{deeplabv3_forward.20} parent=0 // loop_footer_branch
    %13 = sbr.rel target = $region3
  $region8: #{deeplabv3_forward.20} parent=0 // loop_exit
    _

// kernel: deeplabv3_forward.21
$region0: #{deeplabv3_forward.21}
  #allocation0 [shape = 'u32[]', space=smem, size = 0x4, offset = 0x4, fixed_abs, tag = 'smem constant byte address 0x4 - core index']
  #allocation1 [shape = 'u32[144,128]{1,0:T(1,128)}', space=vmem, size = 0x12000, scoped, tag = 'internal scratch']
  #allocation2 [shape = 'f32[128,8]{1,0:T(8,128)}', space=vmem, size = 0x10000, scoped, tag = 'scratch operand']
  %s0 = inlined_call_operand.vmem [shape: bf16[128,16], index: 0, kind: input, shape index: {}]
  %s1 = inlined_call_operand.vmem [shape: bf16[16,8], index: 1, kind: input, shape index: {}]
  %s2 = inlined_call_operand.vmem [shape: f32[1,8], index: 2, kind: input, shape index: {}]
  %s3 = inlined_call_operand.vmem [shape: f32[1,8], index: 3, kind: input, shape index: {}]
  %s4 = inlined_call_operand.vmem [shape: f32[128,8], index: 4, kind: output, shape index: {}]
  %s5 = sld [smem:[#allocation0]]
  $region34: #{deeplabv3_forward.21} parent=0
    _
  %s7 = ssub.s32 1, %s5
  %s8 = scalar_select 0, %s7, %s5
  // Predicated region
  $region2: #{deeplabv3_forward.21} parent=0 // pred_check
    _
  $region3: #{deeplabv3_forward.21} parent=0 // pred_check_branch
    %10 = sbr.rel (0) target = $region5
  $region4: #{deeplabv3_forward.21} parent=0 // pred_region
    _
  $region5: #{deeplabv3_forward.21} parent=0 // pred_fallthru
    _
  // Predicated region
  $region6: #{deeplabv3_forward.21} parent=0 // pred_check
    _
  $region7: #{deeplabv3_forward.21} parent=0 // pred_check_branch
    %12 = sbr.rel (0) target = $region9
  $region8: #{deeplabv3_forward.21} parent=0 // pred_region
    _
  $region9: #{deeplabv3_forward.21} parent=0 // pred_fallthru
    _
  // Predicated region
  $region10: #{deeplabv3_forward.21} parent=0 // pred_check
    _
  $region11: #{deeplabv3_forward.21} parent=0 // pred_check_branch
    %14 = sbr.rel (0) target = $region13
  $region12: #{deeplabv3_forward.21} parent=0 // pred_region
    _
  $region13: #{deeplabv3_forward.21} parent=0 // pred_fallthru
    _
  // Predicated region
  $region14: #{deeplabv3_forward.21} parent=0 // pred_check
    _
  $region15: #{deeplabv3_forward.21} parent=0 // pred_check_branch
    %16 = sbr.rel (0) target = $region17
  $region16: #{deeplabv3_forward.21} parent=0 // pred_region
    _
  $region17: #{deeplabv3_forward.21} parent=0 // pred_fallthru
    _
  %p18 = scmp.eq.s32.totalorder 0, 0
  // Predicated region
  $region18: #{deeplabv3_forward.21} parent=0 // pred_check
    %p19 = pneg %p18
  $region19: #{deeplabv3_forward.21} parent=0 // pred_check_branch
    %21 = sbr.rel (%p19) target = $region21
  $region20: #{deeplabv3_forward.21} parent=0 // pred_region
    %vm22 = vcmask 64512
    %23 = vst.msk [vmem:[#allocation2] sm:$0xff] %vm22, 0.0
    %24 = vst.msk [vmem:[#allocation2 + $0x8] sm:$0xff] %vm22, 0.0
    %25 = vst.msk [vmem:[#allocation2 + $0x10] sm:$0xff] %vm22, 0.0
    %26 = vst.msk [vmem:[#allocation2 + $0x18] sm:$0xff] %vm22, 0.0
    %27 = vst.msk [vmem:[#allocation2 + $0x20] sm:$0xff] %vm22, 0.0
    %28 = vst.msk [vmem:[#allocation2 + $0x28] sm:$0xff] %vm22, 0.0
    %29 = vst.msk [vmem:[#allocation2 + $0x30] sm:$0xff] %vm22, 0.0
    %30 = vst.msk [vmem:[#allocation2 + $0x38] sm:$0xff] %vm22, 0.0
    %31 = vst.msk [vmem:[#allocation2 + $0x40] sm:$0xff] %vm22, 0.0
    %32 = vst.msk [vmem:[#allocation2 + $0x48] sm:$0xff] %vm22, 0.0
    %33 = vst.msk [vmem:[#allocation2 + $0x50] sm:$0xff] %vm22, 0.0
    %34 = vst.msk [vmem:[#allocation2 + $0x58] sm:$0xff] %vm22, 0.0
    %35 = vst.msk [vmem:[#allocation2 + $0x60] sm:$0xff] %vm22, 0.0
    %36 = vst.msk [vmem:[#allocation2 + $0x68] sm:$0xff] %vm22, 0.0
    %37 = vst.msk [vmem:[#allocation2 + $0x70] sm:$0xff] %vm22, 0.0
    %38 = vst.msk [vmem:[#allocation2 + $0x78] sm:$0xff] %vm22, 0.0
  $region21: #{deeplabv3_forward.21} parent=0 // pred_fallthru
    _
  %v39 = vld [vmem:[#allocation2] sm:$0xff]
  %v40 = vld [vmem:[#allocation2 + $0x8] sm:$0xff]
  %v41 = vld [vmem:[#allocation2 + $0x10] sm:$0xff]
  %v42 = vld [vmem:[#allocation2 + $0x18] sm:$0xff]
  %v43 = vld [vmem:[#allocation2 + $0x20] sm:$0xff]
  %v44 = vld [vmem:[#allocation2 + $0x28] sm:$0xff]
  %v45 = vld [vmem:[#allocation2 + $0x30] sm:$0xff]
  %v46 = vld [vmem:[#allocation2 + $0x38] sm:$0xff]
  %v47 = vld [vmem:[#allocation2 + $0x40] sm:$0xff]
  %v48 = vld [vmem:[#allocation2 + $0x48] sm:$0xff]
  %v49 = vld [vmem:[#allocation2 + $0x50] sm:$0xff]
  %v50 = vld [vmem:[#allocation2 + $0x58] sm:$0xff]
  %v51 = vld [vmem:[#allocation2 + $0x60] sm:$0xff]
  %v52 = vld [vmem:[#allocation2 + $0x68] sm:$0xff]
  %v53 = vld [vmem:[#allocation2 + $0x70] sm:$0xff]
  %v54 = vld [vmem:[#allocation2 + $0x78] sm:$0xff]
  %v55 = vld [vmem:[%s0] sm:$0xf]
  %v56 = vld [vmem:[%s0 + $0x4] sm:$0xf]
  %v57 = vld [vmem:[%s0 + $0x8] sm:$0xf]
  %v58 = vld [vmem:[%s0 + $0xc] sm:$0xf]
  %v59 = vld [vmem:[%s0 + $0x10] sm:$0xf]
  %v60 = vld [vmem:[%s0 + $0x14] sm:$0xf]
  %v61 = vld [vmem:[%s0 + $0x18] sm:$0xf]
  %v62 = vld [vmem:[%s0 + $0x1c] sm:$0xf]
  %v63 = vld [vmem:[%s0 + $0x20] sm:$0xf]
  %v64 = vld [vmem:[%s0 + $0x24] sm:$0xf]
  %v65 = vld [vmem:[%s0 + $0x28] sm:$0xf]
  %v66 = vld [vmem:[%s0 + $0x2c] sm:$0xf]
  %v67 = vld [vmem:[%s0 + $0x30] sm:$0xf]
  %v68 = vld [vmem:[%s0 + $0x34] sm:$0xf]
  %v69 = vld [vmem:[%s0 + $0x38] sm:$0xf]
  %v70 = vld [vmem:[%s0 + $0x3c] sm:$0xf]
  %v71 = vld [vmem:[%s1] sm:$0xf]
  %v72 = vld [vmem:[%s1 + $0x4] sm:$0xf]
  %v89 = vunpack.c.l.b16 %v55
  %v90 = vunpack.c.l.b16 %v56
  %v91 = vunpack.c.l.b16 %v57
  %v92 = vunpack.c.l.b16 %v58
  %v93 = vunpack.c.l.b16 %v59
  %v94 = vunpack.c.l.b16 %v60
  %v95 = vunpack.c.l.b16 %v61
  %v96 = vunpack.c.l.b16 %v62
  %v97 = vunpack.c.l.b16 %v63
  %v98 = vunpack.c.l.b16 %v64
  %v99 = vunpack.c.l.b16 %v65
  %v100 = vunpack.c.l.b16 %v66
  %v101 = vunpack.c.l.b16 %v67
  %v102 = vunpack.c.l.b16 %v68
  %v103 = vunpack.c.l.b16 %v69
  %v104 = vunpack.c.l.b16 %v70
  %v105 = vpack.c.b16 %v90, %v89
  %v106 = vpack.c.b16 %v92, %v91
  %v107 = vpack.c.b16 %v94, %v93
  %v108 = vpack.c.b16 %v96, %v95
  %v109 = vpack.c.b16 %v98, %v97
  %v110 = vpack.c.b16 %v100, %v99
  %v111 = vpack.c.b16 %v102, %v101
  %v112 = vpack.c.b16 %v104, %v103
  %v115 = vunpack.c.l.b16 %v71
  %v116 = vunpack.c.l.b16 %v72
  %v117 = vpack.c.b16 %v116, %v115
  %vm119 = vcmask 130048
  %v121 = vsel %vm119, %v105, 0
  %v124 = vsel %vm119, %v106, 0
  %v127 = vsel %vm119, %v107, 0
  %v130 = vsel %vm119, %v108, 0
  %v133 = vsel %vm119, %v109, 0
  %v136 = vsel %vm119, %v110, 0
  %v139 = vsel %vm119, %v111, 0
  %v142 = vsel %vm119, %v112, 0
  %144 = vmatprep.subr.bf16.mxu0 0
  %145 = vmatpush1.bf16.msra.mxu0 %v117
  %146 = vmatprep.subr.bf16.mxu0 0
  %147 = vmatpush1.bf16.msra.mxu0 0
  %148 = vmatprep.subr.bf16.mxu0 0
  %149 = vmatpush1.bf16.msra.mxu0 0
  %150 = vmatprep.subr.bf16.mxu0 0
  %151 = vmatpush1.bf16.msra.mxu0 0
  %152 = vmatprep.subr.bf16.mxu0 0
  %153 = vmatpush1.bf16.msra.mxu0 0
  %154 = vmatprep.subr.bf16.mxu0 0
  %155 = vmatpush1.bf16.msra.mxu0 0
  %156 = vmatprep.subr.bf16.mxu0 0
  %157 = vmatpush1.bf16.msra.mxu0 0
  %158 = vmatprep.subr.bf16.mxu0 0
  %159 = vmatpush1.bf16.msra.mxu0 0
  %160 = vmatprep.subr.bf16.mxu0 0
  %161 = vmatpush1.bf16.msra.mxu0 0
  %162 = vmatprep.subr.bf16.mxu0 0
  %163 = vmatpush1.bf16.msra.mxu0 0
  %164 = vmatprep.subr.bf16.mxu0 0
  %165 = vmatpush1.bf16.msra.mxu0 0
  %166 = vmatprep.subr.bf16.mxu0 0
  %167 = vmatpush1.bf16.msra.mxu0 0
  %168 = vmatprep.subr.bf16.mxu0 0
  %169 = vmatpush1.bf16.msra.mxu0 0
  %170 = vmatprep.subr.bf16.mxu0 0
  %171 = vmatpush1.bf16.msra.mxu0 0
  %172 = vmatprep.subr.bf16.mxu0 0
  %173 = vmatpush1.bf16.msra.mxu0 0
  %174 = vmatprep.subr.bf16.mxu0 0
  %175 = vmatpush1.bf16.msra.mxu0 0
  %176 = vmatprep.mubr.bf16.mxu0 0
  %177 = vmatmul.mubr.bf16.gmra.mrb[0].mxu0 %v121
  %v178 = vpop.f32.mrb[0].mxu0
  %v179 = vadd.f32 0.0, %v178
  %v180 = vpop.f32.mrb[0].mxu0
  %v181 = vpop.f32.mrb[0].mxu0
  %v182 = vadd.f32 0.0, %v181
  %v183 = vpop.f32.mrb[0].mxu0
  %184 = vmatprep.mubr.bf16.mxu0 0
  %185 = vmatmul.mubr.bf16.gmra.mrb[0].mxu0 %v124
  %v186 = vpop.f32.mrb[0].mxu0
  %v187 = vadd.f32 0.0, %v186
  %v188 = vpop.f32.mrb[0].mxu0
  %v189 = vpop.f32.mrb[0].mxu0
  %v190 = vadd.f32 0.0, %v189
  %v191 = vpop.f32.mrb[0].mxu0
  %192 = vmatprep.mubr.bf16.mxu0 0
  %193 = vmatmul.mubr.bf16.gmra.mrb[0].mxu0 %v127
  %v194 = vpop.f32.mrb[0].mxu0
  %v195 = vadd.f32 0.0, %v194
  %v196 = vpop.f32.mrb[0].mxu0
  %v197 = vpop.f32.mrb[0].mxu0
  %v198 = vadd.f32 0.0, %v197
  %v199 = vpop.f32.mrb[0].mxu0
  %200 = vmatprep.mubr.bf16.mxu0 0
  %201 = vmatmul.mubr.bf16.gmra.mrb[0].mxu0 %v130
  %v202 = vpop.f32.mrb[0].mxu0
  %v203 = vadd.f32 0.0, %v202
  %v204 = vpop.f32.mrb[0].mxu0
  %v205 = vpop.f32.mrb[0].mxu0
  %v206 = vadd.f32 0.0, %v205
  %v207 = vpop.f32.mrb[0].mxu0
  %208 = vmatprep.mubr.bf16.mxu0 0
  %209 = vmatmul.mubr.bf16.gmra.mrb[0].mxu0 %v133
  %v210 = vpop.f32.mrb[0].mxu0
  %v211 = vadd.f32 0.0, %v210
  %v212 = vpop.f32.mrb[0].mxu0
  %v213 = vpop.f32.mrb[0].mxu0
  %v214 = vadd.f32 0.0, %v213
  %v215 = vpop.f32.mrb[0].mxu0
  %216 = vmatprep.mubr.bf16.mxu0 0
  %217 = vmatmul.mubr.bf16.gmra.mrb[0].mxu0 %v136
  %v218 = vpop.f32.mrb[0].mxu0
  %v219 = vadd.f32 0.0, %v218
  %v220 = vpop.f32.mrb[0].mxu0
  %v221 = vpop.f32.mrb[0].mxu0
  %v222 = vadd.f32 0.0, %v221
  %v223 = vpop.f32.mrb[0].mxu0
  %224 = vmatprep.mubr.bf16.mxu0 0
  %225 = vmatmul.mubr.bf16.gmra.mrb[0].mxu0 %v139
  %v226 = vpop.f32.mrb[0].mxu0
  %v227 = vadd.f32 0.0, %v226
  %v228 = vpop.f32.mrb[0].mxu0
  %v229 = vpop.f32.mrb[0].mxu0
  %v230 = vadd.f32 0.0, %v229
  %v231 = vpop.f32.mrb[0].mxu0
  %232 = vmatprep.mubr.bf16.mxu0 0
  %233 = vmatmul.mubr.bf16.gmra.mrb[0].mxu0 %v142
  %v234 = vpop.f32.mrb[0].mxu0
  %v235 = vadd.f32 0.0, %v234
  %v236 = vpop.f32.mrb[0].mxu0
  %v237 = vpop.f32.mrb[0].mxu0
  %v238 = vadd.f32 0.0, %v237
  %v239 = vpop.f32.mrb[0].mxu0
  %240 = vdwg.mxu0
  %v241 = vadd.f32 %v39, %v179
  %v242 = vadd.f32 %v40, %v182
  %v243 = vadd.f32 %v41, %v187
  %v244 = vadd.f32 %v42, %v190
  %v245 = vadd.f32 %v43, %v195
  %v246 = vadd.f32 %v44, %v198
  %v247 = vadd.f32 %v45, %v203
  %v248 = vadd.f32 %v46, %v206
  %v249 = vadd.f32 %v47, %v211
  %v250 = vadd.f32 %v48, %v214
  %v251 = vadd.f32 %v49, %v219
  %v252 = vadd.f32 %v50, %v222
  %v253 = vadd.f32 %v51, %v227
  %v254 = vadd.f32 %v52, %v230
  %v255 = vadd.f32 %v53, %v235
  %v256 = vadd.f32 %v54, %v238
  %vm257 = vcmask 64512
  %258 = vst.msk [vmem:[#allocation2] sm:$0xff] %vm257, %v241
  %259 = vst.msk [vmem:[#allocation2 + $0x8] sm:$0xff] %vm257, %v242
  %260 = vst.msk [vmem:[#allocation2 + $0x10] sm:$0xff] %vm257, %v243
  %261 = vst.msk [vmem:[#allocation2 + $0x18] sm:$0xff] %vm257, %v244
  %262 = vst.msk [vmem:[#allocation2 + $0x20] sm:$0xff] %vm257, %v245
  %263 = vst.msk [vmem:[#allocation2 + $0x28] sm:$0xff] %vm257, %v246
  %264 = vst.msk [vmem:[#allocation2 + $0x30] sm:$0xff] %vm257, %v247
  %265 = vst.msk [vmem:[#allocation2 + $0x38] sm:$0xff] %vm257, %v248
  %266 = vst.msk [vmem:[#allocation2 + $0x40] sm:$0xff] %vm257, %v249
  %267 = vst.msk [vmem:[#allocation2 + $0x48] sm:$0xff] %vm257, %v250
  %268 = vst.msk [vmem:[#allocation2 + $0x50] sm:$0xff] %vm257, %v251
  %269 = vst.msk [vmem:[#allocation2 + $0x58] sm:$0xff] %vm257, %v252
  %270 = vst.msk [vmem:[#allocation2 + $0x60] sm:$0xff] %vm257, %v253
  %271 = vst.msk [vmem:[#allocation2 + $0x68] sm:$0xff] %vm257, %v254
  %272 = vst.msk [vmem:[#allocation2 + $0x70] sm:$0xff] %vm257, %v255
  %273 = vst.msk [vmem:[#allocation2 + $0x78] sm:$0xff] %vm257, %v256
  // Predicated region
  $region22: #{deeplabv3_forward.21} parent=0 // pred_check
    %p274 = pneg %p18
  $region23: #{deeplabv3_forward.21} parent=0 // pred_check_branch
    %276 = sbr.rel (%p274) target = $region25
  $region24: #{deeplabv3_forward.21} parent=0 // pred_region
    %v277 = vld [vmem:[#allocation2] sm:$0xff]
    %v278 = vld [vmem:[#allocation2 + $0x8] sm:$0xff]
    %v279 = vld [vmem:[#allocation2 + $0x10] sm:$0xff]
    %v280 = vld [vmem:[#allocation2 + $0x18] sm:$0xff]
    %v281 = vld [vmem:[#allocation2 + $0x20] sm:$0xff]
    %v282 = vld [vmem:[#allocation2 + $0x28] sm:$0xff]
    %v283 = vld [vmem:[#allocation2 + $0x30] sm:$0xff]
    %v284 = vld [vmem:[#allocation2 + $0x38] sm:$0xff]
    %v285 = vld [vmem:[#allocation2 + $0x40] sm:$0xff]
    %v286 = vld [vmem:[#allocation2 + $0x48] sm:$0xff]
    %v287 = vld [vmem:[#allocation2 + $0x50] sm:$0xff]
    %v288 = vld [vmem:[#allocation2 + $0x58] sm:$0xff]
    %v289 = vld [vmem:[#allocation2 + $0x60] sm:$0xff]
    %v290 = vld [vmem:[#allocation2 + $0x68] sm:$0xff]
    %v291 = vld [vmem:[#allocation2 + $0x70] sm:$0xff]
    %v292 = vld [vmem:[#allocation2 + $0x78] sm:$0xff]
    %v293 = vld [vmem:[%s2] sm:$0x1]
    %v295 = vlaneseq
    %v296 = vshrl.u32 %v295, 7
    %v297 = vsub.s32 0, %v296
    %v298 = vrot.slane %v293, %v297
    %v300 = vmul.f32 %v277, %v298
    %v301 = vmul.f32 %v278, %v298
    %v302 = vmul.f32 %v279, %v298
    %v303 = vmul.f32 %v280, %v298
    %v304 = vmul.f32 %v281, %v298
    %v305 = vmul.f32 %v282, %v298
    %v306 = vmul.f32 %v283, %v298
    %v307 = vmul.f32 %v284, %v298
    %v308 = vmul.f32 %v285, %v298
    %v309 = vmul.f32 %v286, %v298
    %v310 = vmul.f32 %v287, %v298
    %v311 = vmul.f32 %v288, %v298
    %v312 = vmul.f32 %v289, %v298
    %v313 = vmul.f32 %v290, %v298
    %v314 = vmul.f32 %v291, %v298
    %v315 = vmul.f32 %v292, %v298
    %v316 = vld [vmem:[%s3] sm:$0x1]
    %v318 = vlaneseq
    %v319 = vshrl.u32 %v318, 7
    %v320 = vsub.s32 0, %v319
    %v321 = vrot.slane %v316, %v320
    %v323 = vadd.f32 %v300, %v321
    %v324 = vadd.f32 %v301, %v321
    %v325 = vadd.f32 %v302, %v321
    %v326 = vadd.f32 %v303, %v321
    %v327 = vadd.f32 %v304, %v321
    %v328 = vadd.f32 %v305, %v321
    %v329 = vadd.f32 %v306, %v321
    %v330 = vadd.f32 %v307, %v321
    %v331 = vadd.f32 %v308, %v321
    %v332 = vadd.f32 %v309, %v321
    %v333 = vadd.f32 %v310, %v321
    %v334 = vadd.f32 %v311, %v321
    %v335 = vadd.f32 %v312, %v321
    %v336 = vadd.f32 %v313, %v321
    %v337 = vadd.f32 %v314, %v321
    %v338 = vadd.f32 %v315, %v321
    %339 = vst.msk [vmem:[%s4] sm:$0xff] %vm257, %v323
    %340 = vst.msk [vmem:[%s4 + $0x8] sm:$0xff] %vm257, %v324
    %341 = vst.msk [vmem:[%s4 + $0x10] sm:$0xff] %vm257, %v325
    %342 = vst.msk [vmem:[%s4 + $0x18] sm:$0xff] %vm257, %v326
    %343 = vst.msk [vmem:[%s4 + $0x20] sm:$0xff] %vm257, %v327
    %344 = vst.msk [vmem:[%s4 + $0x28] sm:$0xff] %vm257, %v328
    %345 = vst.msk [vmem:[%s4 + $0x30] sm:$0xff] %vm257, %v329
    %346 = vst.msk [vmem:[%s4 + $0x38] sm:$0xff] %vm257, %v330
    %347 = vst.msk [vmem:[%s4 + $0x40] sm:$0xff] %vm257, %v331
    %348 = vst.msk [vmem:[%s4 + $0x48] sm:$0xff] %vm257, %v332
    %349 = vst.msk [vmem:[%s4 + $0x50] sm:$0xff] %vm257, %v333
    %350 = vst.msk [vmem:[%s4 + $0x58] sm:$0xff] %vm257, %v334
    %351 = vst.msk [vmem:[%s4 + $0x60] sm:$0xff] %vm257, %v335
    %352 = vst.msk [vmem:[%s4 + $0x68] sm:$0xff] %vm257, %v336
    %353 = vst.msk [vmem:[%s4 + $0x70] sm:$0xff] %vm257, %v337
    %354 = vst.msk [vmem:[%s4 + $0x78] sm:$0xff] %vm257, %v338
  $region25: #{deeplabv3_forward.21} parent=0 // pred_fallthru
    _
  // Predicated region
  $region26: #{deeplabv3_forward.21} parent=0 // pred_check
    _
  $region27: #{deeplabv3_forward.21} parent=0 // pred_check_branch
    %356 = sbr.rel (0) target = $region29
  $region28: #{deeplabv3_forward.21} parent=0 // pred_region
    _
  $region29: #{deeplabv3_forward.21} parent=0 // pred_fallthru
    _
  // Predicated region
  $region30: #{deeplabv3_forward.21} parent=0 // pred_check
    _
  $region31: #{deeplabv3_forward.21} parent=0 // pred_check_branch
    %358 = sbr.rel (0) target = $region33
  $region32: #{deeplabv3_forward.21} parent=0 // pred_region
    _
  $region33: #{deeplabv3_forward.21} parent=0 // pred_fallthru
    _

// kernel: deeplabv3_forward.22
$region0: #{deeplabv3_forward.22}
  #allocation0 [shape = 'u32[]', space=smem, size = 0x4, offset = 0x4, fixed_abs, tag = 'smem constant byte address 0x4 - core index']
  #allocation1 [shape = 'u32[144,128]{1,0:T(1,128)}', space=vmem, size = 0x12000, scoped, tag = 'internal scratch']
  #allocation2 [shape = 'f32[128,32]{1,0:T(8,128)}', space=vmem, size = 0x10000, scoped, tag = 'scratch operand']
  %s0 = inlined_call_operand.vmem [shape: bf16[128,8], index: 0, kind: input, shape index: {}]
  %s1 = inlined_call_operand.vmem [shape: bf16[8,32], index: 1, kind: input, shape index: {}]
  %s2 = inlined_call_operand.vmem [shape: f32[128,32], index: 2, kind: output, shape index: {}]
  %s3 = sld [smem:[#allocation0]]
  $region26: #{deeplabv3_forward.22} parent=0
    _
  %s5 = ssub.s32 1, %s3
  %s6 = scalar_select 0, %s5, %s3
  // Predicated region
  $region2: #{deeplabv3_forward.22} parent=0 // pred_check
    _
  $region3: #{deeplabv3_forward.22} parent=0 // pred_check_branch
    %8 = sbr.rel (0) target = $region5
  $region4: #{deeplabv3_forward.22} parent=0 // pred_region
    _
  $region5: #{deeplabv3_forward.22} parent=0 // pred_fallthru
    _
  // Predicated region
  $region6: #{deeplabv3_forward.22} parent=0 // pred_check
    _
  $region7: #{deeplabv3_forward.22} parent=0 // pred_check_branch
    %10 = sbr.rel (0) target = $region9
  $region8: #{deeplabv3_forward.22} parent=0 // pred_region
    _
  $region9: #{deeplabv3_forward.22} parent=0 // pred_fallthru
    _
  %p12 = scmp.eq.s32.totalorder 0, 0
  // Predicated region
  $region10: #{deeplabv3_forward.22} parent=0 // pred_check
    %p13 = pneg %p12
  $region11: #{deeplabv3_forward.22} parent=0 // pred_check_branch
    %15 = sbr.rel (%p13) target = $region13
  $region12: #{deeplabv3_forward.22} parent=0 // pred_region
    %vm16 = vcmask 261120
    %17 = vst.msk [vmem:[#allocation2] sm:$0xff] %vm16, 0.0
    %18 = vst.msk [vmem:[#allocation2 + $0x8] sm:$0xff] %vm16, 0.0
    %19 = vst.msk [vmem:[#allocation2 + $0x10] sm:$0xff] %vm16, 0.0
    %20 = vst.msk [vmem:[#allocation2 + $0x18] sm:$0xff] %vm16, 0.0
    %21 = vst.msk [vmem:[#allocation2 + $0x20] sm:$0xff] %vm16, 0.0
    %22 = vst.msk [vmem:[#allocation2 + $0x28] sm:$0xff] %vm16, 0.0
    %23 = vst.msk [vmem:[#allocation2 + $0x30] sm:$0xff] %vm16, 0.0
    %24 = vst.msk [vmem:[#allocation2 + $0x38] sm:$0xff] %vm16, 0.0
    %25 = vst.msk [vmem:[#allocation2 + $0x40] sm:$0xff] %vm16, 0.0
    %26 = vst.msk [vmem:[#allocation2 + $0x48] sm:$0xff] %vm16, 0.0
    %27 = vst.msk [vmem:[#allocation2 + $0x50] sm:$0xff] %vm16, 0.0
    %28 = vst.msk [vmem:[#allocation2 + $0x58] sm:$0xff] %vm16, 0.0
    %29 = vst.msk [vmem:[#allocation2 + $0x60] sm:$0xff] %vm16, 0.0
    %30 = vst.msk [vmem:[#allocation2 + $0x68] sm:$0xff] %vm16, 0.0
    %31 = vst.msk [vmem:[#allocation2 + $0x70] sm:$0xff] %vm16, 0.0
    %32 = vst.msk [vmem:[#allocation2 + $0x78] sm:$0xff] %vm16, 0.0
  $region13: #{deeplabv3_forward.22} parent=0 // pred_fallthru
    _
  %v33 = vld [vmem:[#allocation2] sm:$0xff]
  %v34 = vld [vmem:[#allocation2 + $0x8] sm:$0xff]
  %v35 = vld [vmem:[#allocation2 + $0x10] sm:$0xff]
  %v36 = vld [vmem:[#allocation2 + $0x18] sm:$0xff]
  %v37 = vld [vmem:[#allocation2 + $0x20] sm:$0xff]
  %v38 = vld [vmem:[#allocation2 + $0x28] sm:$0xff]
  %v39 = vld [vmem:[#allocation2 + $0x30] sm:$0xff]
  %v40 = vld [vmem:[#allocation2 + $0x38] sm:$0xff]
  %v41 = vld [vmem:[#allocation2 + $0x40] sm:$0xff]
  %v42 = vld [vmem:[#allocation2 + $0x48] sm:$0xff]
  %v43 = vld [vmem:[#allocation2 + $0x50] sm:$0xff]
  %v44 = vld [vmem:[#allocation2 + $0x58] sm:$0xff]
  %v45 = vld [vmem:[#allocation2 + $0x60] sm:$0xff]
  %v46 = vld [vmem:[#allocation2 + $0x68] sm:$0xff]
  %v47 = vld [vmem:[#allocation2 + $0x70] sm:$0xff]
  %v48 = vld [vmem:[#allocation2 + $0x78] sm:$0xff]
  %v49 = vld [vmem:[%s0] sm:$0xf]
  %v50 = vld [vmem:[%s0 + $0x4] sm:$0xf]
  %v51 = vld [vmem:[%s0 + $0x8] sm:$0xf]
  %v52 = vld [vmem:[%s0 + $0xc] sm:$0xf]
  %v53 = vld [vmem:[%s0 + $0x10] sm:$0xf]
  %v54 = vld [vmem:[%s0 + $0x14] sm:$0xf]
  %v55 = vld [vmem:[%s0 + $0x18] sm:$0xf]
  %v56 = vld [vmem:[%s0 + $0x1c] sm:$0xf]
  %v57 = vld [vmem:[%s0 + $0x20] sm:$0xf]
  %v58 = vld [vmem:[%s0 + $0x24] sm:$0xf]
  %v59 = vld [vmem:[%s0 + $0x28] sm:$0xf]
  %v60 = vld [vmem:[%s0 + $0x2c] sm:$0xf]
  %v61 = vld [vmem:[%s0 + $0x30] sm:$0xf]
  %v62 = vld [vmem:[%s0 + $0x34] sm:$0xf]
  %v63 = vld [vmem:[%s0 + $0x38] sm:$0xf]
  %v64 = vld [vmem:[%s0 + $0x3c] sm:$0xf]
  %v65 = vld [vmem:[%s1] sm:$0xf]
  %v82 = vunpack.c.l.b16 %v49
  %v83 = vunpack.c.l.b16 %v50
  %v84 = vunpack.c.l.b16 %v51
  %v85 = vunpack.c.l.b16 %v52
  %v86 = vunpack.c.l.b16 %v53
  %v87 = vunpack.c.l.b16 %v54
  %v88 = vunpack.c.l.b16 %v55
  %v89 = vunpack.c.l.b16 %v56
  %v90 = vunpack.c.l.b16 %v57
  %v91 = vunpack.c.l.b16 %v58
  %v92 = vunpack.c.l.b16 %v59
  %v93 = vunpack.c.l.b16 %v60
  %v94 = vunpack.c.l.b16 %v61
  %v95 = vunpack.c.l.b16 %v62
  %v96 = vunpack.c.l.b16 %v63
  %v97 = vunpack.c.l.b16 %v64
  %v98 = vpack.c.b16 %v83, %v82
  %v99 = vpack.c.b16 %v85, %v84
  %v100 = vpack.c.b16 %v87, %v86
  %v101 = vpack.c.b16 %v89, %v88
  %v102 = vpack.c.b16 %v91, %v90
  %v103 = vpack.c.b16 %v93, %v92
  %v104 = vpack.c.b16 %v95, %v94
  %v105 = vpack.c.b16 %v97, %v96
  %vm106 = vcmask 64512
  %v108 = vsel %vm106, %v98, 0
  %v111 = vsel %vm106, %v99, 0
  %v114 = vsel %vm106, %v100, 0
  %v117 = vsel %vm106, %v101, 0
  %v120 = vsel %vm106, %v102, 0
  %v123 = vsel %vm106, %v103, 0
  %v126 = vsel %vm106, %v104, 0
  %v129 = vsel %vm106, %v105, 0
  %vm131 = vcmask 1043456
  %v133 = vsel %vm131, %v65, 0
  %135 = vmatprep.subr.bf16.mxu0 0
  %136 = vmatpush1.bf16.msra.mxu0 %v133
  %137 = vmatprep.subr.bf16.mxu0 0
  %138 = vmatpush1.bf16.msra.mxu0 0
  %139 = vmatprep.subr.bf16.mxu0 0
  %140 = vmatpush1.bf16.msra.mxu0 0
  %141 = vmatprep.subr.bf16.mxu0 0
  %142 = vmatpush1.bf16.msra.mxu0 0
  %143 = vmatprep.subr.bf16.mxu0 0
  %144 = vmatpush1.bf16.msra.mxu0 0
  %145 = vmatprep.subr.bf16.mxu0 0
  %146 = vmatpush1.bf16.msra.mxu0 0
  %147 = vmatprep.subr.bf16.mxu0 0
  %148 = vmatpush1.bf16.msra.mxu0 0
  %149 = vmatprep.subr.bf16.mxu0 0
  %150 = vmatpush1.bf16.msra.mxu0 0
  %151 = vmatprep.subr.bf16.mxu0 0
  %152 = vmatpush1.bf16.msra.mxu0 0
  %153 = vmatprep.subr.bf16.mxu0 0
  %154 = vmatpush1.bf16.msra.mxu0 0
  %155 = vmatprep.subr.bf16.mxu0 0
  %156 = vmatpush1.bf16.msra.mxu0 0
  %157 = vmatprep.subr.bf16.mxu0 0
  %158 = vmatpush1.bf16.msra.mxu0 0
  %159 = vmatprep.subr.bf16.mxu0 0
  %160 = vmatpush1.bf16.msra.mxu0 0
  %161 = vmatprep.subr.bf16.mxu0 0
  %162 = vmatpush1.bf16.msra.mxu0 0
  %163 = vmatprep.subr.bf16.mxu0 0
  %164 = vmatpush1.bf16.msra.mxu0 0
  %165 = vmatprep.subr.bf16.mxu0 0
  %166 = vmatpush1.bf16.msra.mxu0 0
  %167 = vmatprep.mubr.bf16.mxu0 0
  %168 = vmatmul.mubr.bf16.gmra.mrb[0].mxu0 %v108
  %v169 = vpop.f32.mrb[0].mxu0
  %v170 = vadd.f32 0.0, %v169
  %v171 = vpop.f32.mrb[0].mxu0
  %v172 = vpop.f32.mrb[0].mxu0
  %v173 = vadd.f32 0.0, %v172
  %v174 = vpop.f32.mrb[0].mxu0
  %175 = vmatprep.mubr.bf16.mxu0 0
  %176 = vmatmul.mubr.bf16.gmra.mrb[0].mxu0 %v111
  %v177 = vpop.f32.mrb[0].mxu0
  %v178 = vadd.f32 0.0, %v177
  %v179 = vpop.f32.mrb[0].mxu0
  %v180 = vpop.f32.mrb[0].mxu0
  %v181 = vadd.f32 0.0, %v180
  %v182 = vpop.f32.mrb[0].mxu0
  %183 = vmatprep.mubr.bf16.mxu0 0
  %184 = vmatmul.mubr.bf16.gmra.mrb[0].mxu0 %v114
  %v185 = vpop.f32.mrb[0].mxu0
  %v186 = vadd.f32 0.0, %v185
  %v187 = vpop.f32.mrb[0].mxu0
  %v188 = vpop.f32.mrb[0].mxu0
  %v189 = vadd.f32 0.0, %v188
  %v190 = vpop.f32.mrb[0].mxu0
  %191 = vmatprep.mubr.bf16.mxu0 0
  %192 = vmatmul.mubr.bf16.gmra.mrb[0].mxu0 %v117
  %v193 = vpop.f32.mrb[0].mxu0
  %v194 = vadd.f32 0.0, %v193
  %v195 = vpop.f32.mrb[0].mxu0
  %v196 = vpop.f32.mrb[0].mxu0
  %v197 = vadd.f32 0.0, %v196
  %v198 = vpop.f32.mrb[0].mxu0
  %199 = vmatprep.mubr.bf16.mxu0 0
  %200 = vmatmul.mubr.bf16.gmra.mrb[0].mxu0 %v120
  %v201 = vpop.f32.mrb[0].mxu0
  %v202 = vadd.f32 0.0, %v201
  %v203 = vpop.f32.mrb[0].mxu0
  %v204 = vpop.f32.mrb[0].mxu0
  %v205 = vadd.f32 0.0, %v204
  %v206 = vpop.f32.mrb[0].mxu0
  %207 = vmatprep.mubr.bf16.mxu0 0
  %208 = vmatmul.mubr.bf16.gmra.mrb[0].mxu0 %v123
  %v209 = vpop.f32.mrb[0].mxu0
  %v210 = vadd.f32 0.0, %v209
  %v211 = vpop.f32.mrb[0].mxu0
  %v212 = vpop.f32.mrb[0].mxu0
  %v213 = vadd.f32 0.0, %v212
  %v214 = vpop.f32.mrb[0].mxu0
  %215 = vmatprep.mubr.bf16.mxu0 0
  %216 = vmatmul.mubr.bf16.gmra.mrb[0].mxu0 %v126
  %v217 = vpop.f32.mrb[0].mxu0
  %v218 = vadd.f32 0.0, %v217
  %v219 = vpop.f32.mrb[0].mxu0
  %v220 = vpop.f32.mrb[0].mxu0
  %v221 = vadd.f32 0.0, %v220
  %v222 = vpop.f32.mrb[0].mxu0
  %223 = vmatprep.mubr.bf16.mxu0 0
  %224 = vmatmul.mubr.bf16.gmra.mrb[0].mxu0 %v129
  %v225 = vpop.f32.mrb[0].mxu0
  %v226 = vadd.f32 0.0, %v225
  %v227 = vpop.f32.mrb[0].mxu0
  %v228 = vpop.f32.mrb[0].mxu0
  %v229 = vadd.f32 0.0, %v228
  %v230 = vpop.f32.mrb[0].mxu0
  %231 = vdwg.mxu0
  %v232 = vadd.f32 %v33, %v170
  %v233 = vadd.f32 %v34, %v173
  %v234 = vadd.f32 %v35, %v178
  %v235 = vadd.f32 %v36, %v181
  %v236 = vadd.f32 %v37, %v186
  %v237 = vadd.f32 %v38, %v189
  %v238 = vadd.f32 %v39, %v194
  %v239 = vadd.f32 %v40, %v197
  %v240 = vadd.f32 %v41, %v202
  %v241 = vadd.f32 %v42, %v205
  %v242 = vadd.f32 %v43, %v210
  %v243 = vadd.f32 %v44, %v213
  %v244 = vadd.f32 %v45, %v218
  %v245 = vadd.f32 %v46, %v221
  %v246 = vadd.f32 %v47, %v226
  %v247 = vadd.f32 %v48, %v229
  %vm248 = vcmask 261120
  %249 = vst.msk [vmem:[#allocation2] sm:$0xff] %vm248, %v232
  %250 = vst.msk [vmem:[#allocation2 + $0x8] sm:$0xff] %vm248, %v233
  %251 = vst.msk [vmem:[#allocation2 + $0x10] sm:$0xff] %vm248, %v234
  %252 = vst.msk [vmem:[#allocation2 + $0x18] sm:$0xff] %vm248, %v235
  %253 = vst.msk [vmem:[#allocation2 + $0x20] sm:$0xff] %vm248, %v236
  %254 = vst.msk [vmem:[#allocation2 + $0x28] sm:$0xff] %vm248, %v237
  %255 = vst.msk [vmem:[#allocation2 + $0x30] sm:$0xff] %vm248, %v238
  %256 = vst.msk [vmem:[#allocation2 + $0x38] sm:$0xff] %vm248, %v239
  %257 = vst.msk [vmem:[#allocation2 + $0x40] sm:$0xff] %vm248, %v240
  %258 = vst.msk [vmem:[#allocation2 + $0x48] sm:$0xff] %vm248, %v241
  %259 = vst.msk [vmem:[#allocation2 + $0x50] sm:$0xff] %vm248, %v242
  %260 = vst.msk [vmem:[#allocation2 + $0x58] sm:$0xff] %vm248, %v243
  %261 = vst.msk [vmem:[#allocation2 + $0x60] sm:$0xff] %vm248, %v244
  %262 = vst.msk [vmem:[#allocation2 + $0x68] sm:$0xff] %vm248, %v245
  %263 = vst.msk [vmem:[#allocation2 + $0x70] sm:$0xff] %vm248, %v246
  %264 = vst.msk [vmem:[#allocation2 + $0x78] sm:$0xff] %vm248, %v247
  // Predicated region
  $region14: #{deeplabv3_forward.22} parent=0 // pred_check
    %p265 = pneg %p12
  $region15: #{deeplabv3_forward.22} parent=0 // pred_check_branch
    %267 = sbr.rel (%p265) target = $region17
  $region16: #{deeplabv3_forward.22} parent=0 // pred_region
    %v268 = vld [vmem:[#allocation2] sm:$0xff]
    %v269 = vld [vmem:[#allocation2 + $0x8] sm:$0xff]
    %v270 = vld [vmem:[#allocation2 + $0x10] sm:$0xff]
    %v271 = vld [vmem:[#allocation2 + $0x18] sm:$0xff]
    %v272 = vld [vmem:[#allocation2 + $0x20] sm:$0xff]
    %v273 = vld [vmem:[#allocation2 + $0x28] sm:$0xff]
    %v274 = vld [vmem:[#allocation2 + $0x30] sm:$0xff]
    %v275 = vld [vmem:[#allocation2 + $0x38] sm:$0xff]
    %v276 = vld [vmem:[#allocation2 + $0x40] sm:$0xff]
    %v277 = vld [vmem:[#allocation2 + $0x48] sm:$0xff]
    %v278 = vld [vmem:[#allocation2 + $0x50] sm:$0xff]
    %v279 = vld [vmem:[#allocation2 + $0x58] sm:$0xff]
    %v280 = vld [vmem:[#allocation2 + $0x60] sm:$0xff]
    %v281 = vld [vmem:[#allocation2 + $0x68] sm:$0xff]
    %v282 = vld [vmem:[#allocation2 + $0x70] sm:$0xff]
    %v283 = vld [vmem:[#allocation2 + $0x78] sm:$0xff]
    %284 = vst.msk [vmem:[%s2] sm:$0xff] %vm248, %v268
    %285 = vst.msk [vmem:[%s2 + $0x8] sm:$0xff] %vm248, %v269
    %286 = vst.msk [vmem:[%s2 + $0x10] sm:$0xff] %vm248, %v270
    %287 = vst.msk [vmem:[%s2 + $0x18] sm:$0xff] %vm248, %v271
    %288 = vst.msk [vmem:[%s2 + $0x20] sm:$0xff] %vm248, %v272
    %289 = vst.msk [vmem:[%s2 + $0x28] sm:$0xff] %vm248, %v273
    %290 = vst.msk [vmem:[%s2 + $0x30] sm:$0xff] %vm248, %v274
    %291 = vst.msk [vmem:[%s2 + $0x38] sm:$0xff] %vm248, %v275
    %292 = vst.msk [vmem:[%s2 + $0x40] sm:$0xff] %vm248, %v276
    %293 = vst.msk [vmem:[%s2 + $0x48] sm:$0xff] %vm248, %v277
    %294 = vst.msk [vmem:[%s2 + $0x50] sm:$0xff] %vm248, %v278
    %295 = vst.msk [vmem:[%s2 + $0x58] sm:$0xff] %vm248, %v279
    %296 = vst.msk [vmem:[%s2 + $0x60] sm:$0xff] %vm248, %v280
    %297 = vst.msk [vmem:[%s2 + $0x68] sm:$0xff] %vm248, %v281
    %298 = vst.msk [vmem:[%s2 + $0x70] sm:$0xff] %vm248, %v282
    %299 = vst.msk [vmem:[%s2 + $0x78] sm:$0xff] %vm248, %v283
  $region17: #{deeplabv3_forward.22} parent=0 // pred_fallthru
    _
  // Predicated region
  $region18: #{deeplabv3_forward.22} parent=0 // pred_check
    _
  $region19: #{deeplabv3_forward.22} parent=0 // pred_check_branch
    %301 = sbr.rel (0) target = $region21
  $region20: #{deeplabv3_forward.22} parent=0 // pred_region
    _
  $region21: #{deeplabv3_forward.22} parent=0 // pred_fallthru
    _
  // Predicated region
  $region22: #{deeplabv3_forward.22} parent=0 // pred_check
    _
  $region23: #{deeplabv3_forward.22} parent=0 // pred_check_branch
    %303 = sbr.rel (0) target = $region25
  $region24: #{deeplabv3_forward.22} parent=0 // pred_region
    _
  $region25: #{deeplabv3_forward.22} parent=0 // pred_fallthru
    _

// kernel: deeplabv3_forward.23
$region0: #{deeplabv3_forward.23}
  #allocation0 [shape = 'u32[]', space=smem, size = 0x4, offset = 0x4, fixed_abs, tag = 'smem constant byte address 0x4 - core index']
  #allocation1 [shape = 'u32[144,128]{1,0:T(1,128)}', space=vmem, size = 0x12000, scoped, tag = 'internal scratch']
  #allocation2 [shape = 'f32[512,32]{1,0:T(8,128)}', space=vmem, size = 0x40000, scoped, tag = 'scratch operand']
  %s0 = inlined_call_operand.vmem [shape: bf16[512,8], index: 0, kind: input, shape index: {}]
  %s1 = inlined_call_operand.vmem [shape: bf16[8,32], index: 1, kind: input, shape index: {}]
  %s2 = inlined_call_operand.hbm [shape: f32[512,32], index: 2, kind: output, shape index: {}]
  %s3 = sld [smem:[#allocation0]]
  $region26: #{deeplabv3_forward.23} parent=0
    _
  %s5 = ssub.s32 1, %s3
  %s6 = scalar_select 0, %s5, %s3
  $region1: #{deeplabv3_forward.23} parent=0
    #allocation3 [shape = 'u8[262144]{0}', space=vmem, size = 0x40000, scoped, tag = 'output window, operand 0, single buffered']
    #allocation4 [shape = 's32[1]{0}', space=sflag, size = 0x4, scoped, tag = 'scoped memory for deeplabv3_forward.23']
    %7 = vsyncpa [#allocation4], 0
    // Predicated region
    $region2: #{deeplabv3_forward.23} parent=1 // pred_check
      _
    $region3: #{deeplabv3_forward.23} parent=1 // pred_check_branch
      %9 = sbr.rel (0) target = $region5
    $region4: #{deeplabv3_forward.23} parent=1 // pred_region
      _
    $region5: #{deeplabv3_forward.23} parent=1 // pred_fallthru
      _
    // Predicated region
    $region6: #{deeplabv3_forward.23} parent=1 // pred_check
      _
    $region7: #{deeplabv3_forward.23} parent=1 // pred_check_branch
      %11 = sbr.rel (0) target = $region9
    $region8: #{deeplabv3_forward.23} parent=1 // pred_region
      _
    $region9: #{deeplabv3_forward.23} parent=1 // pred_fallthru
      _
    %p13 = scmp.eq.s32.totalorder 0, 0
    // Predicated region
    $region10: #{deeplabv3_forward.23} parent=1 // pred_check
      %p14 = pneg %p13
    $region11: #{deeplabv3_forward.23} parent=1 // pred_check_branch
      %16 = sbr.rel (%p14) target = $region13
    $region12: #{deeplabv3_forward.23} parent=1 // pred_region
      %vm17 = vcmask 261120
      %18 = vst.msk [vmem:[#allocation2] sm:$0xff] %vm17, 0.0
      %19 = vst.msk [vmem:[#allocation2 + $0x8] sm:$0xff] %vm17, 0.0
      %20 = vst.msk [vmem:[#allocation2 + $0x10] sm:$0xff] %vm17, 0.0
      %21 = vst.msk [vmem:[#allocation2 + $0x18] sm:$0xff] %vm17, 0.0
      %22 = vst.msk [vmem:[#allocation2 + $0x20] sm:$0xff] %vm17, 0.0
      %23 = vst.msk [vmem:[#allocation2 + $0x28] sm:$0xff] %vm17, 0.0
      %24 = vst.msk [vmem:[#allocation2 + $0x30] sm:$0xff] %vm17, 0.0
      %25 = vst.msk [vmem:[#allocation2 + $0x38] sm:$0xff] %vm17, 0.0
      %26 = vst.msk [vmem:[#allocation2 + $0x40] sm:$0xff] %vm17, 0.0
      %27 = vst.msk [vmem:[#allocation2 + $0x48] sm:$0xff] %vm17, 0.0
      %28 = vst.msk [vmem:[#allocation2 + $0x50] sm:$0xff] %vm17, 0.0
      %29 = vst.msk [vmem:[#allocation2 + $0x58] sm:$0xff] %vm17, 0.0
      %30 = vst.msk [vmem:[#allocation2 + $0x60] sm:$0xff] %vm17, 0.0
      %31 = vst.msk [vmem:[#allocation2 + $0x68] sm:$0xff] %vm17, 0.0
      %32 = vst.msk [vmem:[#allocation2 + $0x70] sm:$0xff] %vm17, 0.0
      %33 = vst.msk [vmem:[#allocation2 + $0x78] sm:$0xff] %vm17, 0.0
      %34 = vst.msk [vmem:[#allocation2 + $0x80] sm:$0xff] %vm17, 0.0
      %35 = vst.msk [vmem:[#allocation2 + $0x88] sm:$0xff] %vm17, 0.0
      %36 = vst.msk [vmem:[#allocation2 + $0x90] sm:$0xff] %vm17, 0.0
      %37 = vst.msk [vmem:[#allocation2 + $0x98] sm:$0xff] %vm17, 0.0
      %38 = vst.msk [vmem:[#allocation2 + $0xa0] sm:$0xff] %vm17, 0.0
      %39 = vst.msk [vmem:[#allocation2 + $0xa8] sm:$0xff] %vm17, 0.0
      %40 = vst.msk [vmem:[#allocation2 + $0xb0] sm:$0xff] %vm17, 0.0
      %41 = vst.msk [vmem:[#allocation2 + $0xb8] sm:$0xff] %vm17, 0.0
      %42 = vst.msk [vmem:[#allocation2 + $0xc0] sm:$0xff] %vm17, 0.0
      %43 = vst.msk [vmem:[#allocation2 + $0xc8] sm:$0xff] %vm17, 0.0
      %44 = vst.msk [vmem:[#allocation2 + $0xd0] sm:$0xff] %vm17, 0.0
      %45 = vst.msk [vmem:[#allocation2 + $0xd8] sm:$0xff] %vm17, 0.0
      %46 = vst.msk [vmem:[#allocation2 + $0xe0] sm:$0xff] %vm17, 0.0
      %47 = vst.msk [vmem:[#allocation2 + $0xe8] sm:$0xff] %vm17, 0.0
      %48 = vst.msk [vmem:[#allocation2 + $0xf0] sm:$0xff] %vm17, 0.0
      %49 = vst.msk [vmem:[#allocation2 + $0xf8] sm:$0xff] %vm17, 0.0
      %50 = vst.msk [vmem:[#allocation2 + $0x100] sm:$0xff] %vm17, 0.0
      %51 = vst.msk [vmem:[#allocation2 + $0x108] sm:$0xff] %vm17, 0.0
      %52 = vst.msk [vmem:[#allocation2 + $0x110] sm:$0xff] %vm17, 0.0
      %53 = vst.msk [vmem:[#allocation2 + $0x118] sm:$0xff] %vm17, 0.0
      %54 = vst.msk [vmem:[#allocation2 + $0x120] sm:$0xff] %vm17, 0.0
      %55 = vst.msk [vmem:[#allocation2 + $0x128] sm:$0xff] %vm17, 0.0
      %56 = vst.msk [vmem:[#allocation2 + $0x130] sm:$0xff] %vm17, 0.0
      %57 = vst.msk [vmem:[#allocation2 + $0x138] sm:$0xff] %vm17, 0.0
      %58 = vst.msk [vmem:[#allocation2 + $0x140] sm:$0xff] %vm17, 0.0
      %59 = vst.msk [vmem:[#allocation2 + $0x148] sm:$0xff] %vm17, 0.0
      %60 = vst.msk [vmem:[#allocation2 + $0x150] sm:$0xff] %vm17, 0.0
      %61 = vst.msk [vmem:[#allocation2 + $0x158] sm:$0xff] %vm17, 0.0
      %62 = vst.msk [vmem:[#allocation2 + $0x160] sm:$0xff] %vm17, 0.0
      %63 = vst.msk [vmem:[#allocation2 + $0x168] sm:$0xff] %vm17, 0.0
      %64 = vst.msk [vmem:[#allocation2 + $0x170] sm:$0xff] %vm17, 0.0
      %65 = vst.msk [vmem:[#allocation2 + $0x178] sm:$0xff] %vm17, 0.0
      %66 = vst.msk [vmem:[#allocation2 + $0x180] sm:$0xff] %vm17, 0.0
      %67 = vst.msk [vmem:[#allocation2 + $0x188] sm:$0xff] %vm17, 0.0
      %68 = vst.msk [vmem:[#allocation2 + $0x190] sm:$0xff] %vm17, 0.0
      %69 = vst.msk [vmem:[#allocation2 + $0x198] sm:$0xff] %vm17, 0.0
      %70 = vst.msk [vmem:[#allocation2 + $0x1a0] sm:$0xff] %vm17, 0.0
      %71 = vst.msk [vmem:[#allocation2 + $0x1a8] sm:$0xff] %vm17, 0.0
      %72 = vst.msk [vmem:[#allocation2 + $0x1b0] sm:$0xff] %vm17, 0.0
      %73 = vst.msk [vmem:[#allocation2 + $0x1b8] sm:$0xff] %vm17, 0.0
      %74 = vst.msk [vmem:[#allocation2 + $0x1c0] sm:$0xff] %vm17, 0.0
      %75 = vst.msk [vmem:[#allocation2 + $0x1c8] sm:$0xff] %vm17, 0.0
      %76 = vst.msk [vmem:[#allocation2 + $0x1d0] sm:$0xff] %vm17, 0.0
      %77 = vst.msk [vmem:[#allocation2 + $0x1d8] sm:$0xff] %vm17, 0.0
      %78 = vst.msk [vmem:[#allocation2 + $0x1e0] sm:$0xff] %vm17, 0.0
      %79 = vst.msk [vmem:[#allocation2 + $0x1e8] sm:$0xff] %vm17, 0.0
      %80 = vst.msk [vmem:[#allocation2 + $0x1f0] sm:$0xff] %vm17, 0.0
      %81 = vst.msk [vmem:[#allocation2 + $0x1f8] sm:$0xff] %vm17, 0.0
    $region13: #{deeplabv3_forward.23} parent=1 // pred_fallthru
      _
    %v82 = vld [vmem:[#allocation2] sm:$0xff]
    %v83 = vld [vmem:[#allocation2 + $0x8] sm:$0xff]
    %v84 = vld [vmem:[#allocation2 + $0x10] sm:$0xff]
    %v85 = vld [vmem:[#allocation2 + $0x18] sm:$0xff]
    %v86 = vld [vmem:[#allocation2 + $0x20] sm:$0xff]
    %v87 = vld [vmem:[#allocation2 + $0x28] sm:$0xff]
    %v88 = vld [vmem:[#allocation2 + $0x30] sm:$0xff]
    %v89 = vld [vmem:[#allocation2 + $0x38] sm:$0xff]
    %v90 = vld [vmem:[#allocation2 + $0x40] sm:$0xff]
    %v91 = vld [vmem:[#allocation2 + $0x48] sm:$0xff]
    %v92 = vld [vmem:[#allocation2 + $0x50] sm:$0xff]
    %v93 = vld [vmem:[#allocation2 + $0x58] sm:$0xff]
    %v94 = vld [vmem:[#allocation2 + $0x60] sm:$0xff]
    %v95 = vld [vmem:[#allocation2 + $0x68] sm:$0xff]
    %v96 = vld [vmem:[#allocation2 + $0x70] sm:$0xff]
    %v97 = vld [vmem:[#allocation2 + $0x78] sm:$0xff]
    %v98 = vld [vmem:[#allocation2 + $0x80] sm:$0xff]
    %v99 = vld [vmem:[#allocation2 + $0x88] sm:$0xff]
    %v100 = vld [vmem:[#allocation2 + $0x90] sm:$0xff]
    %v101 = vld [vmem:[#allocation2 + $0x98] sm:$0xff]
    %v102 = vld [vmem:[#allocation2 + $0xa0] sm:$0xff]
    %v103 = vld [vmem:[#allocation2 + $0xa8] sm:$0xff]
    %v104 = vld [vmem:[#allocation2 + $0xb0] sm:$0xff]
    %v105 = vld [vmem:[#allocation2 + $0xb8] sm:$0xff]
    %v106 = vld [vmem:[#allocation2 + $0xc0] sm:$0xff]
    %v107 = vld [vmem:[#allocation2 + $0xc8] sm:$0xff]
    %v108 = vld [vmem:[#allocation2 + $0xd0] sm:$0xff]
    %v109 = vld [vmem:[#allocation2 + $0xd8] sm:$0xff]
    %v110 = vld [vmem:[#allocation2 + $0xe0] sm:$0xff]
    %v111 = vld [vmem:[#allocation2 + $0xe8] sm:$0xff]
    %v112 = vld [vmem:[#allocation2 + $0xf0] sm:$0xff]
    %v113 = vld [vmem:[#allocation2 + $0xf8] sm:$0xff]
    %v114 = vld [vmem:[#allocation2 + $0x100] sm:$0xff]
    %v115 = vld [vmem:[#allocation2 + $0x108] sm:$0xff]
    %v116 = vld [vmem:[#allocation2 + $0x110] sm:$0xff]
    %v117 = vld [vmem:[#allocation2 + $0x118] sm:$0xff]
    %v118 = vld [vmem:[#allocation2 + $0x120] sm:$0xff]
    %v119 = vld [vmem:[#allocation2 + $0x128] sm:$0xff]
    %v120 = vld [vmem:[#allocation2 + $0x130] sm:$0xff]
    %v121 = vld [vmem:[#allocation2 + $0x138] sm:$0xff]
    %v122 = vld [vmem:[#allocation2 + $0x140] sm:$0xff]
    %v123 = vld [vmem:[#allocation2 + $0x148] sm:$0xff]
    %v124 = vld [vmem:[#allocation2 + $0x150] sm:$0xff]
    %v125 = vld [vmem:[#allocation2 + $0x158] sm:$0xff]
    %v126 = vld [vmem:[#allocation2 + $0x160] sm:$0xff]
    %v127 = vld [vmem:[#allocation2 + $0x168] sm:$0xff]
    %v128 = vld [vmem:[#allocation2 + $0x170] sm:$0xff]
    %v129 = vld [vmem:[#allocation2 + $0x178] sm:$0xff]
    %v130 = vld [vmem:[#allocation2 + $0x180] sm:$0xff]
    %v131 = vld [vmem:[#allocation2 + $0x188] sm:$0xff]
    %v132 = vld [vmem:[#allocation2 + $0x190] sm:$0xff]
    %v133 = vld [vmem:[#allocation2 + $0x198] sm:$0xff]
    %v134 = vld [vmem:[#allocation2 + $0x1a0] sm:$0xff]
    %v135 = vld [vmem:[#allocation2 + $0x1a8] sm:$0xff]
    %v136 = vld [vmem:[#allocation2 + $0x1b0] sm:$0xff]
    %v137 = vld [vmem:[#allocation2 + $0x1b8] sm:$0xff]
    %v138 = vld [vmem:[#allocation2 + $0x1c0] sm:$0xff]
    %v139 = vld [vmem:[#allocation2 + $0x1c8] sm:$0xff]
    %v140 = vld [vmem:[#allocation2 + $0x1d0] sm:$0xff]
    %v141 = vld [vmem:[#allocation2 + $0x1d8] sm:$0xff]
    %v142 = vld [vmem:[#allocation2 + $0x1e0] sm:$0xff]
    %v143 = vld [vmem:[#allocation2 + $0x1e8] sm:$0xff]
    %v144 = vld [vmem:[#allocation2 + $0x1f0] sm:$0xff]
    %v145 = vld [vmem:[#allocation2 + $0x1f8] sm:$0xff]
    %v146 = vld [vmem:[%s0] sm:$0xf]
    %v147 = vld [vmem:[%s0 + $0x4] sm:$0xf]
    %v148 = vld [vmem:[%s0 + $0x8] sm:$0xf]
    %v149 = vld [vmem:[%s0 + $0xc] sm:$0xf]
    %v150 = vld [vmem:[%s0 + $0x10] sm:$0xf]
    %v151 = vld [vmem:[%s0 + $0x14] sm:$0xf]
    %v152 = vld [vmem:[%s0 + $0x18] sm:$0xf]
    %v153 = vld [vmem:[%s0 + $0x1c] sm:$0xf]
    %v154 = vld [vmem:[%s0 + $0x20] sm:$0xf]
    %v155 = vld [vmem:[%s0 + $0x24] sm:$0xf]
    %v156 = vld [vmem:[%s0 + $0x28] sm:$0xf]
    %v157 = vld [vmem:[%s0 + $0x2c] sm:$0xf]
    %v158 = vld [vmem:[%s0 + $0x30] sm:$0xf]
    %v159 = vld [vmem:[%s0 + $0x34] sm:$0xf]
    %v160 = vld [vmem:[%s0 + $0x38] sm:$0xf]
    %v161 = vld [vmem:[%s0 + $0x3c] sm:$0xf]
    %v162 = vld [vmem:[%s0 + $0x40] sm:$0xf]
    %v163 = vld [vmem:[%s0 + $0x44] sm:$0xf]
    %v164 = vld [vmem:[%s0 + $0x48] sm:$0xf]
    %v165 = vld [vmem:[%s0 + $0x4c] sm:$0xf]
    %v166 = vld [vmem:[%s0 + $0x50] sm:$0xf]
    %v167 = vld [vmem:[%s0 + $0x54] sm:$0xf]
    %v168 = vld [vmem:[%s0 + $0x58] sm:$0xf]
    %v169 = vld [vmem:[%s0 + $0x5c] sm:$0xf]
    %v170 = vld [vmem:[%s0 + $0x60] sm:$0xf]
    %v171 = vld [vmem:[%s0 + $0x64] sm:$0xf]
    %v172 = vld [vmem:[%s0 + $0x68] sm:$0xf]
    %v173 = vld [vmem:[%s0 + $0x6c] sm:$0xf]
    %v174 = vld [vmem:[%s0 + $0x70] sm:$0xf]
    %v175 = vld [vmem:[%s0 + $0x74] sm:$0xf]
    %v176 = vld [vmem:[%s0 + $0x78] sm:$0xf]
    %v177 = vld [vmem:[%s0 + $0x7c] sm:$0xf]
    %v178 = vld [vmem:[%s0 + $0x80] sm:$0xf]
    %v179 = vld [vmem:[%s0 + $0x84] sm:$0xf]
    %v180 = vld [vmem:[%s0 + $0x88] sm:$0xf]
    %v181 = vld [vmem:[%s0 + $0x8c] sm:$0xf]
    %v182 = vld [vmem:[%s0 + $0x90] sm:$0xf]
    %v183 = vld [vmem:[%s0 + $0x94] sm:$0xf]
    %v184 = vld [vmem:[%s0 + $0x98] sm:$0xf]
    %v185 = vld [vmem:[%s0 + $0x9c] sm:$0xf]
    %v186 = vld [vmem:[%s0 + $0xa0] sm:$0xf]
    %v187 = vld [vmem:[%s0 + $0xa4] sm:$0xf]
    %v188 = vld [vmem:[%s0 + $0xa8] sm:$0xf]
    %v189 = vld [vmem:[%s0 + $0xac] sm:$0xf]
    %v190 = vld [vmem:[%s0 + $0xb0] sm:$0xf]
    %v191 = vld [vmem:[%s0 + $0xb4] sm:$0xf]
    %v192 = vld [vmem:[%s0 + $0xb8] sm:$0xf]
    %v193 = vld [vmem:[%s0 + $0xbc] sm:$0xf]
    %v194 = vld [vmem:[%s0 + $0xc0] sm:$0xf]
    %v195 = vld [vmem:[%s0 + $0xc4] sm:$0xf]
    %v196 = vld [vmem:[%s0 + $0xc8] sm:$0xf]
    %v197 = vld [vmem:[%s0 + $0xcc] sm:$0xf]
    %v198 = vld [vmem:[%s0 + $0xd0] sm:$0xf]
    %v199 = vld [vmem:[%s0 + $0xd4] sm:$0xf]
    %v200 = vld [vmem:[%s0 + $0xd8] sm:$0xf]
    %v201 = vld [vmem:[%s0 + $0xdc] sm:$0xf]
    %v202 = vld [vmem:[%s0 + $0xe0] sm:$0xf]
    %v203 = vld [vmem:[%s0 + $0xe4] sm:$0xf]
    %v204 = vld [vmem:[%s0 + $0xe8] sm:$0xf]
    %v205 = vld [vmem:[%s0 + $0xec] sm:$0xf]
    %v206 = vld [vmem:[%s0 + $0xf0] sm:$0xf]
    %v207 = vld [vmem:[%s0 + $0xf4] sm:$0xf]
    %v208 = vld [vmem:[%s0 + $0xf8] sm:$0xf]
    %v209 = vld [vmem:[%s0 + $0xfc] sm:$0xf]
    %v210 = vld [vmem:[%s1] sm:$0xf]
    %v275 = vunpack.c.l.b16 %v146
    %v276 = vunpack.c.l.b16 %v147
    %v277 = vunpack.c.l.b16 %v148
    %v278 = vunpack.c.l.b16 %v149
    %v279 = vunpack.c.l.b16 %v150
    %v280 = vunpack.c.l.b16 %v151
    %v281 = vunpack.c.l.b16 %v152
    %v282 = vunpack.c.l.b16 %v153
    %v283 = vunpack.c.l.b16 %v154
    %v284 = vunpack.c.l.b16 %v155
    %v285 = vunpack.c.l.b16 %v156
    %v286 = vunpack.c.l.b16 %v157
    %v287 = vunpack.c.l.b16 %v158
    %v288 = vunpack.c.l.b16 %v159
    %v289 = vunpack.c.l.b16 %v160
    %v290 = vunpack.c.l.b16 %v161
    %v291 = vunpack.c.l.b16 %v162
    %v292 = vunpack.c.l.b16 %v163
    %v293 = vunpack.c.l.b16 %v164
    %v294 = vunpack.c.l.b16 %v165
    %v295 = vunpack.c.l.b16 %v166
    %v296 = vunpack.c.l.b16 %v167
    %v297 = vunpack.c.l.b16 %v168
    %v298 = vunpack.c.l.b16 %v169
    %v299 = vunpack.c.l.b16 %v170
    %v300 = vunpack.c.l.b16 %v171
    %v301 = vunpack.c.l.b16 %v172
    %v302 = vunpack.c.l.b16 %v173
    %v303 = vunpack.c.l.b16 %v174
    %v304 = vunpack.c.l.b16 %v175
    %v305 = vunpack.c.l.b16 %v176
    %v306 = vunpack.c.l.b16 %v177
    %v307 = vunpack.c.l.b16 %v178
    %v308 = vunpack.c.l.b16 %v179
    %v309 = vunpack.c.l.b16 %v180
    %v310 = vunpack.c.l.b16 %v181
    %v311 = vunpack.c.l.b16 %v182
    %v312 = vunpack.c.l.b16 %v183
    %v313 = vunpack.c.l.b16 %v184
    %v314 = vunpack.c.l.b16 %v185
    %v315 = vunpack.c.l.b16 %v186
    %v316 = vunpack.c.l.b16 %v187
    %v317 = vunpack.c.l.b16 %v188
    %v318 = vunpack.c.l.b16 %v189
    %v319 = vunpack.c.l.b16 %v190
    %v320 = vunpack.c.l.b16 %v191
    %v321 = vunpack.c.l.b16 %v192
    %v322 = vunpack.c.l.b16 %v193
    %v323 = vunpack.c.l.b16 %v194
    %v324 = vunpack.c.l.b16 %v195
    %v325 = vunpack.c.l.b16 %v196
    %v326 = vunpack.c.l.b16 %v197
    %v327 = vunpack.c.l.b16 %v198
    %v328 = vunpack.c.l.b16 %v199
    %v329 = vunpack.c.l.b16 %v200
    %v330 = vunpack.c.l.b16 %v201
    %v331 = vunpack.c.l.b16 %v202
    %v332 = vunpack.c.l.b16 %v203
    %v333 = vunpack.c.l.b16 %v204
    %v334 = vunpack.c.l.b16 %v205
    %v335 = vunpack.c.l.b16 %v206
    %v336 = vunpack.c.l.b16 %v207
    %v337 = vunpack.c.l.b16 %v208
    %v338 = vunpack.c.l.b16 %v209
    %v339 = vpack.c.b16 %v276, %v275
    %v340 = vpack.c.b16 %v278, %v277
    %v341 = vpack.c.b16 %v280, %v279
    %v342 = vpack.c.b16 %v282, %v281
    %v343 = vpack.c.b16 %v284, %v283
    %v344 = vpack.c.b16 %v286, %v285
    %v345 = vpack.c.b16 %v288, %v287
    %v346 = vpack.c.b16 %v290, %v289
    %v347 = vpack.c.b16 %v292, %v291
    %v348 = vpack.c.b16 %v294, %v293
    %v349 = vpack.c.b16 %v296, %v295
    %v350 = vpack.c.b16 %v298, %v297
    %v351 = vpack.c.b16 %v300, %v299
    %v352 = vpack.c.b16 %v302, %v301
    %v353 = vpack.c.b16 %v304, %v303
    %v354 = vpack.c.b16 %v306, %v305
    %v355 = vpack.c.b16 %v308, %v307
    %v356 = vpack.c.b16 %v310, %v309
    %v357 = vpack.c.b16 %v312, %v311
    %v358 = vpack.c.b16 %v314, %v313
    %v359 = vpack.c.b16 %v316, %v315
    %v360 = vpack.c.b16 %v318, %v317
    %v361 = vpack.c.b16 %v320, %v319
    %v362 = vpack.c.b16 %v322, %v321
    %v363 = vpack.c.b16 %v324, %v323
    %v364 = vpack.c.b16 %v326, %v325
    %v365 = vpack.c.b16 %v328, %v327
    %v366 = vpack.c.b16 %v330, %v329
    %v367 = vpack.c.b16 %v332, %v331
    %v368 = vpack.c.b16 %v334, %v333
    %v369 = vpack.c.b16 %v336, %v335
    %v370 = vpack.c.b16 %v338, %v337
    %vm371 = vcmask 64512
    %v373 = vsel %vm371, %v339, 0
    %v376 = vsel %vm371, %v340, 0
    %v379 = vsel %vm371, %v341, 0
    %v382 = vsel %vm371, %v342, 0
    %v385 = vsel %vm371, %v343, 0
    %v388 = vsel %vm371, %v344, 0
    %v391 = vsel %vm371, %v345, 0
    %v394 = vsel %vm371, %v346, 0
    %v397 = vsel %vm371, %v347, 0
    %v400 = vsel %vm371, %v348, 0
    %v403 = vsel %vm371, %v349, 0
    %v406 = vsel %vm371, %v350, 0
    %v409 = vsel %vm371, %v351, 0
    %v412 = vsel %vm371, %v352, 0
    %v415 = vsel %vm371, %v353, 0
    %v418 = vsel %vm371, %v354, 0
    %v421 = vsel %vm371, %v355, 0
    %v424 = vsel %vm371, %v356, 0
    %v427 = vsel %vm371, %v357, 0
    %v430 = vsel %vm371, %v358, 0
    %v433 = vsel %vm371, %v359, 0
    %v436 = vsel %vm371, %v360, 0
    %v439 = vsel %vm371, %v361, 0
    %v442 = vsel %vm371, %v362, 0
    %v445 = vsel %vm371, %v363, 0
    %v448 = vsel %vm371, %v364, 0
    %v451 = vsel %vm371, %v365, 0
    %v454 = vsel %vm371, %v366, 0
    %v457 = vsel %vm371, %v367, 0
    %v460 = vsel %vm371, %v368, 0
    %v463 = vsel %vm371, %v369, 0
    %v466 = vsel %vm371, %v370, 0
    %vm468 = vcmask 1043456
    %v470 = vsel %vm468, %v210, 0
    %472 = vmatprep.subr.bf16.mxu0 0
    %473 = vmatpush1.bf16.msra.mxu0 %v470
    %474 = vmatprep.subr.bf16.mxu0 0
    %475 = vmatpush1.bf16.msra.mxu0 0
    %476 = vmatprep.subr.bf16.mxu0 0
    %477 = vmatpush1.bf16.msra.mxu0 0
    %478 = vmatprep.subr.bf16.mxu0 0
    %479 = vmatpush1.bf16.msra.mxu0 0
    %480 = vmatprep.subr.bf16.mxu0 0
    %481 = vmatpush1.bf16.msra.mxu0 0
    %482 = vmatprep.subr.bf16.mxu0 0
    %483 = vmatpush1.bf16.msra.mxu0 0
    %484 = vmatprep.subr.bf16.mxu0 0
    %485 = vmatpush1.bf16.msra.mxu0 0
    %486 = vmatprep.subr.bf16.mxu0 0
    %487 = vmatpush1.bf16.msra.mxu0 0
    %488 = vmatprep.subr.bf16.mxu0 0
    %489 = vmatpush1.bf16.msra.mxu0 0
    %490 = vmatprep.subr.bf16.mxu0 0
    %491 = vmatpush1.bf16.msra.mxu0 0
    %492 = vmatprep.subr.bf16.mxu0 0
    %493 = vmatpush1.bf16.msra.mxu0 0
    %494 = vmatprep.subr.bf16.mxu0 0
    %495 = vmatpush1.bf16.msra.mxu0 0
    %496 = vmatprep.subr.bf16.mxu0 0
    %497 = vmatpush1.bf16.msra.mxu0 0
    %498 = vmatprep.subr.bf16.mxu0 0
    %499 = vmatpush1.bf16.msra.mxu0 0
    %500 = vmatprep.subr.bf16.mxu0 0
    %501 = vmatpush1.bf16.msra.mxu0 0
    %502 = vmatprep.subr.bf16.mxu0 0
    %503 = vmatpush1.bf16.msra.mxu0 0
    %504 = vmatprep.mubr.bf16.mxu0 0
    %505 = vmatmul.mubr.bf16.gmra.mrb[0].mxu0 %v373
    %v506 = vpop.f32.mrb[0].mxu0
    %v507 = vadd.f32 0.0, %v506
    %v508 = vpop.f32.mrb[0].mxu0
    %v509 = vpop.f32.mrb[0].mxu0
    %v510 = vadd.f32 0.0, %v509
    %v511 = vpop.f32.mrb[0].mxu0
    %512 = vmatprep.mubr.bf16.mxu0 0
    %513 = vmatmul.mubr.bf16.gmra.mrb[0].mxu0 %v376
    %v514 = vpop.f32.mrb[0].mxu0
    %v515 = vadd.f32 0.0, %v514
    %v516 = vpop.f32.mrb[0].mxu0
    %v517 = vpop.f32.mrb[0].mxu0
    %v518 = vadd.f32 0.0, %v517
    %v519 = vpop.f32.mrb[0].mxu0
    %520 = vmatprep.mubr.bf16.mxu0 0
    %521 = vmatmul.mubr.bf16.gmra.mrb[0].mxu0 %v379
    %v522 = vpop.f32.mrb[0].mxu0
    %v523 = vadd.f32 0.0, %v522
    %v524 = vpop.f32.mrb[0].mxu0
    %v525 = vpop.f32.mrb[0].mxu0
    %v526 = vadd.f32 0.0, %v525
    %v527 = vpop.f32.mrb[0].mxu0
    %528 = vmatprep.mubr.bf16.mxu0 0
    %529 = vmatmul.mubr.bf16.gmra.mrb[0].mxu0 %v382
    %v530 = vpop.f32.mrb[0].mxu0
    %v531 = vadd.f32 0.0, %v530
    %v532 = vpop.f32.mrb[0].mxu0
    %v533 = vpop.f32.mrb[0].mxu0
    %v534 = vadd.f32 0.0, %v533
    %v535 = vpop.f32.mrb[0].mxu0
    %536 = vmatprep.mubr.bf16.mxu0 0
    %537 = vmatmul.mubr.bf16.gmra.mrb[0].mxu0 %v385
    %v538 = vpop.f32.mrb[0].mxu0
    %v539 = vadd.f32 0.0, %v538
    %v540 = vpop.f32.mrb[0].mxu0
    %v541 = vpop.f32.mrb[0].mxu0
    %v542 = vadd.f32 0.0, %v541
    %v543 = vpop.f32.mrb[0].mxu0
    %544 = vmatprep.mubr.bf16.mxu0 0
    %545 = vmatmul.mubr.bf16.gmra.mrb[0].mxu0 %v388
    %v546 = vpop.f32.mrb[0].mxu0
    %v547 = vadd.f32 0.0, %v546
    %v548 = vpop.f32.mrb[0].mxu0
    %v549 = vpop.f32.mrb[0].mxu0
    %v550 = vadd.f32 0.0, %v549
    %v551 = vpop.f32.mrb[0].mxu0
    %552 = vmatprep.mubr.bf16.mxu0 0
    %553 = vmatmul.mubr.bf16.gmra.mrb[0].mxu0 %v391
    %v554 = vpop.f32.mrb[0].mxu0
    %v555 = vadd.f32 0.0, %v554
    %v556 = vpop.f32.mrb[0].mxu0
    %v557 = vpop.f32.mrb[0].mxu0
    %v558 = vadd.f32 0.0, %v557
    %v559 = vpop.f32.mrb[0].mxu0
    %560 = vmatprep.mubr.bf16.mxu0 0
    %561 = vmatmul.mubr.bf16.gmra.mrb[0].mxu0 %v394
    %v562 = vpop.f32.mrb[0].mxu0
    %v563 = vadd.f32 0.0, %v562
    %v564 = vpop.f32.mrb[0].mxu0
    %v565 = vpop.f32.mrb[0].mxu0
    %v566 = vadd.f32 0.0, %v565
    %v567 = vpop.f32.mrb[0].mxu0
    %568 = vmatprep.mubr.bf16.mxu0 0
    %569 = vmatmul.mubr.bf16.gmra.mrb[0].mxu0 %v397
    %v570 = vpop.f32.mrb[0].mxu0
    %v571 = vadd.f32 0.0, %v570
    %v572 = vpop.f32.mrb[0].mxu0
    %v573 = vpop.f32.mrb[0].mxu0
    %v574 = vadd.f32 0.0, %v573
    %v575 = vpop.f32.mrb[0].mxu0
    %576 = vmatprep.mubr.bf16.mxu0 0
    %577 = vmatmul.mubr.bf16.gmra.mrb[0].mxu0 %v400
    %v578 = vpop.f32.mrb[0].mxu0
    %v579 = vadd.f32 0.0, %v578
    %v580 = vpop.f32.mrb[0].mxu0
    %v581 = vpop.f32.mrb[0].mxu0
    %v582 = vadd.f32 0.0, %v581
    %v583 = vpop.f32.mrb[0].mxu0
    %584 = vmatprep.mubr.bf16.mxu0 0
    %585 = vmatmul.mubr.bf16.gmra.mrb[0].mxu0 %v403
    %v586 = vpop.f32.mrb[0].mxu0
    %v587 = vadd.f32 0.0, %v586
    %v588 = vpop.f32.mrb[0].mxu0
    %v589 = vpop.f32.mrb[0].mxu0
    %v590 = vadd.f32 0.0, %v589
    %v591 = vpop.f32.mrb[0].mxu0
    %592 = vmatprep.mubr.bf16.mxu0 0
    %593 = vmatmul.mubr.bf16.gmra.mrb[0].mxu0 %v406
    %v594 = vpop.f32.mrb[0].mxu0
    %v595 = vadd.f32 0.0, %v594
    %v596 = vpop.f32.mrb[0].mxu0
    %v597 = vpop.f32.mrb[0].mxu0
    %v598 = vadd.f32 0.0, %v597
    %v599 = vpop.f32.mrb[0].mxu0
    %600 = vmatprep.mubr.bf16.mxu0 0
    %601 = vmatmul.mubr.bf16.gmra.mrb[0].mxu0 %v409
    %v602 = vpop.f32.mrb[0].mxu0
    %v603 = vadd.f32 0.0, %v602
    %v604 = vpop.f32.mrb[0].mxu0
    %v605 = vpop.f32.mrb[0].mxu0
    %v606 = vadd.f32 0.0, %v605
    %v607 = vpop.f32.mrb[0].mxu0
    %608 = vmatprep.mubr.bf16.mxu0 0
    %609 = vmatmul.mubr.bf16.gmra.mrb[0].mxu0 %v412
    %v610 = vpop.f32.mrb[0].mxu0
    %v611 = vadd.f32 0.0, %v610
    %v612 = vpop.f32.mrb[0].mxu0
    %v613 = vpop.f32.mrb[0].mxu0
    %v614 = vadd.f32 0.0, %v613
    %v615 = vpop.f32.mrb[0].mxu0
    %616 = vmatprep.mubr.bf16.mxu0 0
    %617 = vmatmul.mubr.bf16.gmra.mrb[0].mxu0 %v415
    %v618 = vpop.f32.mrb[0].mxu0
    %v619 = vadd.f32 0.0, %v618
    %v620 = vpop.f32.mrb[0].mxu0
    %v621 = vpop.f32.mrb[0].mxu0
    %v622 = vadd.f32 0.0, %v621
    %v623 = vpop.f32.mrb[0].mxu0
    %624 = vmatprep.mubr.bf16.mxu0 0
    %625 = vmatmul.mubr.bf16.gmra.mrb[0].mxu0 %v418
    %v626 = vpop.f32.mrb[0].mxu0
    %v627 = vadd.f32 0.0, %v626
    %v628 = vpop.f32.mrb[0].mxu0
    %v629 = vpop.f32.mrb[0].mxu0
    %v630 = vadd.f32 0.0, %v629
    %v631 = vpop.f32.mrb[0].mxu0
    %632 = vmatprep.mubr.bf16.mxu0 0
    %633 = vmatmul.mubr.bf16.gmra.mrb[0].mxu0 %v421
    %v634 = vpop.f32.mrb[0].mxu0
    %v635 = vadd.f32 0.0, %v634
    %v636 = vpop.f32.mrb[0].mxu0
    %v637 = vpop.f32.mrb[0].mxu0
    %v638 = vadd.f32 0.0, %v637
    %v639 = vpop.f32.mrb[0].mxu0
    %640 = vmatprep.mubr.bf16.mxu0 0
    %641 = vmatmul.mubr.bf16.gmra.mrb[0].mxu0 %v424
    %v642 = vpop.f32.mrb[0].mxu0
    %v643 = vadd.f32 0.0, %v642
    %v644 = vpop.f32.mrb[0].mxu0
    %v645 = vpop.f32.mrb[0].mxu0
    %v646 = vadd.f32 0.0, %v645
    %v647 = vpop.f32.mrb[0].mxu0
    %648 = vmatprep.mubr.bf16.mxu0 0
    %649 = vmatmul.mubr.bf16.gmra.mrb[0].mxu0 %v427
    %v650 = vpop.f32.mrb[0].mxu0
    %v651 = vadd.f32 0.0, %v650
    %v652 = vpop.f32.mrb[0].mxu0
    %v653 = vpop.f32.mrb[0].mxu0
    %v654 = vadd.f32 0.0, %v653
    %v655 = vpop.f32.mrb[0].mxu0
    %656 = vmatprep.mubr.bf16.mxu0 0
    %657 = vmatmul.mubr.bf16.gmra.mrb[0].mxu0 %v430
    %v658 = vpop.f32.mrb[0].mxu0
    %v659 = vadd.f32 0.0, %v658
    %v660 = vpop.f32.mrb[0].mxu0
    %v661 = vpop.f32.mrb[0].mxu0
    %v662 = vadd.f32 0.0, %v661
    %v663 = vpop.f32.mrb[0].mxu0
    %664 = vmatprep.mubr.bf16.mxu0 0
    %665 = vmatmul.mubr.bf16.gmra.mrb[0].mxu0 %v433
    %v666 = vpop.f32.mrb[0].mxu0
    %v667 = vadd.f32 0.0, %v666
    %v668 = vpop.f32.mrb[0].mxu0
    %v669 = vpop.f32.mrb[0].mxu0
    %v670 = vadd.f32 0.0, %v669
    %v671 = vpop.f32.mrb[0].mxu0
    %672 = vmatprep.mubr.bf16.mxu0 0
    %673 = vmatmul.mubr.bf16.gmra.mrb[0].mxu0 %v436
    %v674 = vpop.f32.mrb[0].mxu0
    %v675 = vadd.f32 0.0, %v674
    %v676 = vpop.f32.mrb[0].mxu0
    %v677 = vpop.f32.mrb[0].mxu0
    %v678 = vadd.f32 0.0, %v677
    %v679 = vpop.f32.mrb[0].mxu0
    %680 = vmatprep.mubr.bf16.mxu0 0
    %681 = vmatmul.mubr.bf16.gmra.mrb[0].mxu0 %v439
    %v682 = vpop.f32.mrb[0].mxu0
    %v683 = vadd.f32 0.0, %v682
    %v684 = vpop.f32.mrb[0].mxu0
    %v685 = vpop.f32.mrb[0].mxu0
    %v686 = vadd.f32 0.0, %v685
    %v687 = vpop.f32.mrb[0].mxu0
    %688 = vmatprep.mubr.bf16.mxu0 0
    %689 = vmatmul.mubr.bf16.gmra.mrb[0].mxu0 %v442
    %v690 = vpop.f32.mrb[0].mxu0
    %v691 = vadd.f32 0.0, %v690
    %v692 = vpop.f32.mrb[0].mxu0
    %v693 = vpop.f32.mrb[0].mxu0
    %v694 = vadd.f32 0.0, %v693
    %v695 = vpop.f32.mrb[0].mxu0
    %696 = vmatprep.mubr.bf16.mxu0 0
    %697 = vmatmul.mubr.bf16.gmra.mrb[0].mxu0 %v445
    %v698 = vpop.f32.mrb[0].mxu0
    %v699 = vadd.f32 0.0, %v698
    %v700 = vpop.f32.mrb[0].mxu0
    %v701 = vpop.f32.mrb[0].mxu0
    %v702 = vadd.f32 0.0, %v701
    %v703 = vpop.f32.mrb[0].mxu0
    %704 = vmatprep.mubr.bf16.mxu0 0
    %705 = vmatmul.mubr.bf16.gmra.mrb[0].mxu0 %v448
    %v706 = vpop.f32.mrb[0].mxu0
    %v707 = vadd.f32 0.0, %v706
    %v708 = vpop.f32.mrb[0].mxu0
    %v709 = vpop.f32.mrb[0].mxu0
    %v710 = vadd.f32 0.0, %v709
    %v711 = vpop.f32.mrb[0].mxu0
    %712 = vmatprep.mubr.bf16.mxu0 0
    %713 = vmatmul.mubr.bf16.gmra.mrb[0].mxu0 %v451
    %v714 = vpop.f32.mrb[0].mxu0
    %v715 = vadd.f32 0.0, %v714
    %v716 = vpop.f32.mrb[0].mxu0
    %v717 = vpop.f32.mrb[0].mxu0
    %v718 = vadd.f32 0.0, %v717
    %v719 = vpop.f32.mrb[0].mxu0
    %720 = vmatprep.mubr.bf16.mxu0 0
    %721 = vmatmul.mubr.bf16.gmra.mrb[0].mxu0 %v454
    %v722 = vpop.f32.mrb[0].mxu0
    %v723 = vadd.f32 0.0, %v722
    %v724 = vpop.f32.mrb[0].mxu0
    %v725 = vpop.f32.mrb[0].mxu0
    %v726 = vadd.f32 0.0, %v725
    %v727 = vpop.f32.mrb[0].mxu0
    %728 = vmatprep.mubr.bf16.mxu0 0
    %729 = vmatmul.mubr.bf16.gmra.mrb[0].mxu0 %v457
    %v730 = vpop.f32.mrb[0].mxu0
    %v731 = vadd.f32 0.0, %v730
    %v732 = vpop.f32.mrb[0].mxu0
    %v733 = vpop.f32.mrb[0].mxu0
    %v734 = vadd.f32 0.0, %v733
    %v735 = vpop.f32.mrb[0].mxu0
    %736 = vmatprep.mubr.bf16.mxu0 0
    %737 = vmatmul.mubr.bf16.gmra.mrb[0].mxu0 %v460
    %v738 = vpop.f32.mrb[0].mxu0
    %v739 = vadd.f32 0.0, %v738
    %v740 = vpop.f32.mrb[0].mxu0
    %v741 = vpop.f32.mrb[0].mxu0
    %v742 = vadd.f32 0.0, %v741
    %v743 = vpop.f32.mrb[0].mxu0
    %744 = vmatprep.mubr.bf16.mxu0 0
    %745 = vmatmul.mubr.bf16.gmra.mrb[0].mxu0 %v463
    %v746 = vpop.f32.mrb[0].mxu0
    %v747 = vadd.f32 0.0, %v746
    %v748 = vpop.f32.mrb[0].mxu0
    %v749 = vpop.f32.mrb[0].mxu0
    %v750 = vadd.f32 0.0, %v749
    %v751 = vpop.f32.mrb[0].mxu0
    %752 = vmatprep.mubr.bf16.mxu0 0
    %753 = vmatmul.mubr.bf16.gmra.mrb[0].mxu0 %v466
    %v754 = vpop.f32.mrb[0].mxu0
    %v755 = vadd.f32 0.0, %v754
    %v756 = vpop.f32.mrb[0].mxu0
    %v757 = vpop.f32.mrb[0].mxu0
    %v758 = vadd.f32 0.0, %v757
    %v759 = vpop.f32.mrb[0].mxu0
    %760 = vdwg.mxu0
    %v761 = vadd.f32 %v82, %v507
    %v762 = vadd.f32 %v83, %v510
    %v763 = vadd.f32 %v84, %v515
    %v764 = vadd.f32 %v85, %v518
    %v765 = vadd.f32 %v86, %v523
    %v766 = vadd.f32 %v87, %v526
    %v767 = vadd.f32 %v88, %v531
    %v768 = vadd.f32 %v89, %v534
    %v769 = vadd.f32 %v90, %v539
    %v770 = vadd.f32 %v91, %v542
    %v771 = vadd.f32 %v92, %v547
    %v772 = vadd.f32 %v93, %v550
    %v773 = vadd.f32 %v94, %v555
    %v774 = vadd.f32 %v95, %v558
    %v775 = vadd.f32 %v96, %v563
    %v776 = vadd.f32 %v97, %v566
    %v777 = vadd.f32 %v98, %v571
    %v778 = vadd.f32 %v99, %v574
    %v779 = vadd.f32 %v100, %v579
    %v780 = vadd.f32 %v101, %v582
    %v781 = vadd.f32 %v102, %v587
    %v782 = vadd.f32 %v103, %v590
    %v783 = vadd.f32 %v104, %v595
    %v784 = vadd.f32 %v105, %v598
    %v785 = vadd.f32 %v106, %v603
    %v786 = vadd.f32 %v107, %v606
    %v787 = vadd.f32 %v108, %v611
    %v788 = vadd.f32 %v109, %v614
    %v789 = vadd.f32 %v110, %v619
    %v790 = vadd.f32 %v111, %v622
    %v791 = vadd.f32 %v112, %v627
    %v792 = vadd.f32 %v113, %v630
    %v793 = vadd.f32 %v114, %v635
    %v794 = vadd.f32 %v115, %v638
    %v795 = vadd.f32 %v116, %v643
    %v796 = vadd.f32 %v117, %v646
    %v797 = vadd.f32 %v118, %v651
    %v798 = vadd.f32 %v119, %v654
    %v799 = vadd.f32 %v120, %v659
    %v800 = vadd.f32 %v121, %v662
    %v801 = vadd.f32 %v122, %v667
    %v802 = vadd.f32 %v123, %v670
    %v803 = vadd.f32 %v124, %v675
    %v804 = vadd.f32 %v125, %v678
    %v805 = vadd.f32 %v126, %v683
    %v806 = vadd.f32 %v127, %v686
    %v807 = vadd.f32 %v128, %v691
    %v808 = vadd.f32 %v129, %v694
    %v809 = vadd.f32 %v130, %v699
    %v810 = vadd.f32 %v131, %v702
    %v811 = vadd.f32 %v132, %v707
    %v812 = vadd.f32 %v133, %v710
    %v813 = vadd.f32 %v134, %v715
    %v814 = vadd.f32 %v135, %v718
    %v815 = vadd.f32 %v136, %v723
    %v816 = vadd.f32 %v137, %v726
    %v817 = vadd.f32 %v138, %v731
    %v818 = vadd.f32 %v139, %v734
    %v819 = vadd.f32 %v140, %v739
    %v820 = vadd.f32 %v141, %v742
    %v821 = vadd.f32 %v142, %v747
    %v822 = vadd.f32 %v143, %v750
    %v823 = vadd.f32 %v144, %v755
    %v824 = vadd.f32 %v145, %v758
    %vm825 = vcmask 261120
    %826 = vst.msk [vmem:[#allocation2] sm:$0xff] %vm825, %v761
    %827 = vst.msk [vmem:[#allocation2 + $0x8] sm:$0xff] %vm825, %v762
    %828 = vst.msk [vmem:[#allocation2 + $0x10] sm:$0xff] %vm825, %v763
    %829 = vst.msk [vmem:[#allocation2 + $0x18] sm:$0xff] %vm825, %v764
    %830 = vst.msk [vmem:[#allocation2 + $0x20] sm:$0xff] %vm825, %v765
    %831 = vst.msk [vmem:[#allocation2 + $0x28] sm:$0xff] %vm825, %v766
    %832 = vst.msk [vmem:[#allocation2 + $0x30] sm:$0xff] %vm825, %v767
    %833 = vst.msk [vmem:[#allocation2 + $0x38] sm:$0xff] %vm825, %v768
    %834 = vst.msk [vmem:[#allocation2 + $0x40] sm:$0xff] %vm825, %v769
    %835 = vst.msk [vmem:[#allocation2 + $0x48] sm:$0xff] %vm825, %v770
    %836 = vst.msk [vmem:[#allocation2 + $0x50] sm:$0xff] %vm825, %v771
    %837 = vst.msk [vmem:[#allocation2 + $0x58] sm:$0xff] %vm825, %v772
    %838 = vst.msk [vmem:[#allocation2 + $0x60] sm:$0xff] %vm825, %v773
    %839 = vst.msk [vmem:[#allocation2 + $0x68] sm:$0xff] %vm825, %v774
    %840 = vst.msk [vmem:[#allocation2 + $0x70] sm:$0xff] %vm825, %v775
    %841 = vst.msk [vmem:[#allocation2 + $0x78] sm:$0xff] %vm825, %v776
    %842 = vst.msk [vmem:[#allocation2 + $0x80] sm:$0xff] %vm825, %v777
    %843 = vst.msk [vmem:[#allocation2 + $0x88] sm:$0xff] %vm825, %v778
    %844 = vst.msk [vmem:[#allocation2 + $0x90] sm:$0xff] %vm825, %v779
    %845 = vst.msk [vmem:[#allocation2 + $0x98] sm:$0xff] %vm825, %v780
    %846 = vst.msk [vmem:[#allocation2 + $0xa0] sm:$0xff] %vm825, %v781
    %847 = vst.msk [vmem:[#allocation2 + $0xa8] sm:$0xff] %vm825, %v782
    %848 = vst.msk [vmem:[#allocation2 + $0xb0] sm:$0xff] %vm825, %v783
    %849 = vst.msk [vmem:[#allocation2 + $0xb8] sm:$0xff] %vm825, %v784
    %850 = vst.msk [vmem:[#allocation2 + $0xc0] sm:$0xff] %vm825, %v785
    %851 = vst.msk [vmem:[#allocation2 + $0xc8] sm:$0xff] %vm825, %v786
    %852 = vst.msk [vmem:[#allocation2 + $0xd0] sm:$0xff] %vm825, %v787
    %853 = vst.msk [vmem:[#allocation2 + $0xd8] sm:$0xff] %vm825, %v788
    %854 = vst.msk [vmem:[#allocation2 + $0xe0] sm:$0xff] %vm825, %v789
    %855 = vst.msk [vmem:[#allocation2 + $0xe8] sm:$0xff] %vm825, %v790
    %856 = vst.msk [vmem:[#allocation2 + $0xf0] sm:$0xff] %vm825, %v791
    %857 = vst.msk [vmem:[#allocation2 + $0xf8] sm:$0xff] %vm825, %v792
    %858 = vst.msk [vmem:[#allocation2 + $0x100] sm:$0xff] %vm825, %v793
    %859 = vst.msk [vmem:[#allocation2 + $0x108] sm:$0xff] %vm825, %v794
    %860 = vst.msk [vmem:[#allocation2 + $0x110] sm:$0xff] %vm825, %v795
    %861 = vst.msk [vmem:[#allocation2 + $0x118] sm:$0xff] %vm825, %v796
    %862 = vst.msk [vmem:[#allocation2 + $0x120] sm:$0xff] %vm825, %v797
    %863 = vst.msk [vmem:[#allocation2 + $0x128] sm:$0xff] %vm825, %v798
    %864 = vst.msk [vmem:[#allocation2 + $0x130] sm:$0xff] %vm825, %v799
    %865 = vst.msk [vmem:[#allocation2 + $0x138] sm:$0xff] %vm825, %v800
    %866 = vst.msk [vmem:[#allocation2 + $0x140] sm:$0xff] %vm825, %v801
    %867 = vst.msk [vmem:[#allocation2 + $0x148] sm:$0xff] %vm825, %v802
    %868 = vst.msk [vmem:[#allocation2 + $0x150] sm:$0xff] %vm825, %v803
    %869 = vst.msk [vmem:[#allocation2 + $0x158] sm:$0xff] %vm825, %v804
    %870 = vst.msk [vmem:[#allocation2 + $0x160] sm:$0xff] %vm825, %v805
    %871 = vst.msk [vmem:[#allocation2 + $0x168] sm:$0xff] %vm825, %v806
    %872 = vst.msk [vmem:[#allocation2 + $0x170] sm:$0xff] %vm825, %v807
    %873 = vst.msk [vmem:[#allocation2 + $0x178] sm:$0xff] %vm825, %v808
    %874 = vst.msk [vmem:[#allocation2 + $0x180] sm:$0xff] %vm825, %v809
    %875 = vst.msk [vmem:[#allocation2 + $0x188] sm:$0xff] %vm825, %v810
    %876 = vst.msk [vmem:[#allocation2 + $0x190] sm:$0xff] %vm825, %v811
    %877 = vst.msk [vmem:[#allocation2 + $0x198] sm:$0xff] %vm825, %v812
    %878 = vst.msk [vmem:[#allocation2 + $0x1a0] sm:$0xff] %vm825, %v813
    %879 = vst.msk [vmem:[#allocation2 + $0x1a8] sm:$0xff] %vm825, %v814
    %880 = vst.msk [vmem:[#allocation2 + $0x1b0] sm:$0xff] %vm825, %v815
    %881 = vst.msk [vmem:[#allocation2 + $0x1b8] sm:$0xff] %vm825, %v816
    %882 = vst.msk [vmem:[#allocation2 + $0x1c0] sm:$0xff] %vm825, %v817
    %883 = vst.msk [vmem:[#allocation2 + $0x1c8] sm:$0xff] %vm825, %v818
    %884 = vst.msk [vmem:[#allocation2 + $0x1d0] sm:$0xff] %vm825, %v819
    %885 = vst.msk [vmem:[#allocation2 + $0x1d8] sm:$0xff] %vm825, %v820
    %886 = vst.msk [vmem:[#allocation2 + $0x1e0] sm:$0xff] %vm825, %v821
    %887 = vst.msk [vmem:[#allocation2 + $0x1e8] sm:$0xff] %vm825, %v822
    %888 = vst.msk [vmem:[#allocation2 + $0x1f0] sm:$0xff] %vm825, %v823
    %889 = vst.msk [vmem:[#allocation2 + $0x1f8] sm:$0xff] %vm825, %v824
    // Predicated region
    $region14: #{deeplabv3_forward.23} parent=1 // pred_check
      %p890 = pneg %p13
    $region15: #{deeplabv3_forward.23} parent=1 // pred_check_branch
      %892 = sbr.rel (%p890) target = $region17
    $region16: #{deeplabv3_forward.23} parent=1 // pred_region
      %v893 = vld [vmem:[#allocation2] sm:$0xff]
      %v894 = vld [vmem:[#allocation2 + $0x8] sm:$0xff]
      %v895 = vld [vmem:[#allocation2 + $0x10] sm:$0xff]
      %v896 = vld [vmem:[#allocation2 + $0x18] sm:$0xff]
      %v897 = vld [vmem:[#allocation2 + $0x20] sm:$0xff]
      %v898 = vld [vmem:[#allocation2 + $0x28] sm:$0xff]
      %v899 = vld [vmem:[#allocation2 + $0x30] sm:$0xff]
      %v900 = vld [vmem:[#allocation2 + $0x38] sm:$0xff]
      %v901 = vld [vmem:[#allocation2 + $0x40] sm:$0xff]
      %v902 = vld [vmem:[#allocation2 + $0x48] sm:$0xff]
      %v903 = vld [vmem:[#allocation2 + $0x50] sm:$0xff]
      %v904 = vld [vmem:[#allocation2 + $0x58] sm:$0xff]
      %v905 = vld [vmem:[#allocation2 + $0x60] sm:$0xff]
      %v906 = vld [vmem:[#allocation2 + $0x68] sm:$0xff]
      %v907 = vld [vmem:[#allocation2 + $0x70] sm:$0xff]
      %v908 = vld [vmem:[#allocation2 + $0x78] sm:$0xff]
      %v909 = vld [vmem:[#allocation2 + $0x80] sm:$0xff]
      %v910 = vld [vmem:[#allocation2 + $0x88] sm:$0xff]
      %v911 = vld [vmem:[#allocation2 + $0x90] sm:$0xff]
      %v912 = vld [vmem:[#allocation2 + $0x98] sm:$0xff]
      %v913 = vld [vmem:[#allocation2 + $0xa0] sm:$0xff]
      %v914 = vld [vmem:[#allocation2 + $0xa8] sm:$0xff]
      %v915 = vld [vmem:[#allocation2 + $0xb0] sm:$0xff]
      %v916 = vld [vmem:[#allocation2 + $0xb8] sm:$0xff]
      %v917 = vld [vmem:[#allocation2 + $0xc0] sm:$0xff]
      %v918 = vld [vmem:[#allocation2 + $0xc8] sm:$0xff]
      %v919 = vld [vmem:[#allocation2 + $0xd0] sm:$0xff]
      %v920 = vld [vmem:[#allocation2 + $0xd8] sm:$0xff]
      %v921 = vld [vmem:[#allocation2 + $0xe0] sm:$0xff]
      %v922 = vld [vmem:[#allocation2 + $0xe8] sm:$0xff]
      %v923 = vld [vmem:[#allocation2 + $0xf0] sm:$0xff]
      %v924 = vld [vmem:[#allocation2 + $0xf8] sm:$0xff]
      %v925 = vld [vmem:[#allocation2 + $0x100] sm:$0xff]
      %v926 = vld [vmem:[#allocation2 + $0x108] sm:$0xff]
      %v927 = vld [vmem:[#allocation2 + $0x110] sm:$0xff]
      %v928 = vld [vmem:[#allocation2 + $0x118] sm:$0xff]
      %v929 = vld [vmem:[#allocation2 + $0x120] sm:$0xff]
      %v930 = vld [vmem:[#allocation2 + $0x128] sm:$0xff]
      %v931 = vld [vmem:[#allocation2 + $0x130] sm:$0xff]
      %v932 = vld [vmem:[#allocation2 + $0x138] sm:$0xff]
      %v933 = vld [vmem:[#allocation2 + $0x140] sm:$0xff]
      %v934 = vld [vmem:[#allocation2 + $0x148] sm:$0xff]
      %v935 = vld [vmem:[#allocation2 + $0x150] sm:$0xff]
      %v936 = vld [vmem:[#allocation2 + $0x158] sm:$0xff]
      %v937 = vld [vmem:[#allocation2 + $0x160] sm:$0xff]
      %v938 = vld [vmem:[#allocation2 + $0x168] sm:$0xff]
      %v939 = vld [vmem:[#allocation2 + $0x170] sm:$0xff]
      %v940 = vld [vmem:[#allocation2 + $0x178] sm:$0xff]
      %v941 = vld [vmem:[#allocation2 + $0x180] sm:$0xff]
      %v942 = vld [vmem:[#allocation2 + $0x188] sm:$0xff]
      %v943 = vld [vmem:[#allocation2 + $0x190] sm:$0xff]
      %v944 = vld [vmem:[#allocation2 + $0x198] sm:$0xff]
      %v945 = vld [vmem:[#allocation2 + $0x1a0] sm:$0xff]
      %v946 = vld [vmem:[#allocation2 + $0x1a8] sm:$0xff]
      %v947 = vld [vmem:[#allocation2 + $0x1b0] sm:$0xff]
      %v948 = vld [vmem:[#allocation2 + $0x1b8] sm:$0xff]
      %v949 = vld [vmem:[#allocation2 + $0x1c0] sm:$0xff]
      %v950 = vld [vmem:[#allocation2 + $0x1c8] sm:$0xff]
      %v951 = vld [vmem:[#allocation2 + $0x1d0] sm:$0xff]
      %v952 = vld [vmem:[#allocation2 + $0x1d8] sm:$0xff]
      %v953 = vld [vmem:[#allocation2 + $0x1e0] sm:$0xff]
      %v954 = vld [vmem:[#allocation2 + $0x1e8] sm:$0xff]
      %v955 = vld [vmem:[#allocation2 + $0x1f0] sm:$0xff]
      %v956 = vld [vmem:[#allocation2 + $0x1f8] sm:$0xff]
      %957 = vst.msk [vmem:[#allocation3] sm:$0xff] %vm825, %v893
      %958 = vst.msk [vmem:[#allocation3 + $0x8] sm:$0xff] %vm825, %v894
      %959 = vst.msk [vmem:[#allocation3 + $0x10] sm:$0xff] %vm825, %v895
      %960 = vst.msk [vmem:[#allocation3 + $0x18] sm:$0xff] %vm825, %v896
      %961 = vst.msk [vmem:[#allocation3 + $0x20] sm:$0xff] %vm825, %v897
      %962 = vst.msk [vmem:[#allocation3 + $0x28] sm:$0xff] %vm825, %v898
      %963 = vst.msk [vmem:[#allocation3 + $0x30] sm:$0xff] %vm825, %v899
      %964 = vst.msk [vmem:[#allocation3 + $0x38] sm:$0xff] %vm825, %v900
      %965 = vst.msk [vmem:[#allocation3 + $0x40] sm:$0xff] %vm825, %v901
      %966 = vst.msk [vmem:[#allocation3 + $0x48] sm:$0xff] %vm825, %v902
      %967 = vst.msk [vmem:[#allocation3 + $0x50] sm:$0xff] %vm825, %v903
      %968 = vst.msk [vmem:[#allocation3 + $0x58] sm:$0xff] %vm825, %v904
      %969 = vst.msk [vmem:[#allocation3 + $0x60] sm:$0xff] %vm825, %v905
      %970 = vst.msk [vmem:[#allocation3 + $0x68] sm:$0xff] %vm825, %v906
      %971 = vst.msk [vmem:[#allocation3 + $0x70] sm:$0xff] %vm825, %v907
      %972 = vst.msk [vmem:[#allocation3 + $0x78] sm:$0xff] %vm825, %v908
      %973 = vst.msk [vmem:[#allocation3 + $0x80] sm:$0xff] %vm825, %v909
      %974 = vst.msk [vmem:[#allocation3 + $0x88] sm:$0xff] %vm825, %v910
      %975 = vst.msk [vmem:[#allocation3 + $0x90] sm:$0xff] %vm825, %v911
      %976 = vst.msk [vmem:[#allocation3 + $0x98] sm:$0xff] %vm825, %v912
      %977 = vst.msk [vmem:[#allocation3 + $0xa0] sm:$0xff] %vm825, %v913
      %978 = vst.msk [vmem:[#allocation3 + $0xa8] sm:$0xff] %vm825, %v914
      %979 = vst.msk [vmem:[#allocation3 + $0xb0] sm:$0xff] %vm825, %v915
      %980 = vst.msk [vmem:[#allocation3 + $0xb8] sm:$0xff] %vm825, %v916
      %981 = vst.msk [vmem:[#allocation3 + $0xc0] sm:$0xff] %vm825, %v917
      %982 = vst.msk [vmem:[#allocation3 + $0xc8] sm:$0xff] %vm825, %v918
      %983 = vst.msk [vmem:[#allocation3 + $0xd0] sm:$0xff] %vm825, %v919
      %984 = vst.msk [vmem:[#allocation3 + $0xd8] sm:$0xff] %vm825, %v920
      %985 = vst.msk [vmem:[#allocation3 + $0xe0] sm:$0xff] %vm825, %v921
      %986 = vst.msk [vmem:[#allocation3 + $0xe8] sm:$0xff] %vm825, %v922
      %987 = vst.msk [vmem:[#allocation3 + $0xf0] sm:$0xff] %vm825, %v923
      %988 = vst.msk [vmem:[#allocation3 + $0xf8] sm:$0xff] %vm825, %v924
      %989 = vst.msk [vmem:[#allocation3 + $0x100] sm:$0xff] %vm825, %v925
      %990 = vst.msk [vmem:[#allocation3 + $0x108] sm:$0xff] %vm825, %v926
      %991 = vst.msk [vmem:[#allocation3 + $0x110] sm:$0xff] %vm825, %v927
      %992 = vst.msk [vmem:[#allocation3 + $0x118] sm:$0xff] %vm825, %v928
      %993 = vst.msk [vmem:[#allocation3 + $0x120] sm:$0xff] %vm825, %v929
      %994 = vst.msk [vmem:[#allocation3 + $0x128] sm:$0xff] %vm825, %v930
      %995 = vst.msk [vmem:[#allocation3 + $0x130] sm:$0xff] %vm825, %v931
      %996 = vst.msk [vmem:[#allocation3 + $0x138] sm:$0xff] %vm825, %v932
      %997 = vst.msk [vmem:[#allocation3 + $0x140] sm:$0xff] %vm825, %v933
      %998 = vst.msk [vmem:[#allocation3 + $0x148] sm:$0xff] %vm825, %v934
      %999 = vst.msk [vmem:[#allocation3 + $0x150] sm:$0xff] %vm825, %v935
      %1000 = vst.msk [vmem:[#allocation3 + $0x158] sm:$0xff] %vm825, %v936
      %1001 = vst.msk [vmem:[#allocation3 + $0x160] sm:$0xff] %vm825, %v937
      %1002 = vst.msk [vmem:[#allocation3 + $0x168] sm:$0xff] %vm825, %v938
      %1003 = vst.msk [vmem:[#allocation3 + $0x170] sm:$0xff] %vm825, %v939
      %1004 = vst.msk [vmem:[#allocation3 + $0x178] sm:$0xff] %vm825, %v940
      %1005 = vst.msk [vmem:[#allocation3 + $0x180] sm:$0xff] %vm825, %v941
      %1006 = vst.msk [vmem:[#allocation3 + $0x188] sm:$0xff] %vm825, %v942
      %1007 = vst.msk [vmem:[#allocation3 + $0x190] sm:$0xff] %vm825, %v943
      %1008 = vst.msk [vmem:[#allocation3 + $0x198] sm:$0xff] %vm825, %v944
      %1009 = vst.msk [vmem:[#allocation3 + $0x1a0] sm:$0xff] %vm825, %v945
      %1010 = vst.msk [vmem:[#allocation3 + $0x1a8] sm:$0xff] %vm825, %v946
      %1011 = vst.msk [vmem:[#allocation3 + $0x1b0] sm:$0xff] %vm825, %v947
      %1012 = vst.msk [vmem:[#allocation3 + $0x1b8] sm:$0xff] %vm825, %v948
      %1013 = vst.msk [vmem:[#allocation3 + $0x1c0] sm:$0xff] %vm825, %v949
      %1014 = vst.msk [vmem:[#allocation3 + $0x1c8] sm:$0xff] %vm825, %v950
      %1015 = vst.msk [vmem:[#allocation3 + $0x1d0] sm:$0xff] %vm825, %v951
      %1016 = vst.msk [vmem:[#allocation3 + $0x1d8] sm:$0xff] %vm825, %v952
      %1017 = vst.msk [vmem:[#allocation3 + $0x1e0] sm:$0xff] %vm825, %v953
      %1018 = vst.msk [vmem:[#allocation3 + $0x1e8] sm:$0xff] %vm825, %v954
      %1019 = vst.msk [vmem:[#allocation3 + $0x1f0] sm:$0xff] %vm825, %v955
      %1020 = vst.msk [vmem:[#allocation3 + $0x1f8] sm:$0xff] %vm825, %v956
    $region17: #{deeplabv3_forward.23} parent=1 // pred_fallthru
      _
    // Predicated region
    $region18: #{deeplabv3_forward.23} parent=1 // pred_check
      _
    $region19: #{deeplabv3_forward.23} parent=1 // pred_check_branch
      %1022 = sbr.rel (0) target = $region21
    $region20: #{deeplabv3_forward.23} parent=1 // pred_region
      %s1024 = ssub.s32 8192, 8192
      %1025 = vsyncadd [#allocation4], %s1024
      %s1026 = sshll.u32 [#allocation3], 4
      %s1027 = int_to_ptr.vmem [resolvable:$true] %s1026
      %1032 = dma.vmem_to_hbm [thread:$0]  %s1027, 8192, %s2, [#allocation4], 128, 128, 8
    $region21: #{deeplabv3_forward.23} parent=1 // pred_fallthru
      _
    // Predicated region
    $region22: #{deeplabv3_forward.23} parent=1 // pred_check
      _
    $region23: #{deeplabv3_forward.23} parent=1 // pred_check_branch
      %1034 = sbr.rel (0) target = $region25
    $region24: #{deeplabv3_forward.23} parent=1 // pred_region
      %1035 = dma.done [#allocation4], 8192
    $region25: #{deeplabv3_forward.23} parent=1 // pred_fallthru
      _
    %1036 = vsyncpa [#allocation4], 1

</llo_original>
